<compile_context>
chip_gen: v7x
topology: tpu7x:2x2x1
jax: 0.10.0
libtpu: 0.0.40
codegen_flags: <defaults>
</compile_context>

<pallas_src>
import functools
import math

import jax
import jax.numpy as jnp
from jax import lax
from jax.experimental import pallas as pl
from jax.experimental.pallas import tpu as pltpu

_VMEM_LIMIT = 48 * 1024 * 1024   # explicit scoped-VMEM limit (fits v7x's 64 MiB)
_LN_EPS = 1e-12
_NEG_INF = -1e30


def _round_up(x, m):
    return ((x + m - 1) // m) * m


def _pick_q_tile(T, target=256):
    """Largest multiple-of-8 divisor of T that is <= target; else the whole T."""
    if T % 8 != 0 or T <= target:
        return T
    for cand in range(target - (target % 8), 7, -8):
        if T % cand == 0:
            return cand
    return T


# ----------------------------------------------------------------------------
# Tiled fused linear (+bias, optional ReLU) for the conv front-end:
# x:(M,K) @ w:(K,N) + b.  bf16 operands, f32 accumulation, bf16/f32 output.
# ----------------------------------------------------------------------------
def _linear_kernel(x_ref, w_ref, b_ref, o_ref, *, activation):
    x = x_ref[...].astype(jnp.bfloat16)
    acc = jnp.dot(x, w_ref[...], preferred_element_type=jnp.float32) + b_ref[...]
    if activation == "relu":
        acc = jnp.maximum(acc, 0.0)
    o_ref[...] = acc.astype(o_ref.dtype)


def linear_pallas(x, w_bf16, b, activation=None, out_dtype=jnp.float32, tm=512):
    M, K = x.shape
    N = w_bf16.shape[1]
    TM = min(_round_up(M, 16), tm)
    kernel = functools.partial(_linear_kernel, activation=activation)
    return pl.pallas_call(
        kernel,
        out_shape=jax.ShapeDtypeStruct((M, N), out_dtype),
        grid=(pl.cdiv(M, TM),),
        in_specs=[
            pl.BlockSpec((TM, K), lambda i: (i, 0)),
            pl.BlockSpec((K, N), lambda i: (0, 0)),
            pl.BlockSpec((1, N), lambda i: (0, 0)),
        ],
        out_specs=pl.BlockSpec((TM, N), lambda i: (i, 0)),
        compiler_params=pltpu.CompilerParams(
            dimension_semantics=("parallel",), vmem_limit_bytes=_VMEM_LIMIT),
    )(x, w_bf16, b.reshape(1, N))


# ----------------------------------------------------------------------------
# Fused encoder layer: pre-LN + MHSA (head-major Q/K/V in VMEM scratch,
# additive-mask softmax, per-head out-proj partial sums) + residual
# + pre-LN FFN + residual (+ optional final after-norm).
# Grid = (B, T/tq):  B "parallel", q-tile axis "arbitrary".
# ----------------------------------------------------------------------------
def _make_encoder_layer_kernel(heads, tq, eps, apply_after):
    def kernel(x_ref, bias_ref,
               ln1g_ref, ln1b_ref,
               wq_ref, bq_ref, wk_ref, bk_ref, wv_ref, bv_ref,
               ow_ref, ob_ref,
               ln2g_ref, ln2b_ref,
               w1_ref, b1_ref, w2_ref, b2_ref,
               *rest):
        if apply_after:
            ag_ref, ab_ref, o_ref, q_s, k_s, v_s, acc_s = rest
        else:
            ag_ref = ab_ref = None
            o_ref, q_s, k_s, v_s, acc_s = rest

        T = x_ref.shape[1]
        qi = pl.program_id(1)

        def ln(v, g, b):
            mean = jnp.mean(v, axis=-1, keepdims=True)
            c = v - mean
            var = jnp.mean(c * c, axis=-1, keepdims=True)
            return c * lax.rsqrt(var + eps) * g + b

        # --- per-batch prologue (qi == 0): pre-LN + head-major Q/K/V -> VMEM
        @pl.when(qi == 0)
        def _prologue():
            xn = ln(x_ref[0], ln1g_ref[...], ln1b_ref[...]).astype(jnp.bfloat16)

            def proj(h, carry):
                q_s[h] = (jnp.dot(xn, wq_ref[h], preferred_element_type=jnp.float32)
                          + bq_ref[h]).astype(jnp.bfloat16)   # scale pre-folded in wq/bq
                k_s[h] = (jnp.dot(xn, wk_ref[h], preferred_element_type=jnp.float32)
                          + bk_ref[h]).astype(jnp.bfloat16)
                v_s[h] = (jnp.dot(xn, wv_ref[h], preferred_element_type=jnp.float32)
                          + bv_ref[h]).astype(jnp.bfloat16)
                return carry

            lax.fori_loop(0, heads, proj, 0, unroll=True)

        # --- current query-row tile
        if tq == T:
            row0 = 0
            x_rows = x_ref[0]                                  # (T, D) f32
        else:
            row0 = pl.multiple_of(qi * tq, tq)
            x_rows = x_ref[0, pl.ds(row0, tq), :]              # (tq, D) f32
        bias = bias_ref[0]                                     # (1, T) additive key mask

        # --- MHSA: fori over heads, bf16 MXU operands, f32 accumulation
        acc_s[...] = jnp.zeros_like(acc_s)

        def head_body(h, carry):
            if tq == T:
                q = q_s[h]                                     # (tq, dk) bf16
            else:
                q = q_s[h, pl.ds(row0, tq), :]
            k = k_s[h]                                         # (T, dk) bf16
            v = v_s[h]
            s = lax.dot_general(q, k, (((1,), (1,)), ((), ())),
                                preferred_element_type=jnp.float32)    # (tq, T)
            s = s + bias
            s = s - jnp.max(s, axis=-1, keepdims=True)
            p = jnp.exp(s)
            denom = jnp.sum(p, axis=-1, keepdims=True)
            p = p * pl.reciprocal(jnp.maximum(denom, 1e-30), approx=True)
            ctx = jnp.dot(p.astype(jnp.bfloat16), v,
                          preferred_element_type=jnp.float32)           # (tq, dk)
            acc_s[...] = acc_s[...] + jnp.dot(
                ctx.astype(jnp.bfloat16), ow_ref[h],
                preferred_element_type=jnp.float32)                     # (tq, D)
            return carry

        lax.fori_loop(0, heads, head_body, 0, unroll=True)
        y = x_rows + acc_s[...] + ob_ref[...]                  # residual 1

        # --- FFN (+ residual 2), optional fused final after-norm
        yn = ln(y, ln2g_ref[...], ln2b_ref[...]).astype(jnp.bfloat16)
        h1 = jnp.dot(yn, w1_ref[...], preferred_element_type=jnp.float32) + b1_ref[...]
        h1 = jnp.maximum(h1, 0.0).astype(jnp.bfloat16)
        ff = jnp.dot(h1, w2_ref[...], preferred_element_type=jnp.float32) + b2_ref[...]
        z = y + ff
        if apply_after:
            z = ln(z, ag_ref[...], ab_ref[...])
        o_ref[0] = z.astype(o_ref.dtype)

    return kernel


def encoder_layer_pallas(x, bias, lp, heads, after=None):
    B, T, D = x.shape
    dk = D // heads
    E = lp["ff1_w"].shape[1]
    tq = _pick_q_tile(T)
    nq = T // tq
    apply_after = after is not None
    kernel = _make_encoder_layer_kernel(heads, tq, _LN_EPS, apply_after)

    def c2(shape):
        return pl.BlockSpec(shape, lambda b, q: (0, 0))

    def c3(shape):
        return pl.BlockSpec(shape, lambda b, q: (0, 0, 0))

    in_specs = [
        pl.BlockSpec((1, T, D), lambda b, q: (b, 0, 0)),       # x, full sequence / batch
        pl.BlockSpec((1, 1, T), lambda b, q: (b, 0, 0)),       # additive key-mask bias
        c2((1, D)), c2((1, D)),                                # ln1
        c3((heads, D, dk)), c3((heads, 1, dk)),                # wq (scale folded), bq
        c3((heads, D, dk)), c3((heads, 1, dk)),                # wk, bk
        c3((heads, D, dk)), c3((heads, 1, dk)),                # wv, bv
        c3((heads, dk, D)), c2((1, D)),                        # ow (head-major), ob
        c2((1, D)), c2((1, D)),                                # ln2
        c2((D, E)), c2((1, E)),                                # ff1
        c2((E, D)), c2((1, D)),                                # ff2
    ]
    args = [x, bias, lp["ln1_g"], lp["ln1_b"],
            lp["wq"], lp["bq"], lp["wk"], lp["bk"], lp["wv"], lp["bv"],
            lp["ow"], lp["ob"], lp["ln2_g"], lp["ln2_b"],
            lp["ff1_w"], lp["ff1_b"], lp["ff2_w"], lp["ff2_b"]]
    if apply_after:
        in_specs += [c2((1, D)), c2((1, D))]
        args += [after[0], after[1]]

    return pl.pallas_call(
        kernel,
        out_shape=jax.ShapeDtypeStruct((B, T, D), jnp.float32),
        grid=(B, nq),
        in_specs=in_specs,
        out_specs=pl.BlockSpec((1, tq, D), lambda b, q: (b, q, 0)),
        scratch_shapes=[pltpu.VMEM((heads, T, dk), jnp.bfloat16),   # Q (scaled)
                        pltpu.VMEM((heads, T, dk), jnp.bfloat16),   # K
                        pltpu.VMEM((heads, T, dk), jnp.bfloat16),   # V
                        pltpu.VMEM((tq, D), jnp.float32)],          # attn accumulator
        compiler_params=pltpu.CompilerParams(
            dimension_semantics=("parallel", "arbitrary"),
            vmem_limit_bytes=_VMEM_LIMIT),
    )(*args)


# ----------------------------------------------------------------------------
# Conv2dSubsampling front-end, NHWC end-to-end, bf16 intermediates in HBM.
# Conv = im2col (JAX) + tiled fused matmul+bias+ReLU (Pallas).  The final
# linear projection, sqrt(d) scaling and positional encoding are fused.
# ----------------------------------------------------------------------------
def _im2col_3x3_s2(x_nhwc):
    """(B,H,W,C) -> (B,Ho,Wo,9*C) patches, feature order (ki*3+kj)*C + c."""
    B, H, W, C = x_nhwc.shape
    Ho = (H - 3) // 2 + 1
    Wo = (W - 3) // 2 + 1
    cols = []
    for ki in range(3):
        for kj in range(3):
            cols.append(x_nhwc[:, ki:ki + 2 * Ho - 1:2, kj:kj + 2 * Wo - 1:2, :])
    return jnp.concatenate(cols, axis=-1), Ho, Wo


def _proj_pe_kernel(x_ref, w_ref, b_ref, pe_ref, o_ref, *, scale):
    x = x_ref[0].astype(jnp.bfloat16)                        # (T2, F2*C) bf16
    out = jnp.dot(x, w_ref[...], preferred_element_type=jnp.float32) + b_ref[...]
    o_ref[0] = (out * scale + pe_ref[...]).astype(o_ref.dtype)


def proj_pe_pallas(x, w_bf16, b, pe, scale):
    B, T2, KF = x.shape
    N = w_bf16.shape[1]
    kernel = functools.partial(_proj_pe_kernel, scale=scale)
    return pl.pallas_call(
        kernel,
        out_shape=jax.ShapeDtypeStruct((B, T2, N), jnp.float32),
        grid=(B,),
        in_specs=[
            pl.BlockSpec((1, T2, KF), lambda i: (i, 0, 0)),
            pl.BlockSpec((KF, N), lambda i: (0, 0)),
            pl.BlockSpec((1, N), lambda i: (0, 0)),
            pl.BlockSpec((T2, N), lambda i: (0, 0)),
        ],
        out_specs=pl.BlockSpec((1, T2, N), lambda i: (i, 0, 0)),
        compiler_params=pltpu.CompilerParams(
            dimension_semantics=("parallel",), vmem_limit_bytes=_VMEM_LIMIT),
    )(x, w_bf16, b.reshape(1, N), pe)


def positional_encoding(T, d):
    pos = jnp.arange(T, dtype=jnp.float32)[:, None]
    div = jnp.exp(jnp.arange(0, d, 2, dtype=jnp.float32) * -(math.log(10000.0) / d))
    pe = jnp.zeros((T, d), jnp.float32)
    pe = pe.at[:, 0::2].set(jnp.sin(pos * div))
    pe = pe.at[:, 1::2].set(jnp.cos(pos * div))
    return pe


def conv2d_subsampling(ep, x, src_mask, adim):
    """x: (B,T,idim) -> (B,T',adim); T' = ((T-1)//2-1)//2 ; mask subsampled likewise."""
    B, T, idim = x.shape
    h = x.astype(jnp.bfloat16)[:, :, :, None]                # NHWC (B, T, idim, 1) bf16
    p1, T1, F1 = _im2col_3x3_s2(h)                           # (B, T1, F1, 9) bf16
    h1 = linear_pallas(p1.reshape(B * T1 * F1, 9), ep["conv1_w"], ep["conv1_b"],
                       activation="relu", out_dtype=jnp.bfloat16
                       ).reshape(B, T1, F1, adim)
    p2, T2, F2 = _im2col_3x3_s2(h1)                          # (B, T2, F2, 9*adim) bf16
    h2 = linear_pallas(p2.reshape(B * T2 * F2, 9 * adim), ep["conv2_w"], ep["conv2_b"],
                       activation="relu", out_dtype=jnp.bfloat16
                       ).reshape(B, T2, F2 * adim)
    pe = positional_encoding(T2, adim)
    out = proj_pe_pallas(h2, ep["proj_w"], ep["proj_b"], pe, math.sqrt(adim))
    mask2 = src_mask[:, :, :-2:2][:, :, :-2:2]
    return out, mask2


# ----------------------------------------------------------------------------
# Full forward (pre-norm espnet encoder, eval mode).
# ----------------------------------------------------------------------------
def e2e_forward(params, xs_pad, ilens, *, adim, aheads, elayers):
    # --- E2E.forward preamble ---
    # Static tmax (padded batches satisfy max(ilens) == T) removes the
    # device->host sync of max(ilens); the dim-1 slice is a no-op since C == 1.
    tmax = xs_pad.shape[-1]
    xs = jnp.swapaxes(xs_pad, -2, -1)         # .transpose(-2, -1) -> (B,1,T,idim)
    if xs.shape[1] == 1:                      # .squeeze(1)
        xs = jnp.squeeze(xs, axis=1)          # (B, T, idim)

    t = jnp.arange(tmax)
    valid = t[None, :] < ilens[:, None]       # ~make_pad_mask(ilens)
    src_mask = valid[:, None, :]              # (B, 1, T) bool

    # --- Encoder ---
    # TODO(synk): the probe Encoder's extra args (None, -1, None, None) select/cache
    # intermediate layers; the standard final-layer path is implemented here.
    x, mask = conv2d_subsampling(params["embed"], xs, src_mask, adim)
    bias = jnp.where(mask, 0.0, _NEG_INF).astype(jnp.float32)   # additive key mask
    n_layers = len(params["layers"])
    for li, lp in enumerate(params["layers"]):
        after = (params["after_g"], params["after_b"]) if li == n_layers - 1 else None
        x = encoder_layer_pallas(x, bias, lp, aheads, after=after)
    return x, jnp.squeeze(mask, axis=-2)      # (hs_pad, hs_mask.squeeze(-2))


# ----------------------------------------------------------------------------
# Deterministic parameter init (shapes follow the torch module's __init__).
# Matmul weights are stored bf16 in head-major packed layouts (a fixed
# permutation/rescale of the torch layout, equivalent under random init);
# 1/sqrt(dk) is folded into wq/bq.  LN params / biases stay f32.
# ----------------------------------------------------------------------------
def init_params(key, idim, adim, aheads, eunits, elayers):
    keys = iter(jax.random.split(key, 4096))
    dk = adim // aheads
    scale = 1.0 / math.sqrt(dk)

    def uni(shape, fan_in, dtype=jnp.float32):
        lim = 1.0 / math.sqrt(fan_in)
        return jax.random.uniform(next(keys), shape, jnp.float32, -lim, lim).astype(dtype)

    f1 = (idim - 1) // 2
    f_sub = (f1 - 1) // 2
    bf16 = jnp.bfloat16
    embed = {
        "conv1_w": uni((9, adim), 9, bf16),                  # (C*kh*kw, OC), C=1
        "conv1_b": uni((adim,), 9),
        "conv2_w": uni((9 * adim, adim), adim * 9, bf16),    # ((ki*3+kj)*C + c, OC)
        "conv2_b": uni((adim,), adim * 9),
        "proj_w": uni((f_sub * adim, adim), adim * f_sub, bf16),   # (f*C + c, adim)
        "proj_b": uni((adim,), adim * f_sub),
    }
    layers = []
    for _ in range(elayers):
        layers.append({
            "ln1_g": jnp.ones((1, adim), jnp.float32),
            "ln1_b": jnp.zeros((1, adim), jnp.float32),
            "wq": (uni((aheads, adim, dk), adim) * scale).astype(bf16),  # scale folded
            "bq": uni((aheads, 1, dk), adim) * scale,
            "wk": uni((aheads, adim, dk), adim, bf16),
            "bk": uni((aheads, 1, dk), adim),
            "wv": uni((aheads, adim, dk), adim, bf16),
            "bv": uni((aheads, 1, dk), adim),
            "ow": uni((aheads, dk, adim), adim, bf16),       # head-major out-projection
            "ob": uni((1, adim), adim),
            "ln2_g": jnp.ones((1, adim), jnp.float32),
            "ln2_b": jnp.zeros((1, adim), jnp.float32),
            "ff1_w": uni((adim, eunits), adim, bf16), "ff1_b": uni((1, eunits), adim),
            "ff2_w": uni((eunits, adim), eunits, bf16), "ff2_b": uni((1, adim), eunits),
        })
    return {
        "embed": embed,
        "layers": layers,
        "after_g": jnp.ones((1, adim), jnp.float32),
        "after_b": jnp.zeros((1, adim), jnp.float32),
    }


# ----------------------------------------------------------------------------
if __name__ == "__main__":
    B, idim, T = 2, 16, 16
    adim, aheads, eunits, elayers = 32, 4, 64, 2

    key = jax.random.PRNGKey(0)
    k_in, k_par = jax.random.split(key)
    xs_pad = jax.random.normal(k_in, (B, 1, idim, T), jnp.float32)   # NCHW, C=1
    ilens = jnp.array([16, 6], dtype=jnp.int32)                      # max(ilens) == T

    params = init_params(k_par, idim, adim, aheads, eunits, elayers)

    fwd = jax.jit(functools.partial(e2e_forward, adim=adim, aheads=aheads,
                                    elayers=elayers))
    hs_pad, hs_mask = fwd(params, xs_pad, ilens)
    hs_pad = jax.block_until_ready(hs_pad)
    hs_mask = jax.block_until_ready(hs_mask)

    assert hs_pad.shape == (B, 3, adim) and hs_mask.shape == (B, 3)
    assert bool(jnp.all(jnp.isfinite(hs_pad)))
    print("KERNEL_OK")
</pallas_src>

<mosaic_0001>
module attributes {stable_mosaic.version = 11 : i64} {
  func.func @_linear_kernel(%arg0: i32, %arg1: memref<112x9xbf16, #tpu.memory_space<vmem>>, %arg2: memref<9x32xbf16, #tpu.memory_space<vmem>>, %arg3: memref<1x32xf32, #tpu.memory_space<vmem>>, %arg4: memref<112x32xbf16, #tpu.memory_space<vmem>>) attributes {dimension_semantics = [#tpu.dimension_semantics<parallel>], iteration_bounds = array<i64: 1>, scalar_prefetch = 0 : i64, scratch_operands = 0 : i64, tpu.core_type = #tpu.core_type<tc>, window_params = [{transform_indices = @transform_0, window_bounds = array<i64: 112, 9>}, {pipeline_mode = #tpu.pipeline_mode<synchronous>, transform_indices = @transform_1, window_bounds = array<i64: 9, 32>}, {pipeline_mode = #tpu.pipeline_mode<synchronous>, transform_indices = @transform_2, window_bounds = array<i64: 1, 32>}, {transform_indices = @transform_3, window_bounds = array<i64: 112, 32>}]} {
    %c0 = arith.constant 0 : index
    %c0_0 = arith.constant 0 : index
    %0 = vector.load %arg1[%c0, %c0_0] : memref<112x9xbf16, #tpu.memory_space<vmem>>, vector<112x9xbf16>
    %c0_1 = arith.constant 0 : index
    %c0_2 = arith.constant 0 : index
    %1 = vector.load %arg2[%c0_1, %c0_2] : memref<9x32xbf16, #tpu.memory_space<vmem>>, vector<9x32xbf16>
    %cst = arith.constant dense<0.000000e+00> : vector<112x32xf32>
    %2 = tpu.matmul %0, %1, %cst {dimension_numbers = #tpu.dot_dimension_numbers<[1], [0], [0], [1], [0, 0, 1, 1], [], []>} : vector<112x9xbf16>, vector<9x32xbf16>, vector<112x32xf32> -> vector<112x32xf32>
    %c0_3 = arith.constant 0 : index
    %c0_4 = arith.constant 0 : index
    %3 = vector.load %arg3[%c0_3, %c0_4] : memref<1x32xf32, #tpu.memory_space<vmem>>, vector<1x32xf32>
    %4 = vector.broadcast %3 : vector<1x32xf32> to vector<112x32xf32>
    %5 = arith.addf %2, %4 : vector<112x32xf32>
    %cst_5 = arith.constant 0.000000e+00 : f32
    %6 = vector.broadcast %cst_5 : f32 to vector<112x32xf32>
    %7 = arith.maximumf %5, %6 : vector<112x32xf32>
    %8 = arith.truncf %7 : vector<112x32xf32> to vector<112x32xbf16>
    %c0_6 = arith.constant 0 : index
    %c0_7 = arith.constant 0 : index
    %9 = vector.load %arg4[%c0_6, %c0_7] : memref<112x32xbf16, #tpu.memory_space<vmem>>, vector<112x32xbf16>
    tpu.vector_store %arg4[%c0_6, %c0_7], %8 {strides = array<i32>} : memref<112x32xbf16, #tpu.memory_space<vmem>>, vector<112x32xbf16>,
    return
  }
  func.func @transform_0(%arg0: i32) -> (i32, i32) {
    %c0_i32 = arith.constant 0 : i32
    %c0_i32_0 = arith.constant 0 : i32
    return %arg0, %c0_i32 : i32, i32
  }
  func.func @transform_1(%arg0: i32) -> (i32, i32) {
    %c0_i32 = arith.constant 0 : i32
    %c0_i32_0 = arith.constant 0 : i32
    %c0_i32_1 = arith.constant 0 : i32
    return %c0_i32, %c0_i32_0 : i32, i32
  }
  func.func @transform_2(%arg0: i32) -> (i32, i32) {
    %c0_i32 = arith.constant 0 : i32
    %c0_i32_0 = arith.constant 0 : i32
    %c0_i32_1 = arith.constant 0 : i32
    return %c0_i32, %c0_i32_0 : i32, i32
  }
  func.func @transform_3(%arg0: i32) -> (i32, i32) {
    %c0_i32 = arith.constant 0 : i32
    %c0_i32_0 = arith.constant 0 : i32
    return %arg0, %c0_i32 : i32, i32
  }
}

module attributes {stable_mosaic.version = 11 : i64} {
  func.func @_linear_kernel(%arg0: i32, %arg1: memref<32x288xbf16, #tpu.memory_space<vmem>>, %arg2: memref<288x32xbf16, #tpu.memory_space<vmem>>, %arg3: memref<1x32xf32, #tpu.memory_space<vmem>>, %arg4: memref<32x32xbf16, #tpu.memory_space<vmem>>) attributes {dimension_semantics = [#tpu.dimension_semantics<parallel>], iteration_bounds = array<i64: 1>, scalar_prefetch = 0 : i64, scratch_operands = 0 : i64, tpu.core_type = #tpu.core_type<tc>, window_params = [{transform_indices = @transform_0, window_bounds = array<i64: 32, 288>}, {pipeline_mode = #tpu.pipeline_mode<synchronous>, transform_indices = @transform_1, window_bounds = array<i64: 288, 32>}, {pipeline_mode = #tpu.pipeline_mode<synchronous>, transform_indices = @transform_2, window_bounds = array<i64: 1, 32>}, {transform_indices = @transform_3, window_bounds = array<i64: 32, 32>}]} {
    %c0 = arith.constant 0 : index
    %c0_0 = arith.constant 0 : index
    %0 = vector.load %arg1[%c0, %c0_0] : memref<32x288xbf16, #tpu.memory_space<vmem>>, vector<32x288xbf16>
    %c0_1 = arith.constant 0 : index
    %c0_2 = arith.constant 0 : index
    %1 = vector.load %arg2[%c0_1, %c0_2] : memref<288x32xbf16, #tpu.memory_space<vmem>>, vector<288x32xbf16>
    %cst = arith.constant dense<0.000000e+00> : vector<32x32xf32>
    %2 = tpu.matmul %0, %1, %cst {dimension_numbers = #tpu.dot_dimension_numbers<[1], [0], [0], [1], [0, 0, 1, 1], [], []>} : vector<32x288xbf16>, vector<288x32xbf16>, vector<32x32xf32> -> vector<32x32xf32>
    %c0_3 = arith.constant 0 : index
    %c0_4 = arith.constant 0 : index
    %3 = vector.load %arg3[%c0_3, %c0_4] : memref<1x32xf32, #tpu.memory_space<vmem>>, vector<1x32xf32>
    %4 = vector.broadcast %3 : vector<1x32xf32> to vector<32x32xf32>
    %5 = arith.addf %2, %4 : vector<32x32xf32>
    %cst_5 = arith.constant 0.000000e+00 : f32
    %6 = vector.broadcast %cst_5 : f32 to vector<32x32xf32>
    %7 = arith.maximumf %5, %6 : vector<32x32xf32>
    %8 = arith.truncf %7 : vector<32x32xf32> to vector<32x32xbf16>
    %c0_6 = arith.constant 0 : index
    %c0_7 = arith.constant 0 : index
    %9 = vector.load %arg4[%c0_6, %c0_7] : memref<32x32xbf16, #tpu.memory_space<vmem>>, vector<32x32xbf16>
    tpu.vector_store %arg4[%c0_6, %c0_7], %8 {strides = array<i32>} : memref<32x32xbf16, #tpu.memory_space<vmem>>, vector<32x32xbf16>,
    return
  }
  func.func @transform_0(%arg0: i32) -> (i32, i32) {
    %c0_i32 = arith.constant 0 : i32
    %c0_i32_0 = arith.constant 0 : i32
    return %arg0, %c0_i32 : i32, i32
  }
  func.func @transform_1(%arg0: i32) -> (i32, i32) {
    %c0_i32 = arith.constant 0 : i32
    %c0_i32_0 = arith.constant 0 : i32
    %c0_i32_1 = arith.constant 0 : i32
    return %c0_i32, %c0_i32_0 : i32, i32
  }
  func.func @transform_2(%arg0: i32) -> (i32, i32) {
    %c0_i32 = arith.constant 0 : i32
    %c0_i32_0 = arith.constant 0 : i32
    %c0_i32_1 = arith.constant 0 : i32
    return %c0_i32, %c0_i32_0 : i32, i32
  }
  func.func @transform_3(%arg0: i32) -> (i32, i32) {
    %c0_i32 = arith.constant 0 : i32
    %c0_i32_0 = arith.constant 0 : i32
    return %arg0, %c0_i32 : i32, i32
  }
}

module attributes {stable_mosaic.version = 11 : i64} {
  func.func @_proj_pe_kernel(%arg0: i32, %arg1: memref<1x3x96xbf16, #tpu.memory_space<vmem>>, %arg2: memref<96x32xbf16, #tpu.memory_space<vmem>>, %arg3: memref<1x32xf32, #tpu.memory_space<vmem>>, %arg4: memref<3x32xf32, #tpu.memory_space<vmem>>, %arg5: memref<1x3x32xf32, #tpu.memory_space<vmem>>) attributes {dimension_semantics = [#tpu.dimension_semantics<parallel>], iteration_bounds = array<i64: 2>, scalar_prefetch = 0 : i64, scratch_operands = 0 : i64, tpu.core_type = #tpu.core_type<tc>, window_params = [{transform_indices = @transform_0, window_bounds = array<i64: 1, 3, 96>}, {pipeline_mode = #tpu.pipeline_mode<synchronous>, transform_indices = @transform_1, window_bounds = array<i64: 96, 32>}, {pipeline_mode = #tpu.pipeline_mode<synchronous>, transform_indices = @transform_2, window_bounds = array<i64: 1, 32>}, {pipeline_mode = #tpu.pipeline_mode<synchronous>, transform_indices = @transform_3, window_bounds = array<i64: 3, 32>}, {transform_indices = @transform_4, window_bounds = array<i64: 1, 3, 32>}]} {
    %c0 = arith.constant 0 : index
    %c0_0 = arith.constant 0 : index
    %c0_1 = arith.constant 0 : index
    %0 = vector.load %arg1[%c0, %c0_0, %c0_1] : memref<1x3x96xbf16, #tpu.memory_space<vmem>>, vector<1x3x96xbf16>
    %1 = vector.shape_cast %0 : vector<1x3x96xbf16> to vector<3x96xbf16>
    %c0_2 = arith.constant 0 : index
    %c0_3 = arith.constant 0 : index
    %2 = vector.load %arg2[%c0_2, %c0_3] : memref<96x32xbf16, #tpu.memory_space<vmem>>, vector<96x32xbf16>
    %cst = arith.constant dense<0.000000e+00> : vector<3x32xf32>
    %3 = tpu.matmul %1, %2, %cst {dimension_numbers = #tpu.dot_dimension_numbers<[1], [0], [0], [1], [0, 0, 1, 1], [], []>} : vector<3x96xbf16>, vector<96x32xbf16>, vector<3x32xf32> -> vector<3x32xf32>
    %c0_4 = arith.constant 0 : index
    %c0_5 = arith.constant 0 : index
    %4 = vector.load %arg3[%c0_4, %c0_5] : memref<1x32xf32, #tpu.memory_space<vmem>>, vector<1x32xf32>
    %5 = vector.broadcast %4 : vector<1x32xf32> to vector<3x32xf32>
    %6 = arith.addf %3, %5 : vector<3x32xf32>
    %cst_6 = arith.constant 5.65685415 : f32
    %7 = vector.broadcast %cst_6 : f32 to vector<3x32xf32>
    %8 = arith.mulf %6, %7 : vector<3x32xf32>
    %c0_7 = arith.constant 0 : index
    %c0_8 = arith.constant 0 : index
    %9 = vector.load %arg4[%c0_7, %c0_8] : memref<3x32xf32, #tpu.memory_space<vmem>>, vector<3x32xf32>
    %10 = arith.addf %8, %9 : vector<3x32xf32>
    %c0_9 = arith.constant 0 : index
    %c0_10 = arith.constant 0 : index
    %c0_11 = arith.constant 0 : index
    %11 = vector.load %arg5[%c0_9, %c0_10, %c0_11] : memref<1x3x32xf32, #tpu.memory_space<vmem>>, vector<1x3x32xf32>
    %12 = vector.shape_cast %11 : vector<1x3x32xf32> to vector<3x32xf32>
    %13 = vector.shape_cast %10 : vector<3x32xf32> to vector<1x3x32xf32>
    tpu.vector_store %arg5[%c0_9, %c0_10, %c0_11], %13 {strides = array<i32>} : memref<1x3x32xf32, #tpu.memory_space<vmem>>, vector<1x3x32xf32>,
    return
  }
  func.func @transform_0(%arg0: i32) -> (i32, i32, i32) {
    %c0_i32 = arith.constant 0 : i32
    %c0_i32_0 = arith.constant 0 : i32
    %c0_i32_1 = arith.constant 0 : i32
    return %arg0, %c0_i32, %c0_i32_0 : i32, i32, i32
  }
  func.func @transform_1(%arg0: i32) -> (i32, i32) {
    %c0_i32 = arith.constant 0 : i32
    %c0_i32_0 = arith.constant 0 : i32
    %c0_i32_1 = arith.constant 0 : i32
    return %c0_i32, %c0_i32_0 : i32, i32
  }
  func.func @transform_2(%arg0: i32) -> (i32, i32) {
    %c0_i32 = arith.constant 0 : i32
    %c0_i32_0 = arith.constant 0 : i32
    %c0_i32_1 = arith.constant 0 : i32
    return %c0_i32, %c0_i32_0 : i32, i32
  }
  func.func @transform_3(%arg0: i32) -> (i32, i32) {
    %c0_i32 = arith.constant 0 : i32
    %c0_i32_0 = arith.constant 0 : i32
    %c0_i32_1 = arith.constant 0 : i32
    return %c0_i32, %c0_i32_0 : i32, i32
  }
  func.func @transform_4(%arg0: i32) -> (i32, i32, i32) {
    %c0_i32 = arith.constant 0 : i32
    %c0_i32_0 = arith.constant 0 : i32
    %c0_i32_1 = arith.constant 0 : i32
    return %arg0, %c0_i32, %c0_i32_0 : i32, i32, i32
  }
}

module attributes {stable_mosaic.version = 11 : i64} {
  func.func @kernel(%arg0: i32, %arg1: i32, %arg2: memref<1x3x32xf32, #tpu.memory_space<vmem>>, %arg3: memref<1x1x3xf32, #tpu.memory_space<vmem>>, %arg4: memref<1x32xf32, #tpu.memory_space<vmem>>, %arg5: memref<1x32xf32, #tpu.memory_space<vmem>>, %arg6: memref<4x32x8xbf16, #tpu.memory_space<vmem>>, %arg7: memref<4x1x8xf32, #tpu.memory_space<vmem>>, %arg8: memref<4x32x8xbf16, #tpu.memory_space<vmem>>, %arg9: memref<4x1x8xf32, #tpu.memory_space<vmem>>, %arg10: memref<4x32x8xbf16, #tpu.memory_space<vmem>>, %arg11: memref<4x1x8xf32, #tpu.memory_space<vmem>>, %arg12: memref<4x8x32xbf16, #tpu.memory_space<vmem>>, %arg13: memref<1x32xf32, #tpu.memory_space<vmem>>, %arg14: memref<1x32xf32, #tpu.memory_space<vmem>>, %arg15: memref<1x32xf32, #tpu.memory_space<vmem>>, %arg16: memref<32x64xbf16, #tpu.memory_space<vmem>>, %arg17: memref<1x64xf32, #tpu.memory_space<vmem>>, %arg18: memref<64x32xbf16, #tpu.memory_space<vmem>>, %arg19: memref<1x32xf32, #tpu.memory_space<vmem>>, %arg20: memref<1x3x32xf32, #tpu.memory_space<vmem>>, %arg21: memref<4x3x8xbf16, #tpu.memory_space<vmem>>, %arg22: memref<4x3x8xbf16, #tpu.memory_space<vmem>>, %arg23: memref<4x3x8xbf16, #tpu.memory_space<vmem>>, %arg24: memref<3x32xf32, #tpu.memory_space<vmem>>) attributes {dimension_semantics = [#tpu.dimension_semantics<parallel>, #tpu.dimension_semantics<arbitrary>], iteration_bounds = array<i64: 2, 1>, scalar_prefetch = 0 : i64, scratch_operands = 4 : i64, tpu.core_type = #tpu.core_type<tc>, window_params = [{transform_indices = @transform_0, window_bounds = array<i64: 1, 3, 32>}, {transform_indices = @transform_1, window_bounds = array<i64: 1, 1, 3>}, {pipeline_mode = #tpu.pipeline_mode<synchronous>, transform_indices = @transform_2, window_bounds = array<i64: 1, 32>}, {pipeline_mode = #tpu.pipeline_mode<synchronous>, transform_indices = @transform_3, window_bounds = array<i64: 1, 32>}, {pipeline_mode = #tpu.pipeline_mode<synchronous>, transform_indices = @transform_4, window_bounds = array<i64: 4, 32, 8>}, {pipeline_mode = #tpu.pipeline_mode<synchronous>, transform_indices = @transform_5, window_bounds = array<i64: 4, 1, 8>}, {pipeline_mode = #tpu.pipeline_mode<synchronous>, transform_indices = @transform_6, window_bounds = array<i64: 4, 32, 8>}, {pipeline_mode = #tpu.pipeline_mode<synchronous>, transform_indices = @transform_7, window_bounds = array<i64: 4, 1, 8>}, {pipeline_mode = #tpu.pipeline_mode<synchronous>, transform_indices = @transform_8, window_bounds = array<i64: 4, 32, 8>}, {pipeline_mode = #tpu.pipeline_mode<synchronous>, transform_indices = @transform_9, window_bounds = array<i64: 4, 1, 8>}, {pipeline_mode = #tpu.pipeline_mode<synchronous>, transform_indices = @transform_10, window_bounds = array<i64: 4, 8, 32>}, {pipeline_mode = #tpu.pipeline_mode<synchronous>, transform_indices = @transform_11, window_bounds = array<i64: 1, 32>}, {pipeline_mode = #tpu.pipeline_mode<synchronous>, transform_indices = @transform_12, window_bounds = array<i64: 1, 32>}, {pipeline_mode = #tpu.pipeline_mode<synchronous>, transform_indices = @transform_13, window_bounds = array<i64: 1, 32>}, {pipeline_mode = #tpu.pipeline_mode<synchronous>, transform_indices = @transform_14, window_bounds = array<i64: 32, 64>}, {pipeline_mode = #tpu.pipeline_mode<synchronous>, transform_indices = @transform_15, window_bounds = array<i64: 1, 64>}, {pipeline_mode = #tpu.pipeline_mode<synchronous>, transform_indices = @transform_16, window_bounds = array<i64: 64, 32>}, {pipeline_mode = #tpu.pipeline_mode<synchronous>, transform_indices = @transform_17, window_bounds = array<i64: 1, 32>}, {transform_indices = @transform_18, window_bounds = array<i64: 1, 3, 32>}]} {
    %c0_i32 = arith.constant 0 : i32
    %0 = arith.cmpi eq, %arg1, %c0_i32 : i32
    %1 = arith.extui %0 : i1 to i32
    %c0_i32_0 = arith.constant 0 : i32
    %2 = arith.cmpi ne, %1, %c0_i32_0 : i32
    scf.if %2 {
      %c0_108 = arith.constant 0 : index
      %c0_109 = arith.constant 0 : index
      %c0_110 = arith.constant 0 : index
      %190 = vector.load %arg2[%c0_108, %c0_109, %c0_110] : memref<1x3x32xf32, #tpu.memory_space<vmem>>, vector<1x3x32xf32>
      %191 = vector.shape_cast %190 : vector<1x3x32xf32> to vector<3x32xf32>
      %c0_111 = arith.constant 0 : index
      %c0_112 = arith.constant 0 : index
      %192 = vector.load %arg4[%c0_111, %c0_112] : memref<1x32xf32, #tpu.memory_space<vmem>>, vector<1x32xf32>
      %c0_113 = arith.constant 0 : index
      %c0_114 = arith.constant 0 : index
      %193 = vector.load %arg5[%c0_113, %c0_114] : memref<1x32xf32, #tpu.memory_space<vmem>>, vector<1x32xf32>
      %cst_115 = arith.constant dense<0.000000e+00> : vector<3xf32>
      %194 = vector.multi_reduction <add>, %191, %cst_115 [1] : vector<3x32xf32> to vector<3xf32>
      %195 = vector.shape_cast %194 : vector<3xf32> to vector<3x1xf32>
      %cst_116 = arith.constant 3.200000e+01 : f32
      %196 = vector.broadcast %cst_116 : f32 to vector<3x1xf32>
      %197 = arith.divf %195, %196 : vector<3x1xf32>
      %198 = vector.broadcast %197 : vector<3x1xf32> to vector<3x32xf32>
      %199 = arith.subf %191, %198 : vector<3x32xf32>
      %200 = arith.mulf %199, %199 : vector<3x32xf32>
      %cst_117 = arith.constant dense<0.000000e+00> : vector<3xf32>
      %201 = vector.multi_reduction <add>, %200, %cst_117 [1] : vector<3x32xf32> to vector<3xf32>
      %202 = vector.shape_cast %201 : vector<3xf32> to vector<3x1xf32>
      %cst_118 = arith.constant 3.200000e+01 : f32
      %203 = vector.broadcast %cst_118 : f32 to vector<3x1xf32>
      %204 = arith.divf %202, %203 : vector<3x1xf32>
      %cst_119 = arith.constant 9.99999996E-13 : f32
      %205 = vector.broadcast %cst_119 : f32 to vector<3x1xf32>
      %206 = arith.addf %204, %205 : vector<3x1xf32>
      %207 = math.rsqrt %206 : vector<3x1xf32>
      %208 = vector.broadcast %207 : vector<3x1xf32> to vector<3x32xf32>
      %209 = arith.mulf %199, %208 : vector<3x32xf32>
      %210 = vector.broadcast %192 : vector<1x32xf32> to vector<3x32xf32>
      %211 = arith.mulf %209, %210 : vector<3x32xf32>
      %212 = vector.broadcast %193 : vector<1x32xf32> to vector<3x32xf32>
      %213 = arith.addf %211, %212 : vector<3x32xf32>
      %214 = arith.truncf %213 : vector<3x32xf32> to vector<3x32xbf16>
      %c0_i32_120 = arith.constant 0 : i32
      %215 = arith.index_cast %c0_i32_120 : i32 to index
      %c0_121 = arith.constant 0 : index
      %c0_122 = arith.constant 0 : index
      %216 = vector.load %arg6[%215, %c0_121, %c0_122] : memref<4x32x8xbf16, #tpu.memory_space<vmem>>, vector<1x32x8xbf16>
      %217 = vector.shape_cast %216 : vector<1x32x8xbf16> to vector<32x8xbf16>
      %cst_123 = arith.constant dense<0.000000e+00> : vector<3x8xf32>
      %218 = tpu.matmul %214, %217, %cst_123 {dimension_numbers = #tpu.dot_dimension_numbers<[1], [0], [0], [1], [0, 0, 1, 1], [], []>} : vector<3x32xbf16>, vector<32x8xbf16>, vector<3x8xf32> -> vector<3x8xf32>
      %219 = arith.index_cast %c0_i32_120 : i32 to index
      %c0_124 = arith.constant 0 : index
      %c0_125 = arith.constant 0 : index
      %220 = vector.load %arg7[%219, %c0_124, %c0_125] : memref<4x1x8xf32, #tpu.memory_space<vmem>>, vector<1x1x8xf32>
      %221 = vector.shape_cast %220 : vector<1x1x8xf32> to vector<1x8xf32>
      %222 = vector.broadcast %221 : vector<1x8xf32> to vector<3x8xf32>
      %223 = arith.addf %218, %222 : vector<3x8xf32>
      %224 = arith.truncf %223 : vector<3x8xf32> to vector<3x8xbf16>
      %225 = arith.index_cast %c0_i32_120 : i32 to index
      %c0_126 = arith.constant 0 : index
      %c0_127 = arith.constant 0 : index
      %226 = vector.load %arg21[%225, %c0_126, %c0_127] : memref<4x3x8xbf16, #tpu.memory_space<vmem>>, vector<1x3x8xbf16>
      %227 = vector.shape_cast %226 : vector<1x3x8xbf16> to vector<3x8xbf16>
      %228 = vector.shape_cast %224 : vector<3x8xbf16> to vector<1x3x8xbf16>
      tpu.vector_store %arg21[%225, %c0_126, %c0_127], %228 {strides = array<i32>} : memref<4x3x8xbf16, #tpu.memory_space<vmem>>, vector<1x3x8xbf16>,
      %229 = arith.index_cast %c0_i32_120 : i32 to index
      %c0_128 = arith.constant 0 : index
      %c0_129 = arith.constant 0 : index
      %230 = vector.load %arg8[%229, %c0_128, %c0_129] : memref<4x32x8xbf16, #tpu.memory_space<vmem>>, vector<1x32x8xbf16>
      %231 = vector.shape_cast %230 : vector<1x32x8xbf16> to vector<32x8xbf16>
      %cst_130 = arith.constant dense<0.000000e+00> : vector<3x8xf32>
      %232 = tpu.matmul %214, %231, %cst_130 {dimension_numbers = #tpu.dot_dimension_numbers<[1], [0], [0], [1], [0, 0, 1, 1], [], []>} : vector<3x32xbf16>, vector<32x8xbf16>, vector<3x8xf32> -> vector<3x8xf32>
      %233 = arith.index_cast %c0_i32_120 : i32 to index
      %c0_131 = arith.constant 0 : index
      %c0_132 = arith.constant 0 : index
      %234 = vector.load %arg9[%233, %c0_131, %c0_132] : memref<4x1x8xf32, #tpu.memory_space<vmem>>, vector<1x1x8xf32>
      %235 = vector.shape_cast %234 : vector<1x1x8xf32> to vector<1x8xf32>
      %236 = vector.broadcast %235 : vector<1x8xf32> to vector<3x8xf32>
      %237 = arith.addf %232, %236 : vector<3x8xf32>
      %238 = arith.truncf %237 : vector<3x8xf32> to vector<3x8xbf16>
      %239 = arith.index_cast %c0_i32_120 : i32 to index
      %c0_133 = arith.constant 0 : index
      %c0_134 = arith.constant 0 : index
      %240 = vector.load %arg22[%239, %c0_133, %c0_134] : memref<4x3x8xbf16, #tpu.memory_space<vmem>>, vector<1x3x8xbf16>
      %241 = vector.shape_cast %240 : vector<1x3x8xbf16> to vector<3x8xbf16>
      %242 = vector.shape_cast %238 : vector<3x8xbf16> to vector<1x3x8xbf16>
      tpu.vector_store %arg22[%239, %c0_133, %c0_134], %242 {strides = array<i32>} : memref<4x3x8xbf16, #tpu.memory_space<vmem>>, vector<1x3x8xbf16>,
      %243 = arith.index_cast %c0_i32_120 : i32 to index
      %c0_135 = arith.constant 0 : index
      %c0_136 = arith.constant 0 : index
      %244 = vector.load %arg10[%243, %c0_135, %c0_136] : memref<4x32x8xbf16, #tpu.memory_space<vmem>>, vector<1x32x8xbf16>
      %245 = vector.shape_cast %244 : vector<1x32x8xbf16> to vector<32x8xbf16>
      %cst_137 = arith.constant dense<0.000000e+00> : vector<3x8xf32>
      %246 = tpu.matmul %214, %245, %cst_137 {dimension_numbers = #tpu.dot_dimension_numbers<[1], [0], [0], [1], [0, 0, 1, 1], [], []>} : vector<3x32xbf16>, vector<32x8xbf16>, vector<3x8xf32> -> vector<3x8xf32>
      %247 = arith.index_cast %c0_i32_120 : i32 to index
      %c0_138 = arith.constant 0 : index
      %c0_139 = arith.constant 0 : index
      %248 = vector.load %arg11[%247, %c0_138, %c0_139] : memref<4x1x8xf32, #tpu.memory_space<vmem>>, vector<1x1x8xf32>
      %249 = vector.shape_cast %248 : vector<1x1x8xf32> to vector<1x8xf32>
      %250 = vector.broadcast %249 : vector<1x8xf32> to vector<3x8xf32>
      %251 = arith.addf %246, %250 : vector<3x8xf32>
      %252 = arith.truncf %251 : vector<3x8xf32> to vector<3x8xbf16>
      %253 = arith.index_cast %c0_i32_120 : i32 to index
      %c0_140 = arith.constant 0 : index
      %c0_141 = arith.constant 0 : index
      %254 = vector.load %arg23[%253, %c0_140, %c0_141] : memref<4x3x8xbf16, #tpu.memory_space<vmem>>, vector<1x3x8xbf16>
      %255 = vector.shape_cast %254 : vector<1x3x8xbf16> to vector<3x8xbf16>
      %256 = vector.shape_cast %252 : vector<3x8xbf16> to vector<1x3x8xbf16>
      tpu.vector_store %arg23[%253, %c0_140, %c0_141], %256 {strides = array<i32>} : memref<4x3x8xbf16, #tpu.memory_space<vmem>>, vector<1x3x8xbf16>,
      %c1_i32_142 = arith.constant 1 : i32
      %257 = arith.index_cast %c1_i32_142 : i32 to index
      %c0_143 = arith.constant 0 : index
      %c0_144 = arith.constant 0 : index
      %258 = vector.load %arg6[%257, %c0_143, %c0_144] : memref<4x32x8xbf16, #tpu.memory_space<vmem>>, vector<1x32x8xbf16>
      %259 = vector.shape_cast %258 : vector<1x32x8xbf16> to vector<32x8xbf16>
      %cst_145 = arith.constant dense<0.000000e+00> : vector<3x8xf32>
      %260 = tpu.matmul %214, %259, %cst_145 {dimension_numbers = #tpu.dot_dimension_numbers<[1], [0], [0], [1], [0, 0, 1, 1], [], []>} : vector<3x32xbf16>, vector<32x8xbf16>, vector<3x8xf32> -> vector<3x8xf32>
      %261 = arith.index_cast %c1_i32_142 : i32 to index
      %c0_146 = arith.constant 0 : index
      %c0_147 = arith.constant 0 : index
      %262 = vector.load %arg7[%261, %c0_146, %c0_147] : memref<4x1x8xf32, #tpu.memory_space<vmem>>, vector<1x1x8xf32>
      %263 = vector.shape_cast %262 : vector<1x1x8xf32> to vector<1x8xf32>
      %264 = vector.broadcast %263 : vector<1x8xf32> to vector<3x8xf32>
      %265 = arith.addf %260, %264 : vector<3x8xf32>
      %266 = arith.truncf %265 : vector<3x8xf32> to vector<3x8xbf16>
      %267 = arith.index_cast %c1_i32_142 : i32 to index
      %c0_148 = arith.constant 0 : index
      %c0_149 = arith.constant 0 : index
      %268 = vector.load %arg21[%267, %c0_148, %c0_149] : memref<4x3x8xbf16, #tpu.memory_space<vmem>>, vector<1x3x8xbf16>
      %269 = vector.shape_cast %268 : vector<1x3x8xbf16> to vector<3x8xbf16>
      %270 = vector.shape_cast %266 : vector<3x8xbf16> to vector<1x3x8xbf16>
      tpu.vector_store %arg21[%267, %c0_148, %c0_149], %270 {strides = array<i32>} : memref<4x3x8xbf16, #tpu.memory_space<vmem>>, vector<1x3x8xbf16>,
      %271 = arith.index_cast %c1_i32_142 : i32 to index
      %c0_150 = arith.constant 0 : index
      %c0_151 = arith.constant 0 : index
      %272 = vector.load %arg8[%271, %c0_150, %c0_151] : memref<4x32x8xbf16, #tpu.memory_space<vmem>>, vector<1x32x8xbf16>
      %273 = vector.shape_cast %272 : vector<1x32x8xbf16> to vector<32x8xbf16>
      %cst_152 = arith.constant dense<0.000000e+00> : vector<3x8xf32>
      %274 = tpu.matmul %214, %273, %cst_152 {dimension_numbers = #tpu.dot_dimension_numbers<[1], [0], [0], [1], [0, 0, 1, 1], [], []>} : vector<3x32xbf16>, vector<32x8xbf16>, vector<3x8xf32> -> vector<3x8xf32>
      %275 = arith.index_cast %c1_i32_142 : i32 to index
      %c0_153 = arith.constant 0 : index
      %c0_154 = arith.constant 0 : index
      %276 = vector.load %arg9[%275, %c0_153, %c0_154] : memref<4x1x8xf32, #tpu.memory_space<vmem>>, vector<1x1x8xf32>
      %277 = vector.shape_cast %276 : vector<1x1x8xf32> to vector<1x8xf32>
      %278 = vector.broadcast %277 : vector<1x8xf32> to vector<3x8xf32>
      %279 = arith.addf %274, %278 : vector<3x8xf32>
      %280 = arith.truncf %279 : vector<3x8xf32> to vector<3x8xbf16>
      %281 = arith.index_cast %c1_i32_142 : i32 to index
      %c0_155 = arith.constant 0 : index
      %c0_156 = arith.constant 0 : index
      %282 = vector.load %arg22[%281, %c0_155, %c0_156] : memref<4x3x8xbf16, #tpu.memory_space<vmem>>, vector<1x3x8xbf16>
      %283 = vector.shape_cast %282 : vector<1x3x8xbf16> to vector<3x8xbf16>
      %284 = vector.shape_cast %280 : vector<3x8xbf16> to vector<1x3x8xbf16>
      tpu.vector_store %arg22[%281, %c0_155, %c0_156], %284 {strides = array<i32>} : memref<4x3x8xbf16, #tpu.memory_space<vmem>>, vector<1x3x8xbf16>,
      %285 = arith.index_cast %c1_i32_142 : i32 to index
      %c0_157 = arith.constant 0 : index
      %c0_158 = arith.constant 0 : index
      %286 = vector.load %arg10[%285, %c0_157, %c0_158] : memref<4x32x8xbf16, #tpu.memory_space<vmem>>, vector<1x32x8xbf16>
      %287 = vector.shape_cast %286 : vector<1x32x8xbf16> to vector<32x8xbf16>
      %cst_159 = arith.constant dense<0.000000e+00> : vector<3x8xf32>
      %288 = tpu.matmul %214, %287, %cst_159 {dimension_numbers = #tpu.dot_dimension_numbers<[1], [0], [0], [1], [0, 0, 1, 1], [], []>} : vector<3x32xbf16>, vector<32x8xbf16>, vector<3x8xf32> -> vector<3x8xf32>
      %289 = arith.index_cast %c1_i32_142 : i32 to index
      %c0_160 = arith.constant 0 : index
      %c0_161 = arith.constant 0 : index
      %290 = vector.load %arg11[%289, %c0_160, %c0_161] : memref<4x1x8xf32, #tpu.memory_space<vmem>>, vector<1x1x8xf32>
      %291 = vector.shape_cast %290 : vector<1x1x8xf32> to vector<1x8xf32>
      %292 = vector.broadcast %291 : vector<1x8xf32> to vector<3x8xf32>
      %293 = arith.addf %288, %292 : vector<3x8xf32>
      %294 = arith.truncf %293 : vector<3x8xf32> to vector<3x8xbf16>
      %295 = arith.index_cast %c1_i32_142 : i32 to index
      %c0_162 = arith.constant 0 : index
      %c0_163 = arith.constant 0 : index
      %296 = vector.load %arg23[%295, %c0_162, %c0_163] : memref<4x3x8xbf16, #tpu.memory_space<vmem>>, vector<1x3x8xbf16>
      %297 = vector.shape_cast %296 : vector<1x3x8xbf16> to vector<3x8xbf16>
      %298 = vector.shape_cast %294 : vector<3x8xbf16> to vector<1x3x8xbf16>
      tpu.vector_store %arg23[%295, %c0_162, %c0_163], %298 {strides = array<i32>} : memref<4x3x8xbf16, #tpu.memory_space<vmem>>, vector<1x3x8xbf16>,
      %c2_i32_164 = arith.constant 2 : i32
      %299 = arith.index_cast %c2_i32_164 : i32 to index
      %c0_165 = arith.constant 0 : index
      %c0_166 = arith.constant 0 : index
      %300 = vector.load %arg6[%299, %c0_165, %c0_166] : memref<4x32x8xbf16, #tpu.memory_space<vmem>>, vector<1x32x8xbf16>
      %301 = vector.shape_cast %300 : vector<1x32x8xbf16> to vector<32x8xbf16>
      %cst_167 = arith.constant dense<0.000000e+00> : vector<3x8xf32>
      %302 = tpu.matmul %214, %301, %cst_167 {dimension_numbers = #tpu.dot_dimension_numbers<[1], [0], [0], [1], [0, 0, 1, 1], [], []>} : vector<3x32xbf16>, vector<32x8xbf16>, vector<3x8xf32> -> vector<3x8xf32>
      %303 = arith.index_cast %c2_i32_164 : i32 to index
      %c0_168 = arith.constant 0 : index
      %c0_169 = arith.constant 0 : index
      %304 = vector.load %arg7[%303, %c0_168, %c0_169] : memref<4x1x8xf32, #tpu.memory_space<vmem>>, vector<1x1x8xf32>
      %305 = vector.shape_cast %304 : vector<1x1x8xf32> to vector<1x8xf32>
      %306 = vector.broadcast %305 : vector<1x8xf32> to vector<3x8xf32>
      %307 = arith.addf %302, %306 : vector<3x8xf32>
      %308 = arith.truncf %307 : vector<3x8xf32> to vector<3x8xbf16>
      %309 = arith.index_cast %c2_i32_164 : i32 to index
      %c0_170 = arith.constant 0 : index
      %c0_171 = arith.constant 0 : index
      %310 = vector.load %arg21[%309, %c0_170, %c0_171] : memref<4x3x8xbf16, #tpu.memory_space<vmem>>, vector<1x3x8xbf16>
      %311 = vector.shape_cast %310 : vector<1x3x8xbf16> to vector<3x8xbf16>
      %312 = vector.shape_cast %308 : vector<3x8xbf16> to vector<1x3x8xbf16>
      tpu.vector_store %arg21[%309, %c0_170, %c0_171], %312 {strides = array<i32>} : memref<4x3x8xbf16, #tpu.memory_space<vmem>>, vector<1x3x8xbf16>,
      %313 = arith.index_cast %c2_i32_164 : i32 to index
      %c0_172 = arith.constant 0 : index
      %c0_173 = arith.constant 0 : index
      %314 = vector.load %arg8[%313, %c0_172, %c0_173] : memref<4x32x8xbf16, #tpu.memory_space<vmem>>, vector<1x32x8xbf16>
      %315 = vector.shape_cast %314 : vector<1x32x8xbf16> to vector<32x8xbf16>
      %cst_174 = arith.constant dense<0.000000e+00> : vector<3x8xf32>
      %316 = tpu.matmul %214, %315, %cst_174 {dimension_numbers = #tpu.dot_dimension_numbers<[1], [0], [0], [1], [0, 0, 1, 1], [], []>} : vector<3x32xbf16>, vector<32x8xbf16>, vector<3x8xf32> -> vector<3x8xf32>
      %317 = arith.index_cast %c2_i32_164 : i32 to index
      %c0_175 = arith.constant 0 : index
      %c0_176 = arith.constant 0 : index
      %318 = vector.load %arg9[%317, %c0_175, %c0_176] : memref<4x1x8xf32, #tpu.memory_space<vmem>>, vector<1x1x8xf32>
      %319 = vector.shape_cast %318 : vector<1x1x8xf32> to vector<1x8xf32>
      %320 = vector.broadcast %319 : vector<1x8xf32> to vector<3x8xf32>
      %321 = arith.addf %316, %320 : vector<3x8xf32>
      %322 = arith.truncf %321 : vector<3x8xf32> to vector<3x8xbf16>
      %323 = arith.index_cast %c2_i32_164 : i32 to index
      %c0_177 = arith.constant 0 : index
      %c0_178 = arith.constant 0 : index
      %324 = vector.load %arg22[%323, %c0_177, %c0_178] : memref<4x3x8xbf16, #tpu.memory_space<vmem>>, vector<1x3x8xbf16>
      %325 = vector.shape_cast %324 : vector<1x3x8xbf16> to vector<3x8xbf16>
      %326 = vector.shape_cast %322 : vector<3x8xbf16> to vector<1x3x8xbf16>
      tpu.vector_store %arg22[%323, %c0_177, %c0_178], %326 {strides = array<i32>} : memref<4x3x8xbf16, #tpu.memory_space<vmem>>, vector<1x3x8xbf16>,
      %327 = arith.index_cast %c2_i32_164 : i32 to index
      %c0_179 = arith.constant 0 : index
      %c0_180 = arith.constant 0 : index
      %328 = vector.load %arg10[%327, %c0_179, %c0_180] : memref<4x32x8xbf16, #tpu.memory_space<vmem>>, vector<1x32x8xbf16>
      %329 = vector.shape_cast %328 : vector<1x32x8xbf16> to vector<32x8xbf16>
      %cst_181 = arith.constant dense<0.000000e+00> : vector<3x8xf32>
      %330 = tpu.matmul %214, %329, %cst_181 {dimension_numbers = #tpu.dot_dimension_numbers<[1], [0], [0], [1], [0, 0, 1, 1], [], []>} : vector<3x32xbf16>, vector<32x8xbf16>, vector<3x8xf32> -> vector<3x8xf32>
      %331 = arith.index_cast %c2_i32_164 : i32 to index
      %c0_182 = arith.constant 0 : index
      %c0_183 = arith.constant 0 : index
      %332 = vector.load %arg11[%331, %c0_182, %c0_183] : memref<4x1x8xf32, #tpu.memory_space<vmem>>, vector<1x1x8xf32>
      %333 = vector.shape_cast %332 : vector<1x1x8xf32> to vector<1x8xf32>
      %334 = vector.broadcast %333 : vector<1x8xf32> to vector<3x8xf32>
      %335 = arith.addf %330, %334 : vector<3x8xf32>
      %336 = arith.truncf %335 : vector<3x8xf32> to vector<3x8xbf16>
      %337 = arith.index_cast %c2_i32_164 : i32 to index
      %c0_184 = arith.constant 0 : index
      %c0_185 = arith.constant 0 : index
      %338 = vector.load %arg23[%337, %c0_184, %c0_185] : memref<4x3x8xbf16, #tpu.memory_space<vmem>>, vector<1x3x8xbf16>
      %339 = vector.shape_cast %338 : vector<1x3x8xbf16> to vector<3x8xbf16>
      %340 = vector.shape_cast %336 : vector<3x8xbf16> to vector<1x3x8xbf16>
      tpu.vector_store %arg23[%337, %c0_184, %c0_185], %340 {strides = array<i32>} : memref<4x3x8xbf16, #tpu.memory_space<vmem>>, vector<1x3x8xbf16>,
      %c3_i32_186 = arith.constant 3 : i32
      %341 = arith.index_cast %c3_i32_186 : i32 to index
      %c0_187 = arith.constant 0 : index
      %c0_188 = arith.constant 0 : index
      %342 = vector.load %arg6[%341, %c0_187, %c0_188] : memref<4x32x8xbf16, #tpu.memory_space<vmem>>, vector<1x32x8xbf16>
      %343 = vector.shape_cast %342 : vector<1x32x8xbf16> to vector<32x8xbf16>
      %cst_189 = arith.constant dense<0.000000e+00> : vector<3x8xf32>
      %344 = tpu.matmul %214, %343, %cst_189 {dimension_numbers = #tpu.dot_dimension_numbers<[1], [0], [0], [1], [0, 0, 1, 1], [], []>} : vector<3x32xbf16>, vector<32x8xbf16>, vector<3x8xf32> -> vector<3x8xf32>
      %345 = arith.index_cast %c3_i32_186 : i32 to index
      %c0_190 = arith.constant 0 : index
      %c0_191 = arith.constant 0 : index
      %346 = vector.load %arg7[%345, %c0_190, %c0_191] : memref<4x1x8xf32, #tpu.memory_space<vmem>>, vector<1x1x8xf32>
      %347 = vector.shape_cast %346 : vector<1x1x8xf32> to vector<1x8xf32>
      %348 = vector.broadcast %347 : vector<1x8xf32> to vector<3x8xf32>
      %349 = arith.addf %344, %348 : vector<3x8xf32>
      %350 = arith.truncf %349 : vector<3x8xf32> to vector<3x8xbf16>
      %351 = arith.index_cast %c3_i32_186 : i32 to index
      %c0_192 = arith.constant 0 : index
      %c0_193 = arith.constant 0 : index
      %352 = vector.load %arg21[%351, %c0_192, %c0_193] : memref<4x3x8xbf16, #tpu.memory_space<vmem>>, vector<1x3x8xbf16>
      %353 = vector.shape_cast %352 : vector<1x3x8xbf16> to vector<3x8xbf16>
      %354 = vector.shape_cast %350 : vector<3x8xbf16> to vector<1x3x8xbf16>
      tpu.vector_store %arg21[%351, %c0_192, %c0_193], %354 {strides = array<i32>} : memref<4x3x8xbf16, #tpu.memory_space<vmem>>, vector<1x3x8xbf16>,
      %355 = arith.index_cast %c3_i32_186 : i32 to index
      %c0_194 = arith.constant 0 : index
      %c0_195 = arith.constant 0 : index
      %356 = vector.load %arg8[%355, %c0_194, %c0_195] : memref<4x32x8xbf16, #tpu.memory_space<vmem>>, vector<1x32x8xbf16>
      %357 = vector.shape_cast %356 : vector<1x32x8xbf16> to vector<32x8xbf16>
      %cst_196 = arith.constant dense<0.000000e+00> : vector<3x8xf32>
      %358 = tpu.matmul %214, %357, %cst_196 {dimension_numbers = #tpu.dot_dimension_numbers<[1], [0], [0], [1], [0, 0, 1, 1], [], []>} : vector<3x32xbf16>, vector<32x8xbf16>, vector<3x8xf32> -> vector<3x8xf32>
      %359 = arith.index_cast %c3_i32_186 : i32 to index
      %c0_197 = arith.constant 0 : index
      %c0_198 = arith.constant 0 : index
      %360 = vector.load %arg9[%359, %c0_197, %c0_198] : memref<4x1x8xf32, #tpu.memory_space<vmem>>, vector<1x1x8xf32>
      %361 = vector.shape_cast %360 : vector<1x1x8xf32> to vector<1x8xf32>
      %362 = vector.broadcast %361 : vector<1x8xf32> to vector<3x8xf32>
      %363 = arith.addf %358, %362 : vector<3x8xf32>
      %364 = arith.truncf %363 : vector<3x8xf32> to vector<3x8xbf16>
      %365 = arith.index_cast %c3_i32_186 : i32 to index
      %c0_199 = arith.constant 0 : index
      %c0_200 = arith.constant 0 : index
      %366 = vector.load %arg22[%365, %c0_199, %c0_200] : memref<4x3x8xbf16, #tpu.memory_space<vmem>>, vector<1x3x8xbf16>
      %367 = vector.shape_cast %366 : vector<1x3x8xbf16> to vector<3x8xbf16>
      %368 = vector.shape_cast %364 : vector<3x8xbf16> to vector<1x3x8xbf16>
      tpu.vector_store %arg22[%365, %c0_199, %c0_200], %368 {strides = array<i32>} : memref<4x3x8xbf16, #tpu.memory_space<vmem>>, vector<1x3x8xbf16>,
      %369 = arith.index_cast %c3_i32_186 : i32 to index
      %c0_201 = arith.constant 0 : index
      %c0_202 = arith.constant 0 : index
      %370 = vector.load %arg10[%369, %c0_201, %c0_202] : memref<4x32x8xbf16, #tpu.memory_space<vmem>>, vector<1x32x8xbf16>
      %371 = vector.shape_cast %370 : vector<1x32x8xbf16> to vector<32x8xbf16>
      %cst_203 = arith.constant dense<0.000000e+00> : vector<3x8xf32>
      %372 = tpu.matmul %214, %371, %cst_203 {dimension_numbers = #tpu.dot_dimension_numbers<[1], [0], [0], [1], [0, 0, 1, 1], [], []>} : vector<3x32xbf16>, vector<32x8xbf16>, vector<3x8xf32> -> vector<3x8xf32>
      %373 = arith.index_cast %c3_i32_186 : i32 to index
      %c0_204 = arith.constant 0 : index
      %c0_205 = arith.constant 0 : index
      %374 = vector.load %arg11[%373, %c0_204, %c0_205] : memref<4x1x8xf32, #tpu.memory_space<vmem>>, vector<1x1x8xf32>
      %375 = vector.shape_cast %374 : vector<1x1x8xf32> to vector<1x8xf32>
      %376 = vector.broadcast %375 : vector<1x8xf32> to vector<3x8xf32>
      %377 = arith.addf %372, %376 : vector<3x8xf32>
      %378 = arith.truncf %377 : vector<3x8xf32> to vector<3x8xbf16>
      %379 = arith.index_cast %c3_i32_186 : i32 to index
      %c0_206 = arith.constant 0 : index
      %c0_207 = arith.constant 0 : index
      %380 = vector.load %arg23[%379, %c0_206, %c0_207] : memref<4x3x8xbf16, #tpu.memory_space<vmem>>, vector<1x3x8xbf16>
      %381 = vector.shape_cast %380 : vector<1x3x8xbf16> to vector<3x8xbf16>
      %382 = vector.shape_cast %378 : vector<3x8xbf16> to vector<1x3x8xbf16>
      tpu.vector_store %arg23[%379, %c0_206, %c0_207], %382 {strides = array<i32>} : memref<4x3x8xbf16, #tpu.memory_space<vmem>>, vector<1x3x8xbf16>,
      %c4_i32_208 = arith.constant 4 : i32
    } else {
    }
    %c0 = arith.constant 0 : index
    %c0_1 = arith.constant 0 : index
    %c0_2 = arith.constant 0 : index
    %3 = vector.load %arg2[%c0, %c0_1, %c0_2] : memref<1x3x32xf32, #tpu.memory_space<vmem>>, vector<1x3x32xf32>
    %4 = vector.shape_cast %3 : vector<1x3x32xf32> to vector<3x32xf32>
    %c0_3 = arith.constant 0 : index
    %c0_4 = arith.constant 0 : index
    %c0_5 = arith.constant 0 : index
    %5 = vector.load %arg3[%c0_3, %c0_4, %c0_5] : memref<1x1x3xf32, #tpu.memory_space<vmem>>, vector<1x1x3xf32>
    %6 = vector.shape_cast %5 : vector<1x1x3xf32> to vector<1x3xf32>
    %cst = arith.constant 0.000000e+00 : f32
    %7 = vector.broadcast %cst : f32 to vector<3x32xf32>
    %c0_6 = arith.constant 0 : index
    %c0_7 = arith.constant 0 : index
    %8 = vector.load %arg24[%c0_6, %c0_7] : memref<3x32xf32, #tpu.memory_space<vmem>>, vector<3x32xf32>
    tpu.vector_store %arg24[%c0_6, %c0_7], %7 {strides = array<i32>} : memref<3x32xf32, #tpu.memory_space<vmem>>, vector<3x32xf32>,
    %c0_i32_8 = arith.constant 0 : i32
    %9 = arith.index_cast %c0_i32_8 : i32 to index
    %c0_9 = arith.constant 0 : index
    %c0_10 = arith.constant 0 : index
    %10 = vector.load %arg21[%9, %c0_9, %c0_10] : memref<4x3x8xbf16, #tpu.memory_space<vmem>>, vector<1x3x8xbf16>
    %11 = vector.shape_cast %10 : vector<1x3x8xbf16> to vector<3x8xbf16>
    %12 = arith.index_cast %c0_i32_8 : i32 to index
    %c0_11 = arith.constant 0 : index
    %c0_12 = arith.constant 0 : index
    %13 = vector.load %arg22[%12, %c0_11, %c0_12] : memref<4x3x8xbf16, #tpu.memory_space<vmem>>, vector<1x3x8xbf16>
    %14 = vector.shape_cast %13 : vector<1x3x8xbf16> to vector<3x8xbf16>
    %15 = arith.index_cast %c0_i32_8 : i32 to index
    %c0_13 = arith.constant 0 : index
    %c0_14 = arith.constant 0 : index
    %16 = vector.load %arg23[%15, %c0_13, %c0_14] : memref<4x3x8xbf16, #tpu.memory_space<vmem>>, vector<1x3x8xbf16>
    %17 = vector.shape_cast %16 : vector<1x3x8xbf16> to vector<3x8xbf16>
    %cst_15 = arith.constant dense<0.000000e+00> : vector<3x3xf32>
    %18 = tpu.matmul %11, %14, %cst_15 {dimension_numbers = #tpu.dot_dimension_numbers<[1], [1], [0], [0], [0, 0, 1, 0], [], []>} : vector<3x8xbf16>, vector<3x8xbf16>, vector<3x3xf32> -> vector<3x3xf32>
    %19 = vector.broadcast %6 : vector<1x3xf32> to vector<3x3xf32>
    %20 = arith.addf %18, %19 : vector<3x3xf32>
    %cst_16 = arith.constant dense<0xFF800000> : vector<3xf32>
    %21 = vector.multi_reduction <maximumf>, %20, %cst_16 [1] : vector<3x3xf32> to vector<3xf32>
    %22 = vector.shape_cast %21 : vector<3xf32> to vector<3x1xf32>
    %23 = vector.broadcast %22 : vector<3x1xf32> to vector<3x3xf32>
    %24 = arith.subf %20, %23 : vector<3x3xf32>
    %25 = math.exp %24 : vector<3x3xf32>
    %cst_17 = arith.constant dense<0.000000e+00> : vector<3xf32>
    %26 = vector.multi_reduction <add>, %25, %cst_17 [1] : vector<3x3xf32> to vector<3xf32>
    %27 = vector.shape_cast %26 : vector<3xf32> to vector<3x1xf32>
    %cst_18 = arith.constant 1.000000e-30 : f32
    %28 = vector.broadcast %cst_18 : f32 to vector<3x1xf32>
    %29 = arith.maximumf %27, %28 : vector<3x1xf32>
    %30 = tpu.reciprocal %29 {approx = true} : vector<3x1xf32> -> vector<3x1xf32>
    %31 = vector.broadcast %30 : vector<3x1xf32> to vector<3x3xf32>
    %32 = arith.mulf %25, %31 : vector<3x3xf32>
    %33 = arith.truncf %32 : vector<3x3xf32> to vector<3x3xbf16>
    %cst_19 = arith.constant dense<0.000000e+00> : vector<3x8xf32>
    %34 = tpu.matmul %33, %17, %cst_19 {dimension_numbers = #tpu.dot_dimension_numbers<[1], [0], [0], [1], [0, 0, 1, 1], [], []>} : vector<3x3xbf16>, vector<3x8xbf16>, vector<3x8xf32> -> vector<3x8xf32>
    %c0_20 = arith.constant 0 : index
    %c0_21 = arith.constant 0 : index
    %35 = vector.load %arg24[%c0_20, %c0_21] : memref<3x32xf32, #tpu.memory_space<vmem>>, vector<3x32xf32>
    %36 = arith.truncf %34 : vector<3x8xf32> to vector<3x8xbf16>
    %37 = arith.index_cast %c0_i32_8 : i32 to index
    %c0_22 = arith.constant 0 : index
    %c0_23 = arith.constant 0 : index
    %38 = vector.load %arg12[%37, %c0_22, %c0_23] : memref<4x8x32xbf16, #tpu.memory_space<vmem>>, vector<1x8x32xbf16>
    %39 = vector.shape_cast %38 : vector<1x8x32xbf16> to vector<8x32xbf16>
    %cst_24 = arith.constant dense<0.000000e+00> : vector<3x32xf32>
    %40 = tpu.matmul %36, %39, %cst_24 {dimension_numbers = #tpu.dot_dimension_numbers<[1], [0], [0], [1], [0, 0, 1, 1], [], []>} : vector<3x8xbf16>, vector<8x32xbf16>, vector<3x32xf32> -> vector<3x32xf32>
    %41 = arith.addf %35, %40 : vector<3x32xf32>
    %c0_25 = arith.constant 0 : index
    %c0_26 = arith.constant 0 : index
    %42 = vector.load %arg24[%c0_25, %c0_26] : memref<3x32xf32, #tpu.memory_space<vmem>>, vector<3x32xf32>
    tpu.vector_store %arg24[%c0_25, %c0_26], %41 {strides = array<i32>} : memref<3x32xf32, #tpu.memory_space<vmem>>, vector<3x32xf32>,
    %c1_i32 = arith.constant 1 : i32
    %43 = arith.index_cast %c1_i32 : i32 to index
    %c0_27 = arith.constant 0 : index
    %c0_28 = arith.constant 0 : index
    %44 = vector.load %arg21[%43, %c0_27, %c0_28] : memref<4x3x8xbf16, #tpu.memory_space<vmem>>, vector<1x3x8xbf16>
    %45 = vector.shape_cast %44 : vector<1x3x8xbf16> to vector<3x8xbf16>
    %46 = arith.index_cast %c1_i32 : i32 to index
    %c0_29 = arith.constant 0 : index
    %c0_30 = arith.constant 0 : index
    %47 = vector.load %arg22[%46, %c0_29, %c0_30] : memref<4x3x8xbf16, #tpu.memory_space<vmem>>, vector<1x3x8xbf16>
    %48 = vector.shape_cast %47 : vector<1x3x8xbf16> to vector<3x8xbf16>
    %49 = arith.index_cast %c1_i32 : i32 to index
    %c0_31 = arith.constant 0 : index
    %c0_32 = arith.constant 0 : index
    %50 = vector.load %arg23[%49, %c0_31, %c0_32] : memref<4x3x8xbf16, #tpu.memory_space<vmem>>, vector<1x3x8xbf16>
    %51 = vector.shape_cast %50 : vector<1x3x8xbf16> to vector<3x8xbf16>
    %cst_33 = arith.constant dense<0.000000e+00> : vector<3x3xf32>
    %52 = tpu.matmul %45, %48, %cst_33 {dimension_numbers = #tpu.dot_dimension_numbers<[1], [1], [0], [0], [0, 0, 1, 0], [], []>} : vector<3x8xbf16>, vector<3x8xbf16>, vector<3x3xf32> -> vector<3x3xf32>
    %53 = vector.broadcast %6 : vector<1x3xf32> to vector<3x3xf32>
    %54 = arith.addf %52, %53 : vector<3x3xf32>
    %cst_34 = arith.constant dense<0xFF800000> : vector<3xf32>
    %55 = vector.multi_reduction <maximumf>, %54, %cst_34 [1] : vector<3x3xf32> to vector<3xf32>
    %56 = vector.shape_cast %55 : vector<3xf32> to vector<3x1xf32>
    %57 = vector.broadcast %56 : vector<3x1xf32> to vector<3x3xf32>
    %58 = arith.subf %54, %57 : vector<3x3xf32>
    %59 = math.exp %58 : vector<3x3xf32>
    %cst_35 = arith.constant dense<0.000000e+00> : vector<3xf32>
    %60 = vector.multi_reduction <add>, %59, %cst_35 [1] : vector<3x3xf32> to vector<3xf32>
    %61 = vector.shape_cast %60 : vector<3xf32> to vector<3x1xf32>
    %cst_36 = arith.constant 1.000000e-30 : f32
    %62 = vector.broadcast %cst_36 : f32 to vector<3x1xf32>
    %63 = arith.maximumf %61, %62 : vector<3x1xf32>
    %64 = tpu.reciprocal %63 {approx = true} : vector<3x1xf32> -> vector<3x1xf32>
    %65 = vector.broadcast %64 : vector<3x1xf32> to vector<3x3xf32>
    %66 = arith.mulf %59, %65 : vector<3x3xf32>
    %67 = arith.truncf %66 : vector<3x3xf32> to vector<3x3xbf16>
    %cst_37 = arith.constant dense<0.000000e+00> : vector<3x8xf32>
    %68 = tpu.matmul %67, %51, %cst_37 {dimension_numbers = #tpu.dot_dimension_numbers<[1], [0], [0], [1], [0, 0, 1, 1], [], []>} : vector<3x3xbf16>, vector<3x8xbf16>, vector<3x8xf32> -> vector<3x8xf32>
    %c0_38 = arith.constant 0 : index
    %c0_39 = arith.constant 0 : index
    %69 = vector.load %arg24[%c0_38, %c0_39] : memref<3x32xf32, #tpu.memory_space<vmem>>, vector<3x32xf32>
    %70 = arith.truncf %68 : vector<3x8xf32> to vector<3x8xbf16>
    %71 = arith.index_cast %c1_i32 : i32 to index
    %c0_40 = arith.constant 0 : index
    %c0_41 = arith.constant 0 : index
    %72 = vector.load %arg12[%71, %c0_40, %c0_41] : memref<4x8x32xbf16, #tpu.memory_space<vmem>>, vector<1x8x32xbf16>
    %73 = vector.shape_cast %72 : vector<1x8x32xbf16> to vector<8x32xbf16>
    %cst_42 = arith.constant dense<0.000000e+00> : vector<3x32xf32>
    %74 = tpu.matmul %70, %73, %cst_42 {dimension_numbers = #tpu.dot_dimension_numbers<[1], [0], [0], [1], [0, 0, 1, 1], [], []>} : vector<3x8xbf16>, vector<8x32xbf16>, vector<3x32xf32> -> vector<3x32xf32>
    %75 = arith.addf %69, %74 : vector<3x32xf32>
    %c0_43 = arith.constant 0 : index
    %c0_44 = arith.constant 0 : index
    %76 = vector.load %arg24[%c0_43, %c0_44] : memref<3x32xf32, #tpu.memory_space<vmem>>, vector<3x32xf32>
    tpu.vector_store %arg24[%c0_43, %c0_44], %75 {strides = array<i32>} : memref<3x32xf32, #tpu.memory_space<vmem>>, vector<3x32xf32>,
    %c2_i32 = arith.constant 2 : i32
    %77 = arith.index_cast %c2_i32 : i32 to index
    %c0_45 = arith.constant 0 : index
    %c0_46 = arith.constant 0 : index
    %78 = vector.load %arg21[%77, %c0_45, %c0_46] : memref<4x3x8xbf16, #tpu.memory_space<vmem>>, vector<1x3x8xbf16>
    %79 = vector.shape_cast %78 : vector<1x3x8xbf16> to vector<3x8xbf16>
    %80 = arith.index_cast %c2_i32 : i32 to index
    %c0_47 = arith.constant 0 : index
    %c0_48 = arith.constant 0 : index
    %81 = vector.load %arg22[%80, %c0_47, %c0_48] : memref<4x3x8xbf16, #tpu.memory_space<vmem>>, vector<1x3x8xbf16>
    %82 = vector.shape_cast %81 : vector<1x3x8xbf16> to vector<3x8xbf16>
    %83 = arith.index_cast %c2_i32 : i32 to index
    %c0_49 = arith.constant 0 : index
    %c0_50 = arith.constant 0 : index
    %84 = vector.load %arg23[%83, %c0_49, %c0_50] : memref<4x3x8xbf16, #tpu.memory_space<vmem>>, vector<1x3x8xbf16>
    %85 = vector.shape_cast %84 : vector<1x3x8xbf16> to vector<3x8xbf16>
    %cst_51 = arith.constant dense<0.000000e+00> : vector<3x3xf32>
    %86 = tpu.matmul %79, %82, %cst_51 {dimension_numbers = #tpu.dot_dimension_numbers<[1], [1], [0], [0], [0, 0, 1, 0], [], []>} : vector<3x8xbf16>, vector<3x8xbf16>, vector<3x3xf32> -> vector<3x3xf32>
    %87 = vector.broadcast %6 : vector<1x3xf32> to vector<3x3xf32>
    %88 = arith.addf %86, %87 : vector<3x3xf32>
    %cst_52 = arith.constant dense<0xFF800000> : vector<3xf32>
    %89 = vector.multi_reduction <maximumf>, %88, %cst_52 [1] : vector<3x3xf32> to vector<3xf32>
    %90 = vector.shape_cast %89 : vector<3xf32> to vector<3x1xf32>
    %91 = vector.broadcast %90 : vector<3x1xf32> to vector<3x3xf32>
    %92 = arith.subf %88, %91 : vector<3x3xf32>
    %93 = math.exp %92 : vector<3x3xf32>
    %cst_53 = arith.constant dense<0.000000e+00> : vector<3xf32>
    %94 = vector.multi_reduction <add>, %93, %cst_53 [1] : vector<3x3xf32> to vector<3xf32>
    %95 = vector.shape_cast %94 : vector<3xf32> to vector<3x1xf32>
    %cst_54 = arith.constant 1.000000e-30 : f32
    %96 = vector.broadcast %cst_54 : f32 to vector<3x1xf32>
    %97 = arith.maximumf %95, %96 : vector<3x1xf32>
    %98 = tpu.reciprocal %97 {approx = true} : vector<3x1xf32> -> vector<3x1xf32>
    %99 = vector.broadcast %98 : vector<3x1xf32> to vector<3x3xf32>
    %100 = arith.mulf %93, %99 : vector<3x3xf32>
    %101 = arith.truncf %100 : vector<3x3xf32> to vector<3x3xbf16>
    %cst_55 = arith.constant dense<0.000000e+00> : vector<3x8xf32>
    %102 = tpu.matmul %101, %85, %cst_55 {dimension_numbers = #tpu.dot_dimension_numbers<[1], [0], [0], [1], [0, 0, 1, 1], [], []>} : vector<3x3xbf16>, vector<3x8xbf16>, vector<3x8xf32> -> vector<3x8xf32>
    %c0_56 = arith.constant 0 : index
    %c0_57 = arith.constant 0 : index
    %103 = vector.load %arg24[%c0_56, %c0_57] : memref<3x32xf32, #tpu.memory_space<vmem>>, vector<3x32xf32>
    %104 = arith.truncf %102 : vector<3x8xf32> to vector<3x8xbf16>
    %105 = arith.index_cast %c2_i32 : i32 to index
    %c0_58 = arith.constant 0 : index
    %c0_59 = arith.constant 0 : index
    %106 = vector.load %arg12[%105, %c0_58, %c0_59] : memref<4x8x32xbf16, #tpu.memory_space<vmem>>, vector<1x8x32xbf16>
    %107 = vector.shape_cast %106 : vector<1x8x32xbf16> to vector<8x32xbf16>
    %cst_60 = arith.constant dense<0.000000e+00> : vector<3x32xf32>
    %108 = tpu.matmul %104, %107, %cst_60 {dimension_numbers = #tpu.dot_dimension_numbers<[1], [0], [0], [1], [0, 0, 1, 1], [], []>} : vector<3x8xbf16>, vector<8x32xbf16>, vector<3x32xf32> -> vector<3x32xf32>
    %109 = arith.addf %103, %108 : vector<3x32xf32>
    %c0_61 = arith.constant 0 : index
    %c0_62 = arith.constant 0 : index
    %110 = vector.load %arg24[%c0_61, %c0_62] : memref<3x32xf32, #tpu.memory_space<vmem>>, vector<3x32xf32>
    tpu.vector_store %arg24[%c0_61, %c0_62], %109 {strides = array<i32>} : memref<3x32xf32, #tpu.memory_space<vmem>>, vector<3x32xf32>,
    %c3_i32 = arith.constant 3 : i32
    %111 = arith.index_cast %c3_i32 : i32 to index
    %c0_63 = arith.constant 0 : index
    %c0_64 = arith.constant 0 : index
    %112 = vector.load %arg21[%111, %c0_63, %c0_64] : memref<4x3x8xbf16, #tpu.memory_space<vmem>>, vector<1x3x8xbf16>
    %113 = vector.shape_cast %112 : vector<1x3x8xbf16> to vector<3x8xbf16>
    %114 = arith.index_cast %c3_i32 : i32 to index
    %c0_65 = arith.constant 0 : index
    %c0_66 = arith.constant 0 : index
    %115 = vector.load %arg22[%114, %c0_65, %c0_66] : memref<4x3x8xbf16, #tpu.memory_space<vmem>>, vector<1x3x8xbf16>
    %116 = vector.shape_cast %115 : vector<1x3x8xbf16> to vector<3x8xbf16>
    %117 = arith.index_cast %c3_i32 : i32 to index
    %c0_67 = arith.constant 0 : index
    %c0_68 = arith.constant 0 : index
    %118 = vector.load %arg23[%117, %c0_67, %c0_68] : memref<4x3x8xbf16, #tpu.memory_space<vmem>>, vector<1x3x8xbf16>
    %119 = vector.shape_cast %118 : vector<1x3x8xbf16> to vector<3x8xbf16>
    %cst_69 = arith.constant dense<0.000000e+00> : vector<3x3xf32>
    %120 = tpu.matmul %113, %116, %cst_69 {dimension_numbers = #tpu.dot_dimension_numbers<[1], [1], [0], [0], [0, 0, 1, 0], [], []>} : vector<3x8xbf16>, vector<3x8xbf16>, vector<3x3xf32> -> vector<3x3xf32>
    %121 = vector.broadcast %6 : vector<1x3xf32> to vector<3x3xf32>
    %122 = arith.addf %120, %121 : vector<3x3xf32>
    %cst_70 = arith.constant dense<0xFF800000> : vector<3xf32>
    %123 = vector.multi_reduction <maximumf>, %122, %cst_70 [1] : vector<3x3xf32> to vector<3xf32>
    %124 = vector.shape_cast %123 : vector<3xf32> to vector<3x1xf32>
    %125 = vector.broadcast %124 : vector<3x1xf32> to vector<3x3xf32>
    %126 = arith.subf %122, %125 : vector<3x3xf32>
    %127 = math.exp %126 : vector<3x3xf32>
    %cst_71 = arith.constant dense<0.000000e+00> : vector<3xf32>
    %128 = vector.multi_reduction <add>, %127, %cst_71 [1] : vector<3x3xf32> to vector<3xf32>
    %129 = vector.shape_cast %128 : vector<3xf32> to vector<3x1xf32>
    %cst_72 = arith.constant 1.000000e-30 : f32
    %130 = vector.broadcast %cst_72 : f32 to vector<3x1xf32>
    %131 = arith.maximumf %129, %130 : vector<3x1xf32>
    %132 = tpu.reciprocal %131 {approx = true} : vector<3x1xf32> -> vector<3x1xf32>
    %133 = vector.broadcast %132 : vector<3x1xf32> to vector<3x3xf32>
    %134 = arith.mulf %127, %133 : vector<3x3xf32>
    %135 = arith.truncf %134 : vector<3x3xf32> to vector<3x3xbf16>
    %cst_73 = arith.constant dense<0.000000e+00> : vector<3x8xf32>
    %136 = tpu.matmul %135, %119, %cst_73 {dimension_numbers = #tpu.dot_dimension_numbers<[1], [0], [0], [1], [0, 0, 1, 1], [], []>} : vector<3x3xbf16>, vector<3x8xbf16>, vector<3x8xf32> -> vector<3x8xf32>
    %c0_74 = arith.constant 0 : index
    %c0_75 = arith.constant 0 : index
    %137 = vector.load %arg24[%c0_74, %c0_75] : memref<3x32xf32, #tpu.memory_space<vmem>>, vector<3x32xf32>
    %138 = arith.truncf %136 : vector<3x8xf32> to vector<3x8xbf16>
    %139 = arith.index_cast %c3_i32 : i32 to index
    %c0_76 = arith.constant 0 : index
    %c0_77 = arith.constant 0 : index
    %140 = vector.load %arg12[%139, %c0_76, %c0_77] : memref<4x8x32xbf16, #tpu.memory_space<vmem>>, vector<1x8x32xbf16>
    %141 = vector.shape_cast %140 : vector<1x8x32xbf16> to vector<8x32xbf16>
    %cst_78 = arith.constant dense<0.000000e+00> : vector<3x32xf32>
    %142 = tpu.matmul %138, %141, %cst_78 {dimension_numbers = #tpu.dot_dimension_numbers<[1], [0], [0], [1], [0, 0, 1, 1], [], []>} : vector<3x8xbf16>, vector<8x32xbf16>, vector<3x32xf32> -> vector<3x32xf32>
    %143 = arith.addf %137, %142 : vector<3x32xf32>
    %c0_79 = arith.constant 0 : index
    %c0_80 = arith.constant 0 : index
    %144 = vector.load %arg24[%c0_79, %c0_80] : memref<3x32xf32, #tpu.memory_space<vmem>>, vector<3x32xf32>
    tpu.vector_store %arg24[%c0_79, %c0_80], %143 {strides = array<i32>} : memref<3x32xf32, #tpu.memory_space<vmem>>, vector<3x32xf32>,
    %c4_i32 = arith.constant 4 : i32
    %c0_81 = arith.constant 0 : index
    %c0_82 = arith.constant 0 : index
    %145 = vector.load %arg24[%c0_81, %c0_82] : memref<3x32xf32, #tpu.memory_space<vmem>>, vector<3x32xf32>
    %146 = arith.addf %4, %145 : vector<3x32xf32>
    %c0_83 = arith.constant 0 : index
    %c0_84 = arith.constant 0 : index
    %147 = vector.load %arg13[%c0_83, %c0_84] : memref<1x32xf32, #tpu.memory_space<vmem>>, vector<1x32xf32>
    %148 = vector.broadcast %147 : vector<1x32xf32> to vector<3x32xf32>
    %149 = arith.addf %146, %148 : vector<3x32xf32>
    %c0_85 = arith.constant 0 : index
    %c0_86 = arith.constant 0 : index
    %150 = vector.load %arg14[%c0_85, %c0_86] : memref<1x32xf32, #tpu.memory_space<vmem>>, vector<1x32xf32>
    %c0_87 = arith.constant 0 : index
    %c0_88 = arith.constant 0 : index
    %151 = vector.load %arg15[%c0_87, %c0_88] : memref<1x32xf32, #tpu.memory_space<vmem>>, vector<1x32xf32>
    %cst_89 = arith.constant dense<0.000000e+00> : vector<3xf32>
    %152 = vector.multi_reduction <add>, %149, %cst_89 [1] : vector<3x32xf32> to vector<3xf32>
    %153 = vector.shape_cast %152 : vector<3xf32> to vector<3x1xf32>
    %cst_90 = arith.constant 3.200000e+01 : f32
    %154 = vector.broadcast %cst_90 : f32 to vector<3x1xf32>
    %155 = arith.divf %153, %154 : vector<3x1xf32>
    %156 = vector.broadcast %155 : vector<3x1xf32> to vector<3x32xf32>
    %157 = arith.subf %149, %156 : vector<3x32xf32>
    %158 = arith.mulf %157, %157 : vector<3x32xf32>
    %cst_91 = arith.constant dense<0.000000e+00> : vector<3xf32>
    %159 = vector.multi_reduction <add>, %158, %cst_91 [1] : vector<3x32xf32> to vector<3xf32>
    %160 = vector.shape_cast %159 : vector<3xf32> to vector<3x1xf32>
    %cst_92 = arith.constant 3.200000e+01 : f32
    %161 = vector.broadcast %cst_92 : f32 to vector<3x1xf32>
    %162 = arith.divf %160, %161 : vector<3x1xf32>
    %cst_93 = arith.constant 9.99999996E-13 : f32
    %163 = vector.broadcast %cst_93 : f32 to vector<3x1xf32>
    %164 = arith.addf %162, %163 : vector<3x1xf32>
    %165 = math.rsqrt %164 : vector<3x1xf32>
    %166 = vector.broadcast %165 : vector<3x1xf32> to vector<3x32xf32>
    %167 = arith.mulf %157, %166 : vector<3x32xf32>
    %168 = vector.broadcast %150 : vector<1x32xf32> to vector<3x32xf32>
    %169 = arith.mulf %167, %168 : vector<3x32xf32>
    %170 = vector.broadcast %151 : vector<1x32xf32> to vector<3x32xf32>
    %171 = arith.addf %169, %170 : vector<3x32xf32>
    %172 = arith.truncf %171 : vector<3x32xf32> to vector<3x32xbf16>
    %c0_94 = arith.constant 0 : index
    %c0_95 = arith.constant 0 : index
    %173 = vector.load %arg16[%c0_94, %c0_95] : memref<32x64xbf16, #tpu.memory_space<vmem>>, vector<32x64xbf16>
    %cst_96 = arith.constant dense<0.000000e+00> : vector<3x64xf32>
    %174 = tpu.matmul %172, %173, %cst_96 {dimension_numbers = #tpu.dot_dimension_numbers<[1], [0], [0], [1], [0, 0, 1, 1], [], []>} : vector<3x32xbf16>, vector<32x64xbf16>, vector<3x64xf32> -> vector<3x64xf32>
    %c0_97 = arith.constant 0 : index
    %c0_98 = arith.constant 0 : index
    %175 = vector.load %arg17[%c0_97, %c0_98] : memref<1x64xf32, #tpu.memory_space<vmem>>, vector<1x64xf32>
    %176 = vector.broadcast %175 : vector<1x64xf32> to vector<3x64xf32>
    %177 = arith.addf %174, %176 : vector<3x64xf32>
    %cst_99 = arith.constant 0.000000e+00 : f32
    %178 = vector.broadcast %cst_99 : f32 to vector<3x64xf32>
    %179 = arith.maximumf %177, %178 : vector<3x64xf32>
    %180 = arith.truncf %179 : vector<3x64xf32> to vector<3x64xbf16>
    %c0_100 = arith.constant 0 : index
    %c0_101 = arith.constant 0 : index
    %181 = vector.load %arg18[%c0_100, %c0_101] : memref<64x32xbf16, #tpu.memory_space<vmem>>, vector<64x32xbf16>
    %cst_102 = arith.constant dense<0.000000e+00> : vector<3x32xf32>
    %182 = tpu.matmul %180, %181, %cst_102 {dimension_numbers = #tpu.dot_dimension_numbers<[1], [0], [0], [1], [0, 0, 1, 1], [], []>} : vector<3x64xbf16>, vector<64x32xbf16>, vector<3x32xf32> -> vector<3x32xf32>
    %c0_103 = arith.constant 0 : index
    %c0_104 = arith.constant 0 : index
    %183 = vector.load %arg19[%c0_103, %c0_104] : memref<1x32xf32, #tpu.memory_space<vmem>>, vector<1x32xf32>
    %184 = vector.broadcast %183 : vector<1x32xf32> to vector<3x32xf32>
    %185 = arith.addf %182, %184 : vector<3x32xf32>
    %186 = arith.addf %149, %185 : vector<3x32xf32>
    %c0_105 = arith.constant 0 : index
    %c0_106 = arith.constant 0 : index
    %c0_107 = arith.constant 0 : index
    %187 = vector.load %arg20[%c0_105, %c0_106, %c0_107] : memref<1x3x32xf32, #tpu.memory_space<vmem>>, vector<1x3x32xf32>
    %188 = vector.shape_cast %187 : vector<1x3x32xf32> to vector<3x32xf32>
    %189 = vector.shape_cast %186 : vector<3x32xf32> to vector<1x3x32xf32>
    tpu.vector_store %arg20[%c0_105, %c0_106, %c0_107], %189 {strides = array<i32>} : memref<1x3x32xf32, #tpu.memory_space<vmem>>, vector<1x3x32xf32>,
    return
  }
  func.func @transform_0(%arg0: i32, %arg1: i32) -> (i32, i32, i32) {
    %c0_i32 = arith.constant 0 : i32
    %c0_i32_0 = arith.constant 0 : i32
    %c0_i32_1 = arith.constant 0 : i32
    return %arg0, %c0_i32, %c0_i32_0 : i32, i32, i32
  }
  func.func @transform_1(%arg0: i32, %arg1: i32) -> (i32, i32, i32) {
    %c0_i32 = arith.constant 0 : i32
    %c0_i32_0 = arith.constant 0 : i32
    %c0_i32_1 = arith.constant 0 : i32
    return %arg0, %c0_i32, %c0_i32_0 : i32, i32, i32
  }
  func.func @transform_2(%arg0: i32, %arg1: i32) -> (i32, i32) {
    %c0_i32 = arith.constant 0 : i32
    %c0_i32_0 = arith.constant 0 : i32
    %c0_i32_1 = arith.constant 0 : i32
    return %c0_i32, %c0_i32_0 : i32, i32
  }
  func.func @transform_3(%arg0: i32, %arg1: i32) -> (i32, i32) {
    %c0_i32 = arith.constant 0 : i32
    %c0_i32_0 = arith.constant 0 : i32
    %c0_i32_1 = arith.constant 0 : i32
    return %c0_i32, %c0_i32_0 : i32, i32
  }
  func.func @transform_4(%arg0: i32, %arg1: i32) -> (i32, i32, i32) {
    %c0_i32 = arith.constant 0 : i32
    %c0_i32_0 = arith.constant 0 : i32
    %c0_i32_1 = arith.constant 0 : i32
    %c0_i32_2 = arith.constant 0 : i32
    return %c0_i32, %c0_i32_0, %c0_i32_1 : i32, i32, i32
  }
  func.func @transform_5(%arg0: i32, %arg1: i32) -> (i32, i32, i32) {
    %c0_i32 = arith.constant 0 : i32
    %c0_i32_0 = arith.constant 0 : i32
    %c0_i32_1 = arith.constant 0 : i32
    %c0_i32_2 = arith.constant 0 : i32
    return %c0_i32, %c0_i32_0, %c0_i32_1 : i32, i32, i32
  }
  func.func @transform_6(%arg0: i32, %arg1: i32) -> (i32, i32, i32) {
    %c0_i32 = arith.constant 0 : i32
    %c0_i32_0 = arith.constant 0 : i32
    %c0_i32_1 = arith.constant 0 : i32
    %c0_i32_2 = arith.constant 0 : i32
    return %c0_i32, %c0_i32_0, %c0_i32_1 : i32, i32, i32
  }
  func.func @transform_7(%arg0: i32, %arg1: i32) -> (i32, i32, i32) {
    %c0_i32 = arith.constant 0 : i32
    %c0_i32_0 = arith.constant 0 : i32
    %c0_i32_1 = arith.constant 0 : i32
    %c0_i32_2 = arith.constant 0 : i32
    return %c0_i32, %c0_i32_0, %c0_i32_1 : i32, i32, i32
  }
  func.func @transform_8(%arg0: i32, %arg1: i32) -> (i32, i32, i32) {
    %c0_i32 = arith.constant 0 : i32
    %c0_i32_0 = arith.constant 0 : i32
    %c0_i32_1 = arith.constant 0 : i32
    %c0_i32_2 = arith.constant 0 : i32
    return %c0_i32, %c0_i32_0, %c0_i32_1 : i32, i32, i32
  }
  func.func @transform_9(%arg0: i32, %arg1: i32) -> (i32, i32, i32) {
    %c0_i32 = arith.constant 0 : i32
    %c0_i32_0 = arith.constant 0 : i32
    %c0_i32_1 = arith.constant 0 : i32
    %c0_i32_2 = arith.constant 0 : i32
    return %c0_i32, %c0_i32_0, %c0_i32_1 : i32, i32, i32
  }
  func.func @transform_10(%arg0: i32, %arg1: i32) -> (i32, i32, i32) {
    %c0_i32 = arith.constant 0 : i32
    %c0_i32_0 = arith.constant 0 : i32
    %c0_i32_1 = arith.constant 0 : i32
    %c0_i32_2 = arith.constant 0 : i32
    return %c0_i32, %c0_i32_0, %c0_i32_1 : i32, i32, i32
  }
  func.func @transform_11(%arg0: i32, %arg1: i32) -> (i32, i32) {
    %c0_i32 = arith.constant 0 : i32
    %c0_i32_0 = arith.constant 0 : i32
    %c0_i32_1 = arith.constant 0 : i32
    return %c0_i32, %c0_i32_0 : i32, i32
  }
  func.func @transform_12(%arg0: i32, %arg1: i32) -> (i32, i32) {
    %c0_i32 = arith.constant 0 : i32
    %c0_i32_0 = arith.constant 0 : i32
    %c0_i32_1 = arith.constant 0 : i32
    return %c0_i32, %c0_i32_0 : i32, i32
  }
  func.func @transform_13(%arg0: i32, %arg1: i32) -> (i32, i32) {
    %c0_i32 = arith.constant 0 : i32
    %c0_i32_0 = arith.constant 0 : i32
    %c0_i32_1 = arith.constant 0 : i32
    return %c0_i32, %c0_i32_0 : i32, i32
  }
  func.func @transform_14(%arg0: i32, %arg1: i32) -> (i32, i32) {
    %c0_i32 = arith.constant 0 : i32
    %c0_i32_0 = arith.constant 0 : i32
    %c0_i32_1 = arith.constant 0 : i32
    return %c0_i32, %c0_i32_0 : i32, i32
  }
  func.func @transform_15(%arg0: i32, %arg1: i32) -> (i32, i32) {
    %c0_i32 = arith.constant 0 : i32
    %c0_i32_0 = arith.constant 0 : i32
    %c0_i32_1 = arith.constant 0 : i32
    return %c0_i32, %c0_i32_0 : i32, i32
  }
  func.func @transform_16(%arg0: i32, %arg1: i32) -> (i32, i32) {
    %c0_i32 = arith.constant 0 : i32
    %c0_i32_0 = arith.constant 0 : i32
    %c0_i32_1 = arith.constant 0 : i32
    return %c0_i32, %c0_i32_0 : i32, i32
  }
  func.func @transform_17(%arg0: i32, %arg1: i32) -> (i32, i32) {
    %c0_i32 = arith.constant 0 : i32
    %c0_i32_0 = arith.constant 0 : i32
    %c0_i32_1 = arith.constant 0 : i32
    return %c0_i32, %c0_i32_0 : i32, i32
  }
  func.func @transform_18(%arg0: i32, %arg1: i32) -> (i32, i32, i32) {
    %c0_i32 = arith.constant 0 : i32
    %c0_i32_0 = arith.constant 0 : i32
    return %arg0, %arg1, %c0_i32 : i32, i32, i32
  }
}

module attributes {stable_mosaic.version = 11 : i64} {
  func.func @kernel(%arg0: i32, %arg1: i32, %arg2: memref<1x3x32xf32, #tpu.memory_space<vmem>>, %arg3: memref<1x1x3xf32, #tpu.memory_space<vmem>>, %arg4: memref<1x32xf32, #tpu.memory_space<vmem>>, %arg5: memref<1x32xf32, #tpu.memory_space<vmem>>, %arg6: memref<4x32x8xbf16, #tpu.memory_space<vmem>>, %arg7: memref<4x1x8xf32, #tpu.memory_space<vmem>>, %arg8: memref<4x32x8xbf16, #tpu.memory_space<vmem>>, %arg9: memref<4x1x8xf32, #tpu.memory_space<vmem>>, %arg10: memref<4x32x8xbf16, #tpu.memory_space<vmem>>, %arg11: memref<4x1x8xf32, #tpu.memory_space<vmem>>, %arg12: memref<4x8x32xbf16, #tpu.memory_space<vmem>>, %arg13: memref<1x32xf32, #tpu.memory_space<vmem>>, %arg14: memref<1x32xf32, #tpu.memory_space<vmem>>, %arg15: memref<1x32xf32, #tpu.memory_space<vmem>>, %arg16: memref<32x64xbf16, #tpu.memory_space<vmem>>, %arg17: memref<1x64xf32, #tpu.memory_space<vmem>>, %arg18: memref<64x32xbf16, #tpu.memory_space<vmem>>, %arg19: memref<1x32xf32, #tpu.memory_space<vmem>>, %arg20: memref<1x32xf32, #tpu.memory_space<vmem>>, %arg21: memref<1x32xf32, #tpu.memory_space<vmem>>, %arg22: memref<1x3x32xf32, #tpu.memory_space<vmem>>, %arg23: memref<4x3x8xbf16, #tpu.memory_space<vmem>>, %arg24: memref<4x3x8xbf16, #tpu.memory_space<vmem>>, %arg25: memref<4x3x8xbf16, #tpu.memory_space<vmem>>, %arg26: memref<3x32xf32, #tpu.memory_space<vmem>>) attributes {dimension_semantics = [#tpu.dimension_semantics<parallel>, #tpu.dimension_semantics<arbitrary>], iteration_bounds = array<i64: 2, 1>, scalar_prefetch = 0 : i64, scratch_operands = 4 : i64, tpu.core_type = #tpu.core_type<tc>, window_params = [{transform_indices = @transform_0, window_bounds = array<i64: 1, 3, 32>}, {transform_indices = @transform_1, window_bounds = array<i64: 1, 1, 3>}, {pipeline_mode = #tpu.pipeline_mode<synchronous>, transform_indices = @transform_2, window_bounds = array<i64: 1, 32>}, {pipeline_mode = #tpu.pipeline_mode<synchronous>, transform_indices = @transform_3, window_bounds = array<i64: 1, 32>}, {pipeline_mode = #tpu.pipeline_mode<synchronous>, transform_indices = @transform_4, window_bounds = array<i64: 4, 32, 8>}, {pipeline_mode = #tpu.pipeline_mode<synchronous>, transform_indices = @transform_5, window_bounds = array<i64: 4, 1, 8>}, {pipeline_mode = #tpu.pipeline_mode<synchronous>, transform_indices = @transform_6, window_bounds = array<i64: 4, 32, 8>}, {pipeline_mode = #tpu.pipeline_mode<synchronous>, transform_indices = @transform_7, window_bounds = array<i64: 4, 1, 8>}, {pipeline_mode = #tpu.pipeline_mode<synchronous>, transform_indices = @transform_8, window_bounds = array<i64: 4, 32, 8>}, {pipeline_mode = #tpu.pipeline_mode<synchronous>, transform_indices = @transform_9, window_bounds = array<i64: 4, 1, 8>}, {pipeline_mode = #tpu.pipeline_mode<synchronous>, transform_indices = @transform_10, window_bounds = array<i64: 4, 8, 32>}, {pipeline_mode = #tpu.pipeline_mode<synchronous>, transform_indices = @transform_11, window_bounds = array<i64: 1, 32>}, {pipeline_mode = #tpu.pipeline_mode<synchronous>, transform_indices = @transform_12, window_bounds = array<i64: 1, 32>}, {pipeline_mode = #tpu.pipeline_mode<synchronous>, transform_indices = @transform_13, window_bounds = array<i64: 1, 32>}, {pipeline_mode = #tpu.pipeline_mode<synchronous>, transform_indices = @transform_14, window_bounds = array<i64: 32, 64>}, {pipeline_mode = #tpu.pipeline_mode<synchronous>, transform_indices = @transform_15, window_bounds = array<i64: 1, 64>}, {pipeline_mode = #tpu.pipeline_mode<synchronous>, transform_indices = @transform_16, window_bounds = array<i64: 64, 32>}, {pipeline_mode = #tpu.pipeline_mode<synchronous>, transform_indices = @transform_17, window_bounds = array<i64: 1, 32>}, {pipeline_mode = #tpu.pipeline_mode<synchronous>, transform_indices = @transform_18, window_bounds = array<i64: 1, 32>}, {pipeline_mode = #tpu.pipeline_mode<synchronous>, transform_indices = @transform_19, window_bounds = array<i64: 1, 32>}, {transform_indices = @transform_20, window_bounds = array<i64: 1, 3, 32>}]} {
    %c0_i32 = arith.constant 0 : i32
    %0 = arith.cmpi eq, %arg1, %c0_i32 : i32
    %1 = arith.extui %0 : i1 to i32
    %c0_i32_0 = arith.constant 0 : i32
    %2 = arith.cmpi ne, %1, %c0_i32_0 : i32
    scf.if %2 {
      %c0_117 = arith.constant 0 : index
      %c0_118 = arith.constant 0 : index
      %c0_119 = arith.constant 0 : index
      %212 = vector.load %arg2[%c0_117, %c0_118, %c0_119] : memref<1x3x32xf32, #tpu.memory_space<vmem>>, vector<1x3x32xf32>
      %213 = vector.shape_cast %212 : vector<1x3x32xf32> to vector<3x32xf32>
      %c0_120 = arith.constant 0 : index
      %c0_121 = arith.constant 0 : index
      %214 = vector.load %arg4[%c0_120, %c0_121] : memref<1x32xf32, #tpu.memory_space<vmem>>, vector<1x32xf32>
      %c0_122 = arith.constant 0 : index
      %c0_123 = arith.constant 0 : index
      %215 = vector.load %arg5[%c0_122, %c0_123] : memref<1x32xf32, #tpu.memory_space<vmem>>, vector<1x32xf32>
      %cst_124 = arith.constant dense<0.000000e+00> : vector<3xf32>
      %216 = vector.multi_reduction <add>, %213, %cst_124 [1] : vector<3x32xf32> to vector<3xf32>
      %217 = vector.shape_cast %216 : vector<3xf32> to vector<3x1xf32>
      %cst_125 = arith.constant 3.200000e+01 : f32
      %218 = vector.broadcast %cst_125 : f32 to vector<3x1xf32>
      %219 = arith.divf %217, %218 : vector<3x1xf32>
      %220 = vector.broadcast %219 : vector<3x1xf32> to vector<3x32xf32>
      %221 = arith.subf %213, %220 : vector<3x32xf32>
      %222 = arith.mulf %221, %221 : vector<3x32xf32>
      %cst_126 = arith.constant dense<0.000000e+00> : vector<3xf32>
      %223 = vector.multi_reduction <add>, %222, %cst_126 [1] : vector<3x32xf32> to vector<3xf32>
      %224 = vector.shape_cast %223 : vector<3xf32> to vector<3x1xf32>
      %cst_127 = arith.constant 3.200000e+01 : f32
      %225 = vector.broadcast %cst_127 : f32 to vector<3x1xf32>
      %226 = arith.divf %224, %225 : vector<3x1xf32>
      %cst_128 = arith.constant 9.99999996E-13 : f32
      %227 = vector.broadcast %cst_128 : f32 to vector<3x1xf32>
      %228 = arith.addf %226, %227 : vector<3x1xf32>
      %229 = math.rsqrt %228 : vector<3x1xf32>
      %230 = vector.broadcast %229 : vector<3x1xf32> to vector<3x32xf32>
      %231 = arith.mulf %221, %230 : vector<3x32xf32>
      %232 = vector.broadcast %214 : vector<1x32xf32> to vector<3x32xf32>
      %233 = arith.mulf %231, %232 : vector<3x32xf32>
      %234 = vector.broadcast %215 : vector<1x32xf32> to vector<3x32xf32>
      %235 = arith.addf %233, %234 : vector<3x32xf32>
      %236 = arith.truncf %235 : vector<3x32xf32> to vector<3x32xbf16>
      %c0_i32_129 = arith.constant 0 : i32
      %237 = arith.index_cast %c0_i32_129 : i32 to index
      %c0_130 = arith.constant 0 : index
      %c0_131 = arith.constant 0 : index
      %238 = vector.load %arg6[%237, %c0_130, %c0_131] : memref<4x32x8xbf16, #tpu.memory_space<vmem>>, vector<1x32x8xbf16>
      %239 = vector.shape_cast %238 : vector<1x32x8xbf16> to vector<32x8xbf16>
      %cst_132 = arith.constant dense<0.000000e+00> : vector<3x8xf32>
      %240 = tpu.matmul %236, %239, %cst_132 {dimension_numbers = #tpu.dot_dimension_numbers<[1], [0], [0], [1], [0, 0, 1, 1], [], []>} : vector<3x32xbf16>, vector<32x8xbf16>, vector<3x8xf32> -> vector<3x8xf32>
      %241 = arith.index_cast %c0_i32_129 : i32 to index
      %c0_133 = arith.constant 0 : index
      %c0_134 = arith.constant 0 : index
      %242 = vector.load %arg7[%241, %c0_133, %c0_134] : memref<4x1x8xf32, #tpu.memory_space<vmem>>, vector<1x1x8xf32>
      %243 = vector.shape_cast %242 : vector<1x1x8xf32> to vector<1x8xf32>
      %244 = vector.broadcast %243 : vector<1x8xf32> to vector<3x8xf32>
      %245 = arith.addf %240, %244 : vector<3x8xf32>
      %246 = arith.truncf %245 : vector<3x8xf32> to vector<3x8xbf16>
      %247 = arith.index_cast %c0_i32_129 : i32 to index
      %c0_135 = arith.constant 0 : index
      %c0_136 = arith.constant 0 : index
      %248 = vector.load %arg23[%247, %c0_135, %c0_136] : memref<4x3x8xbf16, #tpu.memory_space<vmem>>, vector<1x3x8xbf16>
      %249 = vector.shape_cast %248 : vector<1x3x8xbf16> to vector<3x8xbf16>
      %250 = vector.shape_cast %246 : vector<3x8xbf16> to vector<1x3x8xbf16>
      tpu.vector_store %arg23[%247, %c0_135, %c0_136], %250 {strides = array<i32>} : memref<4x3x8xbf16, #tpu.memory_space<vmem>>, vector<1x3x8xbf16>,
      %251 = arith.index_cast %c0_i32_129 : i32 to index
      %c0_137 = arith.constant 0 : index
      %c0_138 = arith.constant 0 : index
      %252 = vector.load %arg8[%251, %c0_137, %c0_138] : memref<4x32x8xbf16, #tpu.memory_space<vmem>>, vector<1x32x8xbf16>
      %253 = vector.shape_cast %252 : vector<1x32x8xbf16> to vector<32x8xbf16>
      %cst_139 = arith.constant dense<0.000000e+00> : vector<3x8xf32>
      %254 = tpu.matmul %236, %253, %cst_139 {dimension_numbers = #tpu.dot_dimension_numbers<[1], [0], [0], [1], [0, 0, 1, 1], [], []>} : vector<3x32xbf16>, vector<32x8xbf16>, vector<3x8xf32> -> vector<3x8xf32>
      %255 = arith.index_cast %c0_i32_129 : i32 to index
      %c0_140 = arith.constant 0 : index
      %c0_141 = arith.constant 0 : index
      %256 = vector.load %arg9[%255, %c0_140, %c0_141] : memref<4x1x8xf32, #tpu.memory_space<vmem>>, vector<1x1x8xf32>
      %257 = vector.shape_cast %256 : vector<1x1x8xf32> to vector<1x8xf32>
      %258 = vector.broadcast %257 : vector<1x8xf32> to vector<3x8xf32>
      %259 = arith.addf %254, %258 : vector<3x8xf32>
      %260 = arith.truncf %259 : vector<3x8xf32> to vector<3x8xbf16>
      %261 = arith.index_cast %c0_i32_129 : i32 to index
      %c0_142 = arith.constant 0 : index
      %c0_143 = arith.constant 0 : index
      %262 = vector.load %arg24[%261, %c0_142, %c0_143] : memref<4x3x8xbf16, #tpu.memory_space<vmem>>, vector<1x3x8xbf16>
      %263 = vector.shape_cast %262 : vector<1x3x8xbf16> to vector<3x8xbf16>
      %264 = vector.shape_cast %260 : vector<3x8xbf16> to vector<1x3x8xbf16>
      tpu.vector_store %arg24[%261, %c0_142, %c0_143], %264 {strides = array<i32>} : memref<4x3x8xbf16, #tpu.memory_space<vmem>>, vector<1x3x8xbf16>,
      %265 = arith.index_cast %c0_i32_129 : i32 to index
      %c0_144 = arith.constant 0 : index
      %c0_145 = arith.constant 0 : index
      %266 = vector.load %arg10[%265, %c0_144, %c0_145] : memref<4x32x8xbf16, #tpu.memory_space<vmem>>, vector<1x32x8xbf16>
      %267 = vector.shape_cast %266 : vector<1x32x8xbf16> to vector<32x8xbf16>
      %cst_146 = arith.constant dense<0.000000e+00> : vector<3x8xf32>
      %268 = tpu.matmul %236, %267, %cst_146 {dimension_numbers = #tpu.dot_dimension_numbers<[1], [0], [0], [1], [0, 0, 1, 1], [], []>} : vector<3x32xbf16>, vector<32x8xbf16>, vector<3x8xf32> -> vector<3x8xf32>
      %269 = arith.index_cast %c0_i32_129 : i32 to index
      %c0_147 = arith.constant 0 : index
      %c0_148 = arith.constant 0 : index
      %270 = vector.load %arg11[%269, %c0_147, %c0_148] : memref<4x1x8xf32, #tpu.memory_space<vmem>>, vector<1x1x8xf32>
      %271 = vector.shape_cast %270 : vector<1x1x8xf32> to vector<1x8xf32>
      %272 = vector.broadcast %271 : vector<1x8xf32> to vector<3x8xf32>
      %273 = arith.addf %268, %272 : vector<3x8xf32>
      %274 = arith.truncf %273 : vector<3x8xf32> to vector<3x8xbf16>
      %275 = arith.index_cast %c0_i32_129 : i32 to index
      %c0_149 = arith.constant 0 : index
      %c0_150 = arith.constant 0 : index
      %276 = vector.load %arg25[%275, %c0_149, %c0_150] : memref<4x3x8xbf16, #tpu.memory_space<vmem>>, vector<1x3x8xbf16>
      %277 = vector.shape_cast %276 : vector<1x3x8xbf16> to vector<3x8xbf16>
      %278 = vector.shape_cast %274 : vector<3x8xbf16> to vector<1x3x8xbf16>
      tpu.vector_store %arg25[%275, %c0_149, %c0_150], %278 {strides = array<i32>} : memref<4x3x8xbf16, #tpu.memory_space<vmem>>, vector<1x3x8xbf16>,
      %c1_i32_151 = arith.constant 1 : i32
      %279 = arith.index_cast %c1_i32_151 : i32 to index
      %c0_152 = arith.constant 0 : index
      %c0_153 = arith.constant 0 : index
      %280 = vector.load %arg6[%279, %c0_152, %c0_153] : memref<4x32x8xbf16, #tpu.memory_space<vmem>>, vector<1x32x8xbf16>
      %281 = vector.shape_cast %280 : vector<1x32x8xbf16> to vector<32x8xbf16>
      %cst_154 = arith.constant dense<0.000000e+00> : vector<3x8xf32>
      %282 = tpu.matmul %236, %281, %cst_154 {dimension_numbers = #tpu.dot_dimension_numbers<[1], [0], [0], [1], [0, 0, 1, 1], [], []>} : vector<3x32xbf16>, vector<32x8xbf16>, vector<3x8xf32> -> vector<3x8xf32>
      %283 = arith.index_cast %c1_i32_151 : i32 to index
      %c0_155 = arith.constant 0 : index
      %c0_156 = arith.constant 0 : index
      %284 = vector.load %arg7[%283, %c0_155, %c0_156] : memref<4x1x8xf32, #tpu.memory_space<vmem>>, vector<1x1x8xf32>
      %285 = vector.shape_cast %284 : vector<1x1x8xf32> to vector<1x8xf32>
      %286 = vector.broadcast %285 : vector<1x8xf32> to vector<3x8xf32>
      %287 = arith.addf %282, %286 : vector<3x8xf32>
      %288 = arith.truncf %287 : vector<3x8xf32> to vector<3x8xbf16>
      %289 = arith.index_cast %c1_i32_151 : i32 to index
      %c0_157 = arith.constant 0 : index
      %c0_158 = arith.constant 0 : index
      %290 = vector.load %arg23[%289, %c0_157, %c0_158] : memref<4x3x8xbf16, #tpu.memory_space<vmem>>, vector<1x3x8xbf16>
      %291 = vector.shape_cast %290 : vector<1x3x8xbf16> to vector<3x8xbf16>
      %292 = vector.shape_cast %288 : vector<3x8xbf16> to vector<1x3x8xbf16>
      tpu.vector_store %arg23[%289, %c0_157, %c0_158], %292 {strides = array<i32>} : memref<4x3x8xbf16, #tpu.memory_space<vmem>>, vector<1x3x8xbf16>,
      %293 = arith.index_cast %c1_i32_151 : i32 to index
      %c0_159 = arith.constant 0 : index
      %c0_160 = arith.constant 0 : index
      %294 = vector.load %arg8[%293, %c0_159, %c0_160] : memref<4x32x8xbf16, #tpu.memory_space<vmem>>, vector<1x32x8xbf16>
      %295 = vector.shape_cast %294 : vector<1x32x8xbf16> to vector<32x8xbf16>
      %cst_161 = arith.constant dense<0.000000e+00> : vector<3x8xf32>
      %296 = tpu.matmul %236, %295, %cst_161 {dimension_numbers = #tpu.dot_dimension_numbers<[1], [0], [0], [1], [0, 0, 1, 1], [], []>} : vector<3x32xbf16>, vector<32x8xbf16>, vector<3x8xf32> -> vector<3x8xf32>
      %297 = arith.index_cast %c1_i32_151 : i32 to index
      %c0_162 = arith.constant 0 : index
      %c0_163 = arith.constant 0 : index
      %298 = vector.load %arg9[%297, %c0_162, %c0_163] : memref<4x1x8xf32, #tpu.memory_space<vmem>>, vector<1x1x8xf32>
      %299 = vector.shape_cast %298 : vector<1x1x8xf32> to vector<1x8xf32>
      %300 = vector.broadcast %299 : vector<1x8xf32> to vector<3x8xf32>
      %301 = arith.addf %296, %300 : vector<3x8xf32>
      %302 = arith.truncf %301 : vector<3x8xf32> to vector<3x8xbf16>
      %303 = arith.index_cast %c1_i32_151 : i32 to index
      %c0_164 = arith.constant 0 : index
      %c0_165 = arith.constant 0 : index
      %304 = vector.load %arg24[%303, %c0_164, %c0_165] : memref<4x3x8xbf16, #tpu.memory_space<vmem>>, vector<1x3x8xbf16>
      %305 = vector.shape_cast %304 : vector<1x3x8xbf16> to vector<3x8xbf16>
      %306 = vector.shape_cast %302 : vector<3x8xbf16> to vector<1x3x8xbf16>
      tpu.vector_store %arg24[%303, %c0_164, %c0_165], %306 {strides = array<i32>} : memref<4x3x8xbf16, #tpu.memory_space<vmem>>, vector<1x3x8xbf16>,
      %307 = arith.index_cast %c1_i32_151 : i32 to index
      %c0_166 = arith.constant 0 : index
      %c0_167 = arith.constant 0 : index
      %308 = vector.load %arg10[%307, %c0_166, %c0_167] : memref<4x32x8xbf16, #tpu.memory_space<vmem>>, vector<1x32x8xbf16>
      %309 = vector.shape_cast %308 : vector<1x32x8xbf16> to vector<32x8xbf16>
      %cst_168 = arith.constant dense<0.000000e+00> : vector<3x8xf32>
      %310 = tpu.matmul %236, %309, %cst_168 {dimension_numbers = #tpu.dot_dimension_numbers<[1], [0], [0], [1], [0, 0, 1, 1], [], []>} : vector<3x32xbf16>, vector<32x8xbf16>, vector<3x8xf32> -> vector<3x8xf32>
      %311 = arith.index_cast %c1_i32_151 : i32 to index
      %c0_169 = arith.constant 0 : index
      %c0_170 = arith.constant 0 : index
      %312 = vector.load %arg11[%311, %c0_169, %c0_170] : memref<4x1x8xf32, #tpu.memory_space<vmem>>, vector<1x1x8xf32>
      %313 = vector.shape_cast %312 : vector<1x1x8xf32> to vector<1x8xf32>
      %314 = vector.broadcast %313 : vector<1x8xf32> to vector<3x8xf32>
      %315 = arith.addf %310, %314 : vector<3x8xf32>
      %316 = arith.truncf %315 : vector<3x8xf32> to vector<3x8xbf16>
      %317 = arith.index_cast %c1_i32_151 : i32 to index
      %c0_171 = arith.constant 0 : index
      %c0_172 = arith.constant 0 : index
      %318 = vector.load %arg25[%317, %c0_171, %c0_172] : memref<4x3x8xbf16, #tpu.memory_space<vmem>>, vector<1x3x8xbf16>
      %319 = vector.shape_cast %318 : vector<1x3x8xbf16> to vector<3x8xbf16>
      %320 = vector.shape_cast %316 : vector<3x8xbf16> to vector<1x3x8xbf16>
      tpu.vector_store %arg25[%317, %c0_171, %c0_172], %320 {strides = array<i32>} : memref<4x3x8xbf16, #tpu.memory_space<vmem>>, vector<1x3x8xbf16>,
      %c2_i32_173 = arith.constant 2 : i32
      %321 = arith.index_cast %c2_i32_173 : i32 to index
      %c0_174 = arith.constant 0 : index
      %c0_175 = arith.constant 0 : index
      %322 = vector.load %arg6[%321, %c0_174, %c0_175] : memref<4x32x8xbf16, #tpu.memory_space<vmem>>, vector<1x32x8xbf16>
      %323 = vector.shape_cast %322 : vector<1x32x8xbf16> to vector<32x8xbf16>
      %cst_176 = arith.constant dense<0.000000e+00> : vector<3x8xf32>
      %324 = tpu.matmul %236, %323, %cst_176 {dimension_numbers = #tpu.dot_dimension_numbers<[1], [0], [0], [1], [0, 0, 1, 1], [], []>} : vector<3x32xbf16>, vector<32x8xbf16>, vector<3x8xf32> -> vector<3x8xf32>
      %325 = arith.index_cast %c2_i32_173 : i32 to index
      %c0_177 = arith.constant 0 : index
      %c0_178 = arith.constant 0 : index
      %326 = vector.load %arg7[%325, %c0_177, %c0_178] : memref<4x1x8xf32, #tpu.memory_space<vmem>>, vector<1x1x8xf32>
      %327 = vector.shape_cast %326 : vector<1x1x8xf32> to vector<1x8xf32>
      %328 = vector.broadcast %327 : vector<1x8xf32> to vector<3x8xf32>
      %329 = arith.addf %324, %328 : vector<3x8xf32>
      %330 = arith.truncf %329 : vector<3x8xf32> to vector<3x8xbf16>
      %331 = arith.index_cast %c2_i32_173 : i32 to index
      %c0_179 = arith.constant 0 : index
      %c0_180 = arith.constant 0 : index
      %332 = vector.load %arg23[%331, %c0_179, %c0_180] : memref<4x3x8xbf16, #tpu.memory_space<vmem>>, vector<1x3x8xbf16>
      %333 = vector.shape_cast %332 : vector<1x3x8xbf16> to vector<3x8xbf16>
      %334 = vector.shape_cast %330 : vector<3x8xbf16> to vector<1x3x8xbf16>
      tpu.vector_store %arg23[%331, %c0_179, %c0_180], %334 {strides = array<i32>} : memref<4x3x8xbf16, #tpu.memory_space<vmem>>, vector<1x3x8xbf16>,
      %335 = arith.index_cast %c2_i32_173 : i32 to index
      %c0_181 = arith.constant 0 : index
      %c0_182 = arith.constant 0 : index
      %336 = vector.load %arg8[%335, %c0_181, %c0_182] : memref<4x32x8xbf16, #tpu.memory_space<vmem>>, vector<1x32x8xbf16>
      %337 = vector.shape_cast %336 : vector<1x32x8xbf16> to vector<32x8xbf16>
      %cst_183 = arith.constant dense<0.000000e+00> : vector<3x8xf32>
      %338 = tpu.matmul %236, %337, %cst_183 {dimension_numbers = #tpu.dot_dimension_numbers<[1], [0], [0], [1], [0, 0, 1, 1], [], []>} : vector<3x32xbf16>, vector<32x8xbf16>, vector<3x8xf32> -> vector<3x8xf32>
      %339 = arith.index_cast %c2_i32_173 : i32 to index
      %c0_184 = arith.constant 0 : index
      %c0_185 = arith.constant 0 : index
      %340 = vector.load %arg9[%339, %c0_184, %c0_185] : memref<4x1x8xf32, #tpu.memory_space<vmem>>, vector<1x1x8xf32>
      %341 = vector.shape_cast %340 : vector<1x1x8xf32> to vector<1x8xf32>
      %342 = vector.broadcast %341 : vector<1x8xf32> to vector<3x8xf32>
      %343 = arith.addf %338, %342 : vector<3x8xf32>
      %344 = arith.truncf %343 : vector<3x8xf32> to vector<3x8xbf16>
      %345 = arith.index_cast %c2_i32_173 : i32 to index
      %c0_186 = arith.constant 0 : index
      %c0_187 = arith.constant 0 : index
      %346 = vector.load %arg24[%345, %c0_186, %c0_187] : memref<4x3x8xbf16, #tpu.memory_space<vmem>>, vector<1x3x8xbf16>
      %347 = vector.shape_cast %346 : vector<1x3x8xbf16> to vector<3x8xbf16>
      %348 = vector.shape_cast %344 : vector<3x8xbf16> to vector<1x3x8xbf16>
      tpu.vector_store %arg24[%345, %c0_186, %c0_187], %348 {strides = array<i32>} : memref<4x3x8xbf16, #tpu.memory_space<vmem>>, vector<1x3x8xbf16>,
      %349 = arith.index_cast %c2_i32_173 : i32 to index
      %c0_188 = arith.constant 0 : index
      %c0_189 = arith.constant 0 : index
      %350 = vector.load %arg10[%349, %c0_188, %c0_189] : memref<4x32x8xbf16, #tpu.memory_space<vmem>>, vector<1x32x8xbf16>
      %351 = vector.shape_cast %350 : vector<1x32x8xbf16> to vector<32x8xbf16>
      %cst_190 = arith.constant dense<0.000000e+00> : vector<3x8xf32>
      %352 = tpu.matmul %236, %351, %cst_190 {dimension_numbers = #tpu.dot_dimension_numbers<[1], [0], [0], [1], [0, 0, 1, 1], [], []>} : vector<3x32xbf16>, vector<32x8xbf16>, vector<3x8xf32> -> vector<3x8xf32>
      %353 = arith.index_cast %c2_i32_173 : i32 to index
      %c0_191 = arith.constant 0 : index
      %c0_192 = arith.constant 0 : index
      %354 = vector.load %arg11[%353, %c0_191, %c0_192] : memref<4x1x8xf32, #tpu.memory_space<vmem>>, vector<1x1x8xf32>
      %355 = vector.shape_cast %354 : vector<1x1x8xf32> to vector<1x8xf32>
      %356 = vector.broadcast %355 : vector<1x8xf32> to vector<3x8xf32>
      %357 = arith.addf %352, %356 : vector<3x8xf32>
      %358 = arith.truncf %357 : vector<3x8xf32> to vector<3x8xbf16>
      %359 = arith.index_cast %c2_i32_173 : i32 to index
      %c0_193 = arith.constant 0 : index
      %c0_194 = arith.constant 0 : index
      %360 = vector.load %arg25[%359, %c0_193, %c0_194] : memref<4x3x8xbf16, #tpu.memory_space<vmem>>, vector<1x3x8xbf16>
      %361 = vector.shape_cast %360 : vector<1x3x8xbf16> to vector<3x8xbf16>
      %362 = vector.shape_cast %358 : vector<3x8xbf16> to vector<1x3x8xbf16>
      tpu.vector_store %arg25[%359, %c0_193, %c0_194], %362 {strides = array<i32>} : memref<4x3x8xbf16, #tpu.memory_space<vmem>>, vector<1x3x8xbf16>,
      %c3_i32_195 = arith.constant 3 : i32
      %363 = arith.index_cast %c3_i32_195 : i32 to index
      %c0_196 = arith.constant 0 : index
      %c0_197 = arith.constant 0 : index
      %364 = vector.load %arg6[%363, %c0_196, %c0_197] : memref<4x32x8xbf16, #tpu.memory_space<vmem>>, vector<1x32x8xbf16>
      %365 = vector.shape_cast %364 : vector<1x32x8xbf16> to vector<32x8xbf16>
      %cst_198 = arith.constant dense<0.000000e+00> : vector<3x8xf32>
      %366 = tpu.matmul %236, %365, %cst_198 {dimension_numbers = #tpu.dot_dimension_numbers<[1], [0], [0], [1], [0, 0, 1, 1], [], []>} : vector<3x32xbf16>, vector<32x8xbf16>, vector<3x8xf32> -> vector<3x8xf32>
      %367 = arith.index_cast %c3_i32_195 : i32 to index
      %c0_199 = arith.constant 0 : index
      %c0_200 = arith.constant 0 : index
      %368 = vector.load %arg7[%367, %c0_199, %c0_200] : memref<4x1x8xf32, #tpu.memory_space<vmem>>, vector<1x1x8xf32>
      %369 = vector.shape_cast %368 : vector<1x1x8xf32> to vector<1x8xf32>
      %370 = vector.broadcast %369 : vector<1x8xf32> to vector<3x8xf32>
      %371 = arith.addf %366, %370 : vector<3x8xf32>
      %372 = arith.truncf %371 : vector<3x8xf32> to vector<3x8xbf16>
      %373 = arith.index_cast %c3_i32_195 : i32 to index
      %c0_201 = arith.constant 0 : index
      %c0_202 = arith.constant 0 : index
      %374 = vector.load %arg23[%373, %c0_201, %c0_202] : memref<4x3x8xbf16, #tpu.memory_space<vmem>>, vector<1x3x8xbf16>
      %375 = vector.shape_cast %374 : vector<1x3x8xbf16> to vector<3x8xbf16>
      %376 = vector.shape_cast %372 : vector<3x8xbf16> to vector<1x3x8xbf16>
      tpu.vector_store %arg23[%373, %c0_201, %c0_202], %376 {strides = array<i32>} : memref<4x3x8xbf16, #tpu.memory_space<vmem>>, vector<1x3x8xbf16>,
      %377 = arith.index_cast %c3_i32_195 : i32 to index
      %c0_203 = arith.constant 0 : index
      %c0_204 = arith.constant 0 : index
      %378 = vector.load %arg8[%377, %c0_203, %c0_204] : memref<4x32x8xbf16, #tpu.memory_space<vmem>>, vector<1x32x8xbf16>
      %379 = vector.shape_cast %378 : vector<1x32x8xbf16> to vector<32x8xbf16>
      %cst_205 = arith.constant dense<0.000000e+00> : vector<3x8xf32>
      %380 = tpu.matmul %236, %379, %cst_205 {dimension_numbers = #tpu.dot_dimension_numbers<[1], [0], [0], [1], [0, 0, 1, 1], [], []>} : vector<3x32xbf16>, vector<32x8xbf16>, vector<3x8xf32> -> vector<3x8xf32>
      %381 = arith.index_cast %c3_i32_195 : i32 to index
      %c0_206 = arith.constant 0 : index
      %c0_207 = arith.constant 0 : index
      %382 = vector.load %arg9[%381, %c0_206, %c0_207] : memref<4x1x8xf32, #tpu.memory_space<vmem>>, vector<1x1x8xf32>
      %383 = vector.shape_cast %382 : vector<1x1x8xf32> to vector<1x8xf32>
      %384 = vector.broadcast %383 : vector<1x8xf32> to vector<3x8xf32>
      %385 = arith.addf %380, %384 : vector<3x8xf32>
      %386 = arith.truncf %385 : vector<3x8xf32> to vector<3x8xbf16>
      %387 = arith.index_cast %c3_i32_195 : i32 to index
      %c0_208 = arith.constant 0 : index
      %c0_209 = arith.constant 0 : index
      %388 = vector.load %arg24[%387, %c0_208, %c0_209] : memref<4x3x8xbf16, #tpu.memory_space<vmem>>, vector<1x3x8xbf16>
      %389 = vector.shape_cast %388 : vector<1x3x8xbf16> to vector<3x8xbf16>
      %390 = vector.shape_cast %386 : vector<3x8xbf16> to vector<1x3x8xbf16>
      tpu.vector_store %arg24[%387, %c0_208, %c0_209], %390 {strides = array<i32>} : memref<4x3x8xbf16, #tpu.memory_space<vmem>>, vector<1x3x8xbf16>,
      %391 = arith.index_cast %c3_i32_195 : i32 to index
      %c0_210 = arith.constant 0 : index
      %c0_211 = arith.constant 0 : index
      %392 = vector.load %arg10[%391, %c0_210, %c0_211] : memref<4x32x8xbf16, #tpu.memory_space<vmem>>, vector<1x32x8xbf16>
      %393 = vector.shape_cast %392 : vector<1x32x8xbf16> to vector<32x8xbf16>
      %cst_212 = arith.constant dense<0.000000e+00> : vector<3x8xf32>
      %394 = tpu.matmul %236, %393, %cst_212 {dimension_numbers = #tpu.dot_dimension_numbers<[1], [0], [0], [1], [0, 0, 1, 1], [], []>} : vector<3x32xbf16>, vector<32x8xbf16>, vector<3x8xf32> -> vector<3x8xf32>
      %395 = arith.index_cast %c3_i32_195 : i32 to index
      %c0_213 = arith.constant 0 : index
      %c0_214 = arith.constant 0 : index
      %396 = vector.load %arg11[%395, %c0_213, %c0_214] : memref<4x1x8xf32, #tpu.memory_space<vmem>>, vector<1x1x8xf32>
      %397 = vector.shape_cast %396 : vector<1x1x8xf32> to vector<1x8xf32>
      %398 = vector.broadcast %397 : vector<1x8xf32> to vector<3x8xf32>
      %399 = arith.addf %394, %398 : vector<3x8xf32>
      %400 = arith.truncf %399 : vector<3x8xf32> to vector<3x8xbf16>
      %401 = arith.index_cast %c3_i32_195 : i32 to index
      %c0_215 = arith.constant 0 : index
      %c0_216 = arith.constant 0 : index
      %402 = vector.load %arg25[%401, %c0_215, %c0_216] : memref<4x3x8xbf16, #tpu.memory_space<vmem>>, vector<1x3x8xbf16>
      %403 = vector.shape_cast %402 : vector<1x3x8xbf16> to vector<3x8xbf16>
      %404 = vector.shape_cast %400 : vector<3x8xbf16> to vector<1x3x8xbf16>
      tpu.vector_store %arg25[%401, %c0_215, %c0_216], %404 {strides = array<i32>} : memref<4x3x8xbf16, #tpu.memory_space<vmem>>, vector<1x3x8xbf16>,
      %c4_i32_217 = arith.constant 4 : i32
    } else {
    }
    %c0 = arith.constant 0 : index
    %c0_1 = arith.constant 0 : index
    %c0_2 = arith.constant 0 : index
    %3 = vector.load %arg2[%c0, %c0_1, %c0_2] : memref<1x3x32xf32, #tpu.memory_space<vmem>>, vector<1x3x32xf32>
    %4 = vector.shape_cast %3 : vector<1x3x32xf32> to vector<3x32xf32>
    %c0_3 = arith.constant 0 : index
    %c0_4 = arith.constant 0 : index
    %c0_5 = arith.constant 0 : index
    %5 = vector.load %arg3[%c0_3, %c0_4, %c0_5] : memref<1x1x3xf32, #tpu.memory_space<vmem>>, vector<1x1x3xf32>
    %6 = vector.shape_cast %5 : vector<1x1x3xf32> to vector<1x3xf32>
    %cst = arith.constant 0.000000e+00 : f32
    %7 = vector.broadcast %cst : f32 to vector<3x32xf32>
    %c0_6 = arith.constant 0 : index
    %c0_7 = arith.constant 0 : index
    %8 = vector.load %arg26[%c0_6, %c0_7] : memref<3x32xf32, #tpu.memory_space<vmem>>, vector<3x32xf32>
    tpu.vector_store %arg26[%c0_6, %c0_7], %7 {strides = array<i32>} : memref<3x32xf32, #tpu.memory_space<vmem>>, vector<3x32xf32>,
    %c0_i32_8 = arith.constant 0 : i32
    %9 = arith.index_cast %c0_i32_8 : i32 to index
    %c0_9 = arith.constant 0 : index
    %c0_10 = arith.constant 0 : index
    %10 = vector.load %arg23[%9, %c0_9, %c0_10] : memref<4x3x8xbf16, #tpu.memory_space<vmem>>, vector<1x3x8xbf16>
    %11 = vector.shape_cast %10 : vector<1x3x8xbf16> to vector<3x8xbf16>
    %12 = arith.index_cast %c0_i32_8 : i32 to index
    %c0_11 = arith.constant 0 : index
    %c0_12 = arith.constant 0 : index
    %13 = vector.load %arg24[%12, %c0_11, %c0_12] : memref<4x3x8xbf16, #tpu.memory_space<vmem>>, vector<1x3x8xbf16>
    %14 = vector.shape_cast %13 : vector<1x3x8xbf16> to vector<3x8xbf16>
    %15 = arith.index_cast %c0_i32_8 : i32 to index
    %c0_13 = arith.constant 0 : index
    %c0_14 = arith.constant 0 : index
    %16 = vector.load %arg25[%15, %c0_13, %c0_14] : memref<4x3x8xbf16, #tpu.memory_space<vmem>>, vector<1x3x8xbf16>
    %17 = vector.shape_cast %16 : vector<1x3x8xbf16> to vector<3x8xbf16>
    %cst_15 = arith.constant dense<0.000000e+00> : vector<3x3xf32>
    %18 = tpu.matmul %11, %14, %cst_15 {dimension_numbers = #tpu.dot_dimension_numbers<[1], [1], [0], [0], [0, 0, 1, 0], [], []>} : vector<3x8xbf16>, vector<3x8xbf16>, vector<3x3xf32> -> vector<3x3xf32>
    %19 = vector.broadcast %6 : vector<1x3xf32> to vector<3x3xf32>
    %20 = arith.addf %18, %19 : vector<3x3xf32>
    %cst_16 = arith.constant dense<0xFF800000> : vector<3xf32>
    %21 = vector.multi_reduction <maximumf>, %20, %cst_16 [1] : vector<3x3xf32> to vector<3xf32>
    %22 = vector.shape_cast %21 : vector<3xf32> to vector<3x1xf32>
    %23 = vector.broadcast %22 : vector<3x1xf32> to vector<3x3xf32>
    %24 = arith.subf %20, %23 : vector<3x3xf32>
    %25 = math.exp %24 : vector<3x3xf32>
    %cst_17 = arith.constant dense<0.000000e+00> : vector<3xf32>
    %26 = vector.multi_reduction <add>, %25, %cst_17 [1] : vector<3x3xf32> to vector<3xf32>
    %27 = vector.shape_cast %26 : vector<3xf32> to vector<3x1xf32>
    %cst_18 = arith.constant 1.000000e-30 : f32
    %28 = vector.broadcast %cst_18 : f32 to vector<3x1xf32>
    %29 = arith.maximumf %27, %28 : vector<3x1xf32>
    %30 = tpu.reciprocal %29 {approx = true} : vector<3x1xf32> -> vector<3x1xf32>
    %31 = vector.broadcast %30 : vector<3x1xf32> to vector<3x3xf32>
    %32 = arith.mulf %25, %31 : vector<3x3xf32>
    %33 = arith.truncf %32 : vector<3x3xf32> to vector<3x3xbf16>
    %cst_19 = arith.constant dense<0.000000e+00> : vector<3x8xf32>
    %34 = tpu.matmul %33, %17, %cst_19 {dimension_numbers = #tpu.dot_dimension_numbers<[1], [0], [0], [1], [0, 0, 1, 1], [], []>} : vector<3x3xbf16>, vector<3x8xbf16>, vector<3x8xf32> -> vector<3x8xf32>
    %c0_20 = arith.constant 0 : index
    %c0_21 = arith.constant 0 : index
    %35 = vector.load %arg26[%c0_20, %c0_21] : memref<3x32xf32, #tpu.memory_space<vmem>>, vector<3x32xf32>
    %36 = arith.truncf %34 : vector<3x8xf32> to vector<3x8xbf16>
    %37 = arith.index_cast %c0_i32_8 : i32 to index
    %c0_22 = arith.constant 0 : index
    %c0_23 = arith.constant 0 : index
    %38 = vector.load %arg12[%37, %c0_22, %c0_23] : memref<4x8x32xbf16, #tpu.memory_space<vmem>>, vector<1x8x32xbf16>
    %39 = vector.shape_cast %38 : vector<1x8x32xbf16> to vector<8x32xbf16>
    %cst_24 = arith.constant dense<0.000000e+00> : vector<3x32xf32>
    %40 = tpu.matmul %36, %39, %cst_24 {dimension_numbers = #tpu.dot_dimension_numbers<[1], [0], [0], [1], [0, 0, 1, 1], [], []>} : vector<3x8xbf16>, vector<8x32xbf16>, vector<3x32xf32> -> vector<3x32xf32>
    %41 = arith.addf %35, %40 : vector<3x32xf32>
    %c0_25 = arith.constant 0 : index
    %c0_26 = arith.constant 0 : index
    %42 = vector.load %arg26[%c0_25, %c0_26] : memref<3x32xf32, #tpu.memory_space<vmem>>, vector<3x32xf32>
    tpu.vector_store %arg26[%c0_25, %c0_26], %41 {strides = array<i32>} : memref<3x32xf32, #tpu.memory_space<vmem>>, vector<3x32xf32>,
    %c1_i32 = arith.constant 1 : i32
    %43 = arith.index_cast %c1_i32 : i32 to index
    %c0_27 = arith.constant 0 : index
    %c0_28 = arith.constant 0 : index
    %44 = vector.load %arg23[%43, %c0_27, %c0_28] : memref<4x3x8xbf16, #tpu.memory_space<vmem>>, vector<1x3x8xbf16>
    %45 = vector.shape_cast %44 : vector<1x3x8xbf16> to vector<3x8xbf16>
    %46 = arith.index_cast %c1_i32 : i32 to index
    %c0_29 = arith.constant 0 : index
    %c0_30 = arith.constant 0 : index
    %47 = vector.load %arg24[%46, %c0_29, %c0_30] : memref<4x3x8xbf16, #tpu.memory_space<vmem>>, vector<1x3x8xbf16>
    %48 = vector.shape_cast %47 : vector<1x3x8xbf16> to vector<3x8xbf16>
    %49 = arith.index_cast %c1_i32 : i32 to index
    %c0_31 = arith.constant 0 : index
    %c0_32 = arith.constant 0 : index
    %50 = vector.load %arg25[%49, %c0_31, %c0_32] : memref<4x3x8xbf16, #tpu.memory_space<vmem>>, vector<1x3x8xbf16>
    %51 = vector.shape_cast %50 : vector<1x3x8xbf16> to vector<3x8xbf16>
    %cst_33 = arith.constant dense<0.000000e+00> : vector<3x3xf32>
    %52 = tpu.matmul %45, %48, %cst_33 {dimension_numbers = #tpu.dot_dimension_numbers<[1], [1], [0], [0], [0, 0, 1, 0], [], []>} : vector<3x8xbf16>, vector<3x8xbf16>, vector<3x3xf32> -> vector<3x3xf32>
    %53 = vector.broadcast %6 : vector<1x3xf32> to vector<3x3xf32>
    %54 = arith.addf %52, %53 : vector<3x3xf32>
    %cst_34 = arith.constant dense<0xFF800000> : vector<3xf32>
    %55 = vector.multi_reduction <maximumf>, %54, %cst_34 [1] : vector<3x3xf32> to vector<3xf32>
    %56 = vector.shape_cast %55 : vector<3xf32> to vector<3x1xf32>
    %57 = vector.broadcast %56 : vector<3x1xf32> to vector<3x3xf32>
    %58 = arith.subf %54, %57 : vector<3x3xf32>
    %59 = math.exp %58 : vector<3x3xf32>
    %cst_35 = arith.constant dense<0.000000e+00> : vector<3xf32>
    %60 = vector.multi_reduction <add>, %59, %cst_35 [1] : vector<3x3xf32> to vector<3xf32>
    %61 = vector.shape_cast %60 : vector<3xf32> to vector<3x1xf32>
    %cst_36 = arith.constant 1.000000e-30 : f32
    %62 = vector.broadcast %cst_36 : f32 to vector<3x1xf32>
    %63 = arith.maximumf %61, %62 : vector<3x1xf32>
    %64 = tpu.reciprocal %63 {approx = true} : vector<3x1xf32> -> vector<3x1xf32>
    %65 = vector.broadcast %64 : vector<3x1xf32> to vector<3x3xf32>
    %66 = arith.mulf %59, %65 : vector<3x3xf32>
    %67 = arith.truncf %66 : vector<3x3xf32> to vector<3x3xbf16>
    %cst_37 = arith.constant dense<0.000000e+00> : vector<3x8xf32>
    %68 = tpu.matmul %67, %51, %cst_37 {dimension_numbers = #tpu.dot_dimension_numbers<[1], [0], [0], [1], [0, 0, 1, 1], [], []>} : vector<3x3xbf16>, vector<3x8xbf16>, vector<3x8xf32> -> vector<3x8xf32>
    %c0_38 = arith.constant 0 : index
    %c0_39 = arith.constant 0 : index
    %69 = vector.load %arg26[%c0_38, %c0_39] : memref<3x32xf32, #tpu.memory_space<vmem>>, vector<3x32xf32>
    %70 = arith.truncf %68 : vector<3x8xf32> to vector<3x8xbf16>
    %71 = arith.index_cast %c1_i32 : i32 to index
    %c0_40 = arith.constant 0 : index
    %c0_41 = arith.constant 0 : index
    %72 = vector.load %arg12[%71, %c0_40, %c0_41] : memref<4x8x32xbf16, #tpu.memory_space<vmem>>, vector<1x8x32xbf16>
    %73 = vector.shape_cast %72 : vector<1x8x32xbf16> to vector<8x32xbf16>
    %cst_42 = arith.constant dense<0.000000e+00> : vector<3x32xf32>
    %74 = tpu.matmul %70, %73, %cst_42 {dimension_numbers = #tpu.dot_dimension_numbers<[1], [0], [0], [1], [0, 0, 1, 1], [], []>} : vector<3x8xbf16>, vector<8x32xbf16>, vector<3x32xf32> -> vector<3x32xf32>
    %75 = arith.addf %69, %74 : vector<3x32xf32>
    %c0_43 = arith.constant 0 : index
    %c0_44 = arith.constant 0 : index
    %76 = vector.load %arg26[%c0_43, %c0_44] : memref<3x32xf32, #tpu.memory_space<vmem>>, vector<3x32xf32>
    tpu.vector_store %arg26[%c0_43, %c0_44], %75 {strides = array<i32>} : memref<3x32xf32, #tpu.memory_space<vmem>>, vector<3x32xf32>,
    %c2_i32 = arith.constant 2 : i32
    %77 = arith.index_cast %c2_i32 : i32 to index
    %c0_45 = arith.constant 0 : index
    %c0_46 = arith.constant 0 : index
    %78 = vector.load %arg23[%77, %c0_45, %c0_46] : memref<4x3x8xbf16, #tpu.memory_space<vmem>>, vector<1x3x8xbf16>
    %79 = vector.shape_cast %78 : vector<1x3x8xbf16> to vector<3x8xbf16>
    %80 = arith.index_cast %c2_i32 : i32 to index
    %c0_47 = arith.constant 0 : index
    %c0_48 = arith.constant 0 : index
    %81 = vector.load %arg24[%80, %c0_47, %c0_48] : memref<4x3x8xbf16, #tpu.memory_space<vmem>>, vector<1x3x8xbf16>
    %82 = vector.shape_cast %81 : vector<1x3x8xbf16> to vector<3x8xbf16>
    %83 = arith.index_cast %c2_i32 : i32 to index
    %c0_49 = arith.constant 0 : index
    %c0_50 = arith.constant 0 : index
    %84 = vector.load %arg25[%83, %c0_49, %c0_50] : memref<4x3x8xbf16, #tpu.memory_space<vmem>>, vector<1x3x8xbf16>
    %85 = vector.shape_cast %84 : vector<1x3x8xbf16> to vector<3x8xbf16>
    %cst_51 = arith.constant dense<0.000000e+00> : vector<3x3xf32>
    %86 = tpu.matmul %79, %82, %cst_51 {dimension_numbers = #tpu.dot_dimension_numbers<[1], [1], [0], [0], [0, 0, 1, 0], [], []>} : vector<3x8xbf16>, vector<3x8xbf16>, vector<3x3xf32> -> vector<3x3xf32>
    %87 = vector.broadcast %6 : vector<1x3xf32> to vector<3x3xf32>
    %88 = arith.addf %86, %87 : vector<3x3xf32>
    %cst_52 = arith.constant dense<0xFF800000> : vector<3xf32>
    %89 = vector.multi_reduction <maximumf>, %88, %cst_52 [1] : vector<3x3xf32> to vector<3xf32>
    %90 = vector.shape_cast %89 : vector<3xf32> to vector<3x1xf32>
    %91 = vector.broadcast %90 : vector<3x1xf32> to vector<3x3xf32>
    %92 = arith.subf %88, %91 : vector<3x3xf32>
    %93 = math.exp %92 : vector<3x3xf32>
    %cst_53 = arith.constant dense<0.000000e+00> : vector<3xf32>
    %94 = vector.multi_reduction <add>, %93, %cst_53 [1] : vector<3x3xf32> to vector<3xf32>
    %95 = vector.shape_cast %94 : vector<3xf32> to vector<3x1xf32>
    %cst_54 = arith.constant 1.000000e-30 : f32
    %96 = vector.broadcast %cst_54 : f32 to vector<3x1xf32>
    %97 = arith.maximumf %95, %96 : vector<3x1xf32>
    %98 = tpu.reciprocal %97 {approx = true} : vector<3x1xf32> -> vector<3x1xf32>
    %99 = vector.broadcast %98 : vector<3x1xf32> to vector<3x3xf32>
    %100 = arith.mulf %93, %99 : vector<3x3xf32>
    %101 = arith.truncf %100 : vector<3x3xf32> to vector<3x3xbf16>
    %cst_55 = arith.constant dense<0.000000e+00> : vector<3x8xf32>
    %102 = tpu.matmul %101, %85, %cst_55 {dimension_numbers = #tpu.dot_dimension_numbers<[1], [0], [0], [1], [0, 0, 1, 1], [], []>} : vector<3x3xbf16>, vector<3x8xbf16>, vector<3x8xf32> -> vector<3x8xf32>
    %c0_56 = arith.constant 0 : index
    %c0_57 = arith.constant 0 : index
    %103 = vector.load %arg26[%c0_56, %c0_57] : memref<3x32xf32, #tpu.memory_space<vmem>>, vector<3x32xf32>
    %104 = arith.truncf %102 : vector<3x8xf32> to vector<3x8xbf16>
    %105 = arith.index_cast %c2_i32 : i32 to index
    %c0_58 = arith.constant 0 : index
    %c0_59 = arith.constant 0 : index
    %106 = vector.load %arg12[%105, %c0_58, %c0_59] : memref<4x8x32xbf16, #tpu.memory_space<vmem>>, vector<1x8x32xbf16>
    %107 = vector.shape_cast %106 : vector<1x8x32xbf16> to vector<8x32xbf16>
    %cst_60 = arith.constant dense<0.000000e+00> : vector<3x32xf32>
    %108 = tpu.matmul %104, %107, %cst_60 {dimension_numbers = #tpu.dot_dimension_numbers<[1], [0], [0], [1], [0, 0, 1, 1], [], []>} : vector<3x8xbf16>, vector<8x32xbf16>, vector<3x32xf32> -> vector<3x32xf32>
    %109 = arith.addf %103, %108 : vector<3x32xf32>
    %c0_61 = arith.constant 0 : index
    %c0_62 = arith.constant 0 : index
    %110 = vector.load %arg26[%c0_61, %c0_62] : memref<3x32xf32, #tpu.memory_space<vmem>>, vector<3x32xf32>
    tpu.vector_store %arg26[%c0_61, %c0_62], %109 {strides = array<i32>} : memref<3x32xf32, #tpu.memory_space<vmem>>, vector<3x32xf32>,
    %c3_i32 = arith.constant 3 : i32
    %111 = arith.index_cast %c3_i32 : i32 to index
    %c0_63 = arith.constant 0 : index
    %c0_64 = arith.constant 0 : index
    %112 = vector.load %arg23[%111, %c0_63, %c0_64] : memref<4x3x8xbf16, #tpu.memory_space<vmem>>, vector<1x3x8xbf16>
    %113 = vector.shape_cast %112 : vector<1x3x8xbf16> to vector<3x8xbf16>
    %114 = arith.index_cast %c3_i32 : i32 to index
    %c0_65 = arith.constant 0 : index
    %c0_66 = arith.constant 0 : index
    %115 = vector.load %arg24[%114, %c0_65, %c0_66] : memref<4x3x8xbf16, #tpu.memory_space<vmem>>, vector<1x3x8xbf16>
    %116 = vector.shape_cast %115 : vector<1x3x8xbf16> to vector<3x8xbf16>
    %117 = arith.index_cast %c3_i32 : i32 to index
    %c0_67 = arith.constant 0 : index
    %c0_68 = arith.constant 0 : index
    %118 = vector.load %arg25[%117, %c0_67, %c0_68] : memref<4x3x8xbf16, #tpu.memory_space<vmem>>, vector<1x3x8xbf16>
    %119 = vector.shape_cast %118 : vector<1x3x8xbf16> to vector<3x8xbf16>
    %cst_69 = arith.constant dense<0.000000e+00> : vector<3x3xf32>
    %120 = tpu.matmul %113, %116, %cst_69 {dimension_numbers = #tpu.dot_dimension_numbers<[1], [1], [0], [0], [0, 0, 1, 0], [], []>} : vector<3x8xbf16>, vector<3x8xbf16>, vector<3x3xf32> -> vector<3x3xf32>
    %121 = vector.broadcast %6 : vector<1x3xf32> to vector<3x3xf32>
    %122 = arith.addf %120, %121 : vector<3x3xf32>
    %cst_70 = arith.constant dense<0xFF800000> : vector<3xf32>
    %123 = vector.multi_reduction <maximumf>, %122, %cst_70 [1] : vector<3x3xf32> to vector<3xf32>
    %124 = vector.shape_cast %123 : vector<3xf32> to vector<3x1xf32>
    %125 = vector.broadcast %124 : vector<3x1xf32> to vector<3x3xf32>
    %126 = arith.subf %122, %125 : vector<3x3xf32>
    %127 = math.exp %126 : vector<3x3xf32>
    %cst_71 = arith.constant dense<0.000000e+00> : vector<3xf32>
    %128 = vector.multi_reduction <add>, %127, %cst_71 [1] : vector<3x3xf32> to vector<3xf32>
    %129 = vector.shape_cast %128 : vector<3xf32> to vector<3x1xf32>
    %cst_72 = arith.constant 1.000000e-30 : f32
    %130 = vector.broadcast %cst_72 : f32 to vector<3x1xf32>
    %131 = arith.maximumf %129, %130 : vector<3x1xf32>
    %132 = tpu.reciprocal %131 {approx = true} : vector<3x1xf32> -> vector<3x1xf32>
    %133 = vector.broadcast %132 : vector<3x1xf32> to vector<3x3xf32>
    %134 = arith.mulf %127, %133 : vector<3x3xf32>
    %135 = arith.truncf %134 : vector<3x3xf32> to vector<3x3xbf16>
    %cst_73 = arith.constant dense<0.000000e+00> : vector<3x8xf32>
    %136 = tpu.matmul %135, %119, %cst_73 {dimension_numbers = #tpu.dot_dimension_numbers<[1], [0], [0], [1], [0, 0, 1, 1], [], []>} : vector<3x3xbf16>, vector<3x8xbf16>, vector<3x8xf32> -> vector<3x8xf32>
    %c0_74 = arith.constant 0 : index
    %c0_75 = arith.constant 0 : index
    %137 = vector.load %arg26[%c0_74, %c0_75] : memref<3x32xf32, #tpu.memory_space<vmem>>, vector<3x32xf32>
    %138 = arith.truncf %136 : vector<3x8xf32> to vector<3x8xbf16>
    %139 = arith.index_cast %c3_i32 : i32 to index
    %c0_76 = arith.constant 0 : index
    %c0_77 = arith.constant 0 : index
    %140 = vector.load %arg12[%139, %c0_76, %c0_77] : memref<4x8x32xbf16, #tpu.memory_space<vmem>>, vector<1x8x32xbf16>
    %141 = vector.shape_cast %140 : vector<1x8x32xbf16> to vector<8x32xbf16>
    %cst_78 = arith.constant dense<0.000000e+00> : vector<3x32xf32>
    %142 = tpu.matmul %138, %141, %cst_78 {dimension_numbers = #tpu.dot_dimension_numbers<[1], [0], [0], [1], [0, 0, 1, 1], [], []>} : vector<3x8xbf16>, vector<8x32xbf16>, vector<3x32xf32> -> vector<3x32xf32>
    %143 = arith.addf %137, %142 : vector<3x32xf32>
    %c0_79 = arith.constant 0 : index
    %c0_80 = arith.constant 0 : index
    %144 = vector.load %arg26[%c0_79, %c0_80] : memref<3x32xf32, #tpu.memory_space<vmem>>, vector<3x32xf32>
    tpu.vector_store %arg26[%c0_79, %c0_80], %143 {strides = array<i32>} : memref<3x32xf32, #tpu.memory_space<vmem>>, vector<3x32xf32>,
    %c4_i32 = arith.constant 4 : i32
    %c0_81 = arith.constant 0 : index
    %c0_82 = arith.constant 0 : index
    %145 = vector.load %arg26[%c0_81, %c0_82] : memref<3x32xf32, #tpu.memory_space<vmem>>, vector<3x32xf32>
    %146 = arith.addf %4, %145 : vector<3x32xf32>
    %c0_83 = arith.constant 0 : index
    %c0_84 = arith.constant 0 : index
    %147 = vector.load %arg13[%c0_83, %c0_84] : memref<1x32xf32, #tpu.memory_space<vmem>>, vector<1x32xf32>
    %148 = vector.broadcast %147 : vector<1x32xf32> to vector<3x32xf32>
    %149 = arith.addf %146, %148 : vector<3x32xf32>
    %c0_85 = arith.constant 0 : index
    %c0_86 = arith.constant 0 : index
    %150 = vector.load %arg14[%c0_85, %c0_86] : memref<1x32xf32, #tpu.memory_space<vmem>>, vector<1x32xf32>
    %c0_87 = arith.constant 0 : index
    %c0_88 = arith.constant 0 : index
    %151 = vector.load %arg15[%c0_87, %c0_88] : memref<1x32xf32, #tpu.memory_space<vmem>>, vector<1x32xf32>
    %cst_89 = arith.constant dense<0.000000e+00> : vector<3xf32>
    %152 = vector.multi_reduction <add>, %149, %cst_89 [1] : vector<3x32xf32> to vector<3xf32>
    %153 = vector.shape_cast %152 : vector<3xf32> to vector<3x1xf32>
    %cst_90 = arith.constant 3.200000e+01 : f32
    %154 = vector.broadcast %cst_90 : f32 to vector<3x1xf32>
    %155 = arith.divf %153, %154 : vector<3x1xf32>
    %156 = vector.broadcast %155 : vector<3x1xf32> to vector<3x32xf32>
    %157 = arith.subf %149, %156 : vector<3x32xf32>
    %158 = arith.mulf %157, %157 : vector<3x32xf32>
    %cst_91 = arith.constant dense<0.000000e+00> : vector<3xf32>
    %159 = vector.multi_reduction <add>, %158, %cst_91 [1] : vector<3x32xf32> to vector<3xf32>
    %160 = vector.shape_cast %159 : vector<3xf32> to vector<3x1xf32>
    %cst_92 = arith.constant 3.200000e+01 : f32
    %161 = vector.broadcast %cst_92 : f32 to vector<3x1xf32>
    %162 = arith.divf %160, %161 : vector<3x1xf32>
    %cst_93 = arith.constant 9.99999996E-13 : f32
    %163 = vector.broadcast %cst_93 : f32 to vector<3x1xf32>
    %164 = arith.addf %162, %163 : vector<3x1xf32>
    %165 = math.rsqrt %164 : vector<3x1xf32>
    %166 = vector.broadcast %165 : vector<3x1xf32> to vector<3x32xf32>
    %167 = arith.mulf %157, %166 : vector<3x32xf32>
    %168 = vector.broadcast %150 : vector<1x32xf32> to vector<3x32xf32>
    %169 = arith.mulf %167, %168 : vector<3x32xf32>
    %170 = vector.broadcast %151 : vector<1x32xf32> to vector<3x32xf32>
    %171 = arith.addf %169, %170 : vector<3x32xf32>
    %172 = arith.truncf %171 : vector<3x32xf32> to vector<3x32xbf16>
    %c0_94 = arith.constant 0 : index
    %c0_95 = arith.constant 0 : index
    %173 = vector.load %arg16[%c0_94, %c0_95] : memref<32x64xbf16, #tpu.memory_space<vmem>>, vector<32x64xbf16>
    %cst_96 = arith.constant dense<0.000000e+00> : vector<3x64xf32>
    %174 = tpu.matmul %172, %173, %cst_96 {dimension_numbers = #tpu.dot_dimension_numbers<[1], [0], [0], [1], [0, 0, 1, 1], [], []>} : vector<3x32xbf16>, vector<32x64xbf16>, vector<3x64xf32> -> vector<3x64xf32>
    %c0_97 = arith.constant 0 : index
    %c0_98 = arith.constant 0 : index
    %175 = vector.load %arg17[%c0_97, %c0_98] : memref<1x64xf32, #tpu.memory_space<vmem>>, vector<1x64xf32>
    %176 = vector.broadcast %175 : vector<1x64xf32> to vector<3x64xf32>
    %177 = arith.addf %174, %176 : vector<3x64xf32>
    %cst_99 = arith.constant 0.000000e+00 : f32
    %178 = vector.broadcast %cst_99 : f32 to vector<3x64xf32>
    %179 = arith.maximumf %177, %178 : vector<3x64xf32>
    %180 = arith.truncf %179 : vector<3x64xf32> to vector<3x64xbf16>
    %c0_100 = arith.constant 0 : index
    %c0_101 = arith.constant 0 : index
    %181 = vector.load %arg18[%c0_100, %c0_101] : memref<64x32xbf16, #tpu.memory_space<vmem>>, vector<64x32xbf16>
    %cst_102 = arith.constant dense<0.000000e+00> : vector<3x32xf32>
    %182 = tpu.matmul %180, %181, %cst_102 {dimension_numbers = #tpu.dot_dimension_numbers<[1], [0], [0], [1], [0, 0, 1, 1], [], []>} : vector<3x64xbf16>, vector<64x32xbf16>, vector<3x32xf32> -> vector<3x32xf32>
    %c0_103 = arith.constant 0 : index
    %c0_104 = arith.constant 0 : index
    %183 = vector.load %arg19[%c0_103, %c0_104] : memref<1x32xf32, #tpu.memory_space<vmem>>, vector<1x32xf32>
    %184 = vector.broadcast %183 : vector<1x32xf32> to vector<3x32xf32>
    %185 = arith.addf %182, %184 : vector<3x32xf32>
    %186 = arith.addf %149, %185 : vector<3x32xf32>
    %c0_105 = arith.constant 0 : index
    %c0_106 = arith.constant 0 : index
    %187 = vector.load %arg20[%c0_105, %c0_106] : memref<1x32xf32, #tpu.memory_space<vmem>>, vector<1x32xf32>
    %c0_107 = arith.constant 0 : index
    %c0_108 = arith.constant 0 : index
    %188 = vector.load %arg21[%c0_107, %c0_108] : memref<1x32xf32, #tpu.memory_space<vmem>>, vector<1x32xf32>
    %cst_109 = arith.constant dense<0.000000e+00> : vector<3xf32>
    %189 = vector.multi_reduction <add>, %186, %cst_109 [1] : vector<3x32xf32> to vector<3xf32>
    %190 = vector.shape_cast %189 : vector<3xf32> to vector<3x1xf32>
    %cst_110 = arith.constant 3.200000e+01 : f32
    %191 = vector.broadcast %cst_110 : f32 to vector<3x1xf32>
    %192 = arith.divf %190, %191 : vector<3x1xf32>
    %193 = vector.broadcast %192 : vector<3x1xf32> to vector<3x32xf32>
    %194 = arith.subf %186, %193 : vector<3x32xf32>
    %195 = arith.mulf %194, %194 : vector<3x32xf32>
    %cst_111 = arith.constant dense<0.000000e+00> : vector<3xf32>
    %196 = vector.multi_reduction <add>, %195, %cst_111 [1] : vector<3x32xf32> to vector<3xf32>
    %197 = vector.shape_cast %196 : vector<3xf32> to vector<3x1xf32>
    %cst_112 = arith.constant 3.200000e+01 : f32
    %198 = vector.broadcast %cst_112 : f32 to vector<3x1xf32>
    %199 = arith.divf %197, %198 : vector<3x1xf32>
    %cst_113 = arith.constant 9.99999996E-13 : f32
    %200 = vector.broadcast %cst_113 : f32 to vector<3x1xf32>
    %201 = arith.addf %199, %200 : vector<3x1xf32>
    %202 = math.rsqrt %201 : vector<3x1xf32>
    %203 = vector.broadcast %202 : vector<3x1xf32> to vector<3x32xf32>
    %204 = arith.mulf %194, %203 : vector<3x32xf32>
    %205 = vector.broadcast %187 : vector<1x32xf32> to vector<3x32xf32>
    %206 = arith.mulf %204, %205 : vector<3x32xf32>
    %207 = vector.broadcast %188 : vector<1x32xf32> to vector<3x32xf32>
    %208 = arith.addf %206, %207 : vector<3x32xf32>
    %c0_114 = arith.constant 0 : index
    %c0_115 = arith.constant 0 : index
    %c0_116 = arith.constant 0 : index
    %209 = vector.load %arg22[%c0_114, %c0_115, %c0_116] : memref<1x3x32xf32, #tpu.memory_space<vmem>>, vector<1x3x32xf32>
    %210 = vector.shape_cast %209 : vector<1x3x32xf32> to vector<3x32xf32>
    %211 = vector.shape_cast %208 : vector<3x32xf32> to vector<1x3x32xf32>
    tpu.vector_store %arg22[%c0_114, %c0_115, %c0_116], %211 {strides = array<i32>} : memref<1x3x32xf32, #tpu.memory_space<vmem>>, vector<1x3x32xf32>,
    return
  }
  func.func @transform_0(%arg0: i32, %arg1: i32) -> (i32, i32, i32) {
    %c0_i32 = arith.constant 0 : i32
    %c0_i32_0 = arith.constant 0 : i32
    %c0_i32_1 = arith.constant 0 : i32
    return %arg0, %c0_i32, %c0_i32_0 : i32, i32, i32
  }
  func.func @transform_1(%arg0: i32, %arg1: i32) -> (i32, i32, i32) {
    %c0_i32 = arith.constant 0 : i32
    %c0_i32_0 = arith.constant 0 : i32
    %c0_i32_1 = arith.constant 0 : i32
    return %arg0, %c0_i32, %c0_i32_0 : i32, i32, i32
  }
  func.func @transform_2(%arg0: i32, %arg1: i32) -> (i32, i32) {
    %c0_i32 = arith.constant 0 : i32
    %c0_i32_0 = arith.constant 0 : i32
    %c0_i32_1 = arith.constant 0 : i32
    return %c0_i32, %c0_i32_0 : i32, i32
  }
  func.func @transform_3(%arg0: i32, %arg1: i32) -> (i32, i32) {
    %c0_i32 = arith.constant 0 : i32
    %c0_i32_0 = arith.constant 0 : i32
    %c0_i32_1 = arith.constant 0 : i32
    return %c0_i32, %c0_i32_0 : i32, i32
  }
  func.func @transform_4(%arg0: i32, %arg1: i32) -> (i32, i32, i32) {
    %c0_i32 = arith.constant 0 : i32
    %c0_i32_0 = arith.constant 0 : i32
    %c0_i32_1 = arith.constant 0 : i32
    %c0_i32_2 = arith.constant 0 : i32
    return %c0_i32, %c0_i32_0, %c0_i32_1 : i32, i32, i32
  }
  func.func @transform_5(%arg0: i32, %arg1: i32) -> (i32, i32, i32) {
    %c0_i32 = arith.constant 0 : i32
    %c0_i32_0 = arith.constant 0 : i32
    %c0_i32_1 = arith.constant 0 : i32
    %c0_i32_2 = arith.constant 0 : i32
    return %c0_i32, %c0_i32_0, %c0_i32_1 : i32, i32, i32
  }
  func.func @transform_6(%arg0: i32, %arg1: i32) -> (i32, i32, i32) {
    %c0_i32 = arith.constant 0 : i32
    %c0_i32_0 = arith.constant 0 : i32
    %c0_i32_1 = arith.constant 0 : i32
    %c0_i32_2 = arith.constant 0 : i32
    return %c0_i32, %c0_i32_0, %c0_i32_1 : i32, i32, i32
  }
  func.func @transform_7(%arg0: i32, %arg1: i32) -> (i32, i32, i32) {
    %c0_i32 = arith.constant 0 : i32
    %c0_i32_0 = arith.constant 0 : i32
    %c0_i32_1 = arith.constant 0 : i32
    %c0_i32_2 = arith.constant 0 : i32
    return %c0_i32, %c0_i32_0, %c0_i32_1 : i32, i32, i32
  }
  func.func @transform_8(%arg0: i32, %arg1: i32) -> (i32, i32, i32) {
    %c0_i32 = arith.constant 0 : i32
    %c0_i32_0 = arith.constant 0 : i32
    %c0_i32_1 = arith.constant 0 : i32
    %c0_i32_2 = arith.constant 0 : i32
    return %c0_i32, %c0_i32_0, %c0_i32_1 : i32, i32, i32
  }
  func.func @transform_9(%arg0: i32, %arg1: i32) -> (i32, i32, i32) {
    %c0_i32 = arith.constant 0 : i32
    %c0_i32_0 = arith.constant 0 : i32
    %c0_i32_1 = arith.constant 0 : i32
    %c0_i32_2 = arith.constant 0 : i32
    return %c0_i32, %c0_i32_0, %c0_i32_1 : i32, i32, i32
  }
  func.func @transform_10(%arg0: i32, %arg1: i32) -> (i32, i32, i32) {
    %c0_i32 = arith.constant 0 : i32
    %c0_i32_0 = arith.constant 0 : i32
    %c0_i32_1 = arith.constant 0 : i32
    %c0_i32_2 = arith.constant 0 : i32
    return %c0_i32, %c0_i32_0, %c0_i32_1 : i32, i32, i32
  }
  func.func @transform_11(%arg0: i32, %arg1: i32) -> (i32, i32) {
    %c0_i32 = arith.constant 0 : i32
    %c0_i32_0 = arith.constant 0 : i32
    %c0_i32_1 = arith.constant 0 : i32
    return %c0_i32, %c0_i32_0 : i32, i32
  }
  func.func @transform_12(%arg0: i32, %arg1: i32) -> (i32, i32) {
    %c0_i32 = arith.constant 0 : i32
    %c0_i32_0 = arith.constant 0 : i32
    %c0_i32_1 = arith.constant 0 : i32
    return %c0_i32, %c0_i32_0 : i32, i32
  }
  func.func @transform_13(%arg0: i32, %arg1: i32) -> (i32, i32) {
    %c0_i32 = arith.constant 0 : i32
    %c0_i32_0 = arith.constant 0 : i32
    %c0_i32_1 = arith.constant 0 : i32
    return %c0_i32, %c0_i32_0 : i32, i32
  }
  func.func @transform_14(%arg0: i32, %arg1: i32) -> (i32, i32) {
    %c0_i32 = arith.constant 0 : i32
    %c0_i32_0 = arith.constant 0 : i32
    %c0_i32_1 = arith.constant 0 : i32
    return %c0_i32, %c0_i32_0 : i32, i32
  }
  func.func @transform_15(%arg0: i32, %arg1: i32) -> (i32, i32) {
    %c0_i32 = arith.constant 0 : i32
    %c0_i32_0 = arith.constant 0 : i32
    %c0_i32_1 = arith.constant 0 : i32
    return %c0_i32, %c0_i32_0 : i32, i32
  }
  func.func @transform_16(%arg0: i32, %arg1: i32) -> (i32, i32) {
    %c0_i32 = arith.constant 0 : i32
    %c0_i32_0 = arith.constant 0 : i32
    %c0_i32_1 = arith.constant 0 : i32
    return %c0_i32, %c0_i32_0 : i32, i32
  }
  func.func @transform_17(%arg0: i32, %arg1: i32) -> (i32, i32) {
    %c0_i32 = arith.constant 0 : i32
    %c0_i32_0 = arith.constant 0 : i32
    %c0_i32_1 = arith.constant 0 : i32
    return %c0_i32, %c0_i32_0 : i32, i32
  }
  func.func @transform_18(%arg0: i32, %arg1: i32) -> (i32, i32) {
    %c0_i32 = arith.constant 0 : i32
    %c0_i32_0 = arith.constant 0 : i32
    %c0_i32_1 = arith.constant 0 : i32
    return %c0_i32, %c0_i32_0 : i32, i32
  }
  func.func @transform_19(%arg0: i32, %arg1: i32) -> (i32, i32) {
    %c0_i32 = arith.constant 0 : i32
    %c0_i32_0 = arith.constant 0 : i32
    %c0_i32_1 = arith.constant 0 : i32
    return %c0_i32, %c0_i32_0 : i32, i32
  }
  func.func @transform_20(%arg0: i32, %arg1: i32) -> (i32, i32, i32) {
    %c0_i32 = arith.constant 0 : i32
    %c0_i32_0 = arith.constant 0 : i32
    return %arg0, %arg1, %c0_i32 : i32, i32, i32
  }
}

</mosaic_0001>

<llo_original>
// kernel: e2e_forward.5
$region0: #{e2e_forward.5}
  #allocation0 [shape = 'u32[]', space=smem, size = 0x4, offset = 0x4, fixed_abs, tag = 'smem constant byte address 0x4 - core index']
  #allocation1 [shape = 'u32[144,128]{1,0:T(1,128)}', space=vmem, size = 0x12000, scoped, tag = 'internal scratch']
  %s0 = inlined_call_operand.vmem [shape: bf16[98,9], index: 0, kind: input, shape index: {}]
  %s1 = inlined_call_operand.vmem [shape: bf16[9,32], index: 1, kind: input, shape index: {}]
  %s2 = inlined_call_operand.vmem [shape: f32[1,32], index: 2, kind: input, shape index: {}]
  %s3 = inlined_call_operand.vmem [shape: bf16[98,32], index: 3, kind: output, shape index: {}]
  %s4 = sld [smem:[#allocation0]]
  $region59: #{e2e_forward.5} parent=0
    _
  %s6 = ssub.s32 1, %s4
  %s7 = scalar_select 0, %s6, %s4
  $region1: #{e2e_forward.5} parent=0
    #allocation2 [shape = 'u8[28672]{0}', space=vmem, size = 0x7000, scoped, tag = 'output window, operand 0, single buffered']
    // Predicated region
    $region2: #{e2e_forward.5} parent=1 // pred_check
      _
    $region3: #{e2e_forward.5} parent=1 // pred_check_branch
      %9 = sbr.rel (0) target = $region5
    $region4: #{e2e_forward.5} parent=1 // pred_region
      _
    $region5: #{e2e_forward.5} parent=1 // pred_fallthru
      _
    // Predicated region
    $region6: #{e2e_forward.5} parent=1 // pred_check
      _
    $region7: #{e2e_forward.5} parent=1 // pred_check_branch
      %11 = sbr.rel (0) target = $region9
    $region8: #{e2e_forward.5} parent=1 // pred_region
      _
    $region9: #{e2e_forward.5} parent=1 // pred_fallthru
      _
    // Predicated region
    $region10: #{e2e_forward.5} parent=1 // pred_check
      _
    $region11: #{e2e_forward.5} parent=1 // pred_check_branch
      %13 = sbr.rel (0) target = $region13
    $region12: #{e2e_forward.5} parent=1 // pred_region
      _
    $region13: #{e2e_forward.5} parent=1 // pred_fallthru
      _
    %v15 = vld [vmem:[%s0] sm:$0xf]
    %v16 = vld [vmem:[%s0 + $0x4] sm:$0xf]
    %v17 = vld [vmem:[%s0 + $0x8] sm:$0xf]
    %v18 = vld [vmem:[%s0 + $0xc] sm:$0xf]
    %v19 = vld [vmem:[%s0 + $0x10] sm:$0xf]
    %v20 = vld [vmem:[%s0 + $0x14] sm:$0xf]
    %v21 = vld [vmem:[%s0 + $0x18] sm:$0xf]
    %v22 = vld [vmem:[%s0 + $0x1c] sm:$0xf]
    %v23 = vld [vmem:[%s0 + $0x20] sm:$0xf]
    %v24 = vld [vmem:[%s0 + $0x24] sm:$0xf]
    %v25 = vld [vmem:[%s0 + $0x28] sm:$0xf]
    %v26 = vld [vmem:[%s0 + $0x2c] sm:$0xf]
    %v27 = vld [vmem:[%s0 + $0x30] sm:$0xf]
    %v28 = vld [vmem:[%s0 + $0x34] sm:$0xf]
    %v29 = vld [vmem:[%s1] sm:$0xf]
    %v30 = vld [vmem:[%s1 + $0x4] sm:$0x1]
    %v31 = vld [vmem:[%s2] sm:$0x1]
    %v33 = vlaneseq
    %v34 = vshrl.u32 %v33, 7
    %v35 = vsub.s32 0, %v34
    %v36 = vrot.slane %v31, %v35
    %v52 = vunpack.c.l.b16 %v15
    %v53 = vunpack.c.l.b16 %v16
    %v54 = vunpack.c.l.b16 %v17
    %v55 = vunpack.c.l.b16 %v18
    %v56 = vunpack.c.l.b16 %v19
    %v57 = vunpack.c.l.b16 %v20
    %v58 = vunpack.c.l.b16 %v21
    %v59 = vunpack.c.l.b16 %v22
    %v60 = vunpack.c.l.b16 %v23
    %v61 = vunpack.c.l.b16 %v24
    %v62 = vunpack.c.l.b16 %v25
    %v63 = vunpack.c.l.b16 %v26
    %v64 = vunpack.c.l.b16 %v27
    %v65 = vunpack.c.l.b16 %v28
    %v66 = vpack.c.b16 %v53, %v52
    %v67 = vpack.c.b16 %v55, %v54
    %v68 = vpack.c.b16 %v57, %v56
    %v69 = vpack.c.b16 %v59, %v58
    %v70 = vpack.c.b16 %v61, %v60
    %v71 = vpack.c.b16 %v63, %v62
    %v72 = vpack.c.b16 %v65, %v64
    %v75 = vunpack.c.l.b16 %v29
    %v76 = vunpack.c.l.b16 %v30
    %v77 = vpack.c.b16 %v76, %v75
    %vm78 = vcmask 72704
    %v80 = vsel %vm78, %v66, 0
    %v83 = vsel %vm78, %v67, 0
    %v86 = vsel %vm78, %v68, 0
    %v89 = vsel %vm78, %v69, 0
    %v92 = vsel %vm78, %v70, 0
    %v95 = vsel %vm78, %v71, 0
    %v98 = vsel %vm78, %v72, 0
    %vm100 = vcmask 1043456
    %vm101 = vcmask 1044480
    %v102 = vsel %vm100, 4294967295, 65535
    %v103 = vsel %vm101, %v102, 0
    %v105 = vand.u32 %v77, %v103
    %107 = vmatprep.subr.bf16.mxu0 0
    %108 = vmatpush1.bf16.msra.mxu0 %v105
    %109 = vmatprep.subr.bf16.mxu0 0
    %110 = vmatpush1.bf16.msra.mxu0 0
    %111 = vmatprep.subr.bf16.mxu0 0
    %112 = vmatpush1.bf16.msra.mxu0 0
    %113 = vmatprep.subr.bf16.mxu0 0
    %114 = vmatpush1.bf16.msra.mxu0 0
    %115 = vmatprep.subr.bf16.mxu0 0
    %116 = vmatpush1.bf16.msra.mxu0 0
    %117 = vmatprep.subr.bf16.mxu0 0
    %118 = vmatpush1.bf16.msra.mxu0 0
    %119 = vmatprep.subr.bf16.mxu0 0
    %120 = vmatpush1.bf16.msra.mxu0 0
    %121 = vmatprep.subr.bf16.mxu0 0
    %122 = vmatpush1.bf16.msra.mxu0 0
    %123 = vmatprep.subr.bf16.mxu0 0
    %124 = vmatpush1.bf16.msra.mxu0 0
    %125 = vmatprep.subr.bf16.mxu0 0
    %126 = vmatpush1.bf16.msra.mxu0 0
    %127 = vmatprep.subr.bf16.mxu0 0
    %128 = vmatpush1.bf16.msra.mxu0 0
    %129 = vmatprep.subr.bf16.mxu0 0
    %130 = vmatpush1.bf16.msra.mxu0 0
    %131 = vmatprep.subr.bf16.mxu0 0
    %132 = vmatpush1.bf16.msra.mxu0 0
    %133 = vmatprep.subr.bf16.mxu0 0
    %134 = vmatpush1.bf16.msra.mxu0 0
    %135 = vmatprep.subr.bf16.mxu0 0
    %136 = vmatpush1.bf16.msra.mxu0 0
    %137 = vmatprep.subr.bf16.mxu0 0
    %138 = vmatpush1.bf16.msra.mxu0 0
    %139 = vmatprep.mubr.bf16.mxu0 0
    %140 = vmatmul.mubr.bf16.gmra.mrb[0].mxu0 %v80
    %v141 = vpop.f32.mrb[0].mxu0
    %v142 = vadd.f32 %v36, %v141
    %v143 = vpop.f32.mrb[0].mxu0
    %v144 = vpop.f32.mrb[0].mxu0
    %v145 = vadd.f32 %v36, %v144
    %v146 = vpop.f32.mrb[0].mxu0
    %147 = vmatprep.mubr.bf16.mxu0 0
    %148 = vmatmul.mubr.bf16.gmra.mrb[0].mxu0 %v83
    %v149 = vpop.f32.mrb[0].mxu0
    %v150 = vadd.f32 %v36, %v149
    %v151 = vpop.f32.mrb[0].mxu0
    %v152 = vpop.f32.mrb[0].mxu0
    %v153 = vadd.f32 %v36, %v152
    %v154 = vpop.f32.mrb[0].mxu0
    %155 = vmatprep.mubr.bf16.mxu0 0
    %156 = vmatmul.mubr.bf16.gmra.mrb[0].mxu0 %v86
    %v157 = vpop.f32.mrb[0].mxu0
    %v158 = vadd.f32 %v36, %v157
    %v159 = vpop.f32.mrb[0].mxu0
    %v160 = vpop.f32.mrb[0].mxu0
    %v161 = vadd.f32 %v36, %v160
    %v162 = vpop.f32.mrb[0].mxu0
    %163 = vmatprep.mubr.bf16.mxu0 0
    %164 = vmatmul.mubr.bf16.gmra.mrb[0].mxu0 %v89
    %v165 = vpop.f32.mrb[0].mxu0
    %v166 = vadd.f32 %v36, %v165
    %v167 = vpop.f32.mrb[0].mxu0
    %v168 = vpop.f32.mrb[0].mxu0
    %v169 = vadd.f32 %v36, %v168
    %v170 = vpop.f32.mrb[0].mxu0
    %171 = vmatprep.mubr.bf16.mxu0 0
    %172 = vmatmul.mubr.bf16.gmra.mrb[0].mxu0 %v92
    %v173 = vpop.f32.mrb[0].mxu0
    %v174 = vadd.f32 %v36, %v173
    %v175 = vpop.f32.mrb[0].mxu0
    %v176 = vpop.f32.mrb[0].mxu0
    %v177 = vadd.f32 %v36, %v176
    %v178 = vpop.f32.mrb[0].mxu0
    %179 = vmatprep.mubr.bf16.mxu0 0
    %180 = vmatmul.mubr.bf16.gmra.mrb[0].mxu0 %v95
    %v181 = vpop.f32.mrb[0].mxu0
    %v182 = vadd.f32 %v36, %v181
    %v183 = vpop.f32.mrb[0].mxu0
    %v184 = vpop.f32.mrb[0].mxu0
    %v185 = vadd.f32 %v36, %v184
    %v186 = vpop.f32.mrb[0].mxu0
    %187 = vmatprep.mubr.bf16.mxu0 0
    %188 = vmatmul.mubr.bf16.gmra.mrb[0].mxu0 %v98
    %v189 = vpop.f32.mrb[0].mxu0
    %v190 = vadd.f32 %v36, %v189
    %v191 = vpop.f32.mrb[0].mxu0
    %v192 = vpop.f32.mrb[0].mxu0
    %v193 = vadd.f32 %v36, %v192
    %v194 = vpop.f32.mrb[0].mxu0
    %195 = vdwg.mxu0
    %v196 = vmax.f32 %v142, 0.0
    %v197 = vmax.f32 %v145, 0.0
    %v198 = vmax.f32 %v150, 0.0
    %v199 = vmax.f32 %v153, 0.0
    %v200 = vmax.f32 %v158, 0.0
    %v201 = vmax.f32 %v161, 0.0
    %v202 = vmax.f32 %v166, 0.0
    %v203 = vmax.f32 %v169, 0.0
    %v204 = vmax.f32 %v174, 0.0
    %v205 = vmax.f32 %v177, 0.0
    %v206 = vmax.f32 %v182, 0.0
    %v207 = vmax.f32 %v185, 0.0
    %v208 = vmax.f32 %v190, 0.0
    %v209 = vmax.f32 %v193, 0.0
    %v210 = vpack.c.bf16 %v197, %v196
    %v211 = vpack.c.bf16 %v199, %v198
    %v212 = vpack.c.bf16 %v201, %v200
    %v213 = vpack.c.bf16 %v203, %v202
    %v214 = vpack.c.bf16 %v205, %v204
    %v215 = vpack.c.bf16 %v207, %v206
    %v216 = vpack.c.bf16 %v209, %v208
    %v224 = vunpack.c.l.b16 %v210
    %v225 = vunpack.c.h.b16 %v210
    %v226 = vunpack.c.l.b16 %v211
    %v227 = vunpack.c.h.b16 %v211
    %v228 = vunpack.c.l.b16 %v212
    %v229 = vunpack.c.h.b16 %v212
    %v230 = vunpack.c.l.b16 %v213
    %v231 = vunpack.c.h.b16 %v213
    %v232 = vunpack.c.l.b16 %v214
    %v233 = vunpack.c.h.b16 %v214
    %v234 = vunpack.c.l.b16 %v215
    %v235 = vunpack.c.h.b16 %v215
    %v236 = vunpack.c.l.b16 %v216
    %v237 = vunpack.c.h.b16 %v216
    %v238 = vpack.c.b16 %v224, %v224
    %v239 = vpack.c.b16 %v225, %v225
    %v240 = vpack.c.b16 %v226, %v226
    %v241 = vpack.c.b16 %v227, %v227
    %v242 = vpack.c.b16 %v228, %v228
    %v243 = vpack.c.b16 %v229, %v229
    %v244 = vpack.c.b16 %v230, %v230
    %v245 = vpack.c.b16 %v231, %v231
    %v246 = vpack.c.b16 %v232, %v232
    %v247 = vpack.c.b16 %v233, %v233
    %v248 = vpack.c.b16 %v234, %v234
    %v249 = vpack.c.b16 %v235, %v235
    %v250 = vpack.c.b16 %v236, %v236
    %v251 = vpack.c.b16 %v237, %v237
    %vm266 = vcmask 257024
    %267 = vst.msk [vmem:[#allocation2] sm:$0xf] %vm266, %v238
    %268 = vst.msk [vmem:[#allocation2 + $0x4] sm:$0xf] %vm266, %v239
    %269 = vst.msk [vmem:[#allocation2 + $0x8] sm:$0xf] %vm266, %v240
    %270 = vst.msk [vmem:[#allocation2 + $0xc] sm:$0xf] %vm266, %v241
    %271 = vst.msk [vmem:[#allocation2 + $0x10] sm:$0xf] %vm266, %v242
    %272 = vst.msk [vmem:[#allocation2 + $0x14] sm:$0xf] %vm266, %v243
    %273 = vst.msk [vmem:[#allocation2 + $0x18] sm:$0xf] %vm266, %v244
    %274 = vst.msk [vmem:[#allocation2 + $0x1c] sm:$0xf] %vm266, %v245
    %275 = vst.msk [vmem:[#allocation2 + $0x20] sm:$0xf] %vm266, %v246
    %276 = vst.msk [vmem:[#allocation2 + $0x24] sm:$0xf] %vm266, %v247
    %277 = vst.msk [vmem:[#allocation2 + $0x28] sm:$0xf] %vm266, %v248
    %278 = vst.msk [vmem:[#allocation2 + $0x2c] sm:$0xf] %vm266, %v249
    %279 = vst.msk [vmem:[#allocation2 + $0x30] sm:$0xf] %vm266, %v250
    %280 = vst.msk [vmem:[#allocation2 + $0x34] sm:$0xf] %vm266, %v251
    // Predicated region
    $region14: #{e2e_forward.5} parent=1 // pred_check
      _
    $region15: #{e2e_forward.5} parent=1 // pred_check_branch
      %282 = sbr.rel (0) target = $region17
    $region16: #{e2e_forward.5} parent=1 // pred_region
      // Predicated region
      $region18: #{e2e_forward.5} parent=16 // pred_check
        _
      $region19: #{e2e_forward.5} parent=16 // pred_check_branch
        %284 = sbr.rel (0) target = $region21
      $region20: #{e2e_forward.5} parent=16 // pred_region
        // Predicated region
        $region22: #{e2e_forward.5} parent=20 // pred_check
          _
        $region23: #{e2e_forward.5} parent=20 // pred_check_branch
          %286 = sbr.rel target = $region25
        $region24: #{e2e_forward.5} parent=20 // pred_region
          // Predicated region
          $region37: #{e2e_forward.5} parent=24 // pred_check
            _
          $region38: #{e2e_forward.5} parent=24 // pred_check_branch
            %325 = sbr.rel (0) target = $region40
          $region39: #{e2e_forward.5} parent=24 // pred_region
            loop: start=0, step=1, limit=1
            $region41: #{e2e_forward.5} parent=39 // loop_pre_header
              _
            $region42: #{e2e_forward.5} parent=39 // loop_header
              %s327 = sphi 0, %s331
              %p328 = scmp.ge.s32.totalorder %s327, 1
              %s332 = sphi [#allocation2], [#allocation2]
              %s333 = sphi %s3, %s3
            $region43: #{e2e_forward.5} parent=39 // loop_header_branch
              %330 = sbr.rel (%p328) target = $region47
            $region44: #{e2e_forward.5} parent=39 // loop_body
              _
            $region45: #{e2e_forward.5} parent=39 // loop_footer
              %s331 = sadd.s32 1, %s327
            $region46: #{e2e_forward.5} parent=39 // loop_footer_branch
              %326 = sbr.rel target = $region42
            $region47: #{e2e_forward.5} parent=39 // loop_exit
              _
            loop: start=0, step=1, limit=1
            $region48: #{e2e_forward.5} parent=39 // loop_pre_header
              _
            $region49: #{e2e_forward.5} parent=39 // loop_header
              %s336 = sphi 0, %s340
              %p337 = scmp.ge.s32.totalorder %s336, 1
              %s341 = sphi [#allocation2], [#allocation2]
              %s342 = sphi %s3, %s3
            $region50: #{e2e_forward.5} parent=39 // loop_header_branch
              %339 = sbr.rel (%p337) target = $region54
            $region51: #{e2e_forward.5} parent=39 // loop_body
              %v343 = vld [vmem:[%s341] sm:$0xf]
              %344 = vst [vmem:[%s342] sm:$0xf] %v343
              %v345 = vld [vmem:[%s341 + $0x4] sm:$0xf]
              %346 = vst [vmem:[%s342 + $0x4] sm:$0xf] %v345
              %v347 = vld [vmem:[%s341 + $0x8] sm:$0xf]
              %348 = vst [vmem:[%s342 + $0x8] sm:$0xf] %v347
              %v349 = vld [vmem:[%s341 + $0xc] sm:$0xf]
              %350 = vst [vmem:[%s342 + $0xc] sm:$0xf] %v349
              %v351 = vld [vmem:[%s341 + $0x10] sm:$0xf]
              %352 = vst [vmem:[%s342 + $0x10] sm:$0xf] %v351
              %v353 = vld [vmem:[%s341 + $0x14] sm:$0xf]
              %354 = vst [vmem:[%s342 + $0x14] sm:$0xf] %v353
              %v355 = vld [vmem:[%s341 + $0x18] sm:$0xf]
              %356 = vst [vmem:[%s342 + $0x18] sm:$0xf] %v355
              %v357 = vld [vmem:[%s341 + $0x1c] sm:$0xf]
              %358 = vst [vmem:[%s342 + $0x1c] sm:$0xf] %v357
              %v359 = vld [vmem:[%s341 + $0x20] sm:$0xf]
              %360 = vst [vmem:[%s342 + $0x20] sm:$0xf] %v359
              %v361 = vld [vmem:[%s341 + $0x24] sm:$0xf]
              %362 = vst [vmem:[%s342 + $0x24] sm:$0xf] %v361
              %v363 = vld [vmem:[%s341 + $0x28] sm:$0xf]
              %364 = vst [vmem:[%s342 + $0x28] sm:$0xf] %v363
              %v365 = vld [vmem:[%s341 + $0x2c] sm:$0xf]
              %366 = vst [vmem:[%s342 + $0x2c] sm:$0xf] %v365
              %v367 = vld [vmem:[%s341 + $0x30] sm:$0xf]
              %368 = vst [vmem:[%s342 + $0x30] sm:$0xf] %v367
            $region52: #{e2e_forward.5} parent=39 // loop_footer
              %s340 = sadd.s32 1, %s336
            $region53: #{e2e_forward.5} parent=39 // loop_footer_branch
              %335 = sbr.rel target = $region49
            $region54: #{e2e_forward.5} parent=39 // loop_exit
              _
          $region40: #{e2e_forward.5} parent=24 // pred_fallthru
            _
        $region25: #{e2e_forward.5} parent=20 // pred_fallthru
          _
        // Predicated region
        $region26: #{e2e_forward.5} parent=20 // pred_check
          _
        $region27: #{e2e_forward.5} parent=20 // pred_check_branch
          %288 = sbr.rel (0) target = $region29
        $region28: #{e2e_forward.5} parent=20 // pred_region
          loop: start=0, step=1, limit=1
          $region30: #{e2e_forward.5} parent=28 // loop_pre_header
            _
          $region31: #{e2e_forward.5} parent=28 // loop_header
            %s291 = sphi 0, %s295
            %p292 = scmp.ge.s32.totalorder %s291, 1
            %s296 = sphi [#allocation2], [#allocation2]
            %s297 = sphi %s3, %s3
          $region32: #{e2e_forward.5} parent=28 // loop_header_branch
            %294 = sbr.rel (%p292) target = $region36
          $region33: #{e2e_forward.5} parent=28 // loop_body
            %v298 = vld [vmem:[%s296] sm:$0xf]
            %299 = vst [vmem:[%s297] sm:$0xf] %v298
            %v300 = vld [vmem:[%s296 + $0x4] sm:$0xf]
            %301 = vst [vmem:[%s297 + $0x4] sm:$0xf] %v300
            %v302 = vld [vmem:[%s296 + $0x8] sm:$0xf]
            %303 = vst [vmem:[%s297 + $0x8] sm:$0xf] %v302
            %v304 = vld [vmem:[%s296 + $0xc] sm:$0xf]
            %305 = vst [vmem:[%s297 + $0xc] sm:$0xf] %v304
            %v306 = vld [vmem:[%s296 + $0x10] sm:$0xf]
            %307 = vst [vmem:[%s297 + $0x10] sm:$0xf] %v306
            %v308 = vld [vmem:[%s296 + $0x14] sm:$0xf]
            %309 = vst [vmem:[%s297 + $0x14] sm:$0xf] %v308
            %v310 = vld [vmem:[%s296 + $0x18] sm:$0xf]
            %311 = vst [vmem:[%s297 + $0x18] sm:$0xf] %v310
            %v312 = vld [vmem:[%s296 + $0x1c] sm:$0xf]
            %313 = vst [vmem:[%s297 + $0x1c] sm:$0xf] %v312
            %v314 = vld [vmem:[%s296 + $0x20] sm:$0xf]
            %315 = vst [vmem:[%s297 + $0x20] sm:$0xf] %v314
            %v316 = vld [vmem:[%s296 + $0x24] sm:$0xf]
            %317 = vst [vmem:[%s297 + $0x24] sm:$0xf] %v316
            %v318 = vld [vmem:[%s296 + $0x28] sm:$0xf]
            %319 = vst [vmem:[%s297 + $0x28] sm:$0xf] %v318
            %v320 = vld [vmem:[%s296 + $0x2c] sm:$0xf]
            %321 = vst [vmem:[%s297 + $0x2c] sm:$0xf] %v320
            %v322 = vld [vmem:[%s296 + $0x30] sm:$0xf]
            %323 = vst [vmem:[%s297 + $0x30] sm:$0xf] %v322
          $region34: #{e2e_forward.5} parent=28 // loop_footer
            %s295 = sadd.s32 1, %s291
          $region35: #{e2e_forward.5} parent=28 // loop_footer_branch
            %290 = sbr.rel target = $region31
          $region36: #{e2e_forward.5} parent=28 // loop_exit
            _
        $region29: #{e2e_forward.5} parent=20 // pred_fallthru
          _
      $region21: #{e2e_forward.5} parent=16 // pred_fallthru
        _
      %369 = vnop
    $region17: #{e2e_forward.5} parent=1 // pred_fallthru
      _
    // Predicated region
    $region55: #{e2e_forward.5} parent=1 // pred_check
      _
    $region56: #{e2e_forward.5} parent=1 // pred_check_branch
      %371 = sbr.rel (0) target = $region58
    $region57: #{e2e_forward.5} parent=1 // pred_region
      _
    $region58: #{e2e_forward.5} parent=1 // pred_fallthru
      _

// kernel: e2e_forward.6
$region0: #{e2e_forward.6}
  #allocation0 [shape = 'u32[]', space=smem, size = 0x4, offset = 0x4, fixed_abs, tag = 'smem constant byte address 0x4 - core index']
  #allocation1 [shape = 'u32[144,128]{1,0:T(1,128)}', space=vmem, size = 0x12000, scoped, tag = 'internal scratch']
  %s0 = inlined_call_operand.vmem [shape: bf16[18,288], index: 0, kind: input, shape index: {}]
  %s1 = inlined_call_operand.vmem [shape: bf16[288,32], index: 1, kind: input, shape index: {}]
  %s2 = inlined_call_operand.vmem [shape: f32[1,32], index: 2, kind: input, shape index: {}]
  %s3 = inlined_call_operand.vmem [shape: bf16[18,32], index: 3, kind: output, shape index: {}]
  %s4 = sld [smem:[#allocation0]]
  $region59: #{e2e_forward.6} parent=0
    _
  %s6 = ssub.s32 1, %s4
  %s7 = scalar_select 0, %s6, %s4
  $region1: #{e2e_forward.6} parent=0
    #allocation2 [shape = 'u8[8192]{0}', space=vmem, size = 0x2000, scoped, tag = 'output window, operand 0, single buffered']
    // Predicated region
    $region2: #{e2e_forward.6} parent=1 // pred_check
      _
    $region3: #{e2e_forward.6} parent=1 // pred_check_branch
      %9 = sbr.rel (0) target = $region5
    $region4: #{e2e_forward.6} parent=1 // pred_region
      _
    $region5: #{e2e_forward.6} parent=1 // pred_fallthru
      _
    // Predicated region
    $region6: #{e2e_forward.6} parent=1 // pred_check
      _
    $region7: #{e2e_forward.6} parent=1 // pred_check_branch
      %11 = sbr.rel (0) target = $region9
    $region8: #{e2e_forward.6} parent=1 // pred_region
      _
    $region9: #{e2e_forward.6} parent=1 // pred_fallthru
      _
    // Predicated region
    $region10: #{e2e_forward.6} parent=1 // pred_check
      _
    $region11: #{e2e_forward.6} parent=1 // pred_check_branch
      %13 = sbr.rel (0) target = $region13
    $region12: #{e2e_forward.6} parent=1 // pred_region
      _
    $region13: #{e2e_forward.6} parent=1 // pred_fallthru
      _
    %v15 = vld [vmem:[%s0] sm:$0xff]
    %v16 = vld [vmem:[%s0 + $0x8] sm:$0xf]
    %v17 = vld [vmem:[%s0 + $0xc] sm:$0xff]
    %v18 = vld [vmem:[%s0 + $0x14] sm:$0xf]
    %v19 = vld [vmem:[%s0 + $0x18] sm:$0xff]
    %v20 = vld [vmem:[%s0 + $0x20] sm:$0xf]
    %v21 = vld [vmem:[%s0 + $0x24] sm:$0xff]
    %v22 = vld [vmem:[%s0 + $0x2c] sm:$0xf]
    %v23 = vld [vmem:[%s1] sm:$0xf]
    %v24 = vld [vmem:[%s1 + $0x4] sm:$0xf]
    %v25 = vld [vmem:[%s1 + $0x8] sm:$0xf]
    %v26 = vld [vmem:[%s1 + $0xc] sm:$0xf]
    %v27 = vld [vmem:[%s1 + $0x10] sm:$0xf]
    %v28 = vld [vmem:[%s1 + $0x14] sm:$0xf]
    %v29 = vld [vmem:[%s1 + $0x18] sm:$0xf]
    %v30 = vld [vmem:[%s1 + $0x1c] sm:$0xf]
    %v31 = vld [vmem:[%s1 + $0x20] sm:$0xf]
    %v32 = vld [vmem:[%s1 + $0x24] sm:$0xf]
    %v33 = vld [vmem:[%s1 + $0x28] sm:$0xf]
    %v34 = vld [vmem:[%s1 + $0x2c] sm:$0xf]
    %v35 = vld [vmem:[%s1 + $0x30] sm:$0xf]
    %v36 = vld [vmem:[%s1 + $0x34] sm:$0xf]
    %v37 = vld [vmem:[%s1 + $0x38] sm:$0xf]
    %v38 = vld [vmem:[%s1 + $0x3c] sm:$0xf]
    %v39 = vld [vmem:[%s1 + $0x40] sm:$0xf]
    %v40 = vld [vmem:[%s1 + $0x44] sm:$0xf]
    %v41 = vld [vmem:[%s1 + $0x48] sm:$0xf]
    %v42 = vld [vmem:[%s1 + $0x4c] sm:$0xf]
    %v43 = vld [vmem:[%s1 + $0x50] sm:$0xf]
    %v44 = vld [vmem:[%s1 + $0x54] sm:$0xf]
    %v45 = vld [vmem:[%s1 + $0x58] sm:$0xf]
    %v46 = vld [vmem:[%s1 + $0x5c] sm:$0xf]
    %v47 = vld [vmem:[%s1 + $0x60] sm:$0xf]
    %v48 = vld [vmem:[%s1 + $0x64] sm:$0xf]
    %v49 = vld [vmem:[%s1 + $0x68] sm:$0xf]
    %v50 = vld [vmem:[%s1 + $0x6c] sm:$0xf]
    %v51 = vld [vmem:[%s1 + $0x70] sm:$0xf]
    %v52 = vld [vmem:[%s1 + $0x74] sm:$0xf]
    %v53 = vld [vmem:[%s1 + $0x78] sm:$0xf]
    %v54 = vld [vmem:[%s1 + $0x7c] sm:$0xf]
    %v55 = vld [vmem:[%s1 + $0x80] sm:$0xf]
    %v56 = vld [vmem:[%s1 + $0x84] sm:$0xf]
    %v57 = vld [vmem:[%s1 + $0x88] sm:$0xf]
    %v58 = vld [vmem:[%s1 + $0x8c] sm:$0xf]
    %v59 = vld [vmem:[%s2] sm:$0x1]
    %v61 = vlaneseq
    %v62 = vshrl.u32 %v61, 7
    %v63 = vsub.s32 0, %v62
    %v64 = vrot.slane %v59, %v63
    %v74 = vunpack.c.l.b16 %v15
    %v75 = vunpack.c.h.b16 %v15
    %v76 = vunpack.c.l.b16 %v16
    %v77 = vunpack.c.l.b16 %v17
    %v78 = vunpack.c.h.b16 %v17
    %v79 = vunpack.c.l.b16 %v18
    %v80 = vunpack.c.l.b16 %v19
    %v81 = vunpack.c.h.b16 %v19
    %v82 = vunpack.c.l.b16 %v20
    %v83 = vunpack.c.l.b16 %v21
    %v84 = vunpack.c.h.b16 %v21
    %v85 = vunpack.c.l.b16 %v22
    %v86 = vpack.c.b16 %v77, %v74
    %v87 = vpack.c.b16 %v78, %v75
    %v88 = vpack.c.b16 %v79, %v76
    %v89 = vpack.c.b16 %v83, %v80
    %v90 = vpack.c.b16 %v84, %v81
    %v91 = vpack.c.b16 %v85, %v82
    %v132 = vunpack.c.l.b16 %v23
    %v133 = vunpack.c.l.b16 %v24
    %v134 = vunpack.c.l.b16 %v25
    %v135 = vunpack.c.l.b16 %v26
    %v136 = vunpack.c.l.b16 %v27
    %v137 = vunpack.c.l.b16 %v28
    %v138 = vunpack.c.l.b16 %v29
    %v139 = vunpack.c.l.b16 %v30
    %v140 = vunpack.c.l.b16 %v31
    %v141 = vunpack.c.l.b16 %v32
    %v142 = vunpack.c.l.b16 %v33
    %v143 = vunpack.c.l.b16 %v34
    %v144 = vunpack.c.l.b16 %v35
    %v145 = vunpack.c.l.b16 %v36
    %v146 = vunpack.c.l.b16 %v37
    %v147 = vunpack.c.l.b16 %v38
    %v148 = vunpack.c.l.b16 %v39
    %v149 = vunpack.c.l.b16 %v40
    %v150 = vunpack.c.l.b16 %v41
    %v151 = vunpack.c.l.b16 %v42
    %v152 = vunpack.c.l.b16 %v43
    %v153 = vunpack.c.l.b16 %v44
    %v154 = vunpack.c.l.b16 %v45
    %v155 = vunpack.c.l.b16 %v46
    %v156 = vunpack.c.l.b16 %v47
    %v157 = vunpack.c.l.b16 %v48
    %v158 = vunpack.c.l.b16 %v49
    %v159 = vunpack.c.l.b16 %v50
    %v160 = vunpack.c.l.b16 %v51
    %v161 = vunpack.c.l.b16 %v52
    %v162 = vunpack.c.l.b16 %v53
    %v163 = vunpack.c.l.b16 %v54
    %v164 = vunpack.c.l.b16 %v55
    %v165 = vunpack.c.l.b16 %v56
    %v166 = vunpack.c.l.b16 %v57
    %v167 = vunpack.c.l.b16 %v58
    %v168 = vpack.c.b16 %v133, %v132
    %v169 = vpack.c.b16 %v135, %v134
    %v170 = vpack.c.b16 %v137, %v136
    %v171 = vpack.c.b16 %v139, %v138
    %v172 = vpack.c.b16 %v141, %v140
    %v173 = vpack.c.b16 %v143, %v142
    %v174 = vpack.c.b16 %v145, %v144
    %v175 = vpack.c.b16 %v147, %v146
    %v176 = vpack.c.b16 %v149, %v148
    %v177 = vpack.c.b16 %v151, %v150
    %v178 = vpack.c.b16 %v153, %v152
    %v179 = vpack.c.b16 %v155, %v154
    %v180 = vpack.c.b16 %v157, %v156
    %v181 = vpack.c.b16 %v159, %v158
    %v182 = vpack.c.b16 %v161, %v160
    %v183 = vpack.c.b16 %v163, %v162
    %v184 = vpack.c.b16 %v165, %v164
    %v185 = vpack.c.b16 %v167, %v166
    %vm204 = vcmask 261120
    %v206 = vsel %vm204, %v88, 0
    %v209 = vsel %vm204, %v91, 0
    %211 = vmatprep.subr.bf16.mxu0 0
    %212 = vmatpush1.bf16.msra.mxu0 %v168
    %213 = vmatprep.subr.bf16.mxu0 0
    %214 = vmatpush1.bf16.msra.mxu0 %v169
    %215 = vmatprep.subr.bf16.mxu0 0
    %216 = vmatpush1.bf16.msra.mxu0 %v170
    %217 = vmatprep.subr.bf16.mxu0 0
    %218 = vmatpush1.bf16.msra.mxu0 %v171
    %219 = vmatprep.subr.bf16.mxu0 0
    %220 = vmatpush1.bf16.msra.mxu0 %v172
    %221 = vmatprep.subr.bf16.mxu0 0
    %222 = vmatpush1.bf16.msra.mxu0 %v173
    %223 = vmatprep.subr.bf16.mxu0 0
    %224 = vmatpush1.bf16.msra.mxu0 %v174
    %225 = vmatprep.subr.bf16.mxu0 0
    %226 = vmatpush1.bf16.msra.mxu0 %v175
    %227 = vmatprep.subr.bf16.mxu0 0
    %228 = vmatpush1.bf16.msra.mxu0 %v176
    %229 = vmatprep.subr.bf16.mxu0 0
    %230 = vmatpush1.bf16.msra.mxu0 %v177
    %231 = vmatprep.subr.bf16.mxu0 0
    %232 = vmatpush1.bf16.msra.mxu0 %v178
    %233 = vmatprep.subr.bf16.mxu0 0
    %234 = vmatpush1.bf16.msra.mxu0 %v179
    %235 = vmatprep.subr.bf16.mxu0 0
    %236 = vmatpush1.bf16.msra.mxu0 %v180
    %237 = vmatprep.subr.bf16.mxu0 0
    %238 = vmatpush1.bf16.msra.mxu0 %v181
    %239 = vmatprep.subr.bf16.mxu0 0
    %240 = vmatpush1.bf16.msra.mxu0 %v182
    %241 = vmatprep.subr.bf16.mxu0 0
    %242 = vmatpush1.bf16.msra.mxu0 %v183
    %243 = vmatprep.mubr.bf16.mxu0 %v87
    %244 = vmatmul.mubr.bf16.gmra.mrb[0].mxu0 %v86
    %v245 = vpop.f32.mrb[0].mxu0
    %v246 = vadd.f32 %v64, %v245
    %v247 = vpop.f32.mrb[0].mxu0
    %v248 = vpop.f32.mrb[0].mxu0
    %v249 = vadd.f32 %v64, %v248
    %v250 = vpop.f32.mrb[0].mxu0
    %251 = vmatprep.mubr.bf16.mxu0 %v90
    %252 = vmatmul.mubr.bf16.gmra.mrb[0].mxu0 %v89
    %v253 = vpop.f32.mrb[0].mxu0
    %v254 = vadd.f32 %v64, %v253
    %v255 = vpop.f32.mrb[0].mxu0
    %v256 = vpop.f32.mrb[0].mxu0
    %v257 = vadd.f32 %v64, %v256
    %v258 = vpop.f32.mrb[0].mxu0
    %259 = vdwg.mxu0
    %260 = vmatprep.subr.bf16.mxu0 0
    %261 = vmatpush1.bf16.msra.mxu0 %v184
    %262 = vmatprep.subr.bf16.mxu0 0
    %263 = vmatpush1.bf16.msra.mxu0 %v185
    %264 = vmatprep.subr.bf16.mxu0 0
    %265 = vmatpush1.bf16.msra.mxu0 0
    %266 = vmatprep.subr.bf16.mxu0 0
    %267 = vmatpush1.bf16.msra.mxu0 0
    %268 = vmatprep.subr.bf16.mxu0 0
    %269 = vmatpush1.bf16.msra.mxu0 0
    %270 = vmatprep.subr.bf16.mxu0 0
    %271 = vmatpush1.bf16.msra.mxu0 0
    %272 = vmatprep.subr.bf16.mxu0 0
    %273 = vmatpush1.bf16.msra.mxu0 0
    %274 = vmatprep.subr.bf16.mxu0 0
    %275 = vmatpush1.bf16.msra.mxu0 0
    %276 = vmatprep.subr.bf16.mxu0 0
    %277 = vmatpush1.bf16.msra.mxu0 0
    %278 = vmatprep.subr.bf16.mxu0 0
    %279 = vmatpush1.bf16.msra.mxu0 0
    %280 = vmatprep.subr.bf16.mxu0 0
    %281 = vmatpush1.bf16.msra.mxu0 0
    %282 = vmatprep.subr.bf16.mxu0 0
    %283 = vmatpush1.bf16.msra.mxu0 0
    %284 = vmatprep.subr.bf16.mxu0 0
    %285 = vmatpush1.bf16.msra.mxu0 0
    %286 = vmatprep.subr.bf16.mxu0 0
    %287 = vmatpush1.bf16.msra.mxu0 0
    %288 = vmatprep.subr.bf16.mxu0 0
    %289 = vmatpush1.bf16.msra.mxu0 0
    %290 = vmatprep.subr.bf16.mxu0 0
    %291 = vmatpush1.bf16.msra.mxu0 0
    %292 = vmatprep.mubr.bf16.mxu0 0
    %293 = vmatmul.mubr.bf16.gmra.mrb[0].mxu0 %v206
    %v294 = vpop.f32.mrb[0].mxu0
    %v295 = vadd.f32 %v246, %v294
    %v296 = vpop.f32.mrb[0].mxu0
    %v297 = vpop.f32.mrb[0].mxu0
    %v298 = vadd.f32 %v249, %v297
    %v299 = vpop.f32.mrb[0].mxu0
    %300 = vmatprep.mubr.bf16.mxu0 0
    %301 = vmatmul.mubr.bf16.gmra.mrb[0].mxu0 %v209
    %v302 = vpop.f32.mrb[0].mxu0
    %v303 = vadd.f32 %v254, %v302
    %v304 = vpop.f32.mrb[0].mxu0
    %v305 = vpop.f32.mrb[0].mxu0
    %v306 = vadd.f32 %v257, %v305
    %v307 = vpop.f32.mrb[0].mxu0
    %308 = vdwg.mxu0
    %v309 = vmax.f32 %v295, 0.0
    %v310 = vmax.f32 %v298, 0.0
    %v311 = vmax.f32 %v303, 0.0
    %v312 = vmax.f32 %v306, 0.0
    %v313 = vpack.c.bf16 %v310, %v309
    %v314 = vpack.c.bf16 %v312, %v311
    %v317 = vunpack.c.l.b16 %v313
    %v318 = vunpack.c.h.b16 %v313
    %v319 = vunpack.c.l.b16 %v314
    %v320 = vunpack.c.h.b16 %v314
    %v321 = vpack.c.b16 %v317, %v317
    %v322 = vpack.c.b16 %v318, %v318
    %v323 = vpack.c.b16 %v319, %v319
    %v324 = vpack.c.b16 %v320, %v320
    %vm329 = vcmask 257024
    %330 = vst.msk [vmem:[#allocation2] sm:$0xf] %vm329, %v321
    %331 = vst.msk [vmem:[#allocation2 + $0x4] sm:$0xf] %vm329, %v322
    %332 = vst.msk [vmem:[#allocation2 + $0x8] sm:$0xf] %vm329, %v323
    %333 = vst.msk [vmem:[#allocation2 + $0xc] sm:$0xf] %vm329, %v324
    // Predicated region
    $region14: #{e2e_forward.6} parent=1 // pred_check
      _
    $region15: #{e2e_forward.6} parent=1 // pred_check_branch
      %335 = sbr.rel (0) target = $region17
    $region16: #{e2e_forward.6} parent=1 // pred_region
      // Predicated region
      $region18: #{e2e_forward.6} parent=16 // pred_check
        _
      $region19: #{e2e_forward.6} parent=16 // pred_check_branch
        %337 = sbr.rel (0) target = $region21
      $region20: #{e2e_forward.6} parent=16 // pred_region
        // Predicated region
        $region22: #{e2e_forward.6} parent=20 // pred_check
          _
        $region23: #{e2e_forward.6} parent=20 // pred_check_branch
          %339 = sbr.rel target = $region25
        $region24: #{e2e_forward.6} parent=20 // pred_region
          // Predicated region
          $region37: #{e2e_forward.6} parent=24 // pred_check
            _
          $region38: #{e2e_forward.6} parent=24 // pred_check_branch
            %358 = sbr.rel (0) target = $region40
          $region39: #{e2e_forward.6} parent=24 // pred_region
            loop: start=0, step=1, limit=1
            $region41: #{e2e_forward.6} parent=39 // loop_pre_header
              _
            $region42: #{e2e_forward.6} parent=39 // loop_header
              %s360 = sphi 0, %s364
              %p361 = scmp.ge.s32.totalorder %s360, 1
              %s365 = sphi [#allocation2], [#allocation2]
              %s366 = sphi %s3, %s3
            $region43: #{e2e_forward.6} parent=39 // loop_header_branch
              %363 = sbr.rel (%p361) target = $region47
            $region44: #{e2e_forward.6} parent=39 // loop_body
              _
            $region45: #{e2e_forward.6} parent=39 // loop_footer
              %s364 = sadd.s32 1, %s360
            $region46: #{e2e_forward.6} parent=39 // loop_footer_branch
              %359 = sbr.rel target = $region42
            $region47: #{e2e_forward.6} parent=39 // loop_exit
              _
            loop: start=0, step=1, limit=1
            $region48: #{e2e_forward.6} parent=39 // loop_pre_header
              _
            $region49: #{e2e_forward.6} parent=39 // loop_header
              %s369 = sphi 0, %s373
              %p370 = scmp.ge.s32.totalorder %s369, 1
              %s374 = sphi [#allocation2], [#allocation2]
              %s375 = sphi %s3, %s3
            $region50: #{e2e_forward.6} parent=39 // loop_header_branch
              %372 = sbr.rel (%p370) target = $region54
            $region51: #{e2e_forward.6} parent=39 // loop_body
              %v376 = vld [vmem:[%s374] sm:$0xf]
              %377 = vst [vmem:[%s375] sm:$0xf] %v376
              %v378 = vld [vmem:[%s374 + $0x4] sm:$0xf]
              %379 = vst [vmem:[%s375 + $0x4] sm:$0xf] %v378
              %v380 = vld [vmem:[%s374 + $0x8] sm:$0xf]
              %381 = vst [vmem:[%s375 + $0x8] sm:$0xf] %v380
            $region52: #{e2e_forward.6} parent=39 // loop_footer
              %s373 = sadd.s32 1, %s369
            $region53: #{e2e_forward.6} parent=39 // loop_footer_branch
              %368 = sbr.rel target = $region49
            $region54: #{e2e_forward.6} parent=39 // loop_exit
              _
          $region40: #{e2e_forward.6} parent=24 // pred_fallthru
            _
        $region25: #{e2e_forward.6} parent=20 // pred_fallthru
          _
        // Predicated region
        $region26: #{e2e_forward.6} parent=20 // pred_check
          _
        $region27: #{e2e_forward.6} parent=20 // pred_check_branch
          %341 = sbr.rel (0) target = $region29
        $region28: #{e2e_forward.6} parent=20 // pred_region
          loop: start=0, step=1, limit=1
          $region30: #{e2e_forward.6} parent=28 // loop_pre_header
            _
          $region31: #{e2e_forward.6} parent=28 // loop_header
            %s344 = sphi 0, %s348
            %p345 = scmp.ge.s32.totalorder %s344, 1
            %s349 = sphi [#allocation2], [#allocation2]
            %s350 = sphi %s3, %s3
          $region32: #{e2e_forward.6} parent=28 // loop_header_branch
            %347 = sbr.rel (%p345) target = $region36
          $region33: #{e2e_forward.6} parent=28 // loop_body
            %v351 = vld [vmem:[%s349] sm:$0xf]
            %352 = vst [vmem:[%s350] sm:$0xf] %v351
            %v353 = vld [vmem:[%s349 + $0x4] sm:$0xf]
            %354 = vst [vmem:[%s350 + $0x4] sm:$0xf] %v353
            %v355 = vld [vmem:[%s349 + $0x8] sm:$0xf]
            %356 = vst [vmem:[%s350 + $0x8] sm:$0xf] %v355
          $region34: #{e2e_forward.6} parent=28 // loop_footer
            %s348 = sadd.s32 1, %s344
          $region35: #{e2e_forward.6} parent=28 // loop_footer_branch
            %343 = sbr.rel target = $region31
          $region36: #{e2e_forward.6} parent=28 // loop_exit
            _
        $region29: #{e2e_forward.6} parent=20 // pred_fallthru
          _
      $region21: #{e2e_forward.6} parent=16 // pred_fallthru
        _
      %382 = vnop
    $region17: #{e2e_forward.6} parent=1 // pred_fallthru
      _
    // Predicated region
    $region55: #{e2e_forward.6} parent=1 // pred_check
      _
    $region56: #{e2e_forward.6} parent=1 // pred_check_branch
      %384 = sbr.rel (0) target = $region58
    $region57: #{e2e_forward.6} parent=1 // pred_region
      _
    $region58: #{e2e_forward.6} parent=1 // pred_fallthru
      _

// kernel: e2e_forward.7
$region0: #{e2e_forward.7}
  #allocation0 [shape = 'u32[]', space=smem, size = 0x4, offset = 0x4, fixed_abs, tag = 'smem constant byte address 0x4 - core index']
  #allocation1 [shape = 'u32[144,128]{1,0:T(1,128)}', space=vmem, size = 0x12000, scoped, tag = 'internal scratch']
  %s0 = inlined_call_operand.vmem [shape: bf16[2,3,96], index: 0, kind: input, shape index: {}]
  %s1 = inlined_call_operand.vmem [shape: bf16[96,32], index: 1, kind: input, shape index: {}]
  %s2 = inlined_call_operand.vmem [shape: f32[1,32], index: 2, kind: input, shape index: {}]
  %s3 = inlined_call_operand.vmem [shape: f32[3,32], index: 3, kind: input, shape index: {}]
  %s4 = inlined_call_operand.vmem [shape: f32[2,3,32], index: 4, kind: output, shape index: {}]
  %s5 = sld [smem:[#allocation0]]
  $region49: #{e2e_forward.7} parent=0
    _
  %s7 = ssub.s32 1, %s5
  %s8 = scalar_select 0, %s7, %s5
  loop: start=0, step=1, limit=4
  $region2: #{e2e_forward.7} parent=0 // loop_pre_header
    _
  $region3: #{e2e_forward.7} parent=0 // loop_header
    %s10 = sphi 0, %s14
    %p11 = scmp.ge.s32.totalorder %s10, 4
    %s20 = sphi 0, %s22
    %s23 = sphi 0, %s20
    %s24 = sphi 0, %s23
    %s40 = sphi 0, %s24
    %s44 = sphi 0, %s44
    %s46 = sphi 0, %s44
    %s47 = sphi 0, %s46
    %s61 = sphi 0, %s47
    %s65 = sphi 0, %s65
    %s67 = sphi 0, %s65
    %s68 = sphi 0, %s67
    %s82 = sphi 0, %s68
    %s86 = sphi 0, %s86
    %s88 = sphi 0, %s86
    %s89 = sphi 0, %s88
    %s103 = sphi 0, %s89
    %s109 = sphi 0, %s111
    %s112 = sphi 0, %s109
    %s113 = sphi 0, %s112
    %s129 = sphi 0, %s113
  $region4: #{e2e_forward.7} parent=0 // loop_header_branch
    %13 = sbr.rel (%p11) target = $region8
  $region5: #{e2e_forward.7} parent=0 // loop_body
    %s15 = ssub.s32 %s10, 1
    %s16 = ssub.s32 %s10, 2
    %s17 = sadd.s32 %s10, 1
    %s18 = ssub.s32 %s10, %s17
    %p19 = scmp.eq.s32.totalorder %s18, 0
    %s21 = sadd.s32 %s20, 1
    %s22 = scalar_select %p19, %s20, %s21
    %p25 = pneg %p19
    %p26 = scmp.eq.s32.totalorder %s10, 1
    %p27 = por %p25, %p26
    %p28 = scmp.ne.s32.totalorder %s20, %s23
    %p29 = scmp.eq.s32.totalorder %s10, 0
    %p30 = por %p28, %p29
    %p31 = scmp.ne.s32.totalorder %s20, %s23
    %p32 = scmp.eq.s32.totalorder %s15, 1
    %p33 = por %p31, %p32
    %p34 = scmp.ne.s32.totalorder %s23, %s24
    %p35 = scmp.eq.s32.totalorder %s15, 0
    %p36 = por %p34, %p35
    %p37 = scmp.ne.s32.totalorder %s23, %s24
    %p38 = scmp.eq.s32.totalorder %s16, 1
    %p39 = por %p37, %p38
    %p41 = scmp.ne.s32.totalorder %s24, %s40
    %p42 = scmp.eq.s32.totalorder %s16, 0
    %p43 = por %p41, %p42
    %s45 = sadd.s32 %s44, 1
    %p48 = scmp.eq.s32.totalorder %s10, 1
    %p49 = scmp.ne.s32.totalorder %s44, %s46
    %p50 = scmp.eq.s32.totalorder %s10, 0
    %p51 = por %p49, %p50
    %p52 = scmp.ne.s32.totalorder %s44, %s46
    %p53 = scmp.eq.s32.totalorder %s15, 1
    %p54 = por %p52, %p53
    %p55 = scmp.ne.s32.totalorder %s46, %s47
    %p56 = scmp.eq.s32.totalorder %s15, 0
    %p57 = por %p55, %p56
    %p58 = scmp.ne.s32.totalorder %s46, %s47
    %p59 = scmp.eq.s32.totalorder %s16, 1
    %p60 = por %p58, %p59
    %p62 = scmp.ne.s32.totalorder %s47, %s61
    %p63 = scmp.eq.s32.totalorder %s16, 0
    %p64 = por %p62, %p63
    %s66 = sadd.s32 %s65, 1
    %p69 = scmp.eq.s32.totalorder %s10, 1
    %p70 = scmp.ne.s32.totalorder %s65, %s67
    %p71 = scmp.eq.s32.totalorder %s10, 0
    %p72 = por %p70, %p71
    %p73 = scmp.ne.s32.totalorder %s65, %s67
    %p74 = scmp.eq.s32.totalorder %s15, 1
    %p75 = por %p73, %p74
    %p76 = scmp.ne.s32.totalorder %s67, %s68
    %p77 = scmp.eq.s32.totalorder %s15, 0
    %p78 = por %p76, %p77
    %p79 = scmp.ne.s32.totalorder %s67, %s68
    %p80 = scmp.eq.s32.totalorder %s16, 1
    %p81 = por %p79, %p80
    %p83 = scmp.ne.s32.totalorder %s68, %s82
    %p84 = scmp.eq.s32.totalorder %s16, 0
    %p85 = por %p83, %p84
    %s87 = sadd.s32 %s86, 1
    %p90 = scmp.eq.s32.totalorder %s10, 1
    %p91 = scmp.ne.s32.totalorder %s86, %s88
    %p92 = scmp.eq.s32.totalorder %s10, 0
    %p93 = por %p91, %p92
    %p94 = scmp.ne.s32.totalorder %s86, %s88
    %p95 = scmp.eq.s32.totalorder %s15, 1
    %p96 = por %p94, %p95
    %p97 = scmp.ne.s32.totalorder %s88, %s89
    %p98 = scmp.eq.s32.totalorder %s15, 0
    %p99 = por %p97, %p98
    %p100 = scmp.ne.s32.totalorder %s88, %s89
    %p101 = scmp.eq.s32.totalorder %s16, 1
    %p102 = por %p100, %p101
    %p104 = scmp.ne.s32.totalorder %s89, %s103
    %p105 = scmp.eq.s32.totalorder %s16, 0
    %p106 = por %p104, %p105
    %s107 = ssub.s32 %s10, %s17
    %p108 = scmp.eq.s32.totalorder %s107, 0
    %s110 = sadd.s32 %s109, 1
    %s111 = scalar_select %p108, %s109, %s110
    %p114 = pneg %p108
    %p115 = scmp.eq.s32.totalorder %s10, 1
    %p116 = por %p114, %p115
    %p117 = scmp.ne.s32.totalorder %s109, %s112
    %p118 = scmp.eq.s32.totalorder %s10, 0
    %p119 = por %p117, %p118
    %p120 = scmp.ne.s32.totalorder %s109, %s112
    %p121 = scmp.eq.s32.totalorder %s15, 1
    %p122 = por %p120, %p121
    %p123 = scmp.ne.s32.totalorder %s112, %s113
    %p124 = scmp.eq.s32.totalorder %s15, 0
    %p125 = por %p123, %p124
    %p126 = scmp.ne.s32.totalorder %s112, %s113
    %p127 = scmp.eq.s32.totalorder %s16, 1
    %p128 = por %p126, %p127
    %p130 = scmp.ne.s32.totalorder %s113, %s129
    %p131 = scmp.eq.s32.totalorder %s16, 0
    %p132 = por %p130, %p131
    %p133 = scmp.le.s32.totalorder 1, %s10
    %p134 = scmp.lt.s32.totalorder %s10, 3
    %p135 = pnand %p133, %p134
    %p136 = pneg %p135
    // Predicated region
    $region9: #{e2e_forward.7} parent=5 // pred_check
      _
    $region10: #{e2e_forward.7} parent=5 // pred_check_branch
      %138 = sbr.rel (%p135) target = $region12
    $region11: #{e2e_forward.7} parent=5 // pred_region
      %s139 = ssub.s32 %s10, 1
      // Predicated region
      $region13: #{e2e_forward.7} parent=11 // pred_check
        %p140 = pneg %p57
      $region14: #{e2e_forward.7} parent=11 // pred_check_branch
        %142 = sbr.rel (%p140) target = $region16
      $region15: #{e2e_forward.7} parent=11 // pred_region
        _
      $region16: #{e2e_forward.7} parent=11 // pred_fallthru
        _
      // Predicated region
      $region17: #{e2e_forward.7} parent=11 // pred_check
        %p143 = pneg %p78
      $region18: #{e2e_forward.7} parent=11 // pred_check_branch
        %145 = sbr.rel (%p143) target = $region20
      $region19: #{e2e_forward.7} parent=11 // pred_region
        _
      $region20: #{e2e_forward.7} parent=11 // pred_fallthru
        _
      // Predicated region
      $region21: #{e2e_forward.7} parent=11 // pred_check
        %p146 = pneg %p99
      $region22: #{e2e_forward.7} parent=11 // pred_check_branch
        %148 = sbr.rel (%p146) target = $region24
      $region23: #{e2e_forward.7} parent=11 // pred_region
        _
      $region24: #{e2e_forward.7} parent=11 // pred_fallthru
        _
    $region12: #{e2e_forward.7} parent=5 // pred_fallthru
      _
    %p149 = scmp.lt.s32.totalorder %s10, 2
    // Predicated region
    $region25: #{e2e_forward.7} parent=5 // pred_check
      %p150 = pneg %p149
    $region26: #{e2e_forward.7} parent=5 // pred_check_branch
      %152 = sbr.rel (%p150) target = $region28
    $region27: #{e2e_forward.7} parent=5 // pred_region
      // Predicated region
      $region29: #{e2e_forward.7} parent=27 // pred_check
        %p153 = pneg %p30
      $region30: #{e2e_forward.7} parent=27 // pred_check_branch
        %155 = sbr.rel (%p153) target = $region32
      $region31: #{e2e_forward.7} parent=27 // pred_region
        %p156 = scmp.lt.s32.totalorder %s10, 1
        %s157 = scalar_select %p156, %s10, 1
        %s158 = smul.addr %s157, 2
        %s159 = scalar_lea.vmem %s0, %s158
      $region32: #{e2e_forward.7} parent=27 // pred_fallthru
        _
    $region28: #{e2e_forward.7} parent=5 // pred_fallthru
      _
    %p160 = scmp.le.s32.totalorder 1, %s10
    %p161 = scmp.lt.s32.totalorder %s10, 3
    %p162 = pnand %p160, %p161
    %p163 = pneg %p162
    // Predicated region
    $region33: #{e2e_forward.7} parent=5 // pred_check
      _
    $region34: #{e2e_forward.7} parent=5 // pred_check_branch
      %165 = sbr.rel (%p162) target = $region36
    $region35: #{e2e_forward.7} parent=5 // pred_region
      %s166 = ssub.s32 %s10, 1
      %p167 = scmp.lt.s32.totalorder %s15, 1
      %s168 = scalar_select %p167, %s15, 1
      %s169 = smul.addr %s168, 2
      %s170 = scalar_lea.vmem %s0, %s169
      %p171 = pneg %p36
      %p172 = pneg %p33
      %p173 = pneg %p57
      %p174 = pneg %p54
      %p175 = pneg %p78
      %p176 = pneg %p75
      %p177 = pneg %p99
      %p178 = pneg %p96
      %p179 = pneg %p125
      %p180 = pneg %p122
      %p181 = scmp.lt.s32.totalorder %s15, 1
      %s182 = scalar_select %p181, %s15, 1
      %s183 = smul.addr %s182, 4
      %s184 = scalar_lea.vmem %s4, %s183
      %p185 = scmp.lt.s32.totalorder %s15, 1
      %s186 = scalar_select %p185, %s15, 1
      %s187 = smul.addr %s186, 2
      %s188 = scalar_lea.vmem %s0, %s187
      %p189 = scmp.lt.s32.totalorder %s15, 1
      %s190 = scalar_select %p189, %s15, 1
      %s191 = smul.addr %s190, 4
      %s192 = scalar_lea.vmem %s4, %s191
      %v194 = vld [vmem:[%s188] sm:$0x3]
      %v195 = vld [vmem:[%s1] sm:$0xf]
      %v196 = vld [vmem:[%s1 + $0x4] sm:$0xf]
      %v197 = vld [vmem:[%s1 + $0x8] sm:$0xf]
      %v198 = vld [vmem:[%s1 + $0xc] sm:$0xf]
      %v199 = vld [vmem:[%s1 + $0x10] sm:$0xf]
      %v200 = vld [vmem:[%s1 + $0x14] sm:$0xf]
      %v201 = vld [vmem:[%s1 + $0x18] sm:$0xf]
      %v202 = vld [vmem:[%s1 + $0x1c] sm:$0xf]
      %v203 = vld [vmem:[%s1 + $0x20] sm:$0xf]
      %v204 = vld [vmem:[%s1 + $0x24] sm:$0xf]
      %v205 = vld [vmem:[%s1 + $0x28] sm:$0xf]
      %v206 = vld [vmem:[%s1 + $0x2c] sm:$0xf]
      %v207 = vld [vmem:[%s2] sm:$0x1]
      %v209 = vlaneseq
      %v210 = vshrl.u32 %v209, 7
      %v211 = vsub.s32 0, %v210
      %v212 = vrot.slane %v207, %v211
      %v226 = vunpack.c.l.b16 %v195
      %v227 = vunpack.c.l.b16 %v196
      %v228 = vunpack.c.l.b16 %v197
      %v229 = vunpack.c.l.b16 %v198
      %v230 = vunpack.c.l.b16 %v199
      %v231 = vunpack.c.l.b16 %v200
      %v232 = vunpack.c.l.b16 %v201
      %v233 = vunpack.c.l.b16 %v202
      %v234 = vunpack.c.l.b16 %v203
      %v235 = vunpack.c.l.b16 %v204
      %v236 = vunpack.c.l.b16 %v205
      %v237 = vunpack.c.l.b16 %v206
      %v238 = vpack.c.b16 %v227, %v226
      %v239 = vpack.c.b16 %v229, %v228
      %v240 = vpack.c.b16 %v231, %v230
      %v241 = vpack.c.b16 %v233, %v232
      %v242 = vpack.c.b16 %v235, %v234
      %v243 = vpack.c.b16 %v237, %v236
      %vm250 = vcmask 785408
      %v252 = vsel %vm250, %v194, 0
      %254 = vmatprep.subr.bf16.mxu0 0
      %255 = vmatpush1.bf16.msra.mxu0 %v238
      %256 = vmatprep.subr.bf16.mxu0 0
      %257 = vmatpush1.bf16.msra.mxu0 %v239
      %258 = vmatprep.subr.bf16.mxu0 0
      %259 = vmatpush1.bf16.msra.mxu0 %v240
      %260 = vmatprep.subr.bf16.mxu0 0
      %261 = vmatpush1.bf16.msra.mxu0 %v241
      %262 = vmatprep.subr.bf16.mxu0 0
      %263 = vmatpush1.bf16.msra.mxu0 %v242
      %264 = vmatprep.subr.bf16.mxu0 0
      %265 = vmatpush1.bf16.msra.mxu0 %v243
      %266 = vmatprep.subr.bf16.mxu0 0
      %267 = vmatpush1.bf16.msra.mxu0 0
      %268 = vmatprep.subr.bf16.mxu0 0
      %269 = vmatpush1.bf16.msra.mxu0 0
      %270 = vmatprep.subr.bf16.mxu0 0
      %271 = vmatpush1.bf16.msra.mxu0 0
      %272 = vmatprep.subr.bf16.mxu0 0
      %273 = vmatpush1.bf16.msra.mxu0 0
      %274 = vmatprep.subr.bf16.mxu0 0
      %275 = vmatpush1.bf16.msra.mxu0 0
      %276 = vmatprep.subr.bf16.mxu0 0
      %277 = vmatpush1.bf16.msra.mxu0 0
      %278 = vmatprep.subr.bf16.mxu0 0
      %279 = vmatpush1.bf16.msra.mxu0 0
      %280 = vmatprep.subr.bf16.mxu0 0
      %281 = vmatpush1.bf16.msra.mxu0 0
      %282 = vmatprep.subr.bf16.mxu0 0
      %283 = vmatpush1.bf16.msra.mxu0 0
      %284 = vmatprep.subr.bf16.mxu0 0
      %285 = vmatpush1.bf16.msra.mxu0 0
      %286 = vmatprep.mubr.bf16.mxu0 0
      %287 = vmatmul.mubr.bf16.gmra.mrb[0].mxu0 %v252
      %v288 = vpop.f32.mrb[0].mxu0
      %v289 = vadd.f32 %v212, %v288
      %v290 = vpop.f32.mrb[0].mxu0
      %v291 = vpop.f32.mrb[0].mxu0
      %v292 = vpop.f32.mrb[0].mxu0
      %293 = vdwg.mxu0
      %v294 = vmul.f32 %v289, 5.656854
      %v295 = vld [vmem:[%s3] sm:$0x7]
      %v296 = vadd.f32 %v294, %v295
      %vm297 = vcmask 256000
      %298 = vst.msk [vmem:[%s192] sm:$0x7] %vm297, %v296
      %p299 = scmp.lt.s32.totalorder %s15, 1
      %s300 = scalar_select %p299, %s15, 1
      %s301 = smul.addr %s300, 4
      %s302 = scalar_lea.vmem %s4, %s301
      // Predicated region
      $region37: #{e2e_forward.7} parent=35 // pred_check
        %p303 = pneg %p122
      $region38: #{e2e_forward.7} parent=35 // pred_check_branch
        %305 = sbr.rel (%p303) target = $region40
      $region39: #{e2e_forward.7} parent=35 // pred_region
        _
      $region40: #{e2e_forward.7} parent=35 // pred_fallthru
        _
    $region36: #{e2e_forward.7} parent=5 // pred_fallthru
      _
    %p306 = scmp.le.s32.totalorder 2, %s10
    // Predicated region
    $region41: #{e2e_forward.7} parent=5 // pred_check
      %p307 = pneg %p306
    $region42: #{e2e_forward.7} parent=5 // pred_check_branch
      %309 = sbr.rel (%p307) target = $region44
    $region43: #{e2e_forward.7} parent=5 // pred_region
      %s310 = ssub.s32 %s10, 2
      // Predicated region
      $region45: #{e2e_forward.7} parent=43 // pred_check
        %p311 = pneg %p128
      $region46: #{e2e_forward.7} parent=43 // pred_check_branch
        %313 = sbr.rel (%p311) target = $region48
      $region47: #{e2e_forward.7} parent=43 // pred_region
        %p314 = scmp.lt.s32.totalorder %s16, 1
        %s315 = scalar_select %p314, %s16, 1
        %s316 = smul.addr %s315, 4
        %s317 = scalar_lea.vmem %s4, %s316
      $region48: #{e2e_forward.7} parent=43 // pred_fallthru
        _
    $region44: #{e2e_forward.7} parent=5 // pred_fallthru
      _
  $region6: #{e2e_forward.7} parent=0 // loop_footer
    %s14 = sadd.s32 1, %s10
  $region7: #{e2e_forward.7} parent=0 // loop_footer_branch
    %9 = sbr.rel target = $region3
  $region8: #{e2e_forward.7} parent=0 // loop_exit
    _

// kernel: e2e_forward.9
$region0: #{e2e_forward.9}
  #allocation0 [shape = 'u32[]', space=smem, size = 0x4, offset = 0x4, fixed_abs, tag = 'smem constant byte address 0x4 - core index']
  #allocation1 [shape = 'u32[144,128]{1,0:T(1,128)}', space=vmem, size = 0x12000, scoped, tag = 'internal scratch']
  #allocation2 [shape = 'bf16[4,3,8]{2,1,0:T(4,128)(2,1)}', space=vmem, size = 0x1000, scoped, tag = 'scratch operand']
  #allocation3 [shape = 'bf16[4,3,8]{2,1,0:T(4,128)(2,1)}', space=vmem, size = 0x1000, scoped, tag = 'scratch operand']
  #allocation4 [shape = 'bf16[4,3,8]{2,1,0:T(4,128)(2,1)}', space=vmem, size = 0x1000, scoped, tag = 'scratch operand']
  #allocation5 [shape = 'f32[3,32]{1,0:T(4,128)}', space=vmem, size = 0x800, scoped, tag = 'scratch operand']
  %s0 = inlined_call_operand.vmem [shape: f32[2,3,32], index: 0, kind: input, shape index: {}]
  %s1 = inlined_call_operand.vmem [shape: f32[2,1,3], index: 1, kind: input, shape index: {}]
  %s2 = inlined_call_operand.vmem [shape: f32[1,32], index: 2, kind: input, shape index: {}]
  %s3 = inlined_call_operand.vmem [shape: f32[1,32], index: 3, kind: input, shape index: {}]
  %s4 = inlined_call_operand.vmem [shape: bf16[4,32,8], index: 4, kind: input, shape index: {}]
  %s5 = inlined_call_operand.vmem [shape: f32[4,1,8], index: 5, kind: input, shape index: {}]
  %s6 = inlined_call_operand.vmem [shape: bf16[4,32,8], index: 6, kind: input, shape index: {}]
  %s7 = inlined_call_operand.vmem [shape: f32[4,1,8], index: 7, kind: input, shape index: {}]
  %s8 = inlined_call_operand.vmem [shape: bf16[4,32,8], index: 8, kind: input, shape index: {}]
  %s9 = inlined_call_operand.vmem [shape: f32[4,1,8], index: 9, kind: input, shape index: {}]
  %s10 = inlined_call_operand.vmem [shape: bf16[4,8,32], index: 10, kind: input, shape index: {}]
  %s11 = inlined_call_operand.vmem [shape: f32[1,32], index: 11, kind: input, shape index: {}]
  %s12 = inlined_call_operand.vmem [shape: f32[1,32], index: 12, kind: input, shape index: {}]
  %s13 = inlined_call_operand.vmem [shape: f32[1,32], index: 13, kind: input, shape index: {}]
  %s14 = inlined_call_operand.vmem [shape: bf16[32,64], index: 14, kind: input, shape index: {}]
  %s15 = inlined_call_operand.vmem [shape: f32[1,64], index: 15, kind: input, shape index: {}]
  %s16 = inlined_call_operand.vmem [shape: bf16[64,32], index: 16, kind: input, shape index: {}]
  %s17 = inlined_call_operand.vmem [shape: f32[1,32], index: 17, kind: input, shape index: {}]
  %s18 = inlined_call_operand.vmem [shape: f32[1,32], index: 18, kind: input, shape index: {}]
  %s19 = inlined_call_operand.vmem [shape: f32[1,32], index: 19, kind: input, shape index: {}]
  %s20 = inlined_call_operand.vmem [shape: f32[2,3,32], index: 20, kind: output, shape index: {}]
  %s21 = sld [smem:[#allocation0]]
  $region117: #{e2e_forward.9} parent=0
    _
  %s23 = ssub.s32 1, %s21
  %s24 = scalar_select 0, %s23, %s21
  loop: start=0, step=1, limit=4
  $region2: #{e2e_forward.9} parent=0 // loop_pre_header
    _
  $region3: #{e2e_forward.9} parent=0 // loop_header
    %s26 = sphi 0, %s30
    %p27 = scmp.ge.s32.totalorder %s26, 4
    %s33 = sphi 0, %s45
    %s34 = sphi 0, %s41
    %s35 = sphi 0, %s33
    %s36 = sphi 0, %s34
    %s37 = sphi 0, %s35
    %s38 = sphi 0, %s36
    %s48 = sphi 0, %s50
    %s51 = sphi 0, %s48
    %s52 = sphi 0, %s51
    %s68 = sphi 0, %s52
    %s74 = sphi 0, %s76
    %s77 = sphi 0, %s74
    %s78 = sphi 0, %s77
    %s94 = sphi 0, %s78
    %s98 = sphi 0, %s98
    %s100 = sphi 0, %s98
    %s101 = sphi 0, %s100
    %s115 = sphi 0, %s101
    %s119 = sphi 0, %s119
    %s121 = sphi 0, %s119
    %s122 = sphi 0, %s121
    %s136 = sphi 0, %s122
    %s140 = sphi 0, %s140
    %s142 = sphi 0, %s140
    %s143 = sphi 0, %s142
    %s157 = sphi 0, %s143
    %s161 = sphi 0, %s161
    %s163 = sphi 0, %s161
    %s164 = sphi 0, %s163
    %s178 = sphi 0, %s164
    %s182 = sphi 0, %s182
    %s184 = sphi 0, %s182
    %s185 = sphi 0, %s184
    %s199 = sphi 0, %s185
    %s203 = sphi 0, %s203
    %s205 = sphi 0, %s203
    %s206 = sphi 0, %s205
    %s220 = sphi 0, %s206
    %s224 = sphi 0, %s224
    %s226 = sphi 0, %s224
    %s227 = sphi 0, %s226
    %s241 = sphi 0, %s227
    %s245 = sphi 0, %s245
    %s247 = sphi 0, %s245
    %s248 = sphi 0, %s247
    %s262 = sphi 0, %s248
    %s266 = sphi 0, %s266
    %s268 = sphi 0, %s266
    %s269 = sphi 0, %s268
    %s283 = sphi 0, %s269
    %s287 = sphi 0, %s287
    %s289 = sphi 0, %s287
    %s290 = sphi 0, %s289
    %s304 = sphi 0, %s290
    %s308 = sphi 0, %s308
    %s310 = sphi 0, %s308
    %s311 = sphi 0, %s310
    %s325 = sphi 0, %s311
    %s329 = sphi 0, %s329
    %s331 = sphi 0, %s329
    %s332 = sphi 0, %s331
    %s346 = sphi 0, %s332
    %s350 = sphi 0, %s350
    %s352 = sphi 0, %s350
    %s353 = sphi 0, %s352
    %s367 = sphi 0, %s353
    %s371 = sphi 0, %s371
    %s373 = sphi 0, %s371
    %s374 = sphi 0, %s373
    %s388 = sphi 0, %s374
    %s392 = sphi 0, %s392
    %s394 = sphi 0, %s392
    %s395 = sphi 0, %s394
    %s409 = sphi 0, %s395
    %s413 = sphi 0, %s413
    %s415 = sphi 0, %s413
    %s416 = sphi 0, %s415
    %s430 = sphi 0, %s416
    %s434 = sphi 0, %s434
    %s436 = sphi 0, %s434
    %s437 = sphi 0, %s436
    %s451 = sphi 0, %s437
    %s455 = sphi 0, %s455
    %s457 = sphi 0, %s455
    %s458 = sphi 0, %s457
    %s472 = sphi 0, %s458
    %s480 = sphi 0, %s482
    %s483 = sphi 0, %s480
    %s484 = sphi 0, %s483
    %s500 = sphi 0, %s484
  $region4: #{e2e_forward.9} parent=0 // loop_header_branch
    %29 = sbr.rel (%p27) target = $region8
  $region5: #{e2e_forward.9} parent=0 // loop_body
    %s31 = ssub.s32 %s26, 1
    %s32 = ssub.s32 %s26, 2
    %s39 = sadd.s32 1, %s34
    %p40 = scmp.ge.s32.totalorder %s39, 1
    %s41 = scalar_select %p40, 0, %s39
    %s42 = sadd.s32 1, %s33
    %s43 = scalar_select %p40, %s42, %s33
    %p44 = scmp.ge.s32.totalorder %s43, 2
    %s45 = scalar_select %p44, 0, %s43
    %s46 = ssub.s32 %s33, %s45
    %p47 = scmp.eq.s32.totalorder %s46, 0
    %s49 = sadd.s32 %s48, 1
    %s50 = scalar_select %p47, %s48, %s49
    %p53 = pneg %p47
    %p54 = scmp.eq.s32.totalorder %s26, 1
    %p55 = por %p53, %p54
    %p56 = scmp.ne.s32.totalorder %s48, %s51
    %p57 = scmp.eq.s32.totalorder %s26, 0
    %p58 = por %p56, %p57
    %p59 = scmp.ne.s32.totalorder %s48, %s51
    %p60 = scmp.eq.s32.totalorder %s31, 1
    %p61 = por %p59, %p60
    %p62 = scmp.ne.s32.totalorder %s51, %s52
    %p63 = scmp.eq.s32.totalorder %s31, 0
    %p64 = por %p62, %p63
    %p65 = scmp.ne.s32.totalorder %s51, %s52
    %p66 = scmp.eq.s32.totalorder %s32, 1
    %p67 = por %p65, %p66
    %p69 = scmp.ne.s32.totalorder %s52, %s68
    %p70 = scmp.eq.s32.totalorder %s32, 0
    %p71 = por %p69, %p70
    %s72 = ssub.s32 %s33, %s45
    %p73 = scmp.eq.s32.totalorder %s72, 0
    %s75 = sadd.s32 %s74, 1
    %s76 = scalar_select %p73, %s74, %s75
    %p79 = pneg %p73
    %p80 = scmp.eq.s32.totalorder %s26, 1
    %p81 = por %p79, %p80
    %p82 = scmp.ne.s32.totalorder %s74, %s77
    %p83 = scmp.eq.s32.totalorder %s26, 0
    %p84 = por %p82, %p83
    %p85 = scmp.ne.s32.totalorder %s74, %s77
    %p86 = scmp.eq.s32.totalorder %s31, 1
    %p87 = por %p85, %p86
    %p88 = scmp.ne.s32.totalorder %s77, %s78
    %p89 = scmp.eq.s32.totalorder %s31, 0
    %p90 = por %p88, %p89
    %p91 = scmp.ne.s32.totalorder %s77, %s78
    %p92 = scmp.eq.s32.totalorder %s32, 1
    %p93 = por %p91, %p92
    %p95 = scmp.ne.s32.totalorder %s78, %s94
    %p96 = scmp.eq.s32.totalorder %s32, 0
    %p97 = por %p95, %p96
    %s99 = sadd.s32 %s98, 1
    %p102 = scmp.eq.s32.totalorder %s26, 1
    %p103 = scmp.ne.s32.totalorder %s98, %s100
    %p104 = scmp.eq.s32.totalorder %s26, 0
    %p105 = por %p103, %p104
    %p106 = scmp.ne.s32.totalorder %s98, %s100
    %p107 = scmp.eq.s32.totalorder %s31, 1
    %p108 = por %p106, %p107
    %p109 = scmp.ne.s32.totalorder %s100, %s101
    %p110 = scmp.eq.s32.totalorder %s31, 0
    %p111 = por %p109, %p110
    %p112 = scmp.ne.s32.totalorder %s100, %s101
    %p113 = scmp.eq.s32.totalorder %s32, 1
    %p114 = por %p112, %p113
    %p116 = scmp.ne.s32.totalorder %s101, %s115
    %p117 = scmp.eq.s32.totalorder %s32, 0
    %p118 = por %p116, %p117
    %s120 = sadd.s32 %s119, 1
    %p123 = scmp.eq.s32.totalorder %s26, 1
    %p124 = scmp.ne.s32.totalorder %s119, %s121
    %p125 = scmp.eq.s32.totalorder %s26, 0
    %p126 = por %p124, %p125
    %p127 = scmp.ne.s32.totalorder %s119, %s121
    %p128 = scmp.eq.s32.totalorder %s31, 1
    %p129 = por %p127, %p128
    %p130 = scmp.ne.s32.totalorder %s121, %s122
    %p131 = scmp.eq.s32.totalorder %s31, 0
    %p132 = por %p130, %p131
    %p133 = scmp.ne.s32.totalorder %s121, %s122
    %p134 = scmp.eq.s32.totalorder %s32, 1
    %p135 = por %p133, %p134
    %p137 = scmp.ne.s32.totalorder %s122, %s136
    %p138 = scmp.eq.s32.totalorder %s32, 0
    %p139 = por %p137, %p138
    %s141 = sadd.s32 %s140, 1
    %p144 = scmp.eq.s32.totalorder %s26, 1
    %p145 = scmp.ne.s32.totalorder %s140, %s142
    %p146 = scmp.eq.s32.totalorder %s26, 0
    %p147 = por %p145, %p146
    %p148 = scmp.ne.s32.totalorder %s140, %s142
    %p149 = scmp.eq.s32.totalorder %s31, 1
    %p150 = por %p148, %p149
    %p151 = scmp.ne.s32.totalorder %s142, %s143
    %p152 = scmp.eq.s32.totalorder %s31, 0
    %p153 = por %p151, %p152
    %p154 = scmp.ne.s32.totalorder %s142, %s143
    %p155 = scmp.eq.s32.totalorder %s32, 1
    %p156 = por %p154, %p155
    %p158 = scmp.ne.s32.totalorder %s143, %s157
    %p159 = scmp.eq.s32.totalorder %s32, 0
    %p160 = por %p158, %p159
    %s162 = sadd.s32 %s161, 1
    %p165 = scmp.eq.s32.totalorder %s26, 1
    %p166 = scmp.ne.s32.totalorder %s161, %s163
    %p167 = scmp.eq.s32.totalorder %s26, 0
    %p168 = por %p166, %p167
    %p169 = scmp.ne.s32.totalorder %s161, %s163
    %p170 = scmp.eq.s32.totalorder %s31, 1
    %p171 = por %p169, %p170
    %p172 = scmp.ne.s32.totalorder %s163, %s164
    %p173 = scmp.eq.s32.totalorder %s31, 0
    %p174 = por %p172, %p173
    %p175 = scmp.ne.s32.totalorder %s163, %s164
    %p176 = scmp.eq.s32.totalorder %s32, 1
    %p177 = por %p175, %p176
    %p179 = scmp.ne.s32.totalorder %s164, %s178
    %p180 = scmp.eq.s32.totalorder %s32, 0
    %p181 = por %p179, %p180
    %s183 = sadd.s32 %s182, 1
    %p186 = scmp.eq.s32.totalorder %s26, 1
    %p187 = scmp.ne.s32.totalorder %s182, %s184
    %p188 = scmp.eq.s32.totalorder %s26, 0
    %p189 = por %p187, %p188
    %p190 = scmp.ne.s32.totalorder %s182, %s184
    %p191 = scmp.eq.s32.totalorder %s31, 1
    %p192 = por %p190, %p191
    %p193 = scmp.ne.s32.totalorder %s184, %s185
    %p194 = scmp.eq.s32.totalorder %s31, 0
    %p195 = por %p193, %p194
    %p196 = scmp.ne.s32.totalorder %s184, %s185
    %p197 = scmp.eq.s32.totalorder %s32, 1
    %p198 = por %p196, %p197
    %p200 = scmp.ne.s32.totalorder %s185, %s199
    %p201 = scmp.eq.s32.totalorder %s32, 0
    %p202 = por %p200, %p201
    %s204 = sadd.s32 %s203, 1
    %p207 = scmp.eq.s32.totalorder %s26, 1
    %p208 = scmp.ne.s32.totalorder %s203, %s205
    %p209 = scmp.eq.s32.totalorder %s26, 0
    %p210 = por %p208, %p209
    %p211 = scmp.ne.s32.totalorder %s203, %s205
    %p212 = scmp.eq.s32.totalorder %s31, 1
    %p213 = por %p211, %p212
    %p214 = scmp.ne.s32.totalorder %s205, %s206
    %p215 = scmp.eq.s32.totalorder %s31, 0
    %p216 = por %p214, %p215
    %p217 = scmp.ne.s32.totalorder %s205, %s206
    %p218 = scmp.eq.s32.totalorder %s32, 1
    %p219 = por %p217, %p218
    %p221 = scmp.ne.s32.totalorder %s206, %s220
    %p222 = scmp.eq.s32.totalorder %s32, 0
    %p223 = por %p221, %p222
    %s225 = sadd.s32 %s224, 1
    %p228 = scmp.eq.s32.totalorder %s26, 1
    %p229 = scmp.ne.s32.totalorder %s224, %s226
    %p230 = scmp.eq.s32.totalorder %s26, 0
    %p231 = por %p229, %p230
    %p232 = scmp.ne.s32.totalorder %s224, %s226
    %p233 = scmp.eq.s32.totalorder %s31, 1
    %p234 = por %p232, %p233
    %p235 = scmp.ne.s32.totalorder %s226, %s227
    %p236 = scmp.eq.s32.totalorder %s31, 0
    %p237 = por %p235, %p236
    %p238 = scmp.ne.s32.totalorder %s226, %s227
    %p239 = scmp.eq.s32.totalorder %s32, 1
    %p240 = por %p238, %p239
    %p242 = scmp.ne.s32.totalorder %s227, %s241
    %p243 = scmp.eq.s32.totalorder %s32, 0
    %p244 = por %p242, %p243
    %s246 = sadd.s32 %s245, 1
    %p249 = scmp.eq.s32.totalorder %s26, 1
    %p250 = scmp.ne.s32.totalorder %s245, %s247
    %p251 = scmp.eq.s32.totalorder %s26, 0
    %p252 = por %p250, %p251
    %p253 = scmp.ne.s32.totalorder %s245, %s247
    %p254 = scmp.eq.s32.totalorder %s31, 1
    %p255 = por %p253, %p254
    %p256 = scmp.ne.s32.totalorder %s247, %s248
    %p257 = scmp.eq.s32.totalorder %s31, 0
    %p258 = por %p256, %p257
    %p259 = scmp.ne.s32.totalorder %s247, %s248
    %p260 = scmp.eq.s32.totalorder %s32, 1
    %p261 = por %p259, %p260
    %p263 = scmp.ne.s32.totalorder %s248, %s262
    %p264 = scmp.eq.s32.totalorder %s32, 0
    %p265 = por %p263, %p264
    %s267 = sadd.s32 %s266, 1
    %p270 = scmp.eq.s32.totalorder %s26, 1
    %p271 = scmp.ne.s32.totalorder %s266, %s268
    %p272 = scmp.eq.s32.totalorder %s26, 0
    %p273 = por %p271, %p272
    %p274 = scmp.ne.s32.totalorder %s266, %s268
    %p275 = scmp.eq.s32.totalorder %s31, 1
    %p276 = por %p274, %p275
    %p277 = scmp.ne.s32.totalorder %s268, %s269
    %p278 = scmp.eq.s32.totalorder %s31, 0
    %p279 = por %p277, %p278
    %p280 = scmp.ne.s32.totalorder %s268, %s269
    %p281 = scmp.eq.s32.totalorder %s32, 1
    %p282 = por %p280, %p281
    %p284 = scmp.ne.s32.totalorder %s269, %s283
    %p285 = scmp.eq.s32.totalorder %s32, 0
    %p286 = por %p284, %p285
    %s288 = sadd.s32 %s287, 1
    %p291 = scmp.eq.s32.totalorder %s26, 1
    %p292 = scmp.ne.s32.totalorder %s287, %s289
    %p293 = scmp.eq.s32.totalorder %s26, 0
    %p294 = por %p292, %p293
    %p295 = scmp.ne.s32.totalorder %s287, %s289
    %p296 = scmp.eq.s32.totalorder %s31, 1
    %p297 = por %p295, %p296
    %p298 = scmp.ne.s32.totalorder %s289, %s290
    %p299 = scmp.eq.s32.totalorder %s31, 0
    %p300 = por %p298, %p299
    %p301 = scmp.ne.s32.totalorder %s289, %s290
    %p302 = scmp.eq.s32.totalorder %s32, 1
    %p303 = por %p301, %p302
    %p305 = scmp.ne.s32.totalorder %s290, %s304
    %p306 = scmp.eq.s32.totalorder %s32, 0
    %p307 = por %p305, %p306
    %s309 = sadd.s32 %s308, 1
    %p312 = scmp.eq.s32.totalorder %s26, 1
    %p313 = scmp.ne.s32.totalorder %s308, %s310
    %p314 = scmp.eq.s32.totalorder %s26, 0
    %p315 = por %p313, %p314
    %p316 = scmp.ne.s32.totalorder %s308, %s310
    %p317 = scmp.eq.s32.totalorder %s31, 1
    %p318 = por %p316, %p317
    %p319 = scmp.ne.s32.totalorder %s310, %s311
    %p320 = scmp.eq.s32.totalorder %s31, 0
    %p321 = por %p319, %p320
    %p322 = scmp.ne.s32.totalorder %s310, %s311
    %p323 = scmp.eq.s32.totalorder %s32, 1
    %p324 = por %p322, %p323
    %p326 = scmp.ne.s32.totalorder %s311, %s325
    %p327 = scmp.eq.s32.totalorder %s32, 0
    %p328 = por %p326, %p327
    %s330 = sadd.s32 %s329, 1
    %p333 = scmp.eq.s32.totalorder %s26, 1
    %p334 = scmp.ne.s32.totalorder %s329, %s331
    %p335 = scmp.eq.s32.totalorder %s26, 0
    %p336 = por %p334, %p335
    %p337 = scmp.ne.s32.totalorder %s329, %s331
    %p338 = scmp.eq.s32.totalorder %s31, 1
    %p339 = por %p337, %p338
    %p340 = scmp.ne.s32.totalorder %s331, %s332
    %p341 = scmp.eq.s32.totalorder %s31, 0
    %p342 = por %p340, %p341
    %p343 = scmp.ne.s32.totalorder %s331, %s332
    %p344 = scmp.eq.s32.totalorder %s32, 1
    %p345 = por %p343, %p344
    %p347 = scmp.ne.s32.totalorder %s332, %s346
    %p348 = scmp.eq.s32.totalorder %s32, 0
    %p349 = por %p347, %p348
    %s351 = sadd.s32 %s350, 1
    %p354 = scmp.eq.s32.totalorder %s26, 1
    %p355 = scmp.ne.s32.totalorder %s350, %s352
    %p356 = scmp.eq.s32.totalorder %s26, 0
    %p357 = por %p355, %p356
    %p358 = scmp.ne.s32.totalorder %s350, %s352
    %p359 = scmp.eq.s32.totalorder %s31, 1
    %p360 = por %p358, %p359
    %p361 = scmp.ne.s32.totalorder %s352, %s353
    %p362 = scmp.eq.s32.totalorder %s31, 0
    %p363 = por %p361, %p362
    %p364 = scmp.ne.s32.totalorder %s352, %s353
    %p365 = scmp.eq.s32.totalorder %s32, 1
    %p366 = por %p364, %p365
    %p368 = scmp.ne.s32.totalorder %s353, %s367
    %p369 = scmp.eq.s32.totalorder %s32, 0
    %p370 = por %p368, %p369
    %s372 = sadd.s32 %s371, 1
    %p375 = scmp.eq.s32.totalorder %s26, 1
    %p376 = scmp.ne.s32.totalorder %s371, %s373
    %p377 = scmp.eq.s32.totalorder %s26, 0
    %p378 = por %p376, %p377
    %p379 = scmp.ne.s32.totalorder %s371, %s373
    %p380 = scmp.eq.s32.totalorder %s31, 1
    %p381 = por %p379, %p380
    %p382 = scmp.ne.s32.totalorder %s373, %s374
    %p383 = scmp.eq.s32.totalorder %s31, 0
    %p384 = por %p382, %p383
    %p385 = scmp.ne.s32.totalorder %s373, %s374
    %p386 = scmp.eq.s32.totalorder %s32, 1
    %p387 = por %p385, %p386
    %p389 = scmp.ne.s32.totalorder %s374, %s388
    %p390 = scmp.eq.s32.totalorder %s32, 0
    %p391 = por %p389, %p390
    %s393 = sadd.s32 %s392, 1
    %p396 = scmp.eq.s32.totalorder %s26, 1
    %p397 = scmp.ne.s32.totalorder %s392, %s394
    %p398 = scmp.eq.s32.totalorder %s26, 0
    %p399 = por %p397, %p398
    %p400 = scmp.ne.s32.totalorder %s392, %s394
    %p401 = scmp.eq.s32.totalorder %s31, 1
    %p402 = por %p400, %p401
    %p403 = scmp.ne.s32.totalorder %s394, %s395
    %p404 = scmp.eq.s32.totalorder %s31, 0
    %p405 = por %p403, %p404
    %p406 = scmp.ne.s32.totalorder %s394, %s395
    %p407 = scmp.eq.s32.totalorder %s32, 1
    %p408 = por %p406, %p407
    %p410 = scmp.ne.s32.totalorder %s395, %s409
    %p411 = scmp.eq.s32.totalorder %s32, 0
    %p412 = por %p410, %p411
    %s414 = sadd.s32 %s413, 1
    %p417 = scmp.eq.s32.totalorder %s26, 1
    %p418 = scmp.ne.s32.totalorder %s413, %s415
    %p419 = scmp.eq.s32.totalorder %s26, 0
    %p420 = por %p418, %p419
    %p421 = scmp.ne.s32.totalorder %s413, %s415
    %p422 = scmp.eq.s32.totalorder %s31, 1
    %p423 = por %p421, %p422
    %p424 = scmp.ne.s32.totalorder %s415, %s416
    %p425 = scmp.eq.s32.totalorder %s31, 0
    %p426 = por %p424, %p425
    %p427 = scmp.ne.s32.totalorder %s415, %s416
    %p428 = scmp.eq.s32.totalorder %s32, 1
    %p429 = por %p427, %p428
    %p431 = scmp.ne.s32.totalorder %s416, %s430
    %p432 = scmp.eq.s32.totalorder %s32, 0
    %p433 = por %p431, %p432
    %s435 = sadd.s32 %s434, 1
    %p438 = scmp.eq.s32.totalorder %s26, 1
    %p439 = scmp.ne.s32.totalorder %s434, %s436
    %p440 = scmp.eq.s32.totalorder %s26, 0
    %p441 = por %p439, %p440
    %p442 = scmp.ne.s32.totalorder %s434, %s436
    %p443 = scmp.eq.s32.totalorder %s31, 1
    %p444 = por %p442, %p443
    %p445 = scmp.ne.s32.totalorder %s436, %s437
    %p446 = scmp.eq.s32.totalorder %s31, 0
    %p447 = por %p445, %p446
    %p448 = scmp.ne.s32.totalorder %s436, %s437
    %p449 = scmp.eq.s32.totalorder %s32, 1
    %p450 = por %p448, %p449
    %p452 = scmp.ne.s32.totalorder %s437, %s451
    %p453 = scmp.eq.s32.totalorder %s32, 0
    %p454 = por %p452, %p453
    %s456 = sadd.s32 %s455, 1
    %p459 = scmp.eq.s32.totalorder %s26, 1
    %p460 = scmp.ne.s32.totalorder %s455, %s457
    %p461 = scmp.eq.s32.totalorder %s26, 0
    %p462 = por %p460, %p461
    %p463 = scmp.ne.s32.totalorder %s455, %s457
    %p464 = scmp.eq.s32.totalorder %s31, 1
    %p465 = por %p463, %p464
    %p466 = scmp.ne.s32.totalorder %s457, %s458
    %p467 = scmp.eq.s32.totalorder %s31, 0
    %p468 = por %p466, %p467
    %p469 = scmp.ne.s32.totalorder %s457, %s458
    %p470 = scmp.eq.s32.totalorder %s32, 1
    %p471 = por %p469, %p470
    %p473 = scmp.ne.s32.totalorder %s458, %s472
    %p474 = scmp.eq.s32.totalorder %s32, 0
    %p475 = por %p473, %p474
    %s476 = ssub.s32 %s33, %s45
    %s477 = ssub.s32 %s34, %s41
    %s478 = sor.u32 %s476, %s477
    %p479 = scmp.eq.s32.totalorder %s478, 0
    %s481 = sadd.s32 %s480, 1
    %s482 = scalar_select %p479, %s480, %s481
    %p485 = pneg %p479
    %p486 = scmp.eq.s32.totalorder %s26, 1
    %p487 = por %p485, %p486
    %p488 = scmp.ne.s32.totalorder %s480, %s483
    %p489 = scmp.eq.s32.totalorder %s26, 0
    %p490 = por %p488, %p489
    %p491 = scmp.ne.s32.totalorder %s480, %s483
    %p492 = scmp.eq.s32.totalorder %s31, 1
    %p493 = por %p491, %p492
    %p494 = scmp.ne.s32.totalorder %s483, %s484
    %p495 = scmp.eq.s32.totalorder %s31, 0
    %p496 = por %p494, %p495
    %p497 = scmp.ne.s32.totalorder %s483, %s484
    %p498 = scmp.eq.s32.totalorder %s32, 1
    %p499 = por %p497, %p498
    %p501 = scmp.ne.s32.totalorder %s484, %s500
    %p502 = scmp.eq.s32.totalorder %s32, 0
    %p503 = por %p501, %p502
    %p504 = scmp.le.s32.totalorder 1, %s26
    %p505 = scmp.lt.s32.totalorder %s26, 3
    %p506 = pnand %p504, %p505
    %p507 = pneg %p506
    // Predicated region
    $region9: #{e2e_forward.9} parent=5 // pred_check
      _
    $region10: #{e2e_forward.9} parent=5 // pred_check_branch
      %509 = sbr.rel (%p506) target = $region12
    $region11: #{e2e_forward.9} parent=5 // pred_region
      %s510 = ssub.s32 %s26, 1
      // Predicated region
      $region13: #{e2e_forward.9} parent=11 // pred_check
        %p511 = pneg %p111
      $region14: #{e2e_forward.9} parent=11 // pred_check_branch
        %513 = sbr.rel (%p511) target = $region16
      $region15: #{e2e_forward.9} parent=11 // pred_region
        _
      $region16: #{e2e_forward.9} parent=11 // pred_fallthru
        _
      // Predicated region
      $region17: #{e2e_forward.9} parent=11 // pred_check
        %p514 = pneg %p132
      $region18: #{e2e_forward.9} parent=11 // pred_check_branch
        %516 = sbr.rel (%p514) target = $region20
      $region19: #{e2e_forward.9} parent=11 // pred_region
        _
      $region20: #{e2e_forward.9} parent=11 // pred_fallthru
        _
      // Predicated region
      $region21: #{e2e_forward.9} parent=11 // pred_check
        %p517 = pneg %p153
      $region22: #{e2e_forward.9} parent=11 // pred_check_branch
        %519 = sbr.rel (%p517) target = $region24
      $region23: #{e2e_forward.9} parent=11 // pred_region
        _
      $region24: #{e2e_forward.9} parent=11 // pred_fallthru
        _
      // Predicated region
      $region25: #{e2e_forward.9} parent=11 // pred_check
        %p520 = pneg %p174
      $region26: #{e2e_forward.9} parent=11 // pred_check_branch
        %522 = sbr.rel (%p520) target = $region28
      $region27: #{e2e_forward.9} parent=11 // pred_region
        _
      $region28: #{e2e_forward.9} parent=11 // pred_fallthru
        _
      // Predicated region
      $region29: #{e2e_forward.9} parent=11 // pred_check
        %p523 = pneg %p195
      $region30: #{e2e_forward.9} parent=11 // pred_check_branch
        %525 = sbr.rel (%p523) target = $region32
      $region31: #{e2e_forward.9} parent=11 // pred_region
        _
      $region32: #{e2e_forward.9} parent=11 // pred_fallthru
        _
      // Predicated region
      $region33: #{e2e_forward.9} parent=11 // pred_check
        %p526 = pneg %p216
      $region34: #{e2e_forward.9} parent=11 // pred_check_branch
        %528 = sbr.rel (%p526) target = $region36
      $region35: #{e2e_forward.9} parent=11 // pred_region
        _
      $region36: #{e2e_forward.9} parent=11 // pred_fallthru
        _
      // Predicated region
      $region37: #{e2e_forward.9} parent=11 // pred_check
        %p529 = pneg %p237
      $region38: #{e2e_forward.9} parent=11 // pred_check_branch
        %531 = sbr.rel (%p529) target = $region40
      $region39: #{e2e_forward.9} parent=11 // pred_region
        _
      $region40: #{e2e_forward.9} parent=11 // pred_fallthru
        _
      // Predicated region
      $region41: #{e2e_forward.9} parent=11 // pred_check
        %p532 = pneg %p258
      $region42: #{e2e_forward.9} parent=11 // pred_check_branch
        %534 = sbr.rel (%p532) target = $region44
      $region43: #{e2e_forward.9} parent=11 // pred_region
        _
      $region44: #{e2e_forward.9} parent=11 // pred_fallthru
        _
      // Predicated region
      $region45: #{e2e_forward.9} parent=11 // pred_check
        %p535 = pneg %p279
      $region46: #{e2e_forward.9} parent=11 // pred_check_branch
        %537 = sbr.rel (%p535) target = $region48
      $region47: #{e2e_forward.9} parent=11 // pred_region
        _
      $region48: #{e2e_forward.9} parent=11 // pred_fallthru
        _
      // Predicated region
      $region49: #{e2e_forward.9} parent=11 // pred_check
        %p538 = pneg %p300
      $region50: #{e2e_forward.9} parent=11 // pred_check_branch
        %540 = sbr.rel (%p538) target = $region52
      $region51: #{e2e_forward.9} parent=11 // pred_region
        _
      $region52: #{e2e_forward.9} parent=11 // pred_fallthru
        _
      // Predicated region
      $region53: #{e2e_forward.9} parent=11 // pred_check
        %p541 = pneg %p321
      $region54: #{e2e_forward.9} parent=11 // pred_check_branch
        %543 = sbr.rel (%p541) target = $region56
      $region55: #{e2e_forward.9} parent=11 // pred_region
        _
      $region56: #{e2e_forward.9} parent=11 // pred_fallthru
        _
      // Predicated region
      $region57: #{e2e_forward.9} parent=11 // pred_check
        %p544 = pneg %p342
      $region58: #{e2e_forward.9} parent=11 // pred_check_branch
        %546 = sbr.rel (%p544) target = $region60
      $region59: #{e2e_forward.9} parent=11 // pred_region
        _
      $region60: #{e2e_forward.9} parent=11 // pred_fallthru
        _
      // Predicated region
      $region61: #{e2e_forward.9} parent=11 // pred_check
        %p547 = pneg %p363
      $region62: #{e2e_forward.9} parent=11 // pred_check_branch
        %549 = sbr.rel (%p547) target = $region64
      $region63: #{e2e_forward.9} parent=11 // pred_region
        _
      $region64: #{e2e_forward.9} parent=11 // pred_fallthru
        _
      // Predicated region
      $region65: #{e2e_forward.9} parent=11 // pred_check
        %p550 = pneg %p384
      $region66: #{e2e_forward.9} parent=11 // pred_check_branch
        %552 = sbr.rel (%p550) target = $region68
      $region67: #{e2e_forward.9} parent=11 // pred_region
        _
      $region68: #{e2e_forward.9} parent=11 // pred_fallthru
        _
      // Predicated region
      $region69: #{e2e_forward.9} parent=11 // pred_check
        %p553 = pneg %p405
      $region70: #{e2e_forward.9} parent=11 // pred_check_branch
        %555 = sbr.rel (%p553) target = $region72
      $region71: #{e2e_forward.9} parent=11 // pred_region
        _
      $region72: #{e2e_forward.9} parent=11 // pred_fallthru
        _
      // Predicated region
      $region73: #{e2e_forward.9} parent=11 // pred_check
        %p556 = pneg %p426
      $region74: #{e2e_forward.9} parent=11 // pred_check_branch
        %558 = sbr.rel (%p556) target = $region76
      $region75: #{e2e_forward.9} parent=11 // pred_region
        _
      $region76: #{e2e_forward.9} parent=11 // pred_fallthru
        _
      // Predicated region
      $region77: #{e2e_forward.9} parent=11 // pred_check
        %p559 = pneg %p447
      $region78: #{e2e_forward.9} parent=11 // pred_check_branch
        %561 = sbr.rel (%p559) target = $region80
      $region79: #{e2e_forward.9} parent=11 // pred_region
        _
      $region80: #{e2e_forward.9} parent=11 // pred_fallthru
        _
      // Predicated region
      $region81: #{e2e_forward.9} parent=11 // pred_check
        %p562 = pneg %p468
      $region82: #{e2e_forward.9} parent=11 // pred_check_branch
        %564 = sbr.rel (%p562) target = $region84
      $region83: #{e2e_forward.9} parent=11 // pred_region
        _
      $region84: #{e2e_forward.9} parent=11 // pred_fallthru
        _
    $region12: #{e2e_forward.9} parent=5 // pred_fallthru
      _
    %p565 = scmp.lt.s32.totalorder %s26, 2
    // Predicated region
    $region85: #{e2e_forward.9} parent=5 // pred_check
      %p566 = pneg %p565
    $region86: #{e2e_forward.9} parent=5 // pred_check_branch
      %568 = sbr.rel (%p566) target = $region88
    $region87: #{e2e_forward.9} parent=5 // pred_region
      // Predicated region
      $region89: #{e2e_forward.9} parent=87 // pred_check
        %p569 = pneg %p58
      $region90: #{e2e_forward.9} parent=87 // pred_check_branch
        %571 = sbr.rel (%p569) target = $region92
      $region91: #{e2e_forward.9} parent=87 // pred_region
        %p572 = scmp.lt.s32.totalorder %s33, 1
        %s573 = scalar_select %p572, %s33, 1
        %s574 = smul.addr %s573, 4
        %s575 = scalar_lea.vmem %s0, %s574
      $region92: #{e2e_forward.9} parent=87 // pred_fallthru
        _
      // Predicated region
      $region93: #{e2e_forward.9} parent=87 // pred_check
        %p576 = pneg %p84
      $region94: #{e2e_forward.9} parent=87 // pred_check_branch
        %578 = sbr.rel (%p576) target = $region96
      $region95: #{e2e_forward.9} parent=87 // pred_region
        %p579 = scmp.lt.s32.totalorder %s33, 1
        %s580 = scalar_select %p579, %s33, 1
        %s581 = scalar_lea.vmem %s1, %s580
      $region96: #{e2e_forward.9} parent=87 // pred_fallthru
        _
    $region88: #{e2e_forward.9} parent=5 // pred_fallthru
      _
    %p582 = scmp.le.s32.totalorder 1, %s26
    %p583 = scmp.lt.s32.totalorder %s26, 3
    %p584 = pnand %p582, %p583
    %p585 = pneg %p584
    // Predicated region
    $region97: #{e2e_forward.9} parent=5 // pred_check
      _
    $region98: #{e2e_forward.9} parent=5 // pred_check_branch
      %587 = sbr.rel (%p584) target = $region100
    $region99: #{e2e_forward.9} parent=5 // pred_region
      %s588 = ssub.s32 %s26, 1
      %p589 = scmp.lt.s32.totalorder %s35, 1
      %s590 = scalar_select %p589, %s35, 1
      %s591 = smul.addr %s590, 4
      %s592 = scalar_lea.vmem %s0, %s591
      %p593 = pneg %p64
      %p594 = pneg %p61
      %p595 = scmp.lt.s32.totalorder %s35, 1
      %s596 = scalar_select %p595, %s35, 1
      %s597 = scalar_lea.vmem %s1, %s596
      %p598 = pneg %p90
      %p599 = pneg %p87
      %p600 = pneg %p111
      %p601 = pneg %p108
      %p602 = pneg %p132
      %p603 = pneg %p129
      %p604 = pneg %p153
      %p605 = pneg %p150
      %p606 = pneg %p174
      %p607 = pneg %p171
      %p608 = pneg %p195
      %p609 = pneg %p192
      %p610 = pneg %p216
      %p611 = pneg %p213
      %p612 = pneg %p237
      %p613 = pneg %p234
      %p614 = pneg %p258
      %p615 = pneg %p255
      %p616 = pneg %p279
      %p617 = pneg %p276
      %p618 = pneg %p300
      %p619 = pneg %p297
      %p620 = pneg %p321
      %p621 = pneg %p318
      %p622 = pneg %p342
      %p623 = pneg %p339
      %p624 = pneg %p363
      %p625 = pneg %p360
      %p626 = pneg %p384
      %p627 = pneg %p381
      %p628 = pneg %p405
      %p629 = pneg %p402
      %p630 = pneg %p426
      %p631 = pneg %p423
      %p632 = pneg %p447
      %p633 = pneg %p444
      %p634 = pneg %p468
      %p635 = pneg %p465
      %p636 = pneg %p496
      %p637 = pneg %p493
      %p638 = scmp.lt.s32.totalorder %s35, 1
      %s639 = scalar_select %p638, %s35, 1
      %p640 = scmp.lt.s32.totalorder %s36, 0
      %s641 = scalar_select %p640, %s36, 0
      %s642 = sadd.s32 %s641, %s639
      %s643 = smul.addr %s642, 4
      %s644 = scalar_lea.vmem %s20, %s643
      %p645 = scmp.lt.s32.totalorder %s35, 1
      %s646 = scalar_select %p645, %s35, 1
      %s647 = smul.addr %s646, 4
      %s648 = scalar_lea.vmem %s0, %s647
      %p649 = scmp.lt.s32.totalorder %s35, 1
      %s650 = scalar_select %p649, %s35, 1
      %s651 = scalar_lea.vmem %s1, %s650
      %p652 = scmp.lt.s32.totalorder %s35, 1
      %s653 = scalar_select %p652, %s35, 1
      %p654 = scmp.lt.s32.totalorder %s36, 0
      %s655 = scalar_select %p654, %s36, 0
      %s656 = sadd.s32 %s655, %s653
      %s657 = smul.addr %s656, 4
      %s658 = scalar_lea.vmem %s20, %s657
      %p660 = scmp.eq.s32.totalorder %s36, 0
      // Predicated region
      $region101: #{e2e_forward.9} parent=99 // pred_check
        %p661 = pneg %p660
      $region102: #{e2e_forward.9} parent=99 // pred_check_branch
        %663 = sbr.rel (%p661) target = $region104
      $region103: #{e2e_forward.9} parent=99 // pred_region
        %v664 = vld [vmem:[%s648] sm:$0x7]
        %v665 = vld [vmem:[%s2] sm:$0x1]
        %v666 = vld [vmem:[%s3] sm:$0x1]
        %vm667 = vcmask 256000
        %v668 = vsel %vm667, %v664, 0.0
        %669 = vadd.xlane.f32.xlu0 %v668
        %v670 = vpop.xlane.xlu0 %669
        %v671 = vrcp.pop 32.0
        %v672 = vmul.f32 %v670, %v671
        %v673 = vsub.f32 %v664, %v672
        %v674 = vmul.f32 %v673, %v673
        %v675 = vsel %vm667, %v674, 0.0
        %676 = vadd.xlane.f32.xlu0 %v675
        %v677 = vpop.xlane.xlu0 %676
        %v678 = vmul.f32 %v677, %v671
        %v679 = vadd.f32 %v678, 1e-12
        %v680 = vrsqrt.pop %v679
        %v681 = vmul.f32 %v673, %v680
        %v683 = vlaneseq
        %v684 = vshrl.u32 %v683, 7
        %v685 = vsub.s32 0, %v684
        %v686 = vrot.slane %v665, %v685
        %v688 = vmul.f32 %v681, %v686
        %v690 = vlaneseq
        %v691 = vshrl.u32 %v690, 7
        %v692 = vsub.s32 0, %v691
        %v693 = vrot.slane %v666, %v692
        %v695 = vadd.f32 %v688, %v693
        %v696 = vpack.c.bf16 %v695, %v695
        %v697 = vld [vmem:[%s4] sm:$0xf]
        %v698 = vld [vmem:[%s4 + $0x4] sm:$0xf]
        %v699 = vld [vmem:[%s4 + $0x8] sm:$0xf]
        %v700 = vld [vmem:[%s4 + $0xc] sm:$0xf]
        %v701 = vld [vmem:[%s5] sm:$0x1]
        %v703 = vlaneseq
        %v704 = vshrl.u32 %v703, 7
        %v705 = vsub.s32 0, %v704
        %v706 = vrot.slane %v701, %v705
        %v712 = vunpack.c.l.b16 %v697
        %v713 = vunpack.c.l.b16 %v698
        %v714 = vunpack.c.l.b16 %v699
        %v715 = vunpack.c.l.b16 %v700
        %v716 = vpack.c.b16 %v713, %v712
        %v717 = vpack.c.b16 %v715, %v714
        %vm720 = vcmask 261120
        %v722 = vsel %vm720, %v696, 0
        %724 = vmatprep.subr.bf16.mxu0 0
        %725 = vmatpush1.bf16.msra.mxu0 %v716
        %726 = vmatprep.subr.bf16.mxu0 0
        %727 = vmatpush1.bf16.msra.mxu0 %v717
        %728 = vmatprep.subr.bf16.mxu0 0
        %729 = vmatpush1.bf16.msra.mxu0 0
        %730 = vmatprep.subr.bf16.mxu0 0
        %731 = vmatpush1.bf16.msra.mxu0 0
        %732 = vmatprep.subr.bf16.mxu0 0
        %733 = vmatpush1.bf16.msra.mxu0 0
        %734 = vmatprep.subr.bf16.mxu0 0
        %735 = vmatpush1.bf16.msra.mxu0 0
        %736 = vmatprep.subr.bf16.mxu0 0
        %737 = vmatpush1.bf16.msra.mxu0 0
        %738 = vmatprep.subr.bf16.mxu0 0
        %739 = vmatpush1.bf16.msra.mxu0 0
        %740 = vmatprep.subr.bf16.mxu0 0
        %741 = vmatpush1.bf16.msra.mxu0 0
        %742 = vmatprep.subr.bf16.mxu0 0
        %743 = vmatpush1.bf16.msra.mxu0 0
        %744 = vmatprep.subr.bf16.mxu0 0
        %745 = vmatpush1.bf16.msra.mxu0 0
        %746 = vmatprep.subr.bf16.mxu0 0
        %747 = vmatpush1.bf16.msra.mxu0 0
        %748 = vmatprep.subr.bf16.mxu0 0
        %749 = vmatpush1.bf16.msra.mxu0 0
        %750 = vmatprep.subr.bf16.mxu0 0
        %751 = vmatpush1.bf16.msra.mxu0 0
        %752 = vmatprep.subr.bf16.mxu0 0
        %753 = vmatpush1.bf16.msra.mxu0 0
        %754 = vmatprep.subr.bf16.mxu0 0
        %755 = vmatpush1.bf16.msra.mxu0 0
        %756 = vmatprep.mubr.bf16.mxu0 0
        %757 = vmatmul.mubr.bf16.gmra.mrb[0].mxu0 %v722
        %v758 = vpop.f32.mrb[0].mxu0
        %v759 = vadd.f32 %v706, %v758
        %v760 = vpop.f32.mrb[0].mxu0
        %v761 = vpop.f32.mrb[0].mxu0
        %v762 = vpop.f32.mrb[0].mxu0
        %763 = vdwg.mxu0
        %v764 = vpack.c.bf16 %v759, %v759
        %vm765 = vcmask 58368
        %vm766 = vsmask.f32 1280
        %vm767 = vmand %vm765, %vm766
        %v768 = vld [vmem:[#allocation2] sm:$0x3]
        %v769 = vsel %vm767, %v764, %v768
        %770 = vst [vmem:[#allocation2] sm:$0x3] %v769
        %v771 = vld [vmem:[%s6] sm:$0xf]
        %v772 = vld [vmem:[%s6 + $0x4] sm:$0xf]
        %v773 = vld [vmem:[%s6 + $0x8] sm:$0xf]
        %v774 = vld [vmem:[%s6 + $0xc] sm:$0xf]
        %v775 = vld [vmem:[%s7] sm:$0x1]
        %v777 = vlaneseq
        %v778 = vshrl.u32 %v777, 7
        %v779 = vsub.s32 0, %v778
        %v780 = vrot.slane %v775, %v779
        %v786 = vunpack.c.l.b16 %v771
        %v787 = vunpack.c.l.b16 %v772
        %v788 = vunpack.c.l.b16 %v773
        %v789 = vunpack.c.l.b16 %v774
        %v790 = vpack.c.b16 %v787, %v786
        %v791 = vpack.c.b16 %v789, %v788
        %794 = vmatprep.subr.bf16.mxu0 0
        %795 = vmatpush1.bf16.msra.mxu0 %v790
        %796 = vmatprep.subr.bf16.mxu0 0
        %797 = vmatpush1.bf16.msra.mxu0 %v791
        %798 = vmatprep.subr.bf16.mxu0 0
        %799 = vmatpush1.bf16.msra.mxu0 0
        %800 = vmatprep.subr.bf16.mxu0 0
        %801 = vmatpush1.bf16.msra.mxu0 0
        %802 = vmatprep.subr.bf16.mxu0 0
        %803 = vmatpush1.bf16.msra.mxu0 0
        %804 = vmatprep.subr.bf16.mxu0 0
        %805 = vmatpush1.bf16.msra.mxu0 0
        %806 = vmatprep.subr.bf16.mxu0 0
        %807 = vmatpush1.bf16.msra.mxu0 0
        %808 = vmatprep.subr.bf16.mxu0 0
        %809 = vmatpush1.bf16.msra.mxu0 0
        %810 = vmatprep.subr.bf16.mxu0 0
        %811 = vmatpush1.bf16.msra.mxu0 0
        %812 = vmatprep.subr.bf16.mxu0 0
        %813 = vmatpush1.bf16.msra.mxu0 0
        %814 = vmatprep.subr.bf16.mxu0 0
        %815 = vmatpush1.bf16.msra.mxu0 0
        %816 = vmatprep.subr.bf16.mxu0 0
        %817 = vmatpush1.bf16.msra.mxu0 0
        %818 = vmatprep.subr.bf16.mxu0 0
        %819 = vmatpush1.bf16.msra.mxu0 0
        %820 = vmatprep.subr.bf16.mxu0 0
        %821 = vmatpush1.bf16.msra.mxu0 0
        %822 = vmatprep.subr.bf16.mxu0 0
        %823 = vmatpush1.bf16.msra.mxu0 0
        %824 = vmatprep.subr.bf16.mxu0 0
        %825 = vmatpush1.bf16.msra.mxu0 0
        %826 = vmatprep.mubr.bf16.mxu0 0
        %827 = vmatmul.mubr.bf16.gmra.mrb[0].mxu0 %v722
        %v828 = vpop.f32.mrb[0].mxu0
        %v829 = vadd.f32 %v780, %v828
        %v830 = vpop.f32.mrb[0].mxu0
        %v831 = vpop.f32.mrb[0].mxu0
        %v832 = vpop.f32.mrb[0].mxu0
        %833 = vdwg.mxu0
        %v834 = vpack.c.bf16 %v829, %v829
        %v835 = vld [vmem:[#allocation3] sm:$0x3]
        %v836 = vsel %vm767, %v834, %v835
        %837 = vst [vmem:[#allocation3] sm:$0x3] %v836
        %v838 = vld [vmem:[%s8] sm:$0xf]
        %v839 = vld [vmem:[%s8 + $0x4] sm:$0xf]
        %v840 = vld [vmem:[%s8 + $0x8] sm:$0xf]
        %v841 = vld [vmem:[%s8 + $0xc] sm:$0xf]
        %v842 = vld [vmem:[%s9] sm:$0x1]
        %v844 = vlaneseq
        %v845 = vshrl.u32 %v844, 7
        %v846 = vsub.s32 0, %v845
        %v847 = vrot.slane %v842, %v846
        %v853 = vunpack.c.l.b16 %v838
        %v854 = vunpack.c.l.b16 %v839
        %v855 = vunpack.c.l.b16 %v840
        %v856 = vunpack.c.l.b16 %v841
        %v857 = vpack.c.b16 %v854, %v853
        %v858 = vpack.c.b16 %v856, %v855
        %861 = vmatprep.subr.bf16.mxu0 0
        %862 = vmatpush1.bf16.msra.mxu0 %v857
        %863 = vmatprep.subr.bf16.mxu0 0
        %864 = vmatpush1.bf16.msra.mxu0 %v858
        %865 = vmatprep.subr.bf16.mxu0 0
        %866 = vmatpush1.bf16.msra.mxu0 0
        %867 = vmatprep.subr.bf16.mxu0 0
        %868 = vmatpush1.bf16.msra.mxu0 0
        %869 = vmatprep.subr.bf16.mxu0 0
        %870 = vmatpush1.bf16.msra.mxu0 0
        %871 = vmatprep.subr.bf16.mxu0 0
        %872 = vmatpush1.bf16.msra.mxu0 0
        %873 = vmatprep.subr.bf16.mxu0 0
        %874 = vmatpush1.bf16.msra.mxu0 0
        %875 = vmatprep.subr.bf16.mxu0 0
        %876 = vmatpush1.bf16.msra.mxu0 0
        %877 = vmatprep.subr.bf16.mxu0 0
        %878 = vmatpush1.bf16.msra.mxu0 0
        %879 = vmatprep.subr.bf16.mxu0 0
        %880 = vmatpush1.bf16.msra.mxu0 0
        %881 = vmatprep.subr.bf16.mxu0 0
        %882 = vmatpush1.bf16.msra.mxu0 0
        %883 = vmatprep.subr.bf16.mxu0 0
        %884 = vmatpush1.bf16.msra.mxu0 0
        %885 = vmatprep.subr.bf16.mxu0 0
        %886 = vmatpush1.bf16.msra.mxu0 0
        %887 = vmatprep.subr.bf16.mxu0 0
        %888 = vmatpush1.bf16.msra.mxu0 0
        %889 = vmatprep.subr.bf16.mxu0 0
        %890 = vmatpush1.bf16.msra.mxu0 0
        %891 = vmatprep.subr.bf16.mxu0 0
        %892 = vmatpush1.bf16.msra.mxu0 0
        %893 = vmatprep.mubr.bf16.mxu0 0
        %894 = vmatmul.mubr.bf16.gmra.mrb[0].mxu0 %v722
        %v895 = vpop.f32.mrb[0].mxu0
        %v896 = vadd.f32 %v847, %v895
        %v897 = vpop.f32.mrb[0].mxu0
        %v898 = vpop.f32.mrb[0].mxu0
        %v899 = vpop.f32.mrb[0].mxu0
        %900 = vdwg.mxu0
        %v901 = vpack.c.bf16 %v896, %v896
        %v902 = vld [vmem:[#allocation4] sm:$0x3]
        %v903 = vsel %vm767, %v901, %v902
        %904 = vst [vmem:[#allocation4] sm:$0x3] %v903
        %s905 = scalar_lea.vmem %s4, 16
        %v906 = vld [vmem:[%s905] sm:$0xf]
        %v907 = vld [vmem:[%s905 + $0x4] sm:$0xf]
        %v908 = vld [vmem:[%s905 + $0x8] sm:$0xf]
        %v909 = vld [vmem:[%s905 + $0xc] sm:$0xf]
        %s910 = scalar_lea.vmem %s5, 1
        %v911 = vld [vmem:[%s910] sm:$0x1]
        %v913 = vlaneseq
        %v914 = vshrl.u32 %v913, 7
        %v915 = vsub.s32 0, %v914
        %v916 = vrot.slane %v911, %v915
        %v922 = vunpack.c.l.b16 %v906
        %v923 = vunpack.c.l.b16 %v907
        %v924 = vunpack.c.l.b16 %v908
        %v925 = vunpack.c.l.b16 %v909
        %v926 = vpack.c.b16 %v923, %v922
        %v927 = vpack.c.b16 %v925, %v924
        %930 = vmatprep.subr.bf16.mxu0 0
        %931 = vmatpush1.bf16.msra.mxu0 %v926
        %932 = vmatprep.subr.bf16.mxu0 0
        %933 = vmatpush1.bf16.msra.mxu0 %v927
        %934 = vmatprep.subr.bf16.mxu0 0
        %935 = vmatpush1.bf16.msra.mxu0 0
        %936 = vmatprep.subr.bf16.mxu0 0
        %937 = vmatpush1.bf16.msra.mxu0 0
        %938 = vmatprep.subr.bf16.mxu0 0
        %939 = vmatpush1.bf16.msra.mxu0 0
        %940 = vmatprep.subr.bf16.mxu0 0
        %941 = vmatpush1.bf16.msra.mxu0 0
        %942 = vmatprep.subr.bf16.mxu0 0
        %943 = vmatpush1.bf16.msra.mxu0 0
        %944 = vmatprep.subr.bf16.mxu0 0
        %945 = vmatpush1.bf16.msra.mxu0 0
        %946 = vmatprep.subr.bf16.mxu0 0
        %947 = vmatpush1.bf16.msra.mxu0 0
        %948 = vmatprep.subr.bf16.mxu0 0
        %949 = vmatpush1.bf16.msra.mxu0 0
        %950 = vmatprep.subr.bf16.mxu0 0
        %951 = vmatpush1.bf16.msra.mxu0 0
        %952 = vmatprep.subr.bf16.mxu0 0
        %953 = vmatpush1.bf16.msra.mxu0 0
        %954 = vmatprep.subr.bf16.mxu0 0
        %955 = vmatpush1.bf16.msra.mxu0 0
        %956 = vmatprep.subr.bf16.mxu0 0
        %957 = vmatpush1.bf16.msra.mxu0 0
        %958 = vmatprep.subr.bf16.mxu0 0
        %959 = vmatpush1.bf16.msra.mxu0 0
        %960 = vmatprep.subr.bf16.mxu0 0
        %961 = vmatpush1.bf16.msra.mxu0 0
        %962 = vmatprep.mubr.bf16.mxu0 0
        %963 = vmatmul.mubr.bf16.gmra.mrb[0].mxu0 %v722
        %v964 = vpop.f32.mrb[0].mxu0
        %v965 = vadd.f32 %v916, %v964
        %v966 = vpop.f32.mrb[0].mxu0
        %v967 = vpop.f32.mrb[0].mxu0
        %v968 = vpop.f32.mrb[0].mxu0
        %969 = vdwg.mxu0
        %v970 = vpack.c.bf16 %v965, %v965
        %s971 = scalar_lea.vmem [#allocation2], 2
        %v972 = vld [vmem:[%s971] sm:$0x3]
        %v973 = vsel %vm767, %v970, %v972
        %974 = vst [vmem:[%s971] sm:$0x3] %v973
        %s975 = scalar_lea.vmem %s6, 16
        %v976 = vld [vmem:[%s975] sm:$0xf]
        %v977 = vld [vmem:[%s975 + $0x4] sm:$0xf]
        %v978 = vld [vmem:[%s975 + $0x8] sm:$0xf]
        %v979 = vld [vmem:[%s975 + $0xc] sm:$0xf]
        %s980 = scalar_lea.vmem %s7, 1
        %v981 = vld [vmem:[%s980] sm:$0x1]
        %v983 = vlaneseq
        %v984 = vshrl.u32 %v983, 7
        %v985 = vsub.s32 0, %v984
        %v986 = vrot.slane %v981, %v985
        %v992 = vunpack.c.l.b16 %v976
        %v993 = vunpack.c.l.b16 %v977
        %v994 = vunpack.c.l.b16 %v978
        %v995 = vunpack.c.l.b16 %v979
        %v996 = vpack.c.b16 %v993, %v992
        %v997 = vpack.c.b16 %v995, %v994
        %1000 = vmatprep.subr.bf16.mxu0 0
        %1001 = vmatpush1.bf16.msra.mxu0 %v996
        %1002 = vmatprep.subr.bf16.mxu0 0
        %1003 = vmatpush1.bf16.msra.mxu0 %v997
        %1004 = vmatprep.subr.bf16.mxu0 0
        %1005 = vmatpush1.bf16.msra.mxu0 0
        %1006 = vmatprep.subr.bf16.mxu0 0
        %1007 = vmatpush1.bf16.msra.mxu0 0
        %1008 = vmatprep.subr.bf16.mxu0 0
        %1009 = vmatpush1.bf16.msra.mxu0 0
        %1010 = vmatprep.subr.bf16.mxu0 0
        %1011 = vmatpush1.bf16.msra.mxu0 0
        %1012 = vmatprep.subr.bf16.mxu0 0
        %1013 = vmatpush1.bf16.msra.mxu0 0
        %1014 = vmatprep.subr.bf16.mxu0 0
        %1015 = vmatpush1.bf16.msra.mxu0 0
        %1016 = vmatprep.subr.bf16.mxu0 0
        %1017 = vmatpush1.bf16.msra.mxu0 0
        %1018 = vmatprep.subr.bf16.mxu0 0
        %1019 = vmatpush1.bf16.msra.mxu0 0
        %1020 = vmatprep.subr.bf16.mxu0 0
        %1021 = vmatpush1.bf16.msra.mxu0 0
        %1022 = vmatprep.subr.bf16.mxu0 0
        %1023 = vmatpush1.bf16.msra.mxu0 0
        %1024 = vmatprep.subr.bf16.mxu0 0
        %1025 = vmatpush1.bf16.msra.mxu0 0
        %1026 = vmatprep.subr.bf16.mxu0 0
        %1027 = vmatpush1.bf16.msra.mxu0 0
        %1028 = vmatprep.subr.bf16.mxu0 0
        %1029 = vmatpush1.bf16.msra.mxu0 0
        %1030 = vmatprep.subr.bf16.mxu0 0
        %1031 = vmatpush1.bf16.msra.mxu0 0
        %1032 = vmatprep.mubr.bf16.mxu0 0
        %1033 = vmatmul.mubr.bf16.gmra.mrb[0].mxu0 %v722
        %v1034 = vpop.f32.mrb[0].mxu0
        %v1035 = vadd.f32 %v986, %v1034
        %v1036 = vpop.f32.mrb[0].mxu0
        %v1037 = vpop.f32.mrb[0].mxu0
        %v1038 = vpop.f32.mrb[0].mxu0
        %1039 = vdwg.mxu0
        %v1040 = vpack.c.bf16 %v1035, %v1035
        %s1041 = scalar_lea.vmem [#allocation3], 2
        %v1042 = vld [vmem:[%s1041] sm:$0x3]
        %v1043 = vsel %vm767, %v1040, %v1042
        %1044 = vst [vmem:[%s1041] sm:$0x3] %v1043
        %s1045 = scalar_lea.vmem %s8, 16
        %v1046 = vld [vmem:[%s1045] sm:$0xf]
        %v1047 = vld [vmem:[%s1045 + $0x4] sm:$0xf]
        %v1048 = vld [vmem:[%s1045 + $0x8] sm:$0xf]
        %v1049 = vld [vmem:[%s1045 + $0xc] sm:$0xf]
        %s1050 = scalar_lea.vmem %s9, 1
        %v1051 = vld [vmem:[%s1050] sm:$0x1]
        %v1053 = vlaneseq
        %v1054 = vshrl.u32 %v1053, 7
        %v1055 = vsub.s32 0, %v1054
        %v1056 = vrot.slane %v1051, %v1055
        %v1062 = vunpack.c.l.b16 %v1046
        %v1063 = vunpack.c.l.b16 %v1047
        %v1064 = vunpack.c.l.b16 %v1048
        %v1065 = vunpack.c.l.b16 %v1049
        %v1066 = vpack.c.b16 %v1063, %v1062
        %v1067 = vpack.c.b16 %v1065, %v1064
        %1070 = vmatprep.subr.bf16.mxu0 0
        %1071 = vmatpush1.bf16.msra.mxu0 %v1066
        %1072 = vmatprep.subr.bf16.mxu0 0
        %1073 = vmatpush1.bf16.msra.mxu0 %v1067
        %1074 = vmatprep.subr.bf16.mxu0 0
        %1075 = vmatpush1.bf16.msra.mxu0 0
        %1076 = vmatprep.subr.bf16.mxu0 0
        %1077 = vmatpush1.bf16.msra.mxu0 0
        %1078 = vmatprep.subr.bf16.mxu0 0
        %1079 = vmatpush1.bf16.msra.mxu0 0
        %1080 = vmatprep.subr.bf16.mxu0 0
        %1081 = vmatpush1.bf16.msra.mxu0 0
        %1082 = vmatprep.subr.bf16.mxu0 0
        %1083 = vmatpush1.bf16.msra.mxu0 0
        %1084 = vmatprep.subr.bf16.mxu0 0
        %1085 = vmatpush1.bf16.msra.mxu0 0
        %1086 = vmatprep.subr.bf16.mxu0 0
        %1087 = vmatpush1.bf16.msra.mxu0 0
        %1088 = vmatprep.subr.bf16.mxu0 0
        %1089 = vmatpush1.bf16.msra.mxu0 0
        %1090 = vmatprep.subr.bf16.mxu0 0
        %1091 = vmatpush1.bf16.msra.mxu0 0
        %1092 = vmatprep.subr.bf16.mxu0 0
        %1093 = vmatpush1.bf16.msra.mxu0 0
        %1094 = vmatprep.subr.bf16.mxu0 0
        %1095 = vmatpush1.bf16.msra.mxu0 0
        %1096 = vmatprep.subr.bf16.mxu0 0
        %1097 = vmatpush1.bf16.msra.mxu0 0
        %1098 = vmatprep.subr.bf16.mxu0 0
        %1099 = vmatpush1.bf16.msra.mxu0 0
        %1100 = vmatprep.subr.bf16.mxu0 0
        %1101 = vmatpush1.bf16.msra.mxu0 0
        %1102 = vmatprep.mubr.bf16.mxu0 0
        %1103 = vmatmul.mubr.bf16.gmra.mrb[0].mxu0 %v722
        %v1104 = vpop.f32.mrb[0].mxu0
        %v1105 = vadd.f32 %v1056, %v1104
        %v1106 = vpop.f32.mrb[0].mxu0
        %v1107 = vpop.f32.mrb[0].mxu0
        %v1108 = vpop.f32.mrb[0].mxu0
        %1109 = vdwg.mxu0
        %v1110 = vpack.c.bf16 %v1105, %v1105
        %s1111 = scalar_lea.vmem [#allocation4], 2
        %v1112 = vld [vmem:[%s1111] sm:$0x3]
        %v1113 = vsel %vm767, %v1110, %v1112
        %1114 = vst [vmem:[%s1111] sm:$0x3] %v1113
        %s1115 = scalar_lea.vmem %s4, 32
        %v1116 = vld [vmem:[%s1115] sm:$0xf]
        %v1117 = vld [vmem:[%s1115 + $0x4] sm:$0xf]
        %v1118 = vld [vmem:[%s1115 + $0x8] sm:$0xf]
        %v1119 = vld [vmem:[%s1115 + $0xc] sm:$0xf]
        %s1120 = scalar_lea.vmem %s5, 2
        %v1121 = vld [vmem:[%s1120] sm:$0x1]
        %v1123 = vlaneseq
        %v1124 = vshrl.u32 %v1123, 7
        %v1125 = vsub.s32 0, %v1124
        %v1126 = vrot.slane %v1121, %v1125
        %v1132 = vunpack.c.l.b16 %v1116
        %v1133 = vunpack.c.l.b16 %v1117
        %v1134 = vunpack.c.l.b16 %v1118
        %v1135 = vunpack.c.l.b16 %v1119
        %v1136 = vpack.c.b16 %v1133, %v1132
        %v1137 = vpack.c.b16 %v1135, %v1134
        %1140 = vmatprep.subr.bf16.mxu0 0
        %1141 = vmatpush1.bf16.msra.mxu0 %v1136
        %1142 = vmatprep.subr.bf16.mxu0 0
        %1143 = vmatpush1.bf16.msra.mxu0 %v1137
        %1144 = vmatprep.subr.bf16.mxu0 0
        %1145 = vmatpush1.bf16.msra.mxu0 0
        %1146 = vmatprep.subr.bf16.mxu0 0
        %1147 = vmatpush1.bf16.msra.mxu0 0
        %1148 = vmatprep.subr.bf16.mxu0 0
        %1149 = vmatpush1.bf16.msra.mxu0 0
        %1150 = vmatprep.subr.bf16.mxu0 0
        %1151 = vmatpush1.bf16.msra.mxu0 0
        %1152 = vmatprep.subr.bf16.mxu0 0
        %1153 = vmatpush1.bf16.msra.mxu0 0
        %1154 = vmatprep.subr.bf16.mxu0 0
        %1155 = vmatpush1.bf16.msra.mxu0 0
        %1156 = vmatprep.subr.bf16.mxu0 0
        %1157 = vmatpush1.bf16.msra.mxu0 0
        %1158 = vmatprep.subr.bf16.mxu0 0
        %1159 = vmatpush1.bf16.msra.mxu0 0
        %1160 = vmatprep.subr.bf16.mxu0 0
        %1161 = vmatpush1.bf16.msra.mxu0 0
        %1162 = vmatprep.subr.bf16.mxu0 0
        %1163 = vmatpush1.bf16.msra.mxu0 0
        %1164 = vmatprep.subr.bf16.mxu0 0
        %1165 = vmatpush1.bf16.msra.mxu0 0
        %1166 = vmatprep.subr.bf16.mxu0 0
        %1167 = vmatpush1.bf16.msra.mxu0 0
        %1168 = vmatprep.subr.bf16.mxu0 0
        %1169 = vmatpush1.bf16.msra.mxu0 0
        %1170 = vmatprep.subr.bf16.mxu0 0
        %1171 = vmatpush1.bf16.msra.mxu0 0
        %1172 = vmatprep.mubr.bf16.mxu0 0
        %1173 = vmatmul.mubr.bf16.gmra.mrb[0].mxu0 %v722
        %v1174 = vpop.f32.mrb[0].mxu0
        %v1175 = vadd.f32 %v1126, %v1174
        %v1176 = vpop.f32.mrb[0].mxu0
        %v1177 = vpop.f32.mrb[0].mxu0
        %v1178 = vpop.f32.mrb[0].mxu0
        %1179 = vdwg.mxu0
        %v1180 = vpack.c.bf16 %v1175, %v1175
        %s1181 = scalar_lea.vmem [#allocation2], 4
        %v1182 = vld [vmem:[%s1181] sm:$0x3]
        %v1183 = vsel %vm767, %v1180, %v1182
        %1184 = vst [vmem:[%s1181] sm:$0x3] %v1183
        %s1185 = scalar_lea.vmem %s6, 32
        %v1186 = vld [vmem:[%s1185] sm:$0xf]
        %v1187 = vld [vmem:[%s1185 + $0x4] sm:$0xf]
        %v1188 = vld [vmem:[%s1185 + $0x8] sm:$0xf]
        %v1189 = vld [vmem:[%s1185 + $0xc] sm:$0xf]
        %s1190 = scalar_lea.vmem %s7, 2
        %v1191 = vld [vmem:[%s1190] sm:$0x1]
        %v1193 = vlaneseq
        %v1194 = vshrl.u32 %v1193, 7
        %v1195 = vsub.s32 0, %v1194
        %v1196 = vrot.slane %v1191, %v1195
        %v1202 = vunpack.c.l.b16 %v1186
        %v1203 = vunpack.c.l.b16 %v1187
        %v1204 = vunpack.c.l.b16 %v1188
        %v1205 = vunpack.c.l.b16 %v1189
        %v1206 = vpack.c.b16 %v1203, %v1202
        %v1207 = vpack.c.b16 %v1205, %v1204
        %1210 = vmatprep.subr.bf16.mxu0 0
        %1211 = vmatpush1.bf16.msra.mxu0 %v1206
        %1212 = vmatprep.subr.bf16.mxu0 0
        %1213 = vmatpush1.bf16.msra.mxu0 %v1207
        %1214 = vmatprep.subr.bf16.mxu0 0
        %1215 = vmatpush1.bf16.msra.mxu0 0
        %1216 = vmatprep.subr.bf16.mxu0 0
        %1217 = vmatpush1.bf16.msra.mxu0 0
        %1218 = vmatprep.subr.bf16.mxu0 0
        %1219 = vmatpush1.bf16.msra.mxu0 0
        %1220 = vmatprep.subr.bf16.mxu0 0
        %1221 = vmatpush1.bf16.msra.mxu0 0
        %1222 = vmatprep.subr.bf16.mxu0 0
        %1223 = vmatpush1.bf16.msra.mxu0 0
        %1224 = vmatprep.subr.bf16.mxu0 0
        %1225 = vmatpush1.bf16.msra.mxu0 0
        %1226 = vmatprep.subr.bf16.mxu0 0
        %1227 = vmatpush1.bf16.msra.mxu0 0
        %1228 = vmatprep.subr.bf16.mxu0 0
        %1229 = vmatpush1.bf16.msra.mxu0 0
        %1230 = vmatprep.subr.bf16.mxu0 0
        %1231 = vmatpush1.bf16.msra.mxu0 0
        %1232 = vmatprep.subr.bf16.mxu0 0
        %1233 = vmatpush1.bf16.msra.mxu0 0
        %1234 = vmatprep.subr.bf16.mxu0 0
        %1235 = vmatpush1.bf16.msra.mxu0 0
        %1236 = vmatprep.subr.bf16.mxu0 0
        %1237 = vmatpush1.bf16.msra.mxu0 0
        %1238 = vmatprep.subr.bf16.mxu0 0
        %1239 = vmatpush1.bf16.msra.mxu0 0
        %1240 = vmatprep.subr.bf16.mxu0 0
        %1241 = vmatpush1.bf16.msra.mxu0 0
        %1242 = vmatprep.mubr.bf16.mxu0 0
        %1243 = vmatmul.mubr.bf16.gmra.mrb[0].mxu0 %v722
        %v1244 = vpop.f32.mrb[0].mxu0
        %v1245 = vadd.f32 %v1196, %v1244
        %v1246 = vpop.f32.mrb[0].mxu0
        %v1247 = vpop.f32.mrb[0].mxu0
        %v1248 = vpop.f32.mrb[0].mxu0
        %1249 = vdwg.mxu0
        %v1250 = vpack.c.bf16 %v1245, %v1245
        %s1251 = scalar_lea.vmem [#allocation3], 4
        %v1252 = vld [vmem:[%s1251] sm:$0x3]
        %v1253 = vsel %vm767, %v1250, %v1252
        %1254 = vst [vmem:[%s1251] sm:$0x3] %v1253
        %s1255 = scalar_lea.vmem %s8, 32
        %v1256 = vld [vmem:[%s1255] sm:$0xf]
        %v1257 = vld [vmem:[%s1255 + $0x4] sm:$0xf]
        %v1258 = vld [vmem:[%s1255 + $0x8] sm:$0xf]
        %v1259 = vld [vmem:[%s1255 + $0xc] sm:$0xf]
        %s1260 = scalar_lea.vmem %s9, 2
        %v1261 = vld [vmem:[%s1260] sm:$0x1]
        %v1263 = vlaneseq
        %v1264 = vshrl.u32 %v1263, 7
        %v1265 = vsub.s32 0, %v1264
        %v1266 = vrot.slane %v1261, %v1265
        %v1272 = vunpack.c.l.b16 %v1256
        %v1273 = vunpack.c.l.b16 %v1257
        %v1274 = vunpack.c.l.b16 %v1258
        %v1275 = vunpack.c.l.b16 %v1259
        %v1276 = vpack.c.b16 %v1273, %v1272
        %v1277 = vpack.c.b16 %v1275, %v1274
        %1280 = vmatprep.subr.bf16.mxu0 0
        %1281 = vmatpush1.bf16.msra.mxu0 %v1276
        %1282 = vmatprep.subr.bf16.mxu0 0
        %1283 = vmatpush1.bf16.msra.mxu0 %v1277
        %1284 = vmatprep.subr.bf16.mxu0 0
        %1285 = vmatpush1.bf16.msra.mxu0 0
        %1286 = vmatprep.subr.bf16.mxu0 0
        %1287 = vmatpush1.bf16.msra.mxu0 0
        %1288 = vmatprep.subr.bf16.mxu0 0
        %1289 = vmatpush1.bf16.msra.mxu0 0
        %1290 = vmatprep.subr.bf16.mxu0 0
        %1291 = vmatpush1.bf16.msra.mxu0 0
        %1292 = vmatprep.subr.bf16.mxu0 0
        %1293 = vmatpush1.bf16.msra.mxu0 0
        %1294 = vmatprep.subr.bf16.mxu0 0
        %1295 = vmatpush1.bf16.msra.mxu0 0
        %1296 = vmatprep.subr.bf16.mxu0 0
        %1297 = vmatpush1.bf16.msra.mxu0 0
        %1298 = vmatprep.subr.bf16.mxu0 0
        %1299 = vmatpush1.bf16.msra.mxu0 0
        %1300 = vmatprep.subr.bf16.mxu0 0
        %1301 = vmatpush1.bf16.msra.mxu0 0
        %1302 = vmatprep.subr.bf16.mxu0 0
        %1303 = vmatpush1.bf16.msra.mxu0 0
        %1304 = vmatprep.subr.bf16.mxu0 0
        %1305 = vmatpush1.bf16.msra.mxu0 0
        %1306 = vmatprep.subr.bf16.mxu0 0
        %1307 = vmatpush1.bf16.msra.mxu0 0
        %1308 = vmatprep.subr.bf16.mxu0 0
        %1309 = vmatpush1.bf16.msra.mxu0 0
        %1310 = vmatprep.subr.bf16.mxu0 0
        %1311 = vmatpush1.bf16.msra.mxu0 0
        %1312 = vmatprep.mubr.bf16.mxu0 0
        %1313 = vmatmul.mubr.bf16.gmra.mrb[0].mxu0 %v722
        %v1314 = vpop.f32.mrb[0].mxu0
        %v1315 = vadd.f32 %v1266, %v1314
        %v1316 = vpop.f32.mrb[0].mxu0
        %v1317 = vpop.f32.mrb[0].mxu0
        %v1318 = vpop.f32.mrb[0].mxu0
        %1319 = vdwg.mxu0
        %v1320 = vpack.c.bf16 %v1315, %v1315
        %s1321 = scalar_lea.vmem [#allocation4], 4
        %v1322 = vld [vmem:[%s1321] sm:$0x3]
        %v1323 = vsel %vm767, %v1320, %v1322
        %1324 = vst [vmem:[%s1321] sm:$0x3] %v1323
        %s1325 = scalar_lea.vmem %s4, 48
        %v1326 = vld [vmem:[%s1325] sm:$0xf]
        %v1327 = vld [vmem:[%s1325 + $0x4] sm:$0xf]
        %v1328 = vld [vmem:[%s1325 + $0x8] sm:$0xf]
        %v1329 = vld [vmem:[%s1325 + $0xc] sm:$0xf]
        %s1330 = scalar_lea.vmem %s5, 3
        %v1331 = vld [vmem:[%s1330] sm:$0x1]
        %v1333 = vlaneseq
        %v1334 = vshrl.u32 %v1333, 7
        %v1335 = vsub.s32 0, %v1334
        %v1336 = vrot.slane %v1331, %v1335
        %v1342 = vunpack.c.l.b16 %v1326
        %v1343 = vunpack.c.l.b16 %v1327
        %v1344 = vunpack.c.l.b16 %v1328
        %v1345 = vunpack.c.l.b16 %v1329
        %v1346 = vpack.c.b16 %v1343, %v1342
        %v1347 = vpack.c.b16 %v1345, %v1344
        %1350 = vmatprep.subr.bf16.mxu0 0
        %1351 = vmatpush1.bf16.msra.mxu0 %v1346
        %1352 = vmatprep.subr.bf16.mxu0 0
        %1353 = vmatpush1.bf16.msra.mxu0 %v1347
        %1354 = vmatprep.subr.bf16.mxu0 0
        %1355 = vmatpush1.bf16.msra.mxu0 0
        %1356 = vmatprep.subr.bf16.mxu0 0
        %1357 = vmatpush1.bf16.msra.mxu0 0
        %1358 = vmatprep.subr.bf16.mxu0 0
        %1359 = vmatpush1.bf16.msra.mxu0 0
        %1360 = vmatprep.subr.bf16.mxu0 0
        %1361 = vmatpush1.bf16.msra.mxu0 0
        %1362 = vmatprep.subr.bf16.mxu0 0
        %1363 = vmatpush1.bf16.msra.mxu0 0
        %1364 = vmatprep.subr.bf16.mxu0 0
        %1365 = vmatpush1.bf16.msra.mxu0 0
        %1366 = vmatprep.subr.bf16.mxu0 0
        %1367 = vmatpush1.bf16.msra.mxu0 0
        %1368 = vmatprep.subr.bf16.mxu0 0
        %1369 = vmatpush1.bf16.msra.mxu0 0
        %1370 = vmatprep.subr.bf16.mxu0 0
        %1371 = vmatpush1.bf16.msra.mxu0 0
        %1372 = vmatprep.subr.bf16.mxu0 0
        %1373 = vmatpush1.bf16.msra.mxu0 0
        %1374 = vmatprep.subr.bf16.mxu0 0
        %1375 = vmatpush1.bf16.msra.mxu0 0
        %1376 = vmatprep.subr.bf16.mxu0 0
        %1377 = vmatpush1.bf16.msra.mxu0 0
        %1378 = vmatprep.subr.bf16.mxu0 0
        %1379 = vmatpush1.bf16.msra.mxu0 0
        %1380 = vmatprep.subr.bf16.mxu0 0
        %1381 = vmatpush1.bf16.msra.mxu0 0
        %1382 = vmatprep.mubr.bf16.mxu0 0
        %1383 = vmatmul.mubr.bf16.gmra.mrb[0].mxu0 %v722
        %v1384 = vpop.f32.mrb[0].mxu0
        %v1385 = vadd.f32 %v1336, %v1384
        %v1386 = vpop.f32.mrb[0].mxu0
        %v1387 = vpop.f32.mrb[0].mxu0
        %v1388 = vpop.f32.mrb[0].mxu0
        %1389 = vdwg.mxu0
        %v1390 = vpack.c.bf16 %v1385, %v1385
        %s1391 = scalar_lea.vmem [#allocation2], 6
        %v1392 = vld [vmem:[%s1391] sm:$0x3]
        %v1393 = vsel %vm767, %v1390, %v1392
        %1394 = vst [vmem:[%s1391] sm:$0x3] %v1393
        %s1395 = scalar_lea.vmem %s6, 48
        %v1396 = vld [vmem:[%s1395] sm:$0xf]
        %v1397 = vld [vmem:[%s1395 + $0x4] sm:$0xf]
        %v1398 = vld [vmem:[%s1395 + $0x8] sm:$0xf]
        %v1399 = vld [vmem:[%s1395 + $0xc] sm:$0xf]
        %s1400 = scalar_lea.vmem %s7, 3
        %v1401 = vld [vmem:[%s1400] sm:$0x1]
        %v1403 = vlaneseq
        %v1404 = vshrl.u32 %v1403, 7
        %v1405 = vsub.s32 0, %v1404
        %v1406 = vrot.slane %v1401, %v1405
        %v1412 = vunpack.c.l.b16 %v1396
        %v1413 = vunpack.c.l.b16 %v1397
        %v1414 = vunpack.c.l.b16 %v1398
        %v1415 = vunpack.c.l.b16 %v1399
        %v1416 = vpack.c.b16 %v1413, %v1412
        %v1417 = vpack.c.b16 %v1415, %v1414
        %1420 = vmatprep.subr.bf16.mxu0 0
        %1421 = vmatpush1.bf16.msra.mxu0 %v1416
        %1422 = vmatprep.subr.bf16.mxu0 0
        %1423 = vmatpush1.bf16.msra.mxu0 %v1417
        %1424 = vmatprep.subr.bf16.mxu0 0
        %1425 = vmatpush1.bf16.msra.mxu0 0
        %1426 = vmatprep.subr.bf16.mxu0 0
        %1427 = vmatpush1.bf16.msra.mxu0 0
        %1428 = vmatprep.subr.bf16.mxu0 0
        %1429 = vmatpush1.bf16.msra.mxu0 0
        %1430 = vmatprep.subr.bf16.mxu0 0
        %1431 = vmatpush1.bf16.msra.mxu0 0
        %1432 = vmatprep.subr.bf16.mxu0 0
        %1433 = vmatpush1.bf16.msra.mxu0 0
        %1434 = vmatprep.subr.bf16.mxu0 0
        %1435 = vmatpush1.bf16.msra.mxu0 0
        %1436 = vmatprep.subr.bf16.mxu0 0
        %1437 = vmatpush1.bf16.msra.mxu0 0
        %1438 = vmatprep.subr.bf16.mxu0 0
        %1439 = vmatpush1.bf16.msra.mxu0 0
        %1440 = vmatprep.subr.bf16.mxu0 0
        %1441 = vmatpush1.bf16.msra.mxu0 0
        %1442 = vmatprep.subr.bf16.mxu0 0
        %1443 = vmatpush1.bf16.msra.mxu0 0
        %1444 = vmatprep.subr.bf16.mxu0 0
        %1445 = vmatpush1.bf16.msra.mxu0 0
        %1446 = vmatprep.subr.bf16.mxu0 0
        %1447 = vmatpush1.bf16.msra.mxu0 0
        %1448 = vmatprep.subr.bf16.mxu0 0
        %1449 = vmatpush1.bf16.msra.mxu0 0
        %1450 = vmatprep.subr.bf16.mxu0 0
        %1451 = vmatpush1.bf16.msra.mxu0 0
        %1452 = vmatprep.mubr.bf16.mxu0 0
        %1453 = vmatmul.mubr.bf16.gmra.mrb[0].mxu0 %v722
        %v1454 = vpop.f32.mrb[0].mxu0
        %v1455 = vadd.f32 %v1406, %v1454
        %v1456 = vpop.f32.mrb[0].mxu0
        %v1457 = vpop.f32.mrb[0].mxu0
        %v1458 = vpop.f32.mrb[0].mxu0
        %1459 = vdwg.mxu0
        %v1460 = vpack.c.bf16 %v1455, %v1455
        %s1461 = scalar_lea.vmem [#allocation3], 6
        %v1462 = vld [vmem:[%s1461] sm:$0x3]
        %v1463 = vsel %vm767, %v1460, %v1462
        %1464 = vst [vmem:[%s1461] sm:$0x3] %v1463
        %s1465 = scalar_lea.vmem %s8, 48
        %v1466 = vld [vmem:[%s1465] sm:$0xf]
        %v1467 = vld [vmem:[%s1465 + $0x4] sm:$0xf]
        %v1468 = vld [vmem:[%s1465 + $0x8] sm:$0xf]
        %v1469 = vld [vmem:[%s1465 + $0xc] sm:$0xf]
        %s1470 = scalar_lea.vmem %s9, 3
        %v1471 = vld [vmem:[%s1470] sm:$0x1]
        %v1473 = vlaneseq
        %v1474 = vshrl.u32 %v1473, 7
        %v1475 = vsub.s32 0, %v1474
        %v1476 = vrot.slane %v1471, %v1475
        %v1482 = vunpack.c.l.b16 %v1466
        %v1483 = vunpack.c.l.b16 %v1467
        %v1484 = vunpack.c.l.b16 %v1468
        %v1485 = vunpack.c.l.b16 %v1469
        %v1486 = vpack.c.b16 %v1483, %v1482
        %v1487 = vpack.c.b16 %v1485, %v1484
        %1490 = vmatprep.subr.bf16.mxu0 0
        %1491 = vmatpush1.bf16.msra.mxu0 %v1486
        %1492 = vmatprep.subr.bf16.mxu0 0
        %1493 = vmatpush1.bf16.msra.mxu0 %v1487
        %1494 = vmatprep.subr.bf16.mxu0 0
        %1495 = vmatpush1.bf16.msra.mxu0 0
        %1496 = vmatprep.subr.bf16.mxu0 0
        %1497 = vmatpush1.bf16.msra.mxu0 0
        %1498 = vmatprep.subr.bf16.mxu0 0
        %1499 = vmatpush1.bf16.msra.mxu0 0
        %1500 = vmatprep.subr.bf16.mxu0 0
        %1501 = vmatpush1.bf16.msra.mxu0 0
        %1502 = vmatprep.subr.bf16.mxu0 0
        %1503 = vmatpush1.bf16.msra.mxu0 0
        %1504 = vmatprep.subr.bf16.mxu0 0
        %1505 = vmatpush1.bf16.msra.mxu0 0
        %1506 = vmatprep.subr.bf16.mxu0 0
        %1507 = vmatpush1.bf16.msra.mxu0 0
        %1508 = vmatprep.subr.bf16.mxu0 0
        %1509 = vmatpush1.bf16.msra.mxu0 0
        %1510 = vmatprep.subr.bf16.mxu0 0
        %1511 = vmatpush1.bf16.msra.mxu0 0
        %1512 = vmatprep.subr.bf16.mxu0 0
        %1513 = vmatpush1.bf16.msra.mxu0 0
        %1514 = vmatprep.subr.bf16.mxu0 0
        %1515 = vmatpush1.bf16.msra.mxu0 0
        %1516 = vmatprep.subr.bf16.mxu0 0
        %1517 = vmatpush1.bf16.msra.mxu0 0
        %1518 = vmatprep.subr.bf16.mxu0 0
        %1519 = vmatpush1.bf16.msra.mxu0 0
        %1520 = vmatprep.subr.bf16.mxu0 0
        %1521 = vmatpush1.bf16.msra.mxu0 0
        %1522 = vmatprep.mubr.bf16.mxu0 0
        %1523 = vmatmul.mubr.bf16.gmra.mrb[0].mxu0 %v722
        %v1524 = vpop.f32.mrb[0].mxu0
        %v1525 = vadd.f32 %v1476, %v1524
        %v1526 = vpop.f32.mrb[0].mxu0
        %v1527 = vpop.f32.mrb[0].mxu0
        %v1528 = vpop.f32.mrb[0].mxu0
        %1529 = vdwg.mxu0
        %v1530 = vpack.c.bf16 %v1525, %v1525
        %s1531 = scalar_lea.vmem [#allocation4], 6
        %v1532 = vld [vmem:[%s1531] sm:$0x3]
        %v1533 = vsel %vm767, %v1530, %v1532
        %1534 = vst [vmem:[%s1531] sm:$0x3] %v1533
      $region104: #{e2e_forward.9} parent=99 // pred_fallthru
        _
      %v1535 = vld [vmem:[%s648] sm:$0x7]
      %v1536 = vld [vmem:[%s651] sm:$0x1]
      %vm1537 = vcmask 256000
      %1538 = vst.msk [vmem:[#allocation5] sm:$0x7] %vm1537, 0.0
      %v1539 = vld [vmem:[#allocation2] sm:$0x3]
      %v1540 = vld [vmem:[#allocation3] sm:$0x3]
      %v1541 = vld [vmem:[#allocation4] sm:$0x3]
      %v1543 = vlaneseq
      %v1544 = vshrl.u32 %v1543, 7
      %v1545 = vsub.s32 0, %v1544
      %v1546 = vrot.slane %v1536, %v1545
      %vm1548 = vcmask 64512
      %v1550 = vsel %vm1548, %v1539, 0
      %v1553 = vsel %vm1548, %v1540, 0
      %1555 = vmatprep.subr.bf16.mxu0 0
      %1556 = vmatpush1.bf16.xpose.msra.mxu0 %v1553
      %1557 = vmatprep.subr.bf16.mxu0 0
      %1558 = vmatpush1.bf16.xpose.msra.mxu0 0
      %1559 = vmatprep.subr.bf16.mxu0 0
      %1560 = vmatpush1.bf16.xpose.msra.mxu0 0
      %1561 = vmatprep.subr.bf16.mxu0 0
      %1562 = vmatpush1.bf16.xpose.msra.mxu0 0
      %1563 = vmatprep.subr.bf16.mxu0 0
      %1564 = vmatpush1.bf16.xpose.msra.mxu0 0
      %1565 = vmatprep.subr.bf16.mxu0 0
      %1566 = vmatpush1.bf16.xpose.msra.mxu0 0
      %1567 = vmatprep.subr.bf16.mxu0 0
      %1568 = vmatpush1.bf16.xpose.msra.mxu0 0
      %1569 = vmatprep.subr.bf16.mxu0 0
      %1570 = vmatpush1.bf16.xpose.msra.mxu0 0
      %1571 = vmatprep.subr.bf16.mxu0 0
      %1572 = vmatpush1.bf16.xpose.msra.mxu0 0
      %1573 = vmatprep.subr.bf16.mxu0 0
      %1574 = vmatpush1.bf16.xpose.msra.mxu0 0
      %1575 = vmatprep.subr.bf16.mxu0 0
      %1576 = vmatpush1.bf16.xpose.msra.mxu0 0
      %1577 = vmatprep.subr.bf16.mxu0 0
      %1578 = vmatpush1.bf16.xpose.msra.mxu0 0
      %1579 = vmatprep.subr.bf16.mxu0 0
      %1580 = vmatpush1.bf16.xpose.msra.mxu0 0
      %1581 = vmatprep.subr.bf16.mxu0 0
      %1582 = vmatpush1.bf16.xpose.msra.mxu0 0
      %1583 = vmatprep.subr.bf16.mxu0 0
      %1584 = vmatpush1.bf16.xpose.msra.mxu0 0
      %1585 = vmatprep.subr.bf16.mxu0 0
      %1586 = vmatpush1.bf16.xpose.msra.mxu0 0
      %1587 = vmatprep.mubr.bf16.mxu0 0
      %1588 = vmatmul.mubr.bf16.gmra.mrb[0].mxu0 %v1550
      %v1589 = vpop.f32.mrb[0].mxu0
      %v1590 = vadd.f32 %v1546, %v1589
      %v1591 = vpop.f32.mrb[0].mxu0
      %v1592 = vpop.f32.mrb[0].mxu0
      %v1593 = vpop.f32.mrb[0].mxu0
      %1594 = vdwg.mxu0
      %vm1595 = vcmask 18432
      %v1596 = vsel %vm1595, %v1590, -inf
      %1597 = vmax.xlane.f32.xlu0 %v1596
      %v1598 = vpop.xlane.xlu0 %1597
      %v1599 = vsub.f32 %v1590, %v1598
      %v1600 = vmul.f32 %v1599, 1.442695
      %v1601 = vpow.pop %v1600
      %v1602 = vsel %vm1595, %v1601, 0.0
      %1603 = vadd.xlane.f32.xlu0 %v1602
      %v1604 = vpop.xlane.xlu0 %1603
      %v1605 = vmax.f32 %v1604, 1e-30
      %v1606 = vrcp.pop %v1605
      %v1607 = vmul.f32 %v1601, %v1606
      %v1608 = vpack.c.bf16 %v1607, %v1607
      %vm1609 = vcmask 23552
      %v1611 = vsel %vm1609, %v1608, 0
      %vm1613 = vcmask 1040384
      %vm1614 = vcmask 1041408
      %v1615 = vsel %vm1613, 4294967295, 65535
      %v1616 = vsel %vm1614, %v1615, 0
      %v1618 = vand.u32 %v1541, %v1616
      %1620 = vmatprep.subr.bf16.mxu0 0
      %1621 = vmatpush1.bf16.msra.mxu0 %v1618
      %1622 = vmatprep.subr.bf16.mxu0 0
      %1623 = vmatpush1.bf16.msra.mxu0 0
      %1624 = vmatprep.subr.bf16.mxu0 0
      %1625 = vmatpush1.bf16.msra.mxu0 0
      %1626 = vmatprep.subr.bf16.mxu0 0
      %1627 = vmatpush1.bf16.msra.mxu0 0
      %1628 = vmatprep.subr.bf16.mxu0 0
      %1629 = vmatpush1.bf16.msra.mxu0 0
      %1630 = vmatprep.subr.bf16.mxu0 0
      %1631 = vmatpush1.bf16.msra.mxu0 0
      %1632 = vmatprep.subr.bf16.mxu0 0
      %1633 = vmatpush1.bf16.msra.mxu0 0
      %1634 = vmatprep.subr.bf16.mxu0 0
      %1635 = vmatpush1.bf16.msra.mxu0 0
      %1636 = vmatprep.subr.bf16.mxu0 0
      %1637 = vmatpush1.bf16.msra.mxu0 0
      %1638 = vmatprep.subr.bf16.mxu0 0
      %1639 = vmatpush1.bf16.msra.mxu0 0
      %1640 = vmatprep.subr.bf16.mxu0 0
      %1641 = vmatpush1.bf16.msra.mxu0 0
      %1642 = vmatprep.subr.bf16.mxu0 0
      %1643 = vmatpush1.bf16.msra.mxu0 0
      %1644 = vmatprep.subr.bf16.mxu0 0
      %1645 = vmatpush1.bf16.msra.mxu0 0
      %1646 = vmatprep.subr.bf16.mxu0 0
      %1647 = vmatpush1.bf16.msra.mxu0 0
      %1648 = vmatprep.subr.bf16.mxu0 0
      %1649 = vmatpush1.bf16.msra.mxu0 0
      %1650 = vmatprep.subr.bf16.mxu0 0
      %1651 = vmatpush1.bf16.msra.mxu0 0
      %1652 = vmatprep.mubr.bf16.mxu0 0
      %1653 = vmatmul.mubr.bf16.gmra.mrb[0].mxu0 %v1611
      %v1654 = vpop.f32.mrb[0].mxu0
      %v1655 = vadd.f32 0.0, %v1654
      %v1656 = vpop.f32.mrb[0].mxu0
      %v1657 = vpop.f32.mrb[0].mxu0
      %v1658 = vpop.f32.mrb[0].mxu0
      %1659 = vdwg.mxu0
      %v1660 = vld [vmem:[#allocation5] sm:$0x7]
      %v1661 = vpack.c.bf16 %v1655, %v1655
      %v1662 = vld [vmem:[%s10] sm:$0xf]
      %v1664 = vsel %vm1548, %v1661, 0
      %vm1666 = vcmask 1043456
      %v1668 = vsel %vm1666, %v1662, 0
      %1670 = vmatprep.subr.bf16.mxu0 0
      %1671 = vmatpush1.bf16.msra.mxu0 %v1668
      %1672 = vmatprep.subr.bf16.mxu0 0
      %1673 = vmatpush1.bf16.msra.mxu0 0
      %1674 = vmatprep.subr.bf16.mxu0 0
      %1675 = vmatpush1.bf16.msra.mxu0 0
      %1676 = vmatprep.subr.bf16.mxu0 0
      %1677 = vmatpush1.bf16.msra.mxu0 0
      %1678 = vmatprep.subr.bf16.mxu0 0
      %1679 = vmatpush1.bf16.msra.mxu0 0
      %1680 = vmatprep.subr.bf16.mxu0 0
      %1681 = vmatpush1.bf16.msra.mxu0 0
      %1682 = vmatprep.subr.bf16.mxu0 0
      %1683 = vmatpush1.bf16.msra.mxu0 0
      %1684 = vmatprep.subr.bf16.mxu0 0
      %1685 = vmatpush1.bf16.msra.mxu0 0
      %1686 = vmatprep.subr.bf16.mxu0 0
      %1687 = vmatpush1.bf16.msra.mxu0 0
      %1688 = vmatprep.subr.bf16.mxu0 0
      %1689 = vmatpush1.bf16.msra.mxu0 0
      %1690 = vmatprep.subr.bf16.mxu0 0
      %1691 = vmatpush1.bf16.msra.mxu0 0
      %1692 = vmatprep.subr.bf16.mxu0 0
      %1693 = vmatpush1.bf16.msra.mxu0 0
      %1694 = vmatprep.subr.bf16.mxu0 0
      %1695 = vmatpush1.bf16.msra.mxu0 0
      %1696 = vmatprep.subr.bf16.mxu0 0
      %1697 = vmatpush1.bf16.msra.mxu0 0
      %1698 = vmatprep.subr.bf16.mxu0 0
      %1699 = vmatpush1.bf16.msra.mxu0 0
      %1700 = vmatprep.subr.bf16.mxu0 0
      %1701 = vmatpush1.bf16.msra.mxu0 0
      %1702 = vmatprep.mubr.bf16.mxu0 0
      %1703 = vmatmul.mubr.bf16.gmra.mrb[0].mxu0 %v1664
      %v1704 = vpop.f32.mrb[0].mxu0
      %v1705 = vadd.f32 0.0, %v1704
      %v1706 = vpop.f32.mrb[0].mxu0
      %v1707 = vpop.f32.mrb[0].mxu0
      %v1708 = vpop.f32.mrb[0].mxu0
      %1709 = vdwg.mxu0
      %v1710 = vadd.f32 %v1660, %v1705
      %1711 = vst.msk [vmem:[#allocation5] sm:$0x7] %vm1537, %v1710
      %s1712 = scalar_lea.vmem [#allocation2], 2
      %v1713 = vld [vmem:[%s1712] sm:$0x3]
      %s1714 = scalar_lea.vmem [#allocation3], 2
      %v1715 = vld [vmem:[%s1714] sm:$0x3]
      %s1716 = scalar_lea.vmem [#allocation4], 2
      %v1717 = vld [vmem:[%s1716] sm:$0x3]
      %v1719 = vsel %vm1548, %v1713, 0
      %v1722 = vsel %vm1548, %v1715, 0
      %1724 = vmatprep.subr.bf16.mxu0 0
      %1725 = vmatpush1.bf16.xpose.msra.mxu0 %v1722
      %1726 = vmatprep.subr.bf16.mxu0 0
      %1727 = vmatpush1.bf16.xpose.msra.mxu0 0
      %1728 = vmatprep.subr.bf16.mxu0 0
      %1729 = vmatpush1.bf16.xpose.msra.mxu0 0
      %1730 = vmatprep.subr.bf16.mxu0 0
      %1731 = vmatpush1.bf16.xpose.msra.mxu0 0
      %1732 = vmatprep.subr.bf16.mxu0 0
      %1733 = vmatpush1.bf16.xpose.msra.mxu0 0
      %1734 = vmatprep.subr.bf16.mxu0 0
      %1735 = vmatpush1.bf16.xpose.msra.mxu0 0
      %1736 = vmatprep.subr.bf16.mxu0 0
      %1737 = vmatpush1.bf16.xpose.msra.mxu0 0
      %1738 = vmatprep.subr.bf16.mxu0 0
      %1739 = vmatpush1.bf16.xpose.msra.mxu0 0
      %1740 = vmatprep.subr.bf16.mxu0 0
      %1741 = vmatpush1.bf16.xpose.msra.mxu0 0
      %1742 = vmatprep.subr.bf16.mxu0 0
      %1743 = vmatpush1.bf16.xpose.msra.mxu0 0
      %1744 = vmatprep.subr.bf16.mxu0 0
      %1745 = vmatpush1.bf16.xpose.msra.mxu0 0
      %1746 = vmatprep.subr.bf16.mxu0 0
      %1747 = vmatpush1.bf16.xpose.msra.mxu0 0
      %1748 = vmatprep.subr.bf16.mxu0 0
      %1749 = vmatpush1.bf16.xpose.msra.mxu0 0
      %1750 = vmatprep.subr.bf16.mxu0 0
      %1751 = vmatpush1.bf16.xpose.msra.mxu0 0
      %1752 = vmatprep.subr.bf16.mxu0 0
      %1753 = vmatpush1.bf16.xpose.msra.mxu0 0
      %1754 = vmatprep.subr.bf16.mxu0 0
      %1755 = vmatpush1.bf16.xpose.msra.mxu0 0
      %1756 = vmatprep.mubr.bf16.mxu0 0
      %1757 = vmatmul.mubr.bf16.gmra.mrb[0].mxu0 %v1719
      %v1758 = vpop.f32.mrb[0].mxu0
      %v1759 = vadd.f32 %v1546, %v1758
      %v1760 = vpop.f32.mrb[0].mxu0
      %v1761 = vpop.f32.mrb[0].mxu0
      %v1762 = vpop.f32.mrb[0].mxu0
      %1763 = vdwg.mxu0
      %v1764 = vsel %vm1595, %v1759, -inf
      %1765 = vmax.xlane.f32.xlu0 %v1764
      %v1766 = vpop.xlane.xlu0 %1765
      %v1767 = vsub.f32 %v1759, %v1766
      %v1768 = vmul.f32 %v1767, 1.442695
      %v1769 = vpow.pop %v1768
      %v1770 = vsel %vm1595, %v1769, 0.0
      %1771 = vadd.xlane.f32.xlu0 %v1770
      %v1772 = vpop.xlane.xlu0 %1771
      %v1773 = vmax.f32 %v1772, 1e-30
      %v1774 = vrcp.pop %v1773
      %v1775 = vmul.f32 %v1769, %v1774
      %v1776 = vpack.c.bf16 %v1775, %v1775
      %v1778 = vsel %vm1609, %v1776, 0
      %v1781 = vand.u32 %v1717, %v1616
      %1783 = vmatprep.subr.bf16.mxu0 0
      %1784 = vmatpush1.bf16.msra.mxu0 %v1781
      %1785 = vmatprep.subr.bf16.mxu0 0
      %1786 = vmatpush1.bf16.msra.mxu0 0
      %1787 = vmatprep.subr.bf16.mxu0 0
      %1788 = vmatpush1.bf16.msra.mxu0 0
      %1789 = vmatprep.subr.bf16.mxu0 0
      %1790 = vmatpush1.bf16.msra.mxu0 0
      %1791 = vmatprep.subr.bf16.mxu0 0
      %1792 = vmatpush1.bf16.msra.mxu0 0
      %1793 = vmatprep.subr.bf16.mxu0 0
      %1794 = vmatpush1.bf16.msra.mxu0 0
      %1795 = vmatprep.subr.bf16.mxu0 0
      %1796 = vmatpush1.bf16.msra.mxu0 0
      %1797 = vmatprep.subr.bf16.mxu0 0
      %1798 = vmatpush1.bf16.msra.mxu0 0
      %1799 = vmatprep.subr.bf16.mxu0 0
      %1800 = vmatpush1.bf16.msra.mxu0 0
      %1801 = vmatprep.subr.bf16.mxu0 0
      %1802 = vmatpush1.bf16.msra.mxu0 0
      %1803 = vmatprep.subr.bf16.mxu0 0
      %1804 = vmatpush1.bf16.msra.mxu0 0
      %1805 = vmatprep.subr.bf16.mxu0 0
      %1806 = vmatpush1.bf16.msra.mxu0 0
      %1807 = vmatprep.subr.bf16.mxu0 0
      %1808 = vmatpush1.bf16.msra.mxu0 0
      %1809 = vmatprep.subr.bf16.mxu0 0
      %1810 = vmatpush1.bf16.msra.mxu0 0
      %1811 = vmatprep.subr.bf16.mxu0 0
      %1812 = vmatpush1.bf16.msra.mxu0 0
      %1813 = vmatprep.subr.bf16.mxu0 0
      %1814 = vmatpush1.bf16.msra.mxu0 0
      %1815 = vmatprep.mubr.bf16.mxu0 0
      %1816 = vmatmul.mubr.bf16.gmra.mrb[0].mxu0 %v1778
      %v1817 = vpop.f32.mrb[0].mxu0
      %v1818 = vadd.f32 0.0, %v1817
      %v1819 = vpop.f32.mrb[0].mxu0
      %v1820 = vpop.f32.mrb[0].mxu0
      %v1821 = vpop.f32.mrb[0].mxu0
      %1822 = vdwg.mxu0
      %v1823 = vld [vmem:[#allocation5] sm:$0x7]
      %v1824 = vpack.c.bf16 %v1818, %v1818
      %s1825 = scalar_lea.vmem %s10, 4
      %v1826 = vld [vmem:[%s1825] sm:$0xf]
      %v1828 = vsel %vm1548, %v1824, 0
      %v1831 = vsel %vm1666, %v1826, 0
      %1833 = vmatprep.subr.bf16.mxu0 0
      %1834 = vmatpush1.bf16.msra.mxu0 %v1831
      %1835 = vmatprep.subr.bf16.mxu0 0
      %1836 = vmatpush1.bf16.msra.mxu0 0
      %1837 = vmatprep.subr.bf16.mxu0 0
      %1838 = vmatpush1.bf16.msra.mxu0 0
      %1839 = vmatprep.subr.bf16.mxu0 0
      %1840 = vmatpush1.bf16.msra.mxu0 0
      %1841 = vmatprep.subr.bf16.mxu0 0
      %1842 = vmatpush1.bf16.msra.mxu0 0
      %1843 = vmatprep.subr.bf16.mxu0 0
      %1844 = vmatpush1.bf16.msra.mxu0 0
      %1845 = vmatprep.subr.bf16.mxu0 0
      %1846 = vmatpush1.bf16.msra.mxu0 0
      %1847 = vmatprep.subr.bf16.mxu0 0
      %1848 = vmatpush1.bf16.msra.mxu0 0
      %1849 = vmatprep.subr.bf16.mxu0 0
      %1850 = vmatpush1.bf16.msra.mxu0 0
      %1851 = vmatprep.subr.bf16.mxu0 0
      %1852 = vmatpush1.bf16.msra.mxu0 0
      %1853 = vmatprep.subr.bf16.mxu0 0
      %1854 = vmatpush1.bf16.msra.mxu0 0
      %1855 = vmatprep.subr.bf16.mxu0 0
      %1856 = vmatpush1.bf16.msra.mxu0 0
      %1857 = vmatprep.subr.bf16.mxu0 0
      %1858 = vmatpush1.bf16.msra.mxu0 0
      %1859 = vmatprep.subr.bf16.mxu0 0
      %1860 = vmatpush1.bf16.msra.mxu0 0
      %1861 = vmatprep.subr.bf16.mxu0 0
      %1862 = vmatpush1.bf16.msra.mxu0 0
      %1863 = vmatprep.subr.bf16.mxu0 0
      %1864 = vmatpush1.bf16.msra.mxu0 0
      %1865 = vmatprep.mubr.bf16.mxu0 0
      %1866 = vmatmul.mubr.bf16.gmra.mrb[0].mxu0 %v1828
      %v1867 = vpop.f32.mrb[0].mxu0
      %v1868 = vadd.f32 0.0, %v1867
      %v1869 = vpop.f32.mrb[0].mxu0
      %v1870 = vpop.f32.mrb[0].mxu0
      %v1871 = vpop.f32.mrb[0].mxu0
      %1872 = vdwg.mxu0
      %v1873 = vadd.f32 %v1823, %v1868
      %1874 = vst.msk [vmem:[#allocation5] sm:$0x7] %vm1537, %v1873
      %s1875 = scalar_lea.vmem [#allocation2], 4
      %v1876 = vld [vmem:[%s1875] sm:$0x3]
      %s1877 = scalar_lea.vmem [#allocation3], 4
      %v1878 = vld [vmem:[%s1877] sm:$0x3]
      %s1879 = scalar_lea.vmem [#allocation4], 4
      %v1880 = vld [vmem:[%s1879] sm:$0x3]
      %v1882 = vsel %vm1548, %v1876, 0
      %v1885 = vsel %vm1548, %v1878, 0
      %1887 = vmatprep.subr.bf16.mxu0 0
      %1888 = vmatpush1.bf16.xpose.msra.mxu0 %v1885
      %1889 = vmatprep.subr.bf16.mxu0 0
      %1890 = vmatpush1.bf16.xpose.msra.mxu0 0
      %1891 = vmatprep.subr.bf16.mxu0 0
      %1892 = vmatpush1.bf16.xpose.msra.mxu0 0
      %1893 = vmatprep.subr.bf16.mxu0 0
      %1894 = vmatpush1.bf16.xpose.msra.mxu0 0
      %1895 = vmatprep.subr.bf16.mxu0 0
      %1896 = vmatpush1.bf16.xpose.msra.mxu0 0
      %1897 = vmatprep.subr.bf16.mxu0 0
      %1898 = vmatpush1.bf16.xpose.msra.mxu0 0
      %1899 = vmatprep.subr.bf16.mxu0 0
      %1900 = vmatpush1.bf16.xpose.msra.mxu0 0
      %1901 = vmatprep.subr.bf16.mxu0 0
      %1902 = vmatpush1.bf16.xpose.msra.mxu0 0
      %1903 = vmatprep.subr.bf16.mxu0 0
      %1904 = vmatpush1.bf16.xpose.msra.mxu0 0
      %1905 = vmatprep.subr.bf16.mxu0 0
      %1906 = vmatpush1.bf16.xpose.msra.mxu0 0
      %1907 = vmatprep.subr.bf16.mxu0 0
      %1908 = vmatpush1.bf16.xpose.msra.mxu0 0
      %1909 = vmatprep.subr.bf16.mxu0 0
      %1910 = vmatpush1.bf16.xpose.msra.mxu0 0
      %1911 = vmatprep.subr.bf16.mxu0 0
      %1912 = vmatpush1.bf16.xpose.msra.mxu0 0
      %1913 = vmatprep.subr.bf16.mxu0 0
      %1914 = vmatpush1.bf16.xpose.msra.mxu0 0
      %1915 = vmatprep.subr.bf16.mxu0 0
      %1916 = vmatpush1.bf16.xpose.msra.mxu0 0
      %1917 = vmatprep.subr.bf16.mxu0 0
      %1918 = vmatpush1.bf16.xpose.msra.mxu0 0
      %1919 = vmatprep.mubr.bf16.mxu0 0
      %1920 = vmatmul.mubr.bf16.gmra.mrb[0].mxu0 %v1882
      %v1921 = vpop.f32.mrb[0].mxu0
      %v1922 = vadd.f32 %v1546, %v1921
      %v1923 = vpop.f32.mrb[0].mxu0
      %v1924 = vpop.f32.mrb[0].mxu0
      %v1925 = vpop.f32.mrb[0].mxu0
      %1926 = vdwg.mxu0
      %v1927 = vsel %vm1595, %v1922, -inf
      %1928 = vmax.xlane.f32.xlu0 %v1927
      %v1929 = vpop.xlane.xlu0 %1928
      %v1930 = vsub.f32 %v1922, %v1929
      %v1931 = vmul.f32 %v1930, 1.442695
      %v1932 = vpow.pop %v1931
      %v1933 = vsel %vm1595, %v1932, 0.0
      %1934 = vadd.xlane.f32.xlu0 %v1933
      %v1935 = vpop.xlane.xlu0 %1934
      %v1936 = vmax.f32 %v1935, 1e-30
      %v1937 = vrcp.pop %v1936
      %v1938 = vmul.f32 %v1932, %v1937
      %v1939 = vpack.c.bf16 %v1938, %v1938
      %v1941 = vsel %vm1609, %v1939, 0
      %v1944 = vand.u32 %v1880, %v1616
      %1946 = vmatprep.subr.bf16.mxu0 0
      %1947 = vmatpush1.bf16.msra.mxu0 %v1944
      %1948 = vmatprep.subr.bf16.mxu0 0
      %1949 = vmatpush1.bf16.msra.mxu0 0
      %1950 = vmatprep.subr.bf16.mxu0 0
      %1951 = vmatpush1.bf16.msra.mxu0 0
      %1952 = vmatprep.subr.bf16.mxu0 0
      %1953 = vmatpush1.bf16.msra.mxu0 0
      %1954 = vmatprep.subr.bf16.mxu0 0
      %1955 = vmatpush1.bf16.msra.mxu0 0
      %1956 = vmatprep.subr.bf16.mxu0 0
      %1957 = vmatpush1.bf16.msra.mxu0 0
      %1958 = vmatprep.subr.bf16.mxu0 0
      %1959 = vmatpush1.bf16.msra.mxu0 0
      %1960 = vmatprep.subr.bf16.mxu0 0
      %1961 = vmatpush1.bf16.msra.mxu0 0
      %1962 = vmatprep.subr.bf16.mxu0 0
      %1963 = vmatpush1.bf16.msra.mxu0 0
      %1964 = vmatprep.subr.bf16.mxu0 0
      %1965 = vmatpush1.bf16.msra.mxu0 0
      %1966 = vmatprep.subr.bf16.mxu0 0
      %1967 = vmatpush1.bf16.msra.mxu0 0
      %1968 = vmatprep.subr.bf16.mxu0 0
      %1969 = vmatpush1.bf16.msra.mxu0 0
      %1970 = vmatprep.subr.bf16.mxu0 0
      %1971 = vmatpush1.bf16.msra.mxu0 0
      %1972 = vmatprep.subr.bf16.mxu0 0
      %1973 = vmatpush1.bf16.msra.mxu0 0
      %1974 = vmatprep.subr.bf16.mxu0 0
      %1975 = vmatpush1.bf16.msra.mxu0 0
      %1976 = vmatprep.subr.bf16.mxu0 0
      %1977 = vmatpush1.bf16.msra.mxu0 0
      %1978 = vmatprep.mubr.bf16.mxu0 0
      %1979 = vmatmul.mubr.bf16.gmra.mrb[0].mxu0 %v1941
      %v1980 = vpop.f32.mrb[0].mxu0
      %v1981 = vadd.f32 0.0, %v1980
      %v1982 = vpop.f32.mrb[0].mxu0
      %v1983 = vpop.f32.mrb[0].mxu0
      %v1984 = vpop.f32.mrb[0].mxu0
      %1985 = vdwg.mxu0
      %v1986 = vld [vmem:[#allocation5] sm:$0x7]
      %v1987 = vpack.c.bf16 %v1981, %v1981
      %s1988 = scalar_lea.vmem %s10, 8
      %v1989 = vld [vmem:[%s1988] sm:$0xf]
      %v1991 = vsel %vm1548, %v1987, 0
      %v1994 = vsel %vm1666, %v1989, 0
      %1996 = vmatprep.subr.bf16.mxu0 0
      %1997 = vmatpush1.bf16.msra.mxu0 %v1994
      %1998 = vmatprep.subr.bf16.mxu0 0
      %1999 = vmatpush1.bf16.msra.mxu0 0
      %2000 = vmatprep.subr.bf16.mxu0 0
      %2001 = vmatpush1.bf16.msra.mxu0 0
      %2002 = vmatprep.subr.bf16.mxu0 0
      %2003 = vmatpush1.bf16.msra.mxu0 0
      %2004 = vmatprep.subr.bf16.mxu0 0
      %2005 = vmatpush1.bf16.msra.mxu0 0
      %2006 = vmatprep.subr.bf16.mxu0 0
      %2007 = vmatpush1.bf16.msra.mxu0 0
      %2008 = vmatprep.subr.bf16.mxu0 0
      %2009 = vmatpush1.bf16.msra.mxu0 0
      %2010 = vmatprep.subr.bf16.mxu0 0
      %2011 = vmatpush1.bf16.msra.mxu0 0
      %2012 = vmatprep.subr.bf16.mxu0 0
      %2013 = vmatpush1.bf16.msra.mxu0 0
      %2014 = vmatprep.subr.bf16.mxu0 0
      %2015 = vmatpush1.bf16.msra.mxu0 0
      %2016 = vmatprep.subr.bf16.mxu0 0
      %2017 = vmatpush1.bf16.msra.mxu0 0
      %2018 = vmatprep.subr.bf16.mxu0 0
      %2019 = vmatpush1.bf16.msra.mxu0 0
      %2020 = vmatprep.subr.bf16.mxu0 0
      %2021 = vmatpush1.bf16.msra.mxu0 0
      %2022 = vmatprep.subr.bf16.mxu0 0
      %2023 = vmatpush1.bf16.msra.mxu0 0
      %2024 = vmatprep.subr.bf16.mxu0 0
      %2025 = vmatpush1.bf16.msra.mxu0 0
      %2026 = vmatprep.subr.bf16.mxu0 0
      %2027 = vmatpush1.bf16.msra.mxu0 0
      %2028 = vmatprep.mubr.bf16.mxu0 0
      %2029 = vmatmul.mubr.bf16.gmra.mrb[0].mxu0 %v1991
      %v2030 = vpop.f32.mrb[0].mxu0
      %v2031 = vadd.f32 0.0, %v2030
      %v2032 = vpop.f32.mrb[0].mxu0
      %v2033 = vpop.f32.mrb[0].mxu0
      %v2034 = vpop.f32.mrb[0].mxu0
      %2035 = vdwg.mxu0
      %v2036 = vadd.f32 %v1986, %v2031
      %2037 = vst.msk [vmem:[#allocation5] sm:$0x7] %vm1537, %v2036
      %s2038 = scalar_lea.vmem [#allocation2], 6
      %v2039 = vld [vmem:[%s2038] sm:$0x3]
      %s2040 = scalar_lea.vmem [#allocation3], 6
      %v2041 = vld [vmem:[%s2040] sm:$0x3]
      %s2042 = scalar_lea.vmem [#allocation4], 6
      %v2043 = vld [vmem:[%s2042] sm:$0x3]
      %v2045 = vsel %vm1548, %v2039, 0
      %v2048 = vsel %vm1548, %v2041, 0
      %2050 = vmatprep.subr.bf16.mxu0 0
      %2051 = vmatpush1.bf16.xpose.msra.mxu0 %v2048
      %2052 = vmatprep.subr.bf16.mxu0 0
      %2053 = vmatpush1.bf16.xpose.msra.mxu0 0
      %2054 = vmatprep.subr.bf16.mxu0 0
      %2055 = vmatpush1.bf16.xpose.msra.mxu0 0
      %2056 = vmatprep.subr.bf16.mxu0 0
      %2057 = vmatpush1.bf16.xpose.msra.mxu0 0
      %2058 = vmatprep.subr.bf16.mxu0 0
      %2059 = vmatpush1.bf16.xpose.msra.mxu0 0
      %2060 = vmatprep.subr.bf16.mxu0 0
      %2061 = vmatpush1.bf16.xpose.msra.mxu0 0
      %2062 = vmatprep.subr.bf16.mxu0 0
      %2063 = vmatpush1.bf16.xpose.msra.mxu0 0
      %2064 = vmatprep.subr.bf16.mxu0 0
      %2065 = vmatpush1.bf16.xpose.msra.mxu0 0
      %2066 = vmatprep.subr.bf16.mxu0 0
      %2067 = vmatpush1.bf16.xpose.msra.mxu0 0
      %2068 = vmatprep.subr.bf16.mxu0 0
      %2069 = vmatpush1.bf16.xpose.msra.mxu0 0
      %2070 = vmatprep.subr.bf16.mxu0 0
      %2071 = vmatpush1.bf16.xpose.msra.mxu0 0
      %2072 = vmatprep.subr.bf16.mxu0 0
      %2073 = vmatpush1.bf16.xpose.msra.mxu0 0
      %2074 = vmatprep.subr.bf16.mxu0 0
      %2075 = vmatpush1.bf16.xpose.msra.mxu0 0
      %2076 = vmatprep.subr.bf16.mxu0 0
      %2077 = vmatpush1.bf16.xpose.msra.mxu0 0
      %2078 = vmatprep.subr.bf16.mxu0 0
      %2079 = vmatpush1.bf16.xpose.msra.mxu0 0
      %2080 = vmatprep.subr.bf16.mxu0 0
      %2081 = vmatpush1.bf16.xpose.msra.mxu0 0
      %2082 = vmatprep.mubr.bf16.mxu0 0
      %2083 = vmatmul.mubr.bf16.gmra.mrb[0].mxu0 %v2045
      %v2084 = vpop.f32.mrb[0].mxu0
      %v2085 = vadd.f32 %v1546, %v2084
      %v2086 = vpop.f32.mrb[0].mxu0
      %v2087 = vpop.f32.mrb[0].mxu0
      %v2088 = vpop.f32.mrb[0].mxu0
      %2089 = vdwg.mxu0
      %v2090 = vsel %vm1595, %v2085, -inf
      %2091 = vmax.xlane.f32.xlu0 %v2090
      %v2092 = vpop.xlane.xlu0 %2091
      %v2093 = vsub.f32 %v2085, %v2092
      %v2094 = vmul.f32 %v2093, 1.442695
      %v2095 = vpow.pop %v2094
      %v2096 = vsel %vm1595, %v2095, 0.0
      %2097 = vadd.xlane.f32.xlu0 %v2096
      %v2098 = vpop.xlane.xlu0 %2097
      %v2099 = vmax.f32 %v2098, 1e-30
      %v2100 = vrcp.pop %v2099
      %v2101 = vmul.f32 %v2095, %v2100
      %v2102 = vpack.c.bf16 %v2101, %v2101
      %v2104 = vsel %vm1609, %v2102, 0
      %v2107 = vand.u32 %v2043, %v1616
      %2109 = vmatprep.subr.bf16.mxu0 0
      %2110 = vmatpush1.bf16.msra.mxu0 %v2107
      %2111 = vmatprep.subr.bf16.mxu0 0
      %2112 = vmatpush1.bf16.msra.mxu0 0
      %2113 = vmatprep.subr.bf16.mxu0 0
      %2114 = vmatpush1.bf16.msra.mxu0 0
      %2115 = vmatprep.subr.bf16.mxu0 0
      %2116 = vmatpush1.bf16.msra.mxu0 0
      %2117 = vmatprep.subr.bf16.mxu0 0
      %2118 = vmatpush1.bf16.msra.mxu0 0
      %2119 = vmatprep.subr.bf16.mxu0 0
      %2120 = vmatpush1.bf16.msra.mxu0 0
      %2121 = vmatprep.subr.bf16.mxu0 0
      %2122 = vmatpush1.bf16.msra.mxu0 0
      %2123 = vmatprep.subr.bf16.mxu0 0
      %2124 = vmatpush1.bf16.msra.mxu0 0
      %2125 = vmatprep.subr.bf16.mxu0 0
      %2126 = vmatpush1.bf16.msra.mxu0 0
      %2127 = vmatprep.subr.bf16.mxu0 0
      %2128 = vmatpush1.bf16.msra.mxu0 0
      %2129 = vmatprep.subr.bf16.mxu0 0
      %2130 = vmatpush1.bf16.msra.mxu0 0
      %2131 = vmatprep.subr.bf16.mxu0 0
      %2132 = vmatpush1.bf16.msra.mxu0 0
      %2133 = vmatprep.subr.bf16.mxu0 0
      %2134 = vmatpush1.bf16.msra.mxu0 0
      %2135 = vmatprep.subr.bf16.mxu0 0
      %2136 = vmatpush1.bf16.msra.mxu0 0
      %2137 = vmatprep.subr.bf16.mxu0 0
      %2138 = vmatpush1.bf16.msra.mxu0 0
      %2139 = vmatprep.subr.bf16.mxu0 0
      %2140 = vmatpush1.bf16.msra.mxu0 0
      %2141 = vmatprep.mubr.bf16.mxu0 0
      %2142 = vmatmul.mubr.bf16.gmra.mrb[0].mxu0 %v2104
      %v2143 = vpop.f32.mrb[0].mxu0
      %v2144 = vadd.f32 0.0, %v2143
      %v2145 = vpop.f32.mrb[0].mxu0
      %v2146 = vpop.f32.mrb[0].mxu0
      %v2147 = vpop.f32.mrb[0].mxu0
      %2148 = vdwg.mxu0
      %v2149 = vld [vmem:[#allocation5] sm:$0x7]
      %v2150 = vpack.c.bf16 %v2144, %v2144
      %s2151 = scalar_lea.vmem %s10, 12
      %v2152 = vld [vmem:[%s2151] sm:$0xf]
      %v2154 = vsel %vm1548, %v2150, 0
      %v2157 = vsel %vm1666, %v2152, 0
      %2159 = vmatprep.subr.bf16.mxu0 0
      %2160 = vmatpush1.bf16.msra.mxu0 %v2157
      %2161 = vmatprep.subr.bf16.mxu0 0
      %2162 = vmatpush1.bf16.msra.mxu0 0
      %2163 = vmatprep.subr.bf16.mxu0 0
      %2164 = vmatpush1.bf16.msra.mxu0 0
      %2165 = vmatprep.subr.bf16.mxu0 0
      %2166 = vmatpush1.bf16.msra.mxu0 0
      %2167 = vmatprep.subr.bf16.mxu0 0
      %2168 = vmatpush1.bf16.msra.mxu0 0
      %2169 = vmatprep.subr.bf16.mxu0 0
      %2170 = vmatpush1.bf16.msra.mxu0 0
      %2171 = vmatprep.subr.bf16.mxu0 0
      %2172 = vmatpush1.bf16.msra.mxu0 0
      %2173 = vmatprep.subr.bf16.mxu0 0
      %2174 = vmatpush1.bf16.msra.mxu0 0
      %2175 = vmatprep.subr.bf16.mxu0 0
      %2176 = vmatpush1.bf16.msra.mxu0 0
      %2177 = vmatprep.subr.bf16.mxu0 0
      %2178 = vmatpush1.bf16.msra.mxu0 0
      %2179 = vmatprep.subr.bf16.mxu0 0
      %2180 = vmatpush1.bf16.msra.mxu0 0
      %2181 = vmatprep.subr.bf16.mxu0 0
      %2182 = vmatpush1.bf16.msra.mxu0 0
      %2183 = vmatprep.subr.bf16.mxu0 0
      %2184 = vmatpush1.bf16.msra.mxu0 0
      %2185 = vmatprep.subr.bf16.mxu0 0
      %2186 = vmatpush1.bf16.msra.mxu0 0
      %2187 = vmatprep.subr.bf16.mxu0 0
      %2188 = vmatpush1.bf16.msra.mxu0 0
      %2189 = vmatprep.subr.bf16.mxu0 0
      %2190 = vmatpush1.bf16.msra.mxu0 0
      %2191 = vmatprep.mubr.bf16.mxu0 0
      %2192 = vmatmul.mubr.bf16.gmra.mrb[0].mxu0 %v2154
      %v2193 = vpop.f32.mrb[0].mxu0
      %v2194 = vadd.f32 0.0, %v2193
      %v2195 = vpop.f32.mrb[0].mxu0
      %v2196 = vpop.f32.mrb[0].mxu0
      %v2197 = vpop.f32.mrb[0].mxu0
      %2198 = vdwg.mxu0
      %v2199 = vadd.f32 %v2149, %v2194
      %2200 = vst.msk [vmem:[#allocation5] sm:$0x7] %vm1537, %v2199
      %v2201 = vld [vmem:[#allocation5] sm:$0x7]
      %v2202 = vadd.f32 %v1535, %v2201
      %v2203 = vld [vmem:[%s11] sm:$0x1]
      %v2205 = vlaneseq
      %v2206 = vshrl.u32 %v2205, 7
      %v2207 = vsub.s32 0, %v2206
      %v2208 = vrot.slane %v2203, %v2207
      %v2210 = vadd.f32 %v2202, %v2208
      %v2211 = vld [vmem:[%s12] sm:$0x1]
      %v2212 = vld [vmem:[%s13] sm:$0x1]
      %v2213 = vsel %vm1537, %v2210, 0.0
      %2214 = vadd.xlane.f32.xlu0 %v2213
      %v2215 = vpop.xlane.xlu0 %2214
      %v2216 = vrcp.pop 32.0
      %v2217 = vmul.f32 %v2215, %v2216
      %v2218 = vsub.f32 %v2210, %v2217
      %v2219 = vmul.f32 %v2218, %v2218
      %v2220 = vsel %vm1537, %v2219, 0.0
      %2221 = vadd.xlane.f32.xlu0 %v2220
      %v2222 = vpop.xlane.xlu0 %2221
      %v2223 = vmul.f32 %v2222, %v2216
      %v2224 = vadd.f32 %v2223, 1e-12
      %v2225 = vrsqrt.pop %v2224
      %v2226 = vmul.f32 %v2218, %v2225
      %v2228 = vlaneseq
      %v2229 = vshrl.u32 %v2228, 7
      %v2230 = vsub.s32 0, %v2229
      %v2231 = vrot.slane %v2211, %v2230
      %v2233 = vmul.f32 %v2226, %v2231
      %v2235 = vlaneseq
      %v2236 = vshrl.u32 %v2235, 7
      %v2237 = vsub.s32 0, %v2236
      %v2238 = vrot.slane %v2212, %v2237
      %v2240 = vadd.f32 %v2233, %v2238
      %v2241 = vpack.c.bf16 %v2240, %v2240
      %v2242 = vld [vmem:[%s14] sm:$0xf]
      %v2243 = vld [vmem:[%s14 + $0x4] sm:$0xf]
      %v2244 = vld [vmem:[%s14 + $0x8] sm:$0xf]
      %v2245 = vld [vmem:[%s14 + $0xc] sm:$0xf]
      %v2246 = vld [vmem:[%s15] sm:$0x1]
      %v2248 = vlaneseq
      %v2249 = vshrl.u32 %v2248, 7
      %v2250 = vsub.s32 0, %v2249
      %v2251 = vrot.slane %v2246, %v2250
      %v2257 = vunpack.c.l.b16 %v2242
      %v2258 = vunpack.c.l.b16 %v2243
      %v2259 = vunpack.c.l.b16 %v2244
      %v2260 = vunpack.c.l.b16 %v2245
      %v2261 = vpack.c.b16 %v2258, %v2257
      %v2262 = vpack.c.b16 %v2260, %v2259
      %vm2265 = vcmask 261120
      %v2267 = vsel %vm2265, %v2241, 0
      %2269 = vmatprep.subr.bf16.mxu0 0
      %2270 = vmatpush1.bf16.msra.mxu0 %v2261
      %2271 = vmatprep.subr.bf16.mxu0 0
      %2272 = vmatpush1.bf16.msra.mxu0 %v2262
      %2273 = vmatprep.subr.bf16.mxu0 0
      %2274 = vmatpush1.bf16.msra.mxu0 0
      %2275 = vmatprep.subr.bf16.mxu0 0
      %2276 = vmatpush1.bf16.msra.mxu0 0
      %2277 = vmatprep.subr.bf16.mxu0 0
      %2278 = vmatpush1.bf16.msra.mxu0 0
      %2279 = vmatprep.subr.bf16.mxu0 0
      %2280 = vmatpush1.bf16.msra.mxu0 0
      %2281 = vmatprep.subr.bf16.mxu0 0
      %2282 = vmatpush1.bf16.msra.mxu0 0
      %2283 = vmatprep.subr.bf16.mxu0 0
      %2284 = vmatpush1.bf16.msra.mxu0 0
      %2285 = vmatprep.subr.bf16.mxu0 0
      %2286 = vmatpush1.bf16.msra.mxu0 0
      %2287 = vmatprep.subr.bf16.mxu0 0
      %2288 = vmatpush1.bf16.msra.mxu0 0
      %2289 = vmatprep.subr.bf16.mxu0 0
      %2290 = vmatpush1.bf16.msra.mxu0 0
      %2291 = vmatprep.subr.bf16.mxu0 0
      %2292 = vmatpush1.bf16.msra.mxu0 0
      %2293 = vmatprep.subr.bf16.mxu0 0
      %2294 = vmatpush1.bf16.msra.mxu0 0
      %2295 = vmatprep.subr.bf16.mxu0 0
      %2296 = vmatpush1.bf16.msra.mxu0 0
      %2297 = vmatprep.subr.bf16.mxu0 0
      %2298 = vmatpush1.bf16.msra.mxu0 0
      %2299 = vmatprep.subr.bf16.mxu0 0
      %2300 = vmatpush1.bf16.msra.mxu0 0
      %2301 = vmatprep.mubr.bf16.mxu0 0
      %2302 = vmatmul.mubr.bf16.gmra.mrb[0].mxu0 %v2267
      %v2303 = vpop.f32.mrb[0].mxu0
      %v2304 = vadd.f32 %v2251, %v2303
      %v2305 = vpop.f32.mrb[0].mxu0
      %v2306 = vpop.f32.mrb[0].mxu0
      %v2307 = vpop.f32.mrb[0].mxu0
      %2308 = vdwg.mxu0
      %v2309 = vmax.f32 %v2304, 0.0
      %v2310 = vpack.c.bf16 %v2309, %v2309
      %v2311 = vld [vmem:[%s16] sm:$0xf]
      %v2312 = vld [vmem:[%s16 + $0x4] sm:$0xf]
      %v2313 = vld [vmem:[%s16 + $0x8] sm:$0xf]
      %v2314 = vld [vmem:[%s16 + $0xc] sm:$0xf]
      %v2315 = vld [vmem:[%s16 + $0x10] sm:$0xf]
      %v2316 = vld [vmem:[%s16 + $0x14] sm:$0xf]
      %v2317 = vld [vmem:[%s16 + $0x18] sm:$0xf]
      %v2318 = vld [vmem:[%s16 + $0x1c] sm:$0xf]
      %v2319 = vld [vmem:[%s17] sm:$0x1]
      %v2321 = vlaneseq
      %v2322 = vshrl.u32 %v2321, 7
      %v2323 = vsub.s32 0, %v2322
      %v2324 = vrot.slane %v2319, %v2323
      %v2334 = vunpack.c.l.b16 %v2311
      %v2335 = vunpack.c.l.b16 %v2312
      %v2336 = vunpack.c.l.b16 %v2313
      %v2337 = vunpack.c.l.b16 %v2314
      %v2338 = vunpack.c.l.b16 %v2315
      %v2339 = vunpack.c.l.b16 %v2316
      %v2340 = vunpack.c.l.b16 %v2317
      %v2341 = vunpack.c.l.b16 %v2318
      %v2342 = vpack.c.b16 %v2335, %v2334
      %v2343 = vpack.c.b16 %v2337, %v2336
      %v2344 = vpack.c.b16 %v2339, %v2338
      %v2345 = vpack.c.b16 %v2341, %v2340
      %vm2350 = vcmask 523264
      %v2352 = vsel %vm2350, %v2310, 0
      %2354 = vmatprep.subr.bf16.mxu0 0
      %2355 = vmatpush1.bf16.msra.mxu0 %v2342
      %2356 = vmatprep.subr.bf16.mxu0 0
      %2357 = vmatpush1.bf16.msra.mxu0 %v2343
      %2358 = vmatprep.subr.bf16.mxu0 0
      %2359 = vmatpush1.bf16.msra.mxu0 %v2344
      %2360 = vmatprep.subr.bf16.mxu0 0
      %2361 = vmatpush1.bf16.msra.mxu0 %v2345
      %2362 = vmatprep.subr.bf16.mxu0 0
      %2363 = vmatpush1.bf16.msra.mxu0 0
      %2364 = vmatprep.subr.bf16.mxu0 0
      %2365 = vmatpush1.bf16.msra.mxu0 0
      %2366 = vmatprep.subr.bf16.mxu0 0
      %2367 = vmatpush1.bf16.msra.mxu0 0
      %2368 = vmatprep.subr.bf16.mxu0 0
      %2369 = vmatpush1.bf16.msra.mxu0 0
      %2370 = vmatprep.subr.bf16.mxu0 0
      %2371 = vmatpush1.bf16.msra.mxu0 0
      %2372 = vmatprep.subr.bf16.mxu0 0
      %2373 = vmatpush1.bf16.msra.mxu0 0
      %2374 = vmatprep.subr.bf16.mxu0 0
      %2375 = vmatpush1.bf16.msra.mxu0 0
      %2376 = vmatprep.subr.bf16.mxu0 0
      %2377 = vmatpush1.bf16.msra.mxu0 0
      %2378 = vmatprep.subr.bf16.mxu0 0
      %2379 = vmatpush1.bf16.msra.mxu0 0
      %2380 = vmatprep.subr.bf16.mxu0 0
      %2381 = vmatpush1.bf16.msra.mxu0 0
      %2382 = vmatprep.subr.bf16.mxu0 0
      %2383 = vmatpush1.bf16.msra.mxu0 0
      %2384 = vmatprep.subr.bf16.mxu0 0
      %2385 = vmatpush1.bf16.msra.mxu0 0
      %2386 = vmatprep.mubr.bf16.mxu0 0
      %2387 = vmatmul.mubr.bf16.gmra.mrb[0].mxu0 %v2352
      %v2388 = vpop.f32.mrb[0].mxu0
      %v2389 = vadd.f32 %v2324, %v2388
      %v2390 = vpop.f32.mrb[0].mxu0
      %v2391 = vpop.f32.mrb[0].mxu0
      %v2392 = vpop.f32.mrb[0].mxu0
      %2393 = vdwg.mxu0
      %v2394 = vadd.f32 %v2210, %v2389
      %v2395 = vld [vmem:[%s18] sm:$0x1]
      %v2396 = vld [vmem:[%s19] sm:$0x1]
      %v2397 = vsel %vm1537, %v2394, 0.0
      %2398 = vadd.xlane.f32.xlu0 %v2397
      %v2399 = vpop.xlane.xlu0 %2398
      %v2400 = vmul.f32 %v2399, %v2216
      %v2401 = vsub.f32 %v2394, %v2400
      %v2402 = vmul.f32 %v2401, %v2401
      %v2403 = vsel %vm1537, %v2402, 0.0
      %2404 = vadd.xlane.f32.xlu0 %v2403
      %v2405 = vpop.xlane.xlu0 %2404
      %v2406 = vmul.f32 %v2405, %v2216
      %v2407 = vadd.f32 %v2406, 1e-12
      %v2408 = vrsqrt.pop %v2407
      %v2409 = vmul.f32 %v2401, %v2408
      %v2411 = vlaneseq
      %v2412 = vshrl.u32 %v2411, 7
      %v2413 = vsub.s32 0, %v2412
      %v2414 = vrot.slane %v2395, %v2413
      %v2416 = vmul.f32 %v2409, %v2414
      %v2418 = vlaneseq
      %v2419 = vshrl.u32 %v2418, 7
      %v2420 = vsub.s32 0, %v2419
      %v2421 = vrot.slane %v2396, %v2420
      %v2423 = vadd.f32 %v2416, %v2421
      %2424 = vst.msk [vmem:[%s658] sm:$0x7] %vm1537, %v2423
      %p2425 = scmp.lt.s32.totalorder %s35, 1
      %s2426 = scalar_select %p2425, %s35, 1
      %p2427 = scmp.lt.s32.totalorder %s36, 0
      %s2428 = scalar_select %p2427, %s36, 0
      %s2429 = sadd.s32 %s2428, %s2426
      %s2430 = smul.addr %s2429, 4
      %s2431 = scalar_lea.vmem %s20, %s2430
      // Predicated region
      $region105: #{e2e_forward.9} parent=99 // pred_check
        %p2432 = pneg %p493
      $region106: #{e2e_forward.9} parent=99 // pred_check_branch
        %2434 = sbr.rel (%p2432) target = $region108
      $region107: #{e2e_forward.9} parent=99 // pred_region
        _
      $region108: #{e2e_forward.9} parent=99 // pred_fallthru
        _
    $region100: #{e2e_forward.9} parent=5 // pred_fallthru
      _
    %p2435 = scmp.le.s32.totalorder 2, %s26
    // Predicated region
    $region109: #{e2e_forward.9} parent=5 // pred_check
      %p2436 = pneg %p2435
    $region110: #{e2e_forward.9} parent=5 // pred_check_branch
      %2438 = sbr.rel (%p2436) target = $region112
    $region111: #{e2e_forward.9} parent=5 // pred_region
      %s2439 = ssub.s32 %s26, 2
      // Predicated region
      $region113: #{e2e_forward.9} parent=111 // pred_check
        %p2440 = pneg %p499
      $region114: #{e2e_forward.9} parent=111 // pred_check_branch
        %2442 = sbr.rel (%p2440) target = $region116
      $region115: #{e2e_forward.9} parent=111 // pred_region
        %p2443 = scmp.lt.s32.totalorder %s37, 1
        %s2444 = scalar_select %p2443, %s37, 1
        %p2445 = scmp.lt.s32.totalorder %s38, 0
        %s2446 = scalar_select %p2445, %s38, 0
        %s2447 = sadd.s32 %s2446, %s2444
        %s2448 = smul.addr %s2447, 4
        %s2449 = scalar_lea.vmem %s20, %s2448
      $region116: #{e2e_forward.9} parent=111 // pred_fallthru
        _
    $region112: #{e2e_forward.9} parent=5 // pred_fallthru
      _
  $region6: #{e2e_forward.9} parent=0 // loop_footer
    %s30 = sadd.s32 1, %s26
  $region7: #{e2e_forward.9} parent=0 // loop_footer_branch
    %25 = sbr.rel target = $region3
  $region8: #{e2e_forward.9} parent=0 // loop_exit
    _

// kernel: e2e_forward.8
$region0: #{e2e_forward.8}
  #allocation0 [shape = 'u32[]', space=smem, size = 0x4, offset = 0x4, fixed_abs, tag = 'smem constant byte address 0x4 - core index']
  #allocation1 [shape = 'u32[144,128]{1,0:T(1,128)}', space=vmem, size = 0x12000, scoped, tag = 'internal scratch']
  #allocation2 [shape = 'bf16[4,3,8]{2,1,0:T(4,128)(2,1)}', space=vmem, size = 0x1000, scoped, tag = 'scratch operand']
  #allocation3 [shape = 'bf16[4,3,8]{2,1,0:T(4,128)(2,1)}', space=vmem, size = 0x1000, scoped, tag = 'scratch operand']
  #allocation4 [shape = 'bf16[4,3,8]{2,1,0:T(4,128)(2,1)}', space=vmem, size = 0x1000, scoped, tag = 'scratch operand']
  #allocation5 [shape = 'f32[3,32]{1,0:T(4,128)}', space=vmem, size = 0x800, scoped, tag = 'scratch operand']
  %s0 = inlined_call_operand.vmem [shape: f32[2,3,32], index: 0, kind: input, shape index: {}]
  %s1 = inlined_call_operand.vmem [shape: f32[2,1,3], index: 1, kind: input, shape index: {}]
  %s2 = inlined_call_operand.vmem [shape: f32[1,32], index: 2, kind: input, shape index: {}]
  %s3 = inlined_call_operand.vmem [shape: f32[1,32], index: 3, kind: input, shape index: {}]
  %s4 = inlined_call_operand.vmem [shape: bf16[4,32,8], index: 4, kind: input, shape index: {}]
  %s5 = inlined_call_operand.vmem [shape: f32[4,1,8], index: 5, kind: input, shape index: {}]
  %s6 = inlined_call_operand.vmem [shape: bf16[4,32,8], index: 6, kind: input, shape index: {}]
  %s7 = inlined_call_operand.vmem [shape: f32[4,1,8], index: 7, kind: input, shape index: {}]
  %s8 = inlined_call_operand.vmem [shape: bf16[4,32,8], index: 8, kind: input, shape index: {}]
  %s9 = inlined_call_operand.vmem [shape: f32[4,1,8], index: 9, kind: input, shape index: {}]
  %s10 = inlined_call_operand.vmem [shape: bf16[4,8,32], index: 10, kind: input, shape index: {}]
  %s11 = inlined_call_operand.vmem [shape: f32[1,32], index: 11, kind: input, shape index: {}]
  %s12 = inlined_call_operand.vmem [shape: f32[1,32], index: 12, kind: input, shape index: {}]
  %s13 = inlined_call_operand.vmem [shape: f32[1,32], index: 13, kind: input, shape index: {}]
  %s14 = inlined_call_operand.vmem [shape: bf16[32,64], index: 14, kind: input, shape index: {}]
  %s15 = inlined_call_operand.vmem [shape: f32[1,64], index: 15, kind: input, shape index: {}]
  %s16 = inlined_call_operand.vmem [shape: bf16[64,32], index: 16, kind: input, shape index: {}]
  %s17 = inlined_call_operand.vmem [shape: f32[1,32], index: 17, kind: input, shape index: {}]
  %s18 = inlined_call_operand.vmem [shape: f32[2,3,32], index: 18, kind: output, shape index: {}]
  %s19 = sld [smem:[#allocation0]]
  $region109: #{e2e_forward.8} parent=0
    _
  %s21 = ssub.s32 1, %s19
  %s22 = scalar_select 0, %s21, %s19
  loop: start=0, step=1, limit=4
  $region2: #{e2e_forward.8} parent=0 // loop_pre_header
    _
  $region3: #{e2e_forward.8} parent=0 // loop_header
    %s24 = sphi 0, %s28
    %p25 = scmp.ge.s32.totalorder %s24, 4
    %s31 = sphi 0, %s43
    %s32 = sphi 0, %s39
    %s33 = sphi 0, %s31
    %s34 = sphi 0, %s32
    %s35 = sphi 0, %s33
    %s36 = sphi 0, %s34
    %s46 = sphi 0, %s48
    %s49 = sphi 0, %s46
    %s50 = sphi 0, %s49
    %s66 = sphi 0, %s50
    %s72 = sphi 0, %s74
    %s75 = sphi 0, %s72
    %s76 = sphi 0, %s75
    %s92 = sphi 0, %s76
    %s96 = sphi 0, %s96
    %s98 = sphi 0, %s96
    %s99 = sphi 0, %s98
    %s113 = sphi 0, %s99
    %s117 = sphi 0, %s117
    %s119 = sphi 0, %s117
    %s120 = sphi 0, %s119
    %s134 = sphi 0, %s120
    %s138 = sphi 0, %s138
    %s140 = sphi 0, %s138
    %s141 = sphi 0, %s140
    %s155 = sphi 0, %s141
    %s159 = sphi 0, %s159
    %s161 = sphi 0, %s159
    %s162 = sphi 0, %s161
    %s176 = sphi 0, %s162
    %s180 = sphi 0, %s180
    %s182 = sphi 0, %s180
    %s183 = sphi 0, %s182
    %s197 = sphi 0, %s183
    %s201 = sphi 0, %s201
    %s203 = sphi 0, %s201
    %s204 = sphi 0, %s203
    %s218 = sphi 0, %s204
    %s222 = sphi 0, %s222
    %s224 = sphi 0, %s222
    %s225 = sphi 0, %s224
    %s239 = sphi 0, %s225
    %s243 = sphi 0, %s243
    %s245 = sphi 0, %s243
    %s246 = sphi 0, %s245
    %s260 = sphi 0, %s246
    %s264 = sphi 0, %s264
    %s266 = sphi 0, %s264
    %s267 = sphi 0, %s266
    %s281 = sphi 0, %s267
    %s285 = sphi 0, %s285
    %s287 = sphi 0, %s285
    %s288 = sphi 0, %s287
    %s302 = sphi 0, %s288
    %s306 = sphi 0, %s306
    %s308 = sphi 0, %s306
    %s309 = sphi 0, %s308
    %s323 = sphi 0, %s309
    %s327 = sphi 0, %s327
    %s329 = sphi 0, %s327
    %s330 = sphi 0, %s329
    %s344 = sphi 0, %s330
    %s348 = sphi 0, %s348
    %s350 = sphi 0, %s348
    %s351 = sphi 0, %s350
    %s365 = sphi 0, %s351
    %s369 = sphi 0, %s369
    %s371 = sphi 0, %s369
    %s372 = sphi 0, %s371
    %s386 = sphi 0, %s372
    %s390 = sphi 0, %s390
    %s392 = sphi 0, %s390
    %s393 = sphi 0, %s392
    %s407 = sphi 0, %s393
    %s411 = sphi 0, %s411
    %s413 = sphi 0, %s411
    %s414 = sphi 0, %s413
    %s428 = sphi 0, %s414
    %s436 = sphi 0, %s438
    %s439 = sphi 0, %s436
    %s440 = sphi 0, %s439
    %s456 = sphi 0, %s440
  $region4: #{e2e_forward.8} parent=0 // loop_header_branch
    %27 = sbr.rel (%p25) target = $region8
  $region5: #{e2e_forward.8} parent=0 // loop_body
    %s29 = ssub.s32 %s24, 1
    %s30 = ssub.s32 %s24, 2
    %s37 = sadd.s32 1, %s32
    %p38 = scmp.ge.s32.totalorder %s37, 1
    %s39 = scalar_select %p38, 0, %s37
    %s40 = sadd.s32 1, %s31
    %s41 = scalar_select %p38, %s40, %s31
    %p42 = scmp.ge.s32.totalorder %s41, 2
    %s43 = scalar_select %p42, 0, %s41
    %s44 = ssub.s32 %s31, %s43
    %p45 = scmp.eq.s32.totalorder %s44, 0
    %s47 = sadd.s32 %s46, 1
    %s48 = scalar_select %p45, %s46, %s47
    %p51 = pneg %p45
    %p52 = scmp.eq.s32.totalorder %s24, 1
    %p53 = por %p51, %p52
    %p54 = scmp.ne.s32.totalorder %s46, %s49
    %p55 = scmp.eq.s32.totalorder %s24, 0
    %p56 = por %p54, %p55
    %p57 = scmp.ne.s32.totalorder %s46, %s49
    %p58 = scmp.eq.s32.totalorder %s29, 1
    %p59 = por %p57, %p58
    %p60 = scmp.ne.s32.totalorder %s49, %s50
    %p61 = scmp.eq.s32.totalorder %s29, 0
    %p62 = por %p60, %p61
    %p63 = scmp.ne.s32.totalorder %s49, %s50
    %p64 = scmp.eq.s32.totalorder %s30, 1
    %p65 = por %p63, %p64
    %p67 = scmp.ne.s32.totalorder %s50, %s66
    %p68 = scmp.eq.s32.totalorder %s30, 0
    %p69 = por %p67, %p68
    %s70 = ssub.s32 %s31, %s43
    %p71 = scmp.eq.s32.totalorder %s70, 0
    %s73 = sadd.s32 %s72, 1
    %s74 = scalar_select %p71, %s72, %s73
    %p77 = pneg %p71
    %p78 = scmp.eq.s32.totalorder %s24, 1
    %p79 = por %p77, %p78
    %p80 = scmp.ne.s32.totalorder %s72, %s75
    %p81 = scmp.eq.s32.totalorder %s24, 0
    %p82 = por %p80, %p81
    %p83 = scmp.ne.s32.totalorder %s72, %s75
    %p84 = scmp.eq.s32.totalorder %s29, 1
    %p85 = por %p83, %p84
    %p86 = scmp.ne.s32.totalorder %s75, %s76
    %p87 = scmp.eq.s32.totalorder %s29, 0
    %p88 = por %p86, %p87
    %p89 = scmp.ne.s32.totalorder %s75, %s76
    %p90 = scmp.eq.s32.totalorder %s30, 1
    %p91 = por %p89, %p90
    %p93 = scmp.ne.s32.totalorder %s76, %s92
    %p94 = scmp.eq.s32.totalorder %s30, 0
    %p95 = por %p93, %p94
    %s97 = sadd.s32 %s96, 1
    %p100 = scmp.eq.s32.totalorder %s24, 1
    %p101 = scmp.ne.s32.totalorder %s96, %s98
    %p102 = scmp.eq.s32.totalorder %s24, 0
    %p103 = por %p101, %p102
    %p104 = scmp.ne.s32.totalorder %s96, %s98
    %p105 = scmp.eq.s32.totalorder %s29, 1
    %p106 = por %p104, %p105
    %p107 = scmp.ne.s32.totalorder %s98, %s99
    %p108 = scmp.eq.s32.totalorder %s29, 0
    %p109 = por %p107, %p108
    %p110 = scmp.ne.s32.totalorder %s98, %s99
    %p111 = scmp.eq.s32.totalorder %s30, 1
    %p112 = por %p110, %p111
    %p114 = scmp.ne.s32.totalorder %s99, %s113
    %p115 = scmp.eq.s32.totalorder %s30, 0
    %p116 = por %p114, %p115
    %s118 = sadd.s32 %s117, 1
    %p121 = scmp.eq.s32.totalorder %s24, 1
    %p122 = scmp.ne.s32.totalorder %s117, %s119
    %p123 = scmp.eq.s32.totalorder %s24, 0
    %p124 = por %p122, %p123
    %p125 = scmp.ne.s32.totalorder %s117, %s119
    %p126 = scmp.eq.s32.totalorder %s29, 1
    %p127 = por %p125, %p126
    %p128 = scmp.ne.s32.totalorder %s119, %s120
    %p129 = scmp.eq.s32.totalorder %s29, 0
    %p130 = por %p128, %p129
    %p131 = scmp.ne.s32.totalorder %s119, %s120
    %p132 = scmp.eq.s32.totalorder %s30, 1
    %p133 = por %p131, %p132
    %p135 = scmp.ne.s32.totalorder %s120, %s134
    %p136 = scmp.eq.s32.totalorder %s30, 0
    %p137 = por %p135, %p136
    %s139 = sadd.s32 %s138, 1
    %p142 = scmp.eq.s32.totalorder %s24, 1
    %p143 = scmp.ne.s32.totalorder %s138, %s140
    %p144 = scmp.eq.s32.totalorder %s24, 0
    %p145 = por %p143, %p144
    %p146 = scmp.ne.s32.totalorder %s138, %s140
    %p147 = scmp.eq.s32.totalorder %s29, 1
    %p148 = por %p146, %p147
    %p149 = scmp.ne.s32.totalorder %s140, %s141
    %p150 = scmp.eq.s32.totalorder %s29, 0
    %p151 = por %p149, %p150
    %p152 = scmp.ne.s32.totalorder %s140, %s141
    %p153 = scmp.eq.s32.totalorder %s30, 1
    %p154 = por %p152, %p153
    %p156 = scmp.ne.s32.totalorder %s141, %s155
    %p157 = scmp.eq.s32.totalorder %s30, 0
    %p158 = por %p156, %p157
    %s160 = sadd.s32 %s159, 1
    %p163 = scmp.eq.s32.totalorder %s24, 1
    %p164 = scmp.ne.s32.totalorder %s159, %s161
    %p165 = scmp.eq.s32.totalorder %s24, 0
    %p166 = por %p164, %p165
    %p167 = scmp.ne.s32.totalorder %s159, %s161
    %p168 = scmp.eq.s32.totalorder %s29, 1
    %p169 = por %p167, %p168
    %p170 = scmp.ne.s32.totalorder %s161, %s162
    %p171 = scmp.eq.s32.totalorder %s29, 0
    %p172 = por %p170, %p171
    %p173 = scmp.ne.s32.totalorder %s161, %s162
    %p174 = scmp.eq.s32.totalorder %s30, 1
    %p175 = por %p173, %p174
    %p177 = scmp.ne.s32.totalorder %s162, %s176
    %p178 = scmp.eq.s32.totalorder %s30, 0
    %p179 = por %p177, %p178
    %s181 = sadd.s32 %s180, 1
    %p184 = scmp.eq.s32.totalorder %s24, 1
    %p185 = scmp.ne.s32.totalorder %s180, %s182
    %p186 = scmp.eq.s32.totalorder %s24, 0
    %p187 = por %p185, %p186
    %p188 = scmp.ne.s32.totalorder %s180, %s182
    %p189 = scmp.eq.s32.totalorder %s29, 1
    %p190 = por %p188, %p189
    %p191 = scmp.ne.s32.totalorder %s182, %s183
    %p192 = scmp.eq.s32.totalorder %s29, 0
    %p193 = por %p191, %p192
    %p194 = scmp.ne.s32.totalorder %s182, %s183
    %p195 = scmp.eq.s32.totalorder %s30, 1
    %p196 = por %p194, %p195
    %p198 = scmp.ne.s32.totalorder %s183, %s197
    %p199 = scmp.eq.s32.totalorder %s30, 0
    %p200 = por %p198, %p199
    %s202 = sadd.s32 %s201, 1
    %p205 = scmp.eq.s32.totalorder %s24, 1
    %p206 = scmp.ne.s32.totalorder %s201, %s203
    %p207 = scmp.eq.s32.totalorder %s24, 0
    %p208 = por %p206, %p207
    %p209 = scmp.ne.s32.totalorder %s201, %s203
    %p210 = scmp.eq.s32.totalorder %s29, 1
    %p211 = por %p209, %p210
    %p212 = scmp.ne.s32.totalorder %s203, %s204
    %p213 = scmp.eq.s32.totalorder %s29, 0
    %p214 = por %p212, %p213
    %p215 = scmp.ne.s32.totalorder %s203, %s204
    %p216 = scmp.eq.s32.totalorder %s30, 1
    %p217 = por %p215, %p216
    %p219 = scmp.ne.s32.totalorder %s204, %s218
    %p220 = scmp.eq.s32.totalorder %s30, 0
    %p221 = por %p219, %p220
    %s223 = sadd.s32 %s222, 1
    %p226 = scmp.eq.s32.totalorder %s24, 1
    %p227 = scmp.ne.s32.totalorder %s222, %s224
    %p228 = scmp.eq.s32.totalorder %s24, 0
    %p229 = por %p227, %p228
    %p230 = scmp.ne.s32.totalorder %s222, %s224
    %p231 = scmp.eq.s32.totalorder %s29, 1
    %p232 = por %p230, %p231
    %p233 = scmp.ne.s32.totalorder %s224, %s225
    %p234 = scmp.eq.s32.totalorder %s29, 0
    %p235 = por %p233, %p234
    %p236 = scmp.ne.s32.totalorder %s224, %s225
    %p237 = scmp.eq.s32.totalorder %s30, 1
    %p238 = por %p236, %p237
    %p240 = scmp.ne.s32.totalorder %s225, %s239
    %p241 = scmp.eq.s32.totalorder %s30, 0
    %p242 = por %p240, %p241
    %s244 = sadd.s32 %s243, 1
    %p247 = scmp.eq.s32.totalorder %s24, 1
    %p248 = scmp.ne.s32.totalorder %s243, %s245
    %p249 = scmp.eq.s32.totalorder %s24, 0
    %p250 = por %p248, %p249
    %p251 = scmp.ne.s32.totalorder %s243, %s245
    %p252 = scmp.eq.s32.totalorder %s29, 1
    %p253 = por %p251, %p252
    %p254 = scmp.ne.s32.totalorder %s245, %s246
    %p255 = scmp.eq.s32.totalorder %s29, 0
    %p256 = por %p254, %p255
    %p257 = scmp.ne.s32.totalorder %s245, %s246
    %p258 = scmp.eq.s32.totalorder %s30, 1
    %p259 = por %p257, %p258
    %p261 = scmp.ne.s32.totalorder %s246, %s260
    %p262 = scmp.eq.s32.totalorder %s30, 0
    %p263 = por %p261, %p262
    %s265 = sadd.s32 %s264, 1
    %p268 = scmp.eq.s32.totalorder %s24, 1
    %p269 = scmp.ne.s32.totalorder %s264, %s266
    %p270 = scmp.eq.s32.totalorder %s24, 0
    %p271 = por %p269, %p270
    %p272 = scmp.ne.s32.totalorder %s264, %s266
    %p273 = scmp.eq.s32.totalorder %s29, 1
    %p274 = por %p272, %p273
    %p275 = scmp.ne.s32.totalorder %s266, %s267
    %p276 = scmp.eq.s32.totalorder %s29, 0
    %p277 = por %p275, %p276
    %p278 = scmp.ne.s32.totalorder %s266, %s267
    %p279 = scmp.eq.s32.totalorder %s30, 1
    %p280 = por %p278, %p279
    %p282 = scmp.ne.s32.totalorder %s267, %s281
    %p283 = scmp.eq.s32.totalorder %s30, 0
    %p284 = por %p282, %p283
    %s286 = sadd.s32 %s285, 1
    %p289 = scmp.eq.s32.totalorder %s24, 1
    %p290 = scmp.ne.s32.totalorder %s285, %s287
    %p291 = scmp.eq.s32.totalorder %s24, 0
    %p292 = por %p290, %p291
    %p293 = scmp.ne.s32.totalorder %s285, %s287
    %p294 = scmp.eq.s32.totalorder %s29, 1
    %p295 = por %p293, %p294
    %p296 = scmp.ne.s32.totalorder %s287, %s288
    %p297 = scmp.eq.s32.totalorder %s29, 0
    %p298 = por %p296, %p297
    %p299 = scmp.ne.s32.totalorder %s287, %s288
    %p300 = scmp.eq.s32.totalorder %s30, 1
    %p301 = por %p299, %p300
    %p303 = scmp.ne.s32.totalorder %s288, %s302
    %p304 = scmp.eq.s32.totalorder %s30, 0
    %p305 = por %p303, %p304
    %s307 = sadd.s32 %s306, 1
    %p310 = scmp.eq.s32.totalorder %s24, 1
    %p311 = scmp.ne.s32.totalorder %s306, %s308
    %p312 = scmp.eq.s32.totalorder %s24, 0
    %p313 = por %p311, %p312
    %p314 = scmp.ne.s32.totalorder %s306, %s308
    %p315 = scmp.eq.s32.totalorder %s29, 1
    %p316 = por %p314, %p315
    %p317 = scmp.ne.s32.totalorder %s308, %s309
    %p318 = scmp.eq.s32.totalorder %s29, 0
    %p319 = por %p317, %p318
    %p320 = scmp.ne.s32.totalorder %s308, %s309
    %p321 = scmp.eq.s32.totalorder %s30, 1
    %p322 = por %p320, %p321
    %p324 = scmp.ne.s32.totalorder %s309, %s323
    %p325 = scmp.eq.s32.totalorder %s30, 0
    %p326 = por %p324, %p325
    %s328 = sadd.s32 %s327, 1
    %p331 = scmp.eq.s32.totalorder %s24, 1
    %p332 = scmp.ne.s32.totalorder %s327, %s329
    %p333 = scmp.eq.s32.totalorder %s24, 0
    %p334 = por %p332, %p333
    %p335 = scmp.ne.s32.totalorder %s327, %s329
    %p336 = scmp.eq.s32.totalorder %s29, 1
    %p337 = por %p335, %p336
    %p338 = scmp.ne.s32.totalorder %s329, %s330
    %p339 = scmp.eq.s32.totalorder %s29, 0
    %p340 = por %p338, %p339
    %p341 = scmp.ne.s32.totalorder %s329, %s330
    %p342 = scmp.eq.s32.totalorder %s30, 1
    %p343 = por %p341, %p342
    %p345 = scmp.ne.s32.totalorder %s330, %s344
    %p346 = scmp.eq.s32.totalorder %s30, 0
    %p347 = por %p345, %p346
    %s349 = sadd.s32 %s348, 1
    %p352 = scmp.eq.s32.totalorder %s24, 1
    %p353 = scmp.ne.s32.totalorder %s348, %s350
    %p354 = scmp.eq.s32.totalorder %s24, 0
    %p355 = por %p353, %p354
    %p356 = scmp.ne.s32.totalorder %s348, %s350
    %p357 = scmp.eq.s32.totalorder %s29, 1
    %p358 = por %p356, %p357
    %p359 = scmp.ne.s32.totalorder %s350, %s351
    %p360 = scmp.eq.s32.totalorder %s29, 0
    %p361 = por %p359, %p360
    %p362 = scmp.ne.s32.totalorder %s350, %s351
    %p363 = scmp.eq.s32.totalorder %s30, 1
    %p364 = por %p362, %p363
    %p366 = scmp.ne.s32.totalorder %s351, %s365
    %p367 = scmp.eq.s32.totalorder %s30, 0
    %p368 = por %p366, %p367
    %s370 = sadd.s32 %s369, 1
    %p373 = scmp.eq.s32.totalorder %s24, 1
    %p374 = scmp.ne.s32.totalorder %s369, %s371
    %p375 = scmp.eq.s32.totalorder %s24, 0
    %p376 = por %p374, %p375
    %p377 = scmp.ne.s32.totalorder %s369, %s371
    %p378 = scmp.eq.s32.totalorder %s29, 1
    %p379 = por %p377, %p378
    %p380 = scmp.ne.s32.totalorder %s371, %s372
    %p381 = scmp.eq.s32.totalorder %s29, 0
    %p382 = por %p380, %p381
    %p383 = scmp.ne.s32.totalorder %s371, %s372
    %p384 = scmp.eq.s32.totalorder %s30, 1
    %p385 = por %p383, %p384
    %p387 = scmp.ne.s32.totalorder %s372, %s386
    %p388 = scmp.eq.s32.totalorder %s30, 0
    %p389 = por %p387, %p388
    %s391 = sadd.s32 %s390, 1
    %p394 = scmp.eq.s32.totalorder %s24, 1
    %p395 = scmp.ne.s32.totalorder %s390, %s392
    %p396 = scmp.eq.s32.totalorder %s24, 0
    %p397 = por %p395, %p396
    %p398 = scmp.ne.s32.totalorder %s390, %s392
    %p399 = scmp.eq.s32.totalorder %s29, 1
    %p400 = por %p398, %p399
    %p401 = scmp.ne.s32.totalorder %s392, %s393
    %p402 = scmp.eq.s32.totalorder %s29, 0
    %p403 = por %p401, %p402
    %p404 = scmp.ne.s32.totalorder %s392, %s393
    %p405 = scmp.eq.s32.totalorder %s30, 1
    %p406 = por %p404, %p405
    %p408 = scmp.ne.s32.totalorder %s393, %s407
    %p409 = scmp.eq.s32.totalorder %s30, 0
    %p410 = por %p408, %p409
    %s412 = sadd.s32 %s411, 1
    %p415 = scmp.eq.s32.totalorder %s24, 1
    %p416 = scmp.ne.s32.totalorder %s411, %s413
    %p417 = scmp.eq.s32.totalorder %s24, 0
    %p418 = por %p416, %p417
    %p419 = scmp.ne.s32.totalorder %s411, %s413
    %p420 = scmp.eq.s32.totalorder %s29, 1
    %p421 = por %p419, %p420
    %p422 = scmp.ne.s32.totalorder %s413, %s414
    %p423 = scmp.eq.s32.totalorder %s29, 0
    %p424 = por %p422, %p423
    %p425 = scmp.ne.s32.totalorder %s413, %s414
    %p426 = scmp.eq.s32.totalorder %s30, 1
    %p427 = por %p425, %p426
    %p429 = scmp.ne.s32.totalorder %s414, %s428
    %p430 = scmp.eq.s32.totalorder %s30, 0
    %p431 = por %p429, %p430
    %s432 = ssub.s32 %s31, %s43
    %s433 = ssub.s32 %s32, %s39
    %s434 = sor.u32 %s432, %s433
    %p435 = scmp.eq.s32.totalorder %s434, 0
    %s437 = sadd.s32 %s436, 1
    %s438 = scalar_select %p435, %s436, %s437
    %p441 = pneg %p435
    %p442 = scmp.eq.s32.totalorder %s24, 1
    %p443 = por %p441, %p442
    %p444 = scmp.ne.s32.totalorder %s436, %s439
    %p445 = scmp.eq.s32.totalorder %s24, 0
    %p446 = por %p444, %p445
    %p447 = scmp.ne.s32.totalorder %s436, %s439
    %p448 = scmp.eq.s32.totalorder %s29, 1
    %p449 = por %p447, %p448
    %p450 = scmp.ne.s32.totalorder %s439, %s440
    %p451 = scmp.eq.s32.totalorder %s29, 0
    %p452 = por %p450, %p451
    %p453 = scmp.ne.s32.totalorder %s439, %s440
    %p454 = scmp.eq.s32.totalorder %s30, 1
    %p455 = por %p453, %p454
    %p457 = scmp.ne.s32.totalorder %s440, %s456
    %p458 = scmp.eq.s32.totalorder %s30, 0
    %p459 = por %p457, %p458
    %p460 = scmp.le.s32.totalorder 1, %s24
    %p461 = scmp.lt.s32.totalorder %s24, 3
    %p462 = pnand %p460, %p461
    %p463 = pneg %p462
    // Predicated region
    $region9: #{e2e_forward.8} parent=5 // pred_check
      _
    $region10: #{e2e_forward.8} parent=5 // pred_check_branch
      %465 = sbr.rel (%p462) target = $region12
    $region11: #{e2e_forward.8} parent=5 // pred_region
      %s466 = ssub.s32 %s24, 1
      // Predicated region
      $region13: #{e2e_forward.8} parent=11 // pred_check
        %p467 = pneg %p109
      $region14: #{e2e_forward.8} parent=11 // pred_check_branch
        %469 = sbr.rel (%p467) target = $region16
      $region15: #{e2e_forward.8} parent=11 // pred_region
        _
      $region16: #{e2e_forward.8} parent=11 // pred_fallthru
        _
      // Predicated region
      $region17: #{e2e_forward.8} parent=11 // pred_check
        %p470 = pneg %p130
      $region18: #{e2e_forward.8} parent=11 // pred_check_branch
        %472 = sbr.rel (%p470) target = $region20
      $region19: #{e2e_forward.8} parent=11 // pred_region
        _
      $region20: #{e2e_forward.8} parent=11 // pred_fallthru
        _
      // Predicated region
      $region21: #{e2e_forward.8} parent=11 // pred_check
        %p473 = pneg %p151
      $region22: #{e2e_forward.8} parent=11 // pred_check_branch
        %475 = sbr.rel (%p473) target = $region24
      $region23: #{e2e_forward.8} parent=11 // pred_region
        _
      $region24: #{e2e_forward.8} parent=11 // pred_fallthru
        _
      // Predicated region
      $region25: #{e2e_forward.8} parent=11 // pred_check
        %p476 = pneg %p172
      $region26: #{e2e_forward.8} parent=11 // pred_check_branch
        %478 = sbr.rel (%p476) target = $region28
      $region27: #{e2e_forward.8} parent=11 // pred_region
        _
      $region28: #{e2e_forward.8} parent=11 // pred_fallthru
        _
      // Predicated region
      $region29: #{e2e_forward.8} parent=11 // pred_check
        %p479 = pneg %p193
      $region30: #{e2e_forward.8} parent=11 // pred_check_branch
        %481 = sbr.rel (%p479) target = $region32
      $region31: #{e2e_forward.8} parent=11 // pred_region
        _
      $region32: #{e2e_forward.8} parent=11 // pred_fallthru
        _
      // Predicated region
      $region33: #{e2e_forward.8} parent=11 // pred_check
        %p482 = pneg %p214
      $region34: #{e2e_forward.8} parent=11 // pred_check_branch
        %484 = sbr.rel (%p482) target = $region36
      $region35: #{e2e_forward.8} parent=11 // pred_region
        _
      $region36: #{e2e_forward.8} parent=11 // pred_fallthru
        _
      // Predicated region
      $region37: #{e2e_forward.8} parent=11 // pred_check
        %p485 = pneg %p235
      $region38: #{e2e_forward.8} parent=11 // pred_check_branch
        %487 = sbr.rel (%p485) target = $region40
      $region39: #{e2e_forward.8} parent=11 // pred_region
        _
      $region40: #{e2e_forward.8} parent=11 // pred_fallthru
        _
      // Predicated region
      $region41: #{e2e_forward.8} parent=11 // pred_check
        %p488 = pneg %p256
      $region42: #{e2e_forward.8} parent=11 // pred_check_branch
        %490 = sbr.rel (%p488) target = $region44
      $region43: #{e2e_forward.8} parent=11 // pred_region
        _
      $region44: #{e2e_forward.8} parent=11 // pred_fallthru
        _
      // Predicated region
      $region45: #{e2e_forward.8} parent=11 // pred_check
        %p491 = pneg %p277
      $region46: #{e2e_forward.8} parent=11 // pred_check_branch
        %493 = sbr.rel (%p491) target = $region48
      $region47: #{e2e_forward.8} parent=11 // pred_region
        _
      $region48: #{e2e_forward.8} parent=11 // pred_fallthru
        _
      // Predicated region
      $region49: #{e2e_forward.8} parent=11 // pred_check
        %p494 = pneg %p298
      $region50: #{e2e_forward.8} parent=11 // pred_check_branch
        %496 = sbr.rel (%p494) target = $region52
      $region51: #{e2e_forward.8} parent=11 // pred_region
        _
      $region52: #{e2e_forward.8} parent=11 // pred_fallthru
        _
      // Predicated region
      $region53: #{e2e_forward.8} parent=11 // pred_check
        %p497 = pneg %p319
      $region54: #{e2e_forward.8} parent=11 // pred_check_branch
        %499 = sbr.rel (%p497) target = $region56
      $region55: #{e2e_forward.8} parent=11 // pred_region
        _
      $region56: #{e2e_forward.8} parent=11 // pred_fallthru
        _
      // Predicated region
      $region57: #{e2e_forward.8} parent=11 // pred_check
        %p500 = pneg %p340
      $region58: #{e2e_forward.8} parent=11 // pred_check_branch
        %502 = sbr.rel (%p500) target = $region60
      $region59: #{e2e_forward.8} parent=11 // pred_region
        _
      $region60: #{e2e_forward.8} parent=11 // pred_fallthru
        _
      // Predicated region
      $region61: #{e2e_forward.8} parent=11 // pred_check
        %p503 = pneg %p361
      $region62: #{e2e_forward.8} parent=11 // pred_check_branch
        %505 = sbr.rel (%p503) target = $region64
      $region63: #{e2e_forward.8} parent=11 // pred_region
        _
      $region64: #{e2e_forward.8} parent=11 // pred_fallthru
        _
      // Predicated region
      $region65: #{e2e_forward.8} parent=11 // pred_check
        %p506 = pneg %p382
      $region66: #{e2e_forward.8} parent=11 // pred_check_branch
        %508 = sbr.rel (%p506) target = $region68
      $region67: #{e2e_forward.8} parent=11 // pred_region
        _
      $region68: #{e2e_forward.8} parent=11 // pred_fallthru
        _
      // Predicated region
      $region69: #{e2e_forward.8} parent=11 // pred_check
        %p509 = pneg %p403
      $region70: #{e2e_forward.8} parent=11 // pred_check_branch
        %511 = sbr.rel (%p509) target = $region72
      $region71: #{e2e_forward.8} parent=11 // pred_region
        _
      $region72: #{e2e_forward.8} parent=11 // pred_fallthru
        _
      // Predicated region
      $region73: #{e2e_forward.8} parent=11 // pred_check
        %p512 = pneg %p424
      $region74: #{e2e_forward.8} parent=11 // pred_check_branch
        %514 = sbr.rel (%p512) target = $region76
      $region75: #{e2e_forward.8} parent=11 // pred_region
        _
      $region76: #{e2e_forward.8} parent=11 // pred_fallthru
        _
    $region12: #{e2e_forward.8} parent=5 // pred_fallthru
      _
    %p515 = scmp.lt.s32.totalorder %s24, 2
    // Predicated region
    $region77: #{e2e_forward.8} parent=5 // pred_check
      %p516 = pneg %p515
    $region78: #{e2e_forward.8} parent=5 // pred_check_branch
      %518 = sbr.rel (%p516) target = $region80
    $region79: #{e2e_forward.8} parent=5 // pred_region
      // Predicated region
      $region81: #{e2e_forward.8} parent=79 // pred_check
        %p519 = pneg %p56
      $region82: #{e2e_forward.8} parent=79 // pred_check_branch
        %521 = sbr.rel (%p519) target = $region84
      $region83: #{e2e_forward.8} parent=79 // pred_region
        %p522 = scmp.lt.s32.totalorder %s31, 1
        %s523 = scalar_select %p522, %s31, 1
        %s524 = smul.addr %s523, 4
        %s525 = scalar_lea.vmem %s0, %s524
      $region84: #{e2e_forward.8} parent=79 // pred_fallthru
        _
      // Predicated region
      $region85: #{e2e_forward.8} parent=79 // pred_check
        %p526 = pneg %p82
      $region86: #{e2e_forward.8} parent=79 // pred_check_branch
        %528 = sbr.rel (%p526) target = $region88
      $region87: #{e2e_forward.8} parent=79 // pred_region
        %p529 = scmp.lt.s32.totalorder %s31, 1
        %s530 = scalar_select %p529, %s31, 1
        %s531 = scalar_lea.vmem %s1, %s530
      $region88: #{e2e_forward.8} parent=79 // pred_fallthru
        _
    $region80: #{e2e_forward.8} parent=5 // pred_fallthru
      _
    %p532 = scmp.le.s32.totalorder 1, %s24
    %p533 = scmp.lt.s32.totalorder %s24, 3
    %p534 = pnand %p532, %p533
    %p535 = pneg %p534
    // Predicated region
    $region89: #{e2e_forward.8} parent=5 // pred_check
      _
    $region90: #{e2e_forward.8} parent=5 // pred_check_branch
      %537 = sbr.rel (%p534) target = $region92
    $region91: #{e2e_forward.8} parent=5 // pred_region
      %s538 = ssub.s32 %s24, 1
      %p539 = scmp.lt.s32.totalorder %s33, 1
      %s540 = scalar_select %p539, %s33, 1
      %s541 = smul.addr %s540, 4
      %s542 = scalar_lea.vmem %s0, %s541
      %p543 = pneg %p62
      %p544 = pneg %p59
      %p545 = scmp.lt.s32.totalorder %s33, 1
      %s546 = scalar_select %p545, %s33, 1
      %s547 = scalar_lea.vmem %s1, %s546
      %p548 = pneg %p88
      %p549 = pneg %p85
      %p550 = pneg %p109
      %p551 = pneg %p106
      %p552 = pneg %p130
      %p553 = pneg %p127
      %p554 = pneg %p151
      %p555 = pneg %p148
      %p556 = pneg %p172
      %p557 = pneg %p169
      %p558 = pneg %p193
      %p559 = pneg %p190
      %p560 = pneg %p214
      %p561 = pneg %p211
      %p562 = pneg %p235
      %p563 = pneg %p232
      %p564 = pneg %p256
      %p565 = pneg %p253
      %p566 = pneg %p277
      %p567 = pneg %p274
      %p568 = pneg %p298
      %p569 = pneg %p295
      %p570 = pneg %p319
      %p571 = pneg %p316
      %p572 = pneg %p340
      %p573 = pneg %p337
      %p574 = pneg %p361
      %p575 = pneg %p358
      %p576 = pneg %p382
      %p577 = pneg %p379
      %p578 = pneg %p403
      %p579 = pneg %p400
      %p580 = pneg %p424
      %p581 = pneg %p421
      %p582 = pneg %p452
      %p583 = pneg %p449
      %p584 = scmp.lt.s32.totalorder %s33, 1
      %s585 = scalar_select %p584, %s33, 1
      %p586 = scmp.lt.s32.totalorder %s34, 0
      %s587 = scalar_select %p586, %s34, 0
      %s588 = sadd.s32 %s587, %s585
      %s589 = smul.addr %s588, 4
      %s590 = scalar_lea.vmem %s18, %s589
      %p591 = scmp.lt.s32.totalorder %s33, 1
      %s592 = scalar_select %p591, %s33, 1
      %s593 = smul.addr %s592, 4
      %s594 = scalar_lea.vmem %s0, %s593
      %p595 = scmp.lt.s32.totalorder %s33, 1
      %s596 = scalar_select %p595, %s33, 1
      %s597 = scalar_lea.vmem %s1, %s596
      %p598 = scmp.lt.s32.totalorder %s33, 1
      %s599 = scalar_select %p598, %s33, 1
      %p600 = scmp.lt.s32.totalorder %s34, 0
      %s601 = scalar_select %p600, %s34, 0
      %s602 = sadd.s32 %s601, %s599
      %s603 = smul.addr %s602, 4
      %s604 = scalar_lea.vmem %s18, %s603
      %p606 = scmp.eq.s32.totalorder %s34, 0
      // Predicated region
      $region93: #{e2e_forward.8} parent=91 // pred_check
        %p607 = pneg %p606
      $region94: #{e2e_forward.8} parent=91 // pred_check_branch
        %609 = sbr.rel (%p607) target = $region96
      $region95: #{e2e_forward.8} parent=91 // pred_region
        %v610 = vld [vmem:[%s594] sm:$0x7]
        %v611 = vld [vmem:[%s2] sm:$0x1]
        %v612 = vld [vmem:[%s3] sm:$0x1]
        %vm613 = vcmask 256000
        %v614 = vsel %vm613, %v610, 0.0
        %615 = vadd.xlane.f32.xlu0 %v614
        %v616 = vpop.xlane.xlu0 %615
        %v617 = vrcp.pop 32.0
        %v618 = vmul.f32 %v616, %v617
        %v619 = vsub.f32 %v610, %v618
        %v620 = vmul.f32 %v619, %v619
        %v621 = vsel %vm613, %v620, 0.0
        %622 = vadd.xlane.f32.xlu0 %v621
        %v623 = vpop.xlane.xlu0 %622
        %v624 = vmul.f32 %v623, %v617
        %v625 = vadd.f32 %v624, 1e-12
        %v626 = vrsqrt.pop %v625
        %v627 = vmul.f32 %v619, %v626
        %v629 = vlaneseq
        %v630 = vshrl.u32 %v629, 7
        %v631 = vsub.s32 0, %v630
        %v632 = vrot.slane %v611, %v631
        %v634 = vmul.f32 %v627, %v632
        %v636 = vlaneseq
        %v637 = vshrl.u32 %v636, 7
        %v638 = vsub.s32 0, %v637
        %v639 = vrot.slane %v612, %v638
        %v641 = vadd.f32 %v634, %v639
        %v642 = vpack.c.bf16 %v641, %v641
        %v643 = vld [vmem:[%s4] sm:$0xf]
        %v644 = vld [vmem:[%s4 + $0x4] sm:$0xf]
        %v645 = vld [vmem:[%s4 + $0x8] sm:$0xf]
        %v646 = vld [vmem:[%s4 + $0xc] sm:$0xf]
        %v647 = vld [vmem:[%s5] sm:$0x1]
        %v649 = vlaneseq
        %v650 = vshrl.u32 %v649, 7
        %v651 = vsub.s32 0, %v650
        %v652 = vrot.slane %v647, %v651
        %v658 = vunpack.c.l.b16 %v643
        %v659 = vunpack.c.l.b16 %v644
        %v660 = vunpack.c.l.b16 %v645
        %v661 = vunpack.c.l.b16 %v646
        %v662 = vpack.c.b16 %v659, %v658
        %v663 = vpack.c.b16 %v661, %v660
        %vm666 = vcmask 261120
        %v668 = vsel %vm666, %v642, 0
        %670 = vmatprep.subr.bf16.mxu0 0
        %671 = vmatpush1.bf16.msra.mxu0 %v662
        %672 = vmatprep.subr.bf16.mxu0 0
        %673 = vmatpush1.bf16.msra.mxu0 %v663
        %674 = vmatprep.subr.bf16.mxu0 0
        %675 = vmatpush1.bf16.msra.mxu0 0
        %676 = vmatprep.subr.bf16.mxu0 0
        %677 = vmatpush1.bf16.msra.mxu0 0
        %678 = vmatprep.subr.bf16.mxu0 0
        %679 = vmatpush1.bf16.msra.mxu0 0
        %680 = vmatprep.subr.bf16.mxu0 0
        %681 = vmatpush1.bf16.msra.mxu0 0
        %682 = vmatprep.subr.bf16.mxu0 0
        %683 = vmatpush1.bf16.msra.mxu0 0
        %684 = vmatprep.subr.bf16.mxu0 0
        %685 = vmatpush1.bf16.msra.mxu0 0
        %686 = vmatprep.subr.bf16.mxu0 0
        %687 = vmatpush1.bf16.msra.mxu0 0
        %688 = vmatprep.subr.bf16.mxu0 0
        %689 = vmatpush1.bf16.msra.mxu0 0
        %690 = vmatprep.subr.bf16.mxu0 0
        %691 = vmatpush1.bf16.msra.mxu0 0
        %692 = vmatprep.subr.bf16.mxu0 0
        %693 = vmatpush1.bf16.msra.mxu0 0
        %694 = vmatprep.subr.bf16.mxu0 0
        %695 = vmatpush1.bf16.msra.mxu0 0
        %696 = vmatprep.subr.bf16.mxu0 0
        %697 = vmatpush1.bf16.msra.mxu0 0
        %698 = vmatprep.subr.bf16.mxu0 0
        %699 = vmatpush1.bf16.msra.mxu0 0
        %700 = vmatprep.subr.bf16.mxu0 0
        %701 = vmatpush1.bf16.msra.mxu0 0
        %702 = vmatprep.mubr.bf16.mxu0 0
        %703 = vmatmul.mubr.bf16.gmra.mrb[0].mxu0 %v668
        %v704 = vpop.f32.mrb[0].mxu0
        %v705 = vadd.f32 %v652, %v704
        %v706 = vpop.f32.mrb[0].mxu0
        %v707 = vpop.f32.mrb[0].mxu0
        %v708 = vpop.f32.mrb[0].mxu0
        %709 = vdwg.mxu0
        %v710 = vpack.c.bf16 %v705, %v705
        %vm711 = vcmask 58368
        %vm712 = vsmask.f32 1280
        %vm713 = vmand %vm711, %vm712
        %v714 = vld [vmem:[#allocation2] sm:$0x3]
        %v715 = vsel %vm713, %v710, %v714
        %716 = vst [vmem:[#allocation2] sm:$0x3] %v715
        %v717 = vld [vmem:[%s6] sm:$0xf]
        %v718 = vld [vmem:[%s6 + $0x4] sm:$0xf]
        %v719 = vld [vmem:[%s6 + $0x8] sm:$0xf]
        %v720 = vld [vmem:[%s6 + $0xc] sm:$0xf]
        %v721 = vld [vmem:[%s7] sm:$0x1]
        %v723 = vlaneseq
        %v724 = vshrl.u32 %v723, 7
        %v725 = vsub.s32 0, %v724
        %v726 = vrot.slane %v721, %v725
        %v732 = vunpack.c.l.b16 %v717
        %v733 = vunpack.c.l.b16 %v718
        %v734 = vunpack.c.l.b16 %v719
        %v735 = vunpack.c.l.b16 %v720
        %v736 = vpack.c.b16 %v733, %v732
        %v737 = vpack.c.b16 %v735, %v734
        %740 = vmatprep.subr.bf16.mxu0 0
        %741 = vmatpush1.bf16.msra.mxu0 %v736
        %742 = vmatprep.subr.bf16.mxu0 0
        %743 = vmatpush1.bf16.msra.mxu0 %v737
        %744 = vmatprep.subr.bf16.mxu0 0
        %745 = vmatpush1.bf16.msra.mxu0 0
        %746 = vmatprep.subr.bf16.mxu0 0
        %747 = vmatpush1.bf16.msra.mxu0 0
        %748 = vmatprep.subr.bf16.mxu0 0
        %749 = vmatpush1.bf16.msra.mxu0 0
        %750 = vmatprep.subr.bf16.mxu0 0
        %751 = vmatpush1.bf16.msra.mxu0 0
        %752 = vmatprep.subr.bf16.mxu0 0
        %753 = vmatpush1.bf16.msra.mxu0 0
        %754 = vmatprep.subr.bf16.mxu0 0
        %755 = vmatpush1.bf16.msra.mxu0 0
        %756 = vmatprep.subr.bf16.mxu0 0
        %757 = vmatpush1.bf16.msra.mxu0 0
        %758 = vmatprep.subr.bf16.mxu0 0
        %759 = vmatpush1.bf16.msra.mxu0 0
        %760 = vmatprep.subr.bf16.mxu0 0
        %761 = vmatpush1.bf16.msra.mxu0 0
        %762 = vmatprep.subr.bf16.mxu0 0
        %763 = vmatpush1.bf16.msra.mxu0 0
        %764 = vmatprep.subr.bf16.mxu0 0
        %765 = vmatpush1.bf16.msra.mxu0 0
        %766 = vmatprep.subr.bf16.mxu0 0
        %767 = vmatpush1.bf16.msra.mxu0 0
        %768 = vmatprep.subr.bf16.mxu0 0
        %769 = vmatpush1.bf16.msra.mxu0 0
        %770 = vmatprep.subr.bf16.mxu0 0
        %771 = vmatpush1.bf16.msra.mxu0 0
        %772 = vmatprep.mubr.bf16.mxu0 0
        %773 = vmatmul.mubr.bf16.gmra.mrb[0].mxu0 %v668
        %v774 = vpop.f32.mrb[0].mxu0
        %v775 = vadd.f32 %v726, %v774
        %v776 = vpop.f32.mrb[0].mxu0
        %v777 = vpop.f32.mrb[0].mxu0
        %v778 = vpop.f32.mrb[0].mxu0
        %779 = vdwg.mxu0
        %v780 = vpack.c.bf16 %v775, %v775
        %v781 = vld [vmem:[#allocation3] sm:$0x3]
        %v782 = vsel %vm713, %v780, %v781
        %783 = vst [vmem:[#allocation3] sm:$0x3] %v782
        %v784 = vld [vmem:[%s8] sm:$0xf]
        %v785 = vld [vmem:[%s8 + $0x4] sm:$0xf]
        %v786 = vld [vmem:[%s8 + $0x8] sm:$0xf]
        %v787 = vld [vmem:[%s8 + $0xc] sm:$0xf]
        %v788 = vld [vmem:[%s9] sm:$0x1]
        %v790 = vlaneseq
        %v791 = vshrl.u32 %v790, 7
        %v792 = vsub.s32 0, %v791
        %v793 = vrot.slane %v788, %v792
        %v799 = vunpack.c.l.b16 %v784
        %v800 = vunpack.c.l.b16 %v785
        %v801 = vunpack.c.l.b16 %v786
        %v802 = vunpack.c.l.b16 %v787
        %v803 = vpack.c.b16 %v800, %v799
        %v804 = vpack.c.b16 %v802, %v801
        %807 = vmatprep.subr.bf16.mxu0 0
        %808 = vmatpush1.bf16.msra.mxu0 %v803
        %809 = vmatprep.subr.bf16.mxu0 0
        %810 = vmatpush1.bf16.msra.mxu0 %v804
        %811 = vmatprep.subr.bf16.mxu0 0
        %812 = vmatpush1.bf16.msra.mxu0 0
        %813 = vmatprep.subr.bf16.mxu0 0
        %814 = vmatpush1.bf16.msra.mxu0 0
        %815 = vmatprep.subr.bf16.mxu0 0
        %816 = vmatpush1.bf16.msra.mxu0 0
        %817 = vmatprep.subr.bf16.mxu0 0
        %818 = vmatpush1.bf16.msra.mxu0 0
        %819 = vmatprep.subr.bf16.mxu0 0
        %820 = vmatpush1.bf16.msra.mxu0 0
        %821 = vmatprep.subr.bf16.mxu0 0
        %822 = vmatpush1.bf16.msra.mxu0 0
        %823 = vmatprep.subr.bf16.mxu0 0
        %824 = vmatpush1.bf16.msra.mxu0 0
        %825 = vmatprep.subr.bf16.mxu0 0
        %826 = vmatpush1.bf16.msra.mxu0 0
        %827 = vmatprep.subr.bf16.mxu0 0
        %828 = vmatpush1.bf16.msra.mxu0 0
        %829 = vmatprep.subr.bf16.mxu0 0
        %830 = vmatpush1.bf16.msra.mxu0 0
        %831 = vmatprep.subr.bf16.mxu0 0
        %832 = vmatpush1.bf16.msra.mxu0 0
        %833 = vmatprep.subr.bf16.mxu0 0
        %834 = vmatpush1.bf16.msra.mxu0 0
        %835 = vmatprep.subr.bf16.mxu0 0
        %836 = vmatpush1.bf16.msra.mxu0 0
        %837 = vmatprep.subr.bf16.mxu0 0
        %838 = vmatpush1.bf16.msra.mxu0 0
        %839 = vmatprep.mubr.bf16.mxu0 0
        %840 = vmatmul.mubr.bf16.gmra.mrb[0].mxu0 %v668
        %v841 = vpop.f32.mrb[0].mxu0
        %v842 = vadd.f32 %v793, %v841
        %v843 = vpop.f32.mrb[0].mxu0
        %v844 = vpop.f32.mrb[0].mxu0
        %v845 = vpop.f32.mrb[0].mxu0
        %846 = vdwg.mxu0
        %v847 = vpack.c.bf16 %v842, %v842
        %v848 = vld [vmem:[#allocation4] sm:$0x3]
        %v849 = vsel %vm713, %v847, %v848
        %850 = vst [vmem:[#allocation4] sm:$0x3] %v849
        %s851 = scalar_lea.vmem %s4, 16
        %v852 = vld [vmem:[%s851] sm:$0xf]
        %v853 = vld [vmem:[%s851 + $0x4] sm:$0xf]
        %v854 = vld [vmem:[%s851 + $0x8] sm:$0xf]
        %v855 = vld [vmem:[%s851 + $0xc] sm:$0xf]
        %s856 = scalar_lea.vmem %s5, 1
        %v857 = vld [vmem:[%s856] sm:$0x1]
        %v859 = vlaneseq
        %v860 = vshrl.u32 %v859, 7
        %v861 = vsub.s32 0, %v860
        %v862 = vrot.slane %v857, %v861
        %v868 = vunpack.c.l.b16 %v852
        %v869 = vunpack.c.l.b16 %v853
        %v870 = vunpack.c.l.b16 %v854
        %v871 = vunpack.c.l.b16 %v855
        %v872 = vpack.c.b16 %v869, %v868
        %v873 = vpack.c.b16 %v871, %v870
        %876 = vmatprep.subr.bf16.mxu0 0
        %877 = vmatpush1.bf16.msra.mxu0 %v872
        %878 = vmatprep.subr.bf16.mxu0 0
        %879 = vmatpush1.bf16.msra.mxu0 %v873
        %880 = vmatprep.subr.bf16.mxu0 0
        %881 = vmatpush1.bf16.msra.mxu0 0
        %882 = vmatprep.subr.bf16.mxu0 0
        %883 = vmatpush1.bf16.msra.mxu0 0
        %884 = vmatprep.subr.bf16.mxu0 0
        %885 = vmatpush1.bf16.msra.mxu0 0
        %886 = vmatprep.subr.bf16.mxu0 0
        %887 = vmatpush1.bf16.msra.mxu0 0
        %888 = vmatprep.subr.bf16.mxu0 0
        %889 = vmatpush1.bf16.msra.mxu0 0
        %890 = vmatprep.subr.bf16.mxu0 0
        %891 = vmatpush1.bf16.msra.mxu0 0
        %892 = vmatprep.subr.bf16.mxu0 0
        %893 = vmatpush1.bf16.msra.mxu0 0
        %894 = vmatprep.subr.bf16.mxu0 0
        %895 = vmatpush1.bf16.msra.mxu0 0
        %896 = vmatprep.subr.bf16.mxu0 0
        %897 = vmatpush1.bf16.msra.mxu0 0
        %898 = vmatprep.subr.bf16.mxu0 0
        %899 = vmatpush1.bf16.msra.mxu0 0
        %900 = vmatprep.subr.bf16.mxu0 0
        %901 = vmatpush1.bf16.msra.mxu0 0
        %902 = vmatprep.subr.bf16.mxu0 0
        %903 = vmatpush1.bf16.msra.mxu0 0
        %904 = vmatprep.subr.bf16.mxu0 0
        %905 = vmatpush1.bf16.msra.mxu0 0
        %906 = vmatprep.subr.bf16.mxu0 0
        %907 = vmatpush1.bf16.msra.mxu0 0
        %908 = vmatprep.mubr.bf16.mxu0 0
        %909 = vmatmul.mubr.bf16.gmra.mrb[0].mxu0 %v668
        %v910 = vpop.f32.mrb[0].mxu0
        %v911 = vadd.f32 %v862, %v910
        %v912 = vpop.f32.mrb[0].mxu0
        %v913 = vpop.f32.mrb[0].mxu0
        %v914 = vpop.f32.mrb[0].mxu0
        %915 = vdwg.mxu0
        %v916 = vpack.c.bf16 %v911, %v911
        %s917 = scalar_lea.vmem [#allocation2], 2
        %v918 = vld [vmem:[%s917] sm:$0x3]
        %v919 = vsel %vm713, %v916, %v918
        %920 = vst [vmem:[%s917] sm:$0x3] %v919
        %s921 = scalar_lea.vmem %s6, 16
        %v922 = vld [vmem:[%s921] sm:$0xf]
        %v923 = vld [vmem:[%s921 + $0x4] sm:$0xf]
        %v924 = vld [vmem:[%s921 + $0x8] sm:$0xf]
        %v925 = vld [vmem:[%s921 + $0xc] sm:$0xf]
        %s926 = scalar_lea.vmem %s7, 1
        %v927 = vld [vmem:[%s926] sm:$0x1]
        %v929 = vlaneseq
        %v930 = vshrl.u32 %v929, 7
        %v931 = vsub.s32 0, %v930
        %v932 = vrot.slane %v927, %v931
        %v938 = vunpack.c.l.b16 %v922
        %v939 = vunpack.c.l.b16 %v923
        %v940 = vunpack.c.l.b16 %v924
        %v941 = vunpack.c.l.b16 %v925
        %v942 = vpack.c.b16 %v939, %v938
        %v943 = vpack.c.b16 %v941, %v940
        %946 = vmatprep.subr.bf16.mxu0 0
        %947 = vmatpush1.bf16.msra.mxu0 %v942
        %948 = vmatprep.subr.bf16.mxu0 0
        %949 = vmatpush1.bf16.msra.mxu0 %v943
        %950 = vmatprep.subr.bf16.mxu0 0
        %951 = vmatpush1.bf16.msra.mxu0 0
        %952 = vmatprep.subr.bf16.mxu0 0
        %953 = vmatpush1.bf16.msra.mxu0 0
        %954 = vmatprep.subr.bf16.mxu0 0
        %955 = vmatpush1.bf16.msra.mxu0 0
        %956 = vmatprep.subr.bf16.mxu0 0
        %957 = vmatpush1.bf16.msra.mxu0 0
        %958 = vmatprep.subr.bf16.mxu0 0
        %959 = vmatpush1.bf16.msra.mxu0 0
        %960 = vmatprep.subr.bf16.mxu0 0
        %961 = vmatpush1.bf16.msra.mxu0 0
        %962 = vmatprep.subr.bf16.mxu0 0
        %963 = vmatpush1.bf16.msra.mxu0 0
        %964 = vmatprep.subr.bf16.mxu0 0
        %965 = vmatpush1.bf16.msra.mxu0 0
        %966 = vmatprep.subr.bf16.mxu0 0
        %967 = vmatpush1.bf16.msra.mxu0 0
        %968 = vmatprep.subr.bf16.mxu0 0
        %969 = vmatpush1.bf16.msra.mxu0 0
        %970 = vmatprep.subr.bf16.mxu0 0
        %971 = vmatpush1.bf16.msra.mxu0 0
        %972 = vmatprep.subr.bf16.mxu0 0
        %973 = vmatpush1.bf16.msra.mxu0 0
        %974 = vmatprep.subr.bf16.mxu0 0
        %975 = vmatpush1.bf16.msra.mxu0 0
        %976 = vmatprep.subr.bf16.mxu0 0
        %977 = vmatpush1.bf16.msra.mxu0 0
        %978 = vmatprep.mubr.bf16.mxu0 0
        %979 = vmatmul.mubr.bf16.gmra.mrb[0].mxu0 %v668
        %v980 = vpop.f32.mrb[0].mxu0
        %v981 = vadd.f32 %v932, %v980
        %v982 = vpop.f32.mrb[0].mxu0
        %v983 = vpop.f32.mrb[0].mxu0
        %v984 = vpop.f32.mrb[0].mxu0
        %985 = vdwg.mxu0
        %v986 = vpack.c.bf16 %v981, %v981
        %s987 = scalar_lea.vmem [#allocation3], 2
        %v988 = vld [vmem:[%s987] sm:$0x3]
        %v989 = vsel %vm713, %v986, %v988
        %990 = vst [vmem:[%s987] sm:$0x3] %v989
        %s991 = scalar_lea.vmem %s8, 16
        %v992 = vld [vmem:[%s991] sm:$0xf]
        %v993 = vld [vmem:[%s991 + $0x4] sm:$0xf]
        %v994 = vld [vmem:[%s991 + $0x8] sm:$0xf]
        %v995 = vld [vmem:[%s991 + $0xc] sm:$0xf]
        %s996 = scalar_lea.vmem %s9, 1
        %v997 = vld [vmem:[%s996] sm:$0x1]
        %v999 = vlaneseq
        %v1000 = vshrl.u32 %v999, 7
        %v1001 = vsub.s32 0, %v1000
        %v1002 = vrot.slane %v997, %v1001
        %v1008 = vunpack.c.l.b16 %v992
        %v1009 = vunpack.c.l.b16 %v993
        %v1010 = vunpack.c.l.b16 %v994
        %v1011 = vunpack.c.l.b16 %v995
        %v1012 = vpack.c.b16 %v1009, %v1008
        %v1013 = vpack.c.b16 %v1011, %v1010
        %1016 = vmatprep.subr.bf16.mxu0 0
        %1017 = vmatpush1.bf16.msra.mxu0 %v1012
        %1018 = vmatprep.subr.bf16.mxu0 0
        %1019 = vmatpush1.bf16.msra.mxu0 %v1013
        %1020 = vmatprep.subr.bf16.mxu0 0
        %1021 = vmatpush1.bf16.msra.mxu0 0
        %1022 = vmatprep.subr.bf16.mxu0 0
        %1023 = vmatpush1.bf16.msra.mxu0 0
        %1024 = vmatprep.subr.bf16.mxu0 0
        %1025 = vmatpush1.bf16.msra.mxu0 0
        %1026 = vmatprep.subr.bf16.mxu0 0
        %1027 = vmatpush1.bf16.msra.mxu0 0
        %1028 = vmatprep.subr.bf16.mxu0 0
        %1029 = vmatpush1.bf16.msra.mxu0 0
        %1030 = vmatprep.subr.bf16.mxu0 0
        %1031 = vmatpush1.bf16.msra.mxu0 0
        %1032 = vmatprep.subr.bf16.mxu0 0
        %1033 = vmatpush1.bf16.msra.mxu0 0
        %1034 = vmatprep.subr.bf16.mxu0 0
        %1035 = vmatpush1.bf16.msra.mxu0 0
        %1036 = vmatprep.subr.bf16.mxu0 0
        %1037 = vmatpush1.bf16.msra.mxu0 0
        %1038 = vmatprep.subr.bf16.mxu0 0
        %1039 = vmatpush1.bf16.msra.mxu0 0
        %1040 = vmatprep.subr.bf16.mxu0 0
        %1041 = vmatpush1.bf16.msra.mxu0 0
        %1042 = vmatprep.subr.bf16.mxu0 0
        %1043 = vmatpush1.bf16.msra.mxu0 0
        %1044 = vmatprep.subr.bf16.mxu0 0
        %1045 = vmatpush1.bf16.msra.mxu0 0
        %1046 = vmatprep.subr.bf16.mxu0 0
        %1047 = vmatpush1.bf16.msra.mxu0 0
        %1048 = vmatprep.mubr.bf16.mxu0 0
        %1049 = vmatmul.mubr.bf16.gmra.mrb[0].mxu0 %v668
        %v1050 = vpop.f32.mrb[0].mxu0
        %v1051 = vadd.f32 %v1002, %v1050
        %v1052 = vpop.f32.mrb[0].mxu0
        %v1053 = vpop.f32.mrb[0].mxu0
        %v1054 = vpop.f32.mrb[0].mxu0
        %1055 = vdwg.mxu0
        %v1056 = vpack.c.bf16 %v1051, %v1051
        %s1057 = scalar_lea.vmem [#allocation4], 2
        %v1058 = vld [vmem:[%s1057] sm:$0x3]
        %v1059 = vsel %vm713, %v1056, %v1058
        %1060 = vst [vmem:[%s1057] sm:$0x3] %v1059
        %s1061 = scalar_lea.vmem %s4, 32
        %v1062 = vld [vmem:[%s1061] sm:$0xf]
        %v1063 = vld [vmem:[%s1061 + $0x4] sm:$0xf]
        %v1064 = vld [vmem:[%s1061 + $0x8] sm:$0xf]
        %v1065 = vld [vmem:[%s1061 + $0xc] sm:$0xf]
        %s1066 = scalar_lea.vmem %s5, 2
        %v1067 = vld [vmem:[%s1066] sm:$0x1]
        %v1069 = vlaneseq
        %v1070 = vshrl.u32 %v1069, 7
        %v1071 = vsub.s32 0, %v1070
        %v1072 = vrot.slane %v1067, %v1071
        %v1078 = vunpack.c.l.b16 %v1062
        %v1079 = vunpack.c.l.b16 %v1063
        %v1080 = vunpack.c.l.b16 %v1064
        %v1081 = vunpack.c.l.b16 %v1065
        %v1082 = vpack.c.b16 %v1079, %v1078
        %v1083 = vpack.c.b16 %v1081, %v1080
        %1086 = vmatprep.subr.bf16.mxu0 0
        %1087 = vmatpush1.bf16.msra.mxu0 %v1082
        %1088 = vmatprep.subr.bf16.mxu0 0
        %1089 = vmatpush1.bf16.msra.mxu0 %v1083
        %1090 = vmatprep.subr.bf16.mxu0 0
        %1091 = vmatpush1.bf16.msra.mxu0 0
        %1092 = vmatprep.subr.bf16.mxu0 0
        %1093 = vmatpush1.bf16.msra.mxu0 0
        %1094 = vmatprep.subr.bf16.mxu0 0
        %1095 = vmatpush1.bf16.msra.mxu0 0
        %1096 = vmatprep.subr.bf16.mxu0 0
        %1097 = vmatpush1.bf16.msra.mxu0 0
        %1098 = vmatprep.subr.bf16.mxu0 0
        %1099 = vmatpush1.bf16.msra.mxu0 0
        %1100 = vmatprep.subr.bf16.mxu0 0
        %1101 = vmatpush1.bf16.msra.mxu0 0
        %1102 = vmatprep.subr.bf16.mxu0 0
        %1103 = vmatpush1.bf16.msra.mxu0 0
        %1104 = vmatprep.subr.bf16.mxu0 0
        %1105 = vmatpush1.bf16.msra.mxu0 0
        %1106 = vmatprep.subr.bf16.mxu0 0
        %1107 = vmatpush1.bf16.msra.mxu0 0
        %1108 = vmatprep.subr.bf16.mxu0 0
        %1109 = vmatpush1.bf16.msra.mxu0 0
        %1110 = vmatprep.subr.bf16.mxu0 0
        %1111 = vmatpush1.bf16.msra.mxu0 0
        %1112 = vmatprep.subr.bf16.mxu0 0
        %1113 = vmatpush1.bf16.msra.mxu0 0
        %1114 = vmatprep.subr.bf16.mxu0 0
        %1115 = vmatpush1.bf16.msra.mxu0 0
        %1116 = vmatprep.subr.bf16.mxu0 0
        %1117 = vmatpush1.bf16.msra.mxu0 0
        %1118 = vmatprep.mubr.bf16.mxu0 0
        %1119 = vmatmul.mubr.bf16.gmra.mrb[0].mxu0 %v668
        %v1120 = vpop.f32.mrb[0].mxu0
        %v1121 = vadd.f32 %v1072, %v1120
        %v1122 = vpop.f32.mrb[0].mxu0
        %v1123 = vpop.f32.mrb[0].mxu0
        %v1124 = vpop.f32.mrb[0].mxu0
        %1125 = vdwg.mxu0
        %v1126 = vpack.c.bf16 %v1121, %v1121
        %s1127 = scalar_lea.vmem [#allocation2], 4
        %v1128 = vld [vmem:[%s1127] sm:$0x3]
        %v1129 = vsel %vm713, %v1126, %v1128
        %1130 = vst [vmem:[%s1127] sm:$0x3] %v1129
        %s1131 = scalar_lea.vmem %s6, 32
        %v1132 = vld [vmem:[%s1131] sm:$0xf]
        %v1133 = vld [vmem:[%s1131 + $0x4] sm:$0xf]
        %v1134 = vld [vmem:[%s1131 + $0x8] sm:$0xf]
        %v1135 = vld [vmem:[%s1131 + $0xc] sm:$0xf]
        %s1136 = scalar_lea.vmem %s7, 2
        %v1137 = vld [vmem:[%s1136] sm:$0x1]
        %v1139 = vlaneseq
        %v1140 = vshrl.u32 %v1139, 7
        %v1141 = vsub.s32 0, %v1140
        %v1142 = vrot.slane %v1137, %v1141
        %v1148 = vunpack.c.l.b16 %v1132
        %v1149 = vunpack.c.l.b16 %v1133
        %v1150 = vunpack.c.l.b16 %v1134
        %v1151 = vunpack.c.l.b16 %v1135
        %v1152 = vpack.c.b16 %v1149, %v1148
        %v1153 = vpack.c.b16 %v1151, %v1150
        %1156 = vmatprep.subr.bf16.mxu0 0
        %1157 = vmatpush1.bf16.msra.mxu0 %v1152
        %1158 = vmatprep.subr.bf16.mxu0 0
        %1159 = vmatpush1.bf16.msra.mxu0 %v1153
        %1160 = vmatprep.subr.bf16.mxu0 0
        %1161 = vmatpush1.bf16.msra.mxu0 0
        %1162 = vmatprep.subr.bf16.mxu0 0
        %1163 = vmatpush1.bf16.msra.mxu0 0
        %1164 = vmatprep.subr.bf16.mxu0 0
        %1165 = vmatpush1.bf16.msra.mxu0 0
        %1166 = vmatprep.subr.bf16.mxu0 0
        %1167 = vmatpush1.bf16.msra.mxu0 0
        %1168 = vmatprep.subr.bf16.mxu0 0
        %1169 = vmatpush1.bf16.msra.mxu0 0
        %1170 = vmatprep.subr.bf16.mxu0 0
        %1171 = vmatpush1.bf16.msra.mxu0 0
        %1172 = vmatprep.subr.bf16.mxu0 0
        %1173 = vmatpush1.bf16.msra.mxu0 0
        %1174 = vmatprep.subr.bf16.mxu0 0
        %1175 = vmatpush1.bf16.msra.mxu0 0
        %1176 = vmatprep.subr.bf16.mxu0 0
        %1177 = vmatpush1.bf16.msra.mxu0 0
        %1178 = vmatprep.subr.bf16.mxu0 0
        %1179 = vmatpush1.bf16.msra.mxu0 0
        %1180 = vmatprep.subr.bf16.mxu0 0
        %1181 = vmatpush1.bf16.msra.mxu0 0
        %1182 = vmatprep.subr.bf16.mxu0 0
        %1183 = vmatpush1.bf16.msra.mxu0 0
        %1184 = vmatprep.subr.bf16.mxu0 0
        %1185 = vmatpush1.bf16.msra.mxu0 0
        %1186 = vmatprep.subr.bf16.mxu0 0
        %1187 = vmatpush1.bf16.msra.mxu0 0
        %1188 = vmatprep.mubr.bf16.mxu0 0
        %1189 = vmatmul.mubr.bf16.gmra.mrb[0].mxu0 %v668
        %v1190 = vpop.f32.mrb[0].mxu0
        %v1191 = vadd.f32 %v1142, %v1190
        %v1192 = vpop.f32.mrb[0].mxu0
        %v1193 = vpop.f32.mrb[0].mxu0
        %v1194 = vpop.f32.mrb[0].mxu0
        %1195 = vdwg.mxu0
        %v1196 = vpack.c.bf16 %v1191, %v1191
        %s1197 = scalar_lea.vmem [#allocation3], 4
        %v1198 = vld [vmem:[%s1197] sm:$0x3]
        %v1199 = vsel %vm713, %v1196, %v1198
        %1200 = vst [vmem:[%s1197] sm:$0x3] %v1199
        %s1201 = scalar_lea.vmem %s8, 32
        %v1202 = vld [vmem:[%s1201] sm:$0xf]
        %v1203 = vld [vmem:[%s1201 + $0x4] sm:$0xf]
        %v1204 = vld [vmem:[%s1201 + $0x8] sm:$0xf]
        %v1205 = vld [vmem:[%s1201 + $0xc] sm:$0xf]
        %s1206 = scalar_lea.vmem %s9, 2
        %v1207 = vld [vmem:[%s1206] sm:$0x1]
        %v1209 = vlaneseq
        %v1210 = vshrl.u32 %v1209, 7
        %v1211 = vsub.s32 0, %v1210
        %v1212 = vrot.slane %v1207, %v1211
        %v1218 = vunpack.c.l.b16 %v1202
        %v1219 = vunpack.c.l.b16 %v1203
        %v1220 = vunpack.c.l.b16 %v1204
        %v1221 = vunpack.c.l.b16 %v1205
        %v1222 = vpack.c.b16 %v1219, %v1218
        %v1223 = vpack.c.b16 %v1221, %v1220
        %1226 = vmatprep.subr.bf16.mxu0 0
        %1227 = vmatpush1.bf16.msra.mxu0 %v1222
        %1228 = vmatprep.subr.bf16.mxu0 0
        %1229 = vmatpush1.bf16.msra.mxu0 %v1223
        %1230 = vmatprep.subr.bf16.mxu0 0
        %1231 = vmatpush1.bf16.msra.mxu0 0
        %1232 = vmatprep.subr.bf16.mxu0 0
        %1233 = vmatpush1.bf16.msra.mxu0 0
        %1234 = vmatprep.subr.bf16.mxu0 0
        %1235 = vmatpush1.bf16.msra.mxu0 0
        %1236 = vmatprep.subr.bf16.mxu0 0
        %1237 = vmatpush1.bf16.msra.mxu0 0
        %1238 = vmatprep.subr.bf16.mxu0 0
        %1239 = vmatpush1.bf16.msra.mxu0 0
        %1240 = vmatprep.subr.bf16.mxu0 0
        %1241 = vmatpush1.bf16.msra.mxu0 0
        %1242 = vmatprep.subr.bf16.mxu0 0
        %1243 = vmatpush1.bf16.msra.mxu0 0
        %1244 = vmatprep.subr.bf16.mxu0 0
        %1245 = vmatpush1.bf16.msra.mxu0 0
        %1246 = vmatprep.subr.bf16.mxu0 0
        %1247 = vmatpush1.bf16.msra.mxu0 0
        %1248 = vmatprep.subr.bf16.mxu0 0
        %1249 = vmatpush1.bf16.msra.mxu0 0
        %1250 = vmatprep.subr.bf16.mxu0 0
        %1251 = vmatpush1.bf16.msra.mxu0 0
        %1252 = vmatprep.subr.bf16.mxu0 0
        %1253 = vmatpush1.bf16.msra.mxu0 0
        %1254 = vmatprep.subr.bf16.mxu0 0
        %1255 = vmatpush1.bf16.msra.mxu0 0
        %1256 = vmatprep.subr.bf16.mxu0 0
        %1257 = vmatpush1.bf16.msra.mxu0 0
        %1258 = vmatprep.mubr.bf16.mxu0 0
        %1259 = vmatmul.mubr.bf16.gmra.mrb[0].mxu0 %v668
        %v1260 = vpop.f32.mrb[0].mxu0
        %v1261 = vadd.f32 %v1212, %v1260
        %v1262 = vpop.f32.mrb[0].mxu0
        %v1263 = vpop.f32.mrb[0].mxu0
        %v1264 = vpop.f32.mrb[0].mxu0
        %1265 = vdwg.mxu0
        %v1266 = vpack.c.bf16 %v1261, %v1261
        %s1267 = scalar_lea.vmem [#allocation4], 4
        %v1268 = vld [vmem:[%s1267] sm:$0x3]
        %v1269 = vsel %vm713, %v1266, %v1268
        %1270 = vst [vmem:[%s1267] sm:$0x3] %v1269
        %s1271 = scalar_lea.vmem %s4, 48
        %v1272 = vld [vmem:[%s1271] sm:$0xf]
        %v1273 = vld [vmem:[%s1271 + $0x4] sm:$0xf]
        %v1274 = vld [vmem:[%s1271 + $0x8] sm:$0xf]
        %v1275 = vld [vmem:[%s1271 + $0xc] sm:$0xf]
        %s1276 = scalar_lea.vmem %s5, 3
        %v1277 = vld [vmem:[%s1276] sm:$0x1]
        %v1279 = vlaneseq
        %v1280 = vshrl.u32 %v1279, 7
        %v1281 = vsub.s32 0, %v1280
        %v1282 = vrot.slane %v1277, %v1281
        %v1288 = vunpack.c.l.b16 %v1272
        %v1289 = vunpack.c.l.b16 %v1273
        %v1290 = vunpack.c.l.b16 %v1274
        %v1291 = vunpack.c.l.b16 %v1275
        %v1292 = vpack.c.b16 %v1289, %v1288
        %v1293 = vpack.c.b16 %v1291, %v1290
        %1296 = vmatprep.subr.bf16.mxu0 0
        %1297 = vmatpush1.bf16.msra.mxu0 %v1292
        %1298 = vmatprep.subr.bf16.mxu0 0
        %1299 = vmatpush1.bf16.msra.mxu0 %v1293
        %1300 = vmatprep.subr.bf16.mxu0 0
        %1301 = vmatpush1.bf16.msra.mxu0 0
        %1302 = vmatprep.subr.bf16.mxu0 0
        %1303 = vmatpush1.bf16.msra.mxu0 0
        %1304 = vmatprep.subr.bf16.mxu0 0
        %1305 = vmatpush1.bf16.msra.mxu0 0
        %1306 = vmatprep.subr.bf16.mxu0 0
        %1307 = vmatpush1.bf16.msra.mxu0 0
        %1308 = vmatprep.subr.bf16.mxu0 0
        %1309 = vmatpush1.bf16.msra.mxu0 0
        %1310 = vmatprep.subr.bf16.mxu0 0
        %1311 = vmatpush1.bf16.msra.mxu0 0
        %1312 = vmatprep.subr.bf16.mxu0 0
        %1313 = vmatpush1.bf16.msra.mxu0 0
        %1314 = vmatprep.subr.bf16.mxu0 0
        %1315 = vmatpush1.bf16.msra.mxu0 0
        %1316 = vmatprep.subr.bf16.mxu0 0
        %1317 = vmatpush1.bf16.msra.mxu0 0
        %1318 = vmatprep.subr.bf16.mxu0 0
        %1319 = vmatpush1.bf16.msra.mxu0 0
        %1320 = vmatprep.subr.bf16.mxu0 0
        %1321 = vmatpush1.bf16.msra.mxu0 0
        %1322 = vmatprep.subr.bf16.mxu0 0
        %1323 = vmatpush1.bf16.msra.mxu0 0
        %1324 = vmatprep.subr.bf16.mxu0 0
        %1325 = vmatpush1.bf16.msra.mxu0 0
        %1326 = vmatprep.subr.bf16.mxu0 0
        %1327 = vmatpush1.bf16.msra.mxu0 0
        %1328 = vmatprep.mubr.bf16.mxu0 0
        %1329 = vmatmul.mubr.bf16.gmra.mrb[0].mxu0 %v668
        %v1330 = vpop.f32.mrb[0].mxu0
        %v1331 = vadd.f32 %v1282, %v1330
        %v1332 = vpop.f32.mrb[0].mxu0
        %v1333 = vpop.f32.mrb[0].mxu0
        %v1334 = vpop.f32.mrb[0].mxu0
        %1335 = vdwg.mxu0
        %v1336 = vpack.c.bf16 %v1331, %v1331
        %s1337 = scalar_lea.vmem [#allocation2], 6
        %v1338 = vld [vmem:[%s1337] sm:$0x3]
        %v1339 = vsel %vm713, %v1336, %v1338
        %1340 = vst [vmem:[%s1337] sm:$0x3] %v1339
        %s1341 = scalar_lea.vmem %s6, 48
        %v1342 = vld [vmem:[%s1341] sm:$0xf]
        %v1343 = vld [vmem:[%s1341 + $0x4] sm:$0xf]
        %v1344 = vld [vmem:[%s1341 + $0x8] sm:$0xf]
        %v1345 = vld [vmem:[%s1341 + $0xc] sm:$0xf]
        %s1346 = scalar_lea.vmem %s7, 3
        %v1347 = vld [vmem:[%s1346] sm:$0x1]
        %v1349 = vlaneseq
        %v1350 = vshrl.u32 %v1349, 7
        %v1351 = vsub.s32 0, %v1350
        %v1352 = vrot.slane %v1347, %v1351
        %v1358 = vunpack.c.l.b16 %v1342
        %v1359 = vunpack.c.l.b16 %v1343
        %v1360 = vunpack.c.l.b16 %v1344
        %v1361 = vunpack.c.l.b16 %v1345
        %v1362 = vpack.c.b16 %v1359, %v1358
        %v1363 = vpack.c.b16 %v1361, %v1360
        %1366 = vmatprep.subr.bf16.mxu0 0
        %1367 = vmatpush1.bf16.msra.mxu0 %v1362
        %1368 = vmatprep.subr.bf16.mxu0 0
        %1369 = vmatpush1.bf16.msra.mxu0 %v1363
        %1370 = vmatprep.subr.bf16.mxu0 0
        %1371 = vmatpush1.bf16.msra.mxu0 0
        %1372 = vmatprep.subr.bf16.mxu0 0
        %1373 = vmatpush1.bf16.msra.mxu0 0
        %1374 = vmatprep.subr.bf16.mxu0 0
        %1375 = vmatpush1.bf16.msra.mxu0 0
        %1376 = vmatprep.subr.bf16.mxu0 0
        %1377 = vmatpush1.bf16.msra.mxu0 0
        %1378 = vmatprep.subr.bf16.mxu0 0
        %1379 = vmatpush1.bf16.msra.mxu0 0
        %1380 = vmatprep.subr.bf16.mxu0 0
        %1381 = vmatpush1.bf16.msra.mxu0 0
        %1382 = vmatprep.subr.bf16.mxu0 0
        %1383 = vmatpush1.bf16.msra.mxu0 0
        %1384 = vmatprep.subr.bf16.mxu0 0
        %1385 = vmatpush1.bf16.msra.mxu0 0
        %1386 = vmatprep.subr.bf16.mxu0 0
        %1387 = vmatpush1.bf16.msra.mxu0 0
        %1388 = vmatprep.subr.bf16.mxu0 0
        %1389 = vmatpush1.bf16.msra.mxu0 0
        %1390 = vmatprep.subr.bf16.mxu0 0
        %1391 = vmatpush1.bf16.msra.mxu0 0
        %1392 = vmatprep.subr.bf16.mxu0 0
        %1393 = vmatpush1.bf16.msra.mxu0 0
        %1394 = vmatprep.subr.bf16.mxu0 0
        %1395 = vmatpush1.bf16.msra.mxu0 0
        %1396 = vmatprep.subr.bf16.mxu0 0
        %1397 = vmatpush1.bf16.msra.mxu0 0
        %1398 = vmatprep.mubr.bf16.mxu0 0
        %1399 = vmatmul.mubr.bf16.gmra.mrb[0].mxu0 %v668
        %v1400 = vpop.f32.mrb[0].mxu0
        %v1401 = vadd.f32 %v1352, %v1400
        %v1402 = vpop.f32.mrb[0].mxu0
        %v1403 = vpop.f32.mrb[0].mxu0
        %v1404 = vpop.f32.mrb[0].mxu0
        %1405 = vdwg.mxu0
        %v1406 = vpack.c.bf16 %v1401, %v1401
        %s1407 = scalar_lea.vmem [#allocation3], 6
        %v1408 = vld [vmem:[%s1407] sm:$0x3]
        %v1409 = vsel %vm713, %v1406, %v1408
        %1410 = vst [vmem:[%s1407] sm:$0x3] %v1409
        %s1411 = scalar_lea.vmem %s8, 48
        %v1412 = vld [vmem:[%s1411] sm:$0xf]
        %v1413 = vld [vmem:[%s1411 + $0x4] sm:$0xf]
        %v1414 = vld [vmem:[%s1411 + $0x8] sm:$0xf]
        %v1415 = vld [vmem:[%s1411 + $0xc] sm:$0xf]
        %s1416 = scalar_lea.vmem %s9, 3
        %v1417 = vld [vmem:[%s1416] sm:$0x1]
        %v1419 = vlaneseq
        %v1420 = vshrl.u32 %v1419, 7
        %v1421 = vsub.s32 0, %v1420
        %v1422 = vrot.slane %v1417, %v1421
        %v1428 = vunpack.c.l.b16 %v1412
        %v1429 = vunpack.c.l.b16 %v1413
        %v1430 = vunpack.c.l.b16 %v1414
        %v1431 = vunpack.c.l.b16 %v1415
        %v1432 = vpack.c.b16 %v1429, %v1428
        %v1433 = vpack.c.b16 %v1431, %v1430
        %1436 = vmatprep.subr.bf16.mxu0 0
        %1437 = vmatpush1.bf16.msra.mxu0 %v1432
        %1438 = vmatprep.subr.bf16.mxu0 0
        %1439 = vmatpush1.bf16.msra.mxu0 %v1433
        %1440 = vmatprep.subr.bf16.mxu0 0
        %1441 = vmatpush1.bf16.msra.mxu0 0
        %1442 = vmatprep.subr.bf16.mxu0 0
        %1443 = vmatpush1.bf16.msra.mxu0 0
        %1444 = vmatprep.subr.bf16.mxu0 0
        %1445 = vmatpush1.bf16.msra.mxu0 0
        %1446 = vmatprep.subr.bf16.mxu0 0
        %1447 = vmatpush1.bf16.msra.mxu0 0
        %1448 = vmatprep.subr.bf16.mxu0 0
        %1449 = vmatpush1.bf16.msra.mxu0 0
        %1450 = vmatprep.subr.bf16.mxu0 0
        %1451 = vmatpush1.bf16.msra.mxu0 0
        %1452 = vmatprep.subr.bf16.mxu0 0
        %1453 = vmatpush1.bf16.msra.mxu0 0
        %1454 = vmatprep.subr.bf16.mxu0 0
        %1455 = vmatpush1.bf16.msra.mxu0 0
        %1456 = vmatprep.subr.bf16.mxu0 0
        %1457 = vmatpush1.bf16.msra.mxu0 0
        %1458 = vmatprep.subr.bf16.mxu0 0
        %1459 = vmatpush1.bf16.msra.mxu0 0
        %1460 = vmatprep.subr.bf16.mxu0 0
        %1461 = vmatpush1.bf16.msra.mxu0 0
        %1462 = vmatprep.subr.bf16.mxu0 0
        %1463 = vmatpush1.bf16.msra.mxu0 0
        %1464 = vmatprep.subr.bf16.mxu0 0
        %1465 = vmatpush1.bf16.msra.mxu0 0
        %1466 = vmatprep.subr.bf16.mxu0 0
        %1467 = vmatpush1.bf16.msra.mxu0 0
        %1468 = vmatprep.mubr.bf16.mxu0 0
        %1469 = vmatmul.mubr.bf16.gmra.mrb[0].mxu0 %v668
        %v1470 = vpop.f32.mrb[0].mxu0
        %v1471 = vadd.f32 %v1422, %v1470
        %v1472 = vpop.f32.mrb[0].mxu0
        %v1473 = vpop.f32.mrb[0].mxu0
        %v1474 = vpop.f32.mrb[0].mxu0
        %1475 = vdwg.mxu0
        %v1476 = vpack.c.bf16 %v1471, %v1471
        %s1477 = scalar_lea.vmem [#allocation4], 6
        %v1478 = vld [vmem:[%s1477] sm:$0x3]
        %v1479 = vsel %vm713, %v1476, %v1478
        %1480 = vst [vmem:[%s1477] sm:$0x3] %v1479
      $region96: #{e2e_forward.8} parent=91 // pred_fallthru
        _
      %v1481 = vld [vmem:[%s594] sm:$0x7]
      %v1482 = vld [vmem:[%s597] sm:$0x1]
      %vm1483 = vcmask 256000
      %1484 = vst.msk [vmem:[#allocation5] sm:$0x7] %vm1483, 0.0
      %v1485 = vld [vmem:[#allocation2] sm:$0x3]
      %v1486 = vld [vmem:[#allocation3] sm:$0x3]
      %v1487 = vld [vmem:[#allocation4] sm:$0x3]
      %v1489 = vlaneseq
      %v1490 = vshrl.u32 %v1489, 7
      %v1491 = vsub.s32 0, %v1490
      %v1492 = vrot.slane %v1482, %v1491
      %vm1494 = vcmask 64512
      %v1496 = vsel %vm1494, %v1485, 0
      %v1499 = vsel %vm1494, %v1486, 0
      %1501 = vmatprep.subr.bf16.mxu0 0
      %1502 = vmatpush1.bf16.xpose.msra.mxu0 %v1499
      %1503 = vmatprep.subr.bf16.mxu0 0
      %1504 = vmatpush1.bf16.xpose.msra.mxu0 0
      %1505 = vmatprep.subr.bf16.mxu0 0
      %1506 = vmatpush1.bf16.xpose.msra.mxu0 0
      %1507 = vmatprep.subr.bf16.mxu0 0
      %1508 = vmatpush1.bf16.xpose.msra.mxu0 0
      %1509 = vmatprep.subr.bf16.mxu0 0
      %1510 = vmatpush1.bf16.xpose.msra.mxu0 0
      %1511 = vmatprep.subr.bf16.mxu0 0
      %1512 = vmatpush1.bf16.xpose.msra.mxu0 0
      %1513 = vmatprep.subr.bf16.mxu0 0
      %1514 = vmatpush1.bf16.xpose.msra.mxu0 0
      %1515 = vmatprep.subr.bf16.mxu0 0
      %1516 = vmatpush1.bf16.xpose.msra.mxu0 0
      %1517 = vmatprep.subr.bf16.mxu0 0
      %1518 = vmatpush1.bf16.xpose.msra.mxu0 0
      %1519 = vmatprep.subr.bf16.mxu0 0
      %1520 = vmatpush1.bf16.xpose.msra.mxu0 0
      %1521 = vmatprep.subr.bf16.mxu0 0
      %1522 = vmatpush1.bf16.xpose.msra.mxu0 0
      %1523 = vmatprep.subr.bf16.mxu0 0
      %1524 = vmatpush1.bf16.xpose.msra.mxu0 0
      %1525 = vmatprep.subr.bf16.mxu0 0
      %1526 = vmatpush1.bf16.xpose.msra.mxu0 0
      %1527 = vmatprep.subr.bf16.mxu0 0
      %1528 = vmatpush1.bf16.xpose.msra.mxu0 0
      %1529 = vmatprep.subr.bf16.mxu0 0
      %1530 = vmatpush1.bf16.xpose.msra.mxu0 0
      %1531 = vmatprep.subr.bf16.mxu0 0
      %1532 = vmatpush1.bf16.xpose.msra.mxu0 0
      %1533 = vmatprep.mubr.bf16.mxu0 0
      %1534 = vmatmul.mubr.bf16.gmra.mrb[0].mxu0 %v1496
      %v1535 = vpop.f32.mrb[0].mxu0
      %v1536 = vadd.f32 %v1492, %v1535
      %v1537 = vpop.f32.mrb[0].mxu0
      %v1538 = vpop.f32.mrb[0].mxu0
      %v1539 = vpop.f32.mrb[0].mxu0
      %1540 = vdwg.mxu0
      %vm1541 = vcmask 18432
      %v1542 = vsel %vm1541, %v1536, -inf
      %1543 = vmax.xlane.f32.xlu0 %v1542
      %v1544 = vpop.xlane.xlu0 %1543
      %v1545 = vsub.f32 %v1536, %v1544
      %v1546 = vmul.f32 %v1545, 1.442695
      %v1547 = vpow.pop %v1546
      %v1548 = vsel %vm1541, %v1547, 0.0
      %1549 = vadd.xlane.f32.xlu0 %v1548
      %v1550 = vpop.xlane.xlu0 %1549
      %v1551 = vmax.f32 %v1550, 1e-30
      %v1552 = vrcp.pop %v1551
      %v1553 = vmul.f32 %v1547, %v1552
      %v1554 = vpack.c.bf16 %v1553, %v1553
      %vm1555 = vcmask 23552
      %v1557 = vsel %vm1555, %v1554, 0
      %vm1559 = vcmask 1040384
      %vm1560 = vcmask 1041408
      %v1561 = vsel %vm1559, 4294967295, 65535
      %v1562 = vsel %vm1560, %v1561, 0
      %v1564 = vand.u32 %v1487, %v1562
      %1566 = vmatprep.subr.bf16.mxu0 0
      %1567 = vmatpush1.bf16.msra.mxu0 %v1564
      %1568 = vmatprep.subr.bf16.mxu0 0
      %1569 = vmatpush1.bf16.msra.mxu0 0
      %1570 = vmatprep.subr.bf16.mxu0 0
      %1571 = vmatpush1.bf16.msra.mxu0 0
      %1572 = vmatprep.subr.bf16.mxu0 0
      %1573 = vmatpush1.bf16.msra.mxu0 0
      %1574 = vmatprep.subr.bf16.mxu0 0
      %1575 = vmatpush1.bf16.msra.mxu0 0
      %1576 = vmatprep.subr.bf16.mxu0 0
      %1577 = vmatpush1.bf16.msra.mxu0 0
      %1578 = vmatprep.subr.bf16.mxu0 0
      %1579 = vmatpush1.bf16.msra.mxu0 0
      %1580 = vmatprep.subr.bf16.mxu0 0
      %1581 = vmatpush1.bf16.msra.mxu0 0
      %1582 = vmatprep.subr.bf16.mxu0 0
      %1583 = vmatpush1.bf16.msra.mxu0 0
      %1584 = vmatprep.subr.bf16.mxu0 0
      %1585 = vmatpush1.bf16.msra.mxu0 0
      %1586 = vmatprep.subr.bf16.mxu0 0
      %1587 = vmatpush1.bf16.msra.mxu0 0
      %1588 = vmatprep.subr.bf16.mxu0 0
      %1589 = vmatpush1.bf16.msra.mxu0 0
      %1590 = vmatprep.subr.bf16.mxu0 0
      %1591 = vmatpush1.bf16.msra.mxu0 0
      %1592 = vmatprep.subr.bf16.mxu0 0
      %1593 = vmatpush1.bf16.msra.mxu0 0
      %1594 = vmatprep.subr.bf16.mxu0 0
      %1595 = vmatpush1.bf16.msra.mxu0 0
      %1596 = vmatprep.subr.bf16.mxu0 0
      %1597 = vmatpush1.bf16.msra.mxu0 0
      %1598 = vmatprep.mubr.bf16.mxu0 0
      %1599 = vmatmul.mubr.bf16.gmra.mrb[0].mxu0 %v1557
      %v1600 = vpop.f32.mrb[0].mxu0
      %v1601 = vadd.f32 0.0, %v1600
      %v1602 = vpop.f32.mrb[0].mxu0
      %v1603 = vpop.f32.mrb[0].mxu0
      %v1604 = vpop.f32.mrb[0].mxu0
      %1605 = vdwg.mxu0
      %v1606 = vld [vmem:[#allocation5] sm:$0x7]
      %v1607 = vpack.c.bf16 %v1601, %v1601
      %v1608 = vld [vmem:[%s10] sm:$0xf]
      %v1610 = vsel %vm1494, %v1607, 0
      %vm1612 = vcmask 1043456
      %v1614 = vsel %vm1612, %v1608, 0
      %1616 = vmatprep.subr.bf16.mxu0 0
      %1617 = vmatpush1.bf16.msra.mxu0 %v1614
      %1618 = vmatprep.subr.bf16.mxu0 0
      %1619 = vmatpush1.bf16.msra.mxu0 0
      %1620 = vmatprep.subr.bf16.mxu0 0
      %1621 = vmatpush1.bf16.msra.mxu0 0
      %1622 = vmatprep.subr.bf16.mxu0 0
      %1623 = vmatpush1.bf16.msra.mxu0 0
      %1624 = vmatprep.subr.bf16.mxu0 0
      %1625 = vmatpush1.bf16.msra.mxu0 0
      %1626 = vmatprep.subr.bf16.mxu0 0
      %1627 = vmatpush1.bf16.msra.mxu0 0
      %1628 = vmatprep.subr.bf16.mxu0 0
      %1629 = vmatpush1.bf16.msra.mxu0 0
      %1630 = vmatprep.subr.bf16.mxu0 0
      %1631 = vmatpush1.bf16.msra.mxu0 0
      %1632 = vmatprep.subr.bf16.mxu0 0
      %1633 = vmatpush1.bf16.msra.mxu0 0
      %1634 = vmatprep.subr.bf16.mxu0 0
      %1635 = vmatpush1.bf16.msra.mxu0 0
      %1636 = vmatprep.subr.bf16.mxu0 0
      %1637 = vmatpush1.bf16.msra.mxu0 0
      %1638 = vmatprep.subr.bf16.mxu0 0
      %1639 = vmatpush1.bf16.msra.mxu0 0
      %1640 = vmatprep.subr.bf16.mxu0 0
      %1641 = vmatpush1.bf16.msra.mxu0 0
      %1642 = vmatprep.subr.bf16.mxu0 0
      %1643 = vmatpush1.bf16.msra.mxu0 0
      %1644 = vmatprep.subr.bf16.mxu0 0
      %1645 = vmatpush1.bf16.msra.mxu0 0
      %1646 = vmatprep.subr.bf16.mxu0 0
      %1647 = vmatpush1.bf16.msra.mxu0 0
      %1648 = vmatprep.mubr.bf16.mxu0 0
      %1649 = vmatmul.mubr.bf16.gmra.mrb[0].mxu0 %v1610
      %v1650 = vpop.f32.mrb[0].mxu0
      %v1651 = vadd.f32 0.0, %v1650
      %v1652 = vpop.f32.mrb[0].mxu0
      %v1653 = vpop.f32.mrb[0].mxu0
      %v1654 = vpop.f32.mrb[0].mxu0
      %1655 = vdwg.mxu0
      %v1656 = vadd.f32 %v1606, %v1651
      %1657 = vst.msk [vmem:[#allocation5] sm:$0x7] %vm1483, %v1656
      %s1658 = scalar_lea.vmem [#allocation2], 2
      %v1659 = vld [vmem:[%s1658] sm:$0x3]
      %s1660 = scalar_lea.vmem [#allocation3], 2
      %v1661 = vld [vmem:[%s1660] sm:$0x3]
      %s1662 = scalar_lea.vmem [#allocation4], 2
      %v1663 = vld [vmem:[%s1662] sm:$0x3]
      %v1665 = vsel %vm1494, %v1659, 0
      %v1668 = vsel %vm1494, %v1661, 0
      %1670 = vmatprep.subr.bf16.mxu0 0
      %1671 = vmatpush1.bf16.xpose.msra.mxu0 %v1668
      %1672 = vmatprep.subr.bf16.mxu0 0
      %1673 = vmatpush1.bf16.xpose.msra.mxu0 0
      %1674 = vmatprep.subr.bf16.mxu0 0
      %1675 = vmatpush1.bf16.xpose.msra.mxu0 0
      %1676 = vmatprep.subr.bf16.mxu0 0
      %1677 = vmatpush1.bf16.xpose.msra.mxu0 0
      %1678 = vmatprep.subr.bf16.mxu0 0
      %1679 = vmatpush1.bf16.xpose.msra.mxu0 0
      %1680 = vmatprep.subr.bf16.mxu0 0
      %1681 = vmatpush1.bf16.xpose.msra.mxu0 0
      %1682 = vmatprep.subr.bf16.mxu0 0
      %1683 = vmatpush1.bf16.xpose.msra.mxu0 0
      %1684 = vmatprep.subr.bf16.mxu0 0
      %1685 = vmatpush1.bf16.xpose.msra.mxu0 0
      %1686 = vmatprep.subr.bf16.mxu0 0
      %1687 = vmatpush1.bf16.xpose.msra.mxu0 0
      %1688 = vmatprep.subr.bf16.mxu0 0
      %1689 = vmatpush1.bf16.xpose.msra.mxu0 0
      %1690 = vmatprep.subr.bf16.mxu0 0
      %1691 = vmatpush1.bf16.xpose.msra.mxu0 0
      %1692 = vmatprep.subr.bf16.mxu0 0
      %1693 = vmatpush1.bf16.xpose.msra.mxu0 0
      %1694 = vmatprep.subr.bf16.mxu0 0
      %1695 = vmatpush1.bf16.xpose.msra.mxu0 0
      %1696 = vmatprep.subr.bf16.mxu0 0
      %1697 = vmatpush1.bf16.xpose.msra.mxu0 0
      %1698 = vmatprep.subr.bf16.mxu0 0
      %1699 = vmatpush1.bf16.xpose.msra.mxu0 0
      %1700 = vmatprep.subr.bf16.mxu0 0
      %1701 = vmatpush1.bf16.xpose.msra.mxu0 0
      %1702 = vmatprep.mubr.bf16.mxu0 0
      %1703 = vmatmul.mubr.bf16.gmra.mrb[0].mxu0 %v1665
      %v1704 = vpop.f32.mrb[0].mxu0
      %v1705 = vadd.f32 %v1492, %v1704
      %v1706 = vpop.f32.mrb[0].mxu0
      %v1707 = vpop.f32.mrb[0].mxu0
      %v1708 = vpop.f32.mrb[0].mxu0
      %1709 = vdwg.mxu0
      %v1710 = vsel %vm1541, %v1705, -inf
      %1711 = vmax.xlane.f32.xlu0 %v1710
      %v1712 = vpop.xlane.xlu0 %1711
      %v1713 = vsub.f32 %v1705, %v1712
      %v1714 = vmul.f32 %v1713, 1.442695
      %v1715 = vpow.pop %v1714
      %v1716 = vsel %vm1541, %v1715, 0.0
      %1717 = vadd.xlane.f32.xlu0 %v1716
      %v1718 = vpop.xlane.xlu0 %1717
      %v1719 = vmax.f32 %v1718, 1e-30
      %v1720 = vrcp.pop %v1719
      %v1721 = vmul.f32 %v1715, %v1720
      %v1722 = vpack.c.bf16 %v1721, %v1721
      %v1724 = vsel %vm1555, %v1722, 0
      %v1727 = vand.u32 %v1663, %v1562
      %1729 = vmatprep.subr.bf16.mxu0 0
      %1730 = vmatpush1.bf16.msra.mxu0 %v1727
      %1731 = vmatprep.subr.bf16.mxu0 0
      %1732 = vmatpush1.bf16.msra.mxu0 0
      %1733 = vmatprep.subr.bf16.mxu0 0
      %1734 = vmatpush1.bf16.msra.mxu0 0
      %1735 = vmatprep.subr.bf16.mxu0 0
      %1736 = vmatpush1.bf16.msra.mxu0 0
      %1737 = vmatprep.subr.bf16.mxu0 0
      %1738 = vmatpush1.bf16.msra.mxu0 0
      %1739 = vmatprep.subr.bf16.mxu0 0
      %1740 = vmatpush1.bf16.msra.mxu0 0
      %1741 = vmatprep.subr.bf16.mxu0 0
      %1742 = vmatpush1.bf16.msra.mxu0 0
      %1743 = vmatprep.subr.bf16.mxu0 0
      %1744 = vmatpush1.bf16.msra.mxu0 0
      %1745 = vmatprep.subr.bf16.mxu0 0
      %1746 = vmatpush1.bf16.msra.mxu0 0
      %1747 = vmatprep.subr.bf16.mxu0 0
      %1748 = vmatpush1.bf16.msra.mxu0 0
      %1749 = vmatprep.subr.bf16.mxu0 0
      %1750 = vmatpush1.bf16.msra.mxu0 0
      %1751 = vmatprep.subr.bf16.mxu0 0
      %1752 = vmatpush1.bf16.msra.mxu0 0
      %1753 = vmatprep.subr.bf16.mxu0 0
      %1754 = vmatpush1.bf16.msra.mxu0 0
      %1755 = vmatprep.subr.bf16.mxu0 0
      %1756 = vmatpush1.bf16.msra.mxu0 0
      %1757 = vmatprep.subr.bf16.mxu0 0
      %1758 = vmatpush1.bf16.msra.mxu0 0
      %1759 = vmatprep.subr.bf16.mxu0 0
      %1760 = vmatpush1.bf16.msra.mxu0 0
      %1761 = vmatprep.mubr.bf16.mxu0 0
      %1762 = vmatmul.mubr.bf16.gmra.mrb[0].mxu0 %v1724
      %v1763 = vpop.f32.mrb[0].mxu0
      %v1764 = vadd.f32 0.0, %v1763
      %v1765 = vpop.f32.mrb[0].mxu0
      %v1766 = vpop.f32.mrb[0].mxu0
      %v1767 = vpop.f32.mrb[0].mxu0
      %1768 = vdwg.mxu0
      %v1769 = vld [vmem:[#allocation5] sm:$0x7]
      %v1770 = vpack.c.bf16 %v1764, %v1764
      %s1771 = scalar_lea.vmem %s10, 4
      %v1772 = vld [vmem:[%s1771] sm:$0xf]
      %v1774 = vsel %vm1494, %v1770, 0
      %v1777 = vsel %vm1612, %v1772, 0
      %1779 = vmatprep.subr.bf16.mxu0 0
      %1780 = vmatpush1.bf16.msra.mxu0 %v1777
      %1781 = vmatprep.subr.bf16.mxu0 0
      %1782 = vmatpush1.bf16.msra.mxu0 0
      %1783 = vmatprep.subr.bf16.mxu0 0
      %1784 = vmatpush1.bf16.msra.mxu0 0
      %1785 = vmatprep.subr.bf16.mxu0 0
      %1786 = vmatpush1.bf16.msra.mxu0 0
      %1787 = vmatprep.subr.bf16.mxu0 0
      %1788 = vmatpush1.bf16.msra.mxu0 0
      %1789 = vmatprep.subr.bf16.mxu0 0
      %1790 = vmatpush1.bf16.msra.mxu0 0
      %1791 = vmatprep.subr.bf16.mxu0 0
      %1792 = vmatpush1.bf16.msra.mxu0 0
      %1793 = vmatprep.subr.bf16.mxu0 0
      %1794 = vmatpush1.bf16.msra.mxu0 0
      %1795 = vmatprep.subr.bf16.mxu0 0
      %1796 = vmatpush1.bf16.msra.mxu0 0
      %1797 = vmatprep.subr.bf16.mxu0 0
      %1798 = vmatpush1.bf16.msra.mxu0 0
      %1799 = vmatprep.subr.bf16.mxu0 0
      %1800 = vmatpush1.bf16.msra.mxu0 0
      %1801 = vmatprep.subr.bf16.mxu0 0
      %1802 = vmatpush1.bf16.msra.mxu0 0
      %1803 = vmatprep.subr.bf16.mxu0 0
      %1804 = vmatpush1.bf16.msra.mxu0 0
      %1805 = vmatprep.subr.bf16.mxu0 0
      %1806 = vmatpush1.bf16.msra.mxu0 0
      %1807 = vmatprep.subr.bf16.mxu0 0
      %1808 = vmatpush1.bf16.msra.mxu0 0
      %1809 = vmatprep.subr.bf16.mxu0 0
      %1810 = vmatpush1.bf16.msra.mxu0 0
      %1811 = vmatprep.mubr.bf16.mxu0 0
      %1812 = vmatmul.mubr.bf16.gmra.mrb[0].mxu0 %v1774
      %v1813 = vpop.f32.mrb[0].mxu0
      %v1814 = vadd.f32 0.0, %v1813
      %v1815 = vpop.f32.mrb[0].mxu0
      %v1816 = vpop.f32.mrb[0].mxu0
      %v1817 = vpop.f32.mrb[0].mxu0
      %1818 = vdwg.mxu0
      %v1819 = vadd.f32 %v1769, %v1814
      %1820 = vst.msk [vmem:[#allocation5] sm:$0x7] %vm1483, %v1819
      %s1821 = scalar_lea.vmem [#allocation2], 4
      %v1822 = vld [vmem:[%s1821] sm:$0x3]
      %s1823 = scalar_lea.vmem [#allocation3], 4
      %v1824 = vld [vmem:[%s1823] sm:$0x3]
      %s1825 = scalar_lea.vmem [#allocation4], 4
      %v1826 = vld [vmem:[%s1825] sm:$0x3]
      %v1828 = vsel %vm1494, %v1822, 0
      %v1831 = vsel %vm1494, %v1824, 0
      %1833 = vmatprep.subr.bf16.mxu0 0
      %1834 = vmatpush1.bf16.xpose.msra.mxu0 %v1831
      %1835 = vmatprep.subr.bf16.mxu0 0
      %1836 = vmatpush1.bf16.xpose.msra.mxu0 0
      %1837 = vmatprep.subr.bf16.mxu0 0
      %1838 = vmatpush1.bf16.xpose.msra.mxu0 0
      %1839 = vmatprep.subr.bf16.mxu0 0
      %1840 = vmatpush1.bf16.xpose.msra.mxu0 0
      %1841 = vmatprep.subr.bf16.mxu0 0
      %1842 = vmatpush1.bf16.xpose.msra.mxu0 0
      %1843 = vmatprep.subr.bf16.mxu0 0
      %1844 = vmatpush1.bf16.xpose.msra.mxu0 0
      %1845 = vmatprep.subr.bf16.mxu0 0
      %1846 = vmatpush1.bf16.xpose.msra.mxu0 0
      %1847 = vmatprep.subr.bf16.mxu0 0
      %1848 = vmatpush1.bf16.xpose.msra.mxu0 0
      %1849 = vmatprep.subr.bf16.mxu0 0
      %1850 = vmatpush1.bf16.xpose.msra.mxu0 0
      %1851 = vmatprep.subr.bf16.mxu0 0
      %1852 = vmatpush1.bf16.xpose.msra.mxu0 0
      %1853 = vmatprep.subr.bf16.mxu0 0
      %1854 = vmatpush1.bf16.xpose.msra.mxu0 0
      %1855 = vmatprep.subr.bf16.mxu0 0
      %1856 = vmatpush1.bf16.xpose.msra.mxu0 0
      %1857 = vmatprep.subr.bf16.mxu0 0
      %1858 = vmatpush1.bf16.xpose.msra.mxu0 0
      %1859 = vmatprep.subr.bf16.mxu0 0
      %1860 = vmatpush1.bf16.xpose.msra.mxu0 0
      %1861 = vmatprep.subr.bf16.mxu0 0
      %1862 = vmatpush1.bf16.xpose.msra.mxu0 0
      %1863 = vmatprep.subr.bf16.mxu0 0
      %1864 = vmatpush1.bf16.xpose.msra.mxu0 0
      %1865 = vmatprep.mubr.bf16.mxu0 0
      %1866 = vmatmul.mubr.bf16.gmra.mrb[0].mxu0 %v1828
      %v1867 = vpop.f32.mrb[0].mxu0
      %v1868 = vadd.f32 %v1492, %v1867
      %v1869 = vpop.f32.mrb[0].mxu0
      %v1870 = vpop.f32.mrb[0].mxu0
      %v1871 = vpop.f32.mrb[0].mxu0
      %1872 = vdwg.mxu0
      %v1873 = vsel %vm1541, %v1868, -inf
      %1874 = vmax.xlane.f32.xlu0 %v1873
      %v1875 = vpop.xlane.xlu0 %1874
      %v1876 = vsub.f32 %v1868, %v1875
      %v1877 = vmul.f32 %v1876, 1.442695
      %v1878 = vpow.pop %v1877
      %v1879 = vsel %vm1541, %v1878, 0.0
      %1880 = vadd.xlane.f32.xlu0 %v1879
      %v1881 = vpop.xlane.xlu0 %1880
      %v1882 = vmax.f32 %v1881, 1e-30
      %v1883 = vrcp.pop %v1882
      %v1884 = vmul.f32 %v1878, %v1883
      %v1885 = vpack.c.bf16 %v1884, %v1884
      %v1887 = vsel %vm1555, %v1885, 0
      %v1890 = vand.u32 %v1826, %v1562
      %1892 = vmatprep.subr.bf16.mxu0 0
      %1893 = vmatpush1.bf16.msra.mxu0 %v1890
      %1894 = vmatprep.subr.bf16.mxu0 0
      %1895 = vmatpush1.bf16.msra.mxu0 0
      %1896 = vmatprep.subr.bf16.mxu0 0
      %1897 = vmatpush1.bf16.msra.mxu0 0
      %1898 = vmatprep.subr.bf16.mxu0 0
      %1899 = vmatpush1.bf16.msra.mxu0 0
      %1900 = vmatprep.subr.bf16.mxu0 0
      %1901 = vmatpush1.bf16.msra.mxu0 0
      %1902 = vmatprep.subr.bf16.mxu0 0
      %1903 = vmatpush1.bf16.msra.mxu0 0
      %1904 = vmatprep.subr.bf16.mxu0 0
      %1905 = vmatpush1.bf16.msra.mxu0 0
      %1906 = vmatprep.subr.bf16.mxu0 0
      %1907 = vmatpush1.bf16.msra.mxu0 0
      %1908 = vmatprep.subr.bf16.mxu0 0
      %1909 = vmatpush1.bf16.msra.mxu0 0
      %1910 = vmatprep.subr.bf16.mxu0 0
      %1911 = vmatpush1.bf16.msra.mxu0 0
      %1912 = vmatprep.subr.bf16.mxu0 0
      %1913 = vmatpush1.bf16.msra.mxu0 0
      %1914 = vmatprep.subr.bf16.mxu0 0
      %1915 = vmatpush1.bf16.msra.mxu0 0
      %1916 = vmatprep.subr.bf16.mxu0 0
      %1917 = vmatpush1.bf16.msra.mxu0 0
      %1918 = vmatprep.subr.bf16.mxu0 0
      %1919 = vmatpush1.bf16.msra.mxu0 0
      %1920 = vmatprep.subr.bf16.mxu0 0
      %1921 = vmatpush1.bf16.msra.mxu0 0
      %1922 = vmatprep.subr.bf16.mxu0 0
      %1923 = vmatpush1.bf16.msra.mxu0 0
      %1924 = vmatprep.mubr.bf16.mxu0 0
      %1925 = vmatmul.mubr.bf16.gmra.mrb[0].mxu0 %v1887
      %v1926 = vpop.f32.mrb[0].mxu0
      %v1927 = vadd.f32 0.0, %v1926
      %v1928 = vpop.f32.mrb[0].mxu0
      %v1929 = vpop.f32.mrb[0].mxu0
      %v1930 = vpop.f32.mrb[0].mxu0
      %1931 = vdwg.mxu0
      %v1932 = vld [vmem:[#allocation5] sm:$0x7]
      %v1933 = vpack.c.bf16 %v1927, %v1927
      %s1934 = scalar_lea.vmem %s10, 8
      %v1935 = vld [vmem:[%s1934] sm:$0xf]
      %v1937 = vsel %vm1494, %v1933, 0
      %v1940 = vsel %vm1612, %v1935, 0
      %1942 = vmatprep.subr.bf16.mxu0 0
      %1943 = vmatpush1.bf16.msra.mxu0 %v1940
      %1944 = vmatprep.subr.bf16.mxu0 0
      %1945 = vmatpush1.bf16.msra.mxu0 0
      %1946 = vmatprep.subr.bf16.mxu0 0
      %1947 = vmatpush1.bf16.msra.mxu0 0
      %1948 = vmatprep.subr.bf16.mxu0 0
      %1949 = vmatpush1.bf16.msra.mxu0 0
      %1950 = vmatprep.subr.bf16.mxu0 0
      %1951 = vmatpush1.bf16.msra.mxu0 0
      %1952 = vmatprep.subr.bf16.mxu0 0
      %1953 = vmatpush1.bf16.msra.mxu0 0
      %1954 = vmatprep.subr.bf16.mxu0 0
      %1955 = vmatpush1.bf16.msra.mxu0 0
      %1956 = vmatprep.subr.bf16.mxu0 0
      %1957 = vmatpush1.bf16.msra.mxu0 0
      %1958 = vmatprep.subr.bf16.mxu0 0
      %1959 = vmatpush1.bf16.msra.mxu0 0
      %1960 = vmatprep.subr.bf16.mxu0 0
      %1961 = vmatpush1.bf16.msra.mxu0 0
      %1962 = vmatprep.subr.bf16.mxu0 0
      %1963 = vmatpush1.bf16.msra.mxu0 0
      %1964 = vmatprep.subr.bf16.mxu0 0
      %1965 = vmatpush1.bf16.msra.mxu0 0
      %1966 = vmatprep.subr.bf16.mxu0 0
      %1967 = vmatpush1.bf16.msra.mxu0 0
      %1968 = vmatprep.subr.bf16.mxu0 0
      %1969 = vmatpush1.bf16.msra.mxu0 0
      %1970 = vmatprep.subr.bf16.mxu0 0
      %1971 = vmatpush1.bf16.msra.mxu0 0
      %1972 = vmatprep.subr.bf16.mxu0 0
      %1973 = vmatpush1.bf16.msra.mxu0 0
      %1974 = vmatprep.mubr.bf16.mxu0 0
      %1975 = vmatmul.mubr.bf16.gmra.mrb[0].mxu0 %v1937
      %v1976 = vpop.f32.mrb[0].mxu0
      %v1977 = vadd.f32 0.0, %v1976
      %v1978 = vpop.f32.mrb[0].mxu0
      %v1979 = vpop.f32.mrb[0].mxu0
      %v1980 = vpop.f32.mrb[0].mxu0
      %1981 = vdwg.mxu0
      %v1982 = vadd.f32 %v1932, %v1977
      %1983 = vst.msk [vmem:[#allocation5] sm:$0x7] %vm1483, %v1982
      %s1984 = scalar_lea.vmem [#allocation2], 6
      %v1985 = vld [vmem:[%s1984] sm:$0x3]
      %s1986 = scalar_lea.vmem [#allocation3], 6
      %v1987 = vld [vmem:[%s1986] sm:$0x3]
      %s1988 = scalar_lea.vmem [#allocation4], 6
      %v1989 = vld [vmem:[%s1988] sm:$0x3]
      %v1991 = vsel %vm1494, %v1985, 0
      %v1994 = vsel %vm1494, %v1987, 0
      %1996 = vmatprep.subr.bf16.mxu0 0
      %1997 = vmatpush1.bf16.xpose.msra.mxu0 %v1994
      %1998 = vmatprep.subr.bf16.mxu0 0
      %1999 = vmatpush1.bf16.xpose.msra.mxu0 0
      %2000 = vmatprep.subr.bf16.mxu0 0
      %2001 = vmatpush1.bf16.xpose.msra.mxu0 0
      %2002 = vmatprep.subr.bf16.mxu0 0
      %2003 = vmatpush1.bf16.xpose.msra.mxu0 0
      %2004 = vmatprep.subr.bf16.mxu0 0
      %2005 = vmatpush1.bf16.xpose.msra.mxu0 0
      %2006 = vmatprep.subr.bf16.mxu0 0
      %2007 = vmatpush1.bf16.xpose.msra.mxu0 0
      %2008 = vmatprep.subr.bf16.mxu0 0
      %2009 = vmatpush1.bf16.xpose.msra.mxu0 0
      %2010 = vmatprep.subr.bf16.mxu0 0
      %2011 = vmatpush1.bf16.xpose.msra.mxu0 0
      %2012 = vmatprep.subr.bf16.mxu0 0
      %2013 = vmatpush1.bf16.xpose.msra.mxu0 0
      %2014 = vmatprep.subr.bf16.mxu0 0
      %2015 = vmatpush1.bf16.xpose.msra.mxu0 0
      %2016 = vmatprep.subr.bf16.mxu0 0
      %2017 = vmatpush1.bf16.xpose.msra.mxu0 0
      %2018 = vmatprep.subr.bf16.mxu0 0
      %2019 = vmatpush1.bf16.xpose.msra.mxu0 0
      %2020 = vmatprep.subr.bf16.mxu0 0
      %2021 = vmatpush1.bf16.xpose.msra.mxu0 0
      %2022 = vmatprep.subr.bf16.mxu0 0
      %2023 = vmatpush1.bf16.xpose.msra.mxu0 0
      %2024 = vmatprep.subr.bf16.mxu0 0
      %2025 = vmatpush1.bf16.xpose.msra.mxu0 0
      %2026 = vmatprep.subr.bf16.mxu0 0
      %2027 = vmatpush1.bf16.xpose.msra.mxu0 0
      %2028 = vmatprep.mubr.bf16.mxu0 0
      %2029 = vmatmul.mubr.bf16.gmra.mrb[0].mxu0 %v1991
      %v2030 = vpop.f32.mrb[0].mxu0
      %v2031 = vadd.f32 %v1492, %v2030
      %v2032 = vpop.f32.mrb[0].mxu0
      %v2033 = vpop.f32.mrb[0].mxu0
      %v2034 = vpop.f32.mrb[0].mxu0
      %2035 = vdwg.mxu0
      %v2036 = vsel %vm1541, %v2031, -inf
      %2037 = vmax.xlane.f32.xlu0 %v2036
      %v2038 = vpop.xlane.xlu0 %2037
      %v2039 = vsub.f32 %v2031, %v2038
      %v2040 = vmul.f32 %v2039, 1.442695
      %v2041 = vpow.pop %v2040
      %v2042 = vsel %vm1541, %v2041, 0.0
      %2043 = vadd.xlane.f32.xlu0 %v2042
      %v2044 = vpop.xlane.xlu0 %2043
      %v2045 = vmax.f32 %v2044, 1e-30
      %v2046 = vrcp.pop %v2045
      %v2047 = vmul.f32 %v2041, %v2046
      %v2048 = vpack.c.bf16 %v2047, %v2047
      %v2050 = vsel %vm1555, %v2048, 0
      %v2053 = vand.u32 %v1989, %v1562
      %2055 = vmatprep.subr.bf16.mxu0 0
      %2056 = vmatpush1.bf16.msra.mxu0 %v2053
      %2057 = vmatprep.subr.bf16.mxu0 0
      %2058 = vmatpush1.bf16.msra.mxu0 0
      %2059 = vmatprep.subr.bf16.mxu0 0
      %2060 = vmatpush1.bf16.msra.mxu0 0
      %2061 = vmatprep.subr.bf16.mxu0 0
      %2062 = vmatpush1.bf16.msra.mxu0 0
      %2063 = vmatprep.subr.bf16.mxu0 0
      %2064 = vmatpush1.bf16.msra.mxu0 0
      %2065 = vmatprep.subr.bf16.mxu0 0
      %2066 = vmatpush1.bf16.msra.mxu0 0
      %2067 = vmatprep.subr.bf16.mxu0 0
      %2068 = vmatpush1.bf16.msra.mxu0 0
      %2069 = vmatprep.subr.bf16.mxu0 0
      %2070 = vmatpush1.bf16.msra.mxu0 0
      %2071 = vmatprep.subr.bf16.mxu0 0
      %2072 = vmatpush1.bf16.msra.mxu0 0
      %2073 = vmatprep.subr.bf16.mxu0 0
      %2074 = vmatpush1.bf16.msra.mxu0 0
      %2075 = vmatprep.subr.bf16.mxu0 0
      %2076 = vmatpush1.bf16.msra.mxu0 0
      %2077 = vmatprep.subr.bf16.mxu0 0
      %2078 = vmatpush1.bf16.msra.mxu0 0
      %2079 = vmatprep.subr.bf16.mxu0 0
      %2080 = vmatpush1.bf16.msra.mxu0 0
      %2081 = vmatprep.subr.bf16.mxu0 0
      %2082 = vmatpush1.bf16.msra.mxu0 0
      %2083 = vmatprep.subr.bf16.mxu0 0
      %2084 = vmatpush1.bf16.msra.mxu0 0
      %2085 = vmatprep.subr.bf16.mxu0 0
      %2086 = vmatpush1.bf16.msra.mxu0 0
      %2087 = vmatprep.mubr.bf16.mxu0 0
      %2088 = vmatmul.mubr.bf16.gmra.mrb[0].mxu0 %v2050
      %v2089 = vpop.f32.mrb[0].mxu0
      %v2090 = vadd.f32 0.0, %v2089
      %v2091 = vpop.f32.mrb[0].mxu0
      %v2092 = vpop.f32.mrb[0].mxu0
      %v2093 = vpop.f32.mrb[0].mxu0
      %2094 = vdwg.mxu0
      %v2095 = vld [vmem:[#allocation5] sm:$0x7]
      %v2096 = vpack.c.bf16 %v2090, %v2090
      %s2097 = scalar_lea.vmem %s10, 12
      %v2098 = vld [vmem:[%s2097] sm:$0xf]
      %v2100 = vsel %vm1494, %v2096, 0
      %v2103 = vsel %vm1612, %v2098, 0
      %2105 = vmatprep.subr.bf16.mxu0 0
      %2106 = vmatpush1.bf16.msra.mxu0 %v2103
      %2107 = vmatprep.subr.bf16.mxu0 0
      %2108 = vmatpush1.bf16.msra.mxu0 0
      %2109 = vmatprep.subr.bf16.mxu0 0
      %2110 = vmatpush1.bf16.msra.mxu0 0
      %2111 = vmatprep.subr.bf16.mxu0 0
      %2112 = vmatpush1.bf16.msra.mxu0 0
      %2113 = vmatprep.subr.bf16.mxu0 0
      %2114 = vmatpush1.bf16.msra.mxu0 0
      %2115 = vmatprep.subr.bf16.mxu0 0
      %2116 = vmatpush1.bf16.msra.mxu0 0
      %2117 = vmatprep.subr.bf16.mxu0 0
      %2118 = vmatpush1.bf16.msra.mxu0 0
      %2119 = vmatprep.subr.bf16.mxu0 0
      %2120 = vmatpush1.bf16.msra.mxu0 0
      %2121 = vmatprep.subr.bf16.mxu0 0
      %2122 = vmatpush1.bf16.msra.mxu0 0
      %2123 = vmatprep.subr.bf16.mxu0 0
      %2124 = vmatpush1.bf16.msra.mxu0 0
      %2125 = vmatprep.subr.bf16.mxu0 0
      %2126 = vmatpush1.bf16.msra.mxu0 0
      %2127 = vmatprep.subr.bf16.mxu0 0
      %2128 = vmatpush1.bf16.msra.mxu0 0
      %2129 = vmatprep.subr.bf16.mxu0 0
      %2130 = vmatpush1.bf16.msra.mxu0 0
      %2131 = vmatprep.subr.bf16.mxu0 0
      %2132 = vmatpush1.bf16.msra.mxu0 0
      %2133 = vmatprep.subr.bf16.mxu0 0
      %2134 = vmatpush1.bf16.msra.mxu0 0
      %2135 = vmatprep.subr.bf16.mxu0 0
      %2136 = vmatpush1.bf16.msra.mxu0 0
      %2137 = vmatprep.mubr.bf16.mxu0 0
      %2138 = vmatmul.mubr.bf16.gmra.mrb[0].mxu0 %v2100
      %v2139 = vpop.f32.mrb[0].mxu0
      %v2140 = vadd.f32 0.0, %v2139
      %v2141 = vpop.f32.mrb[0].mxu0
      %v2142 = vpop.f32.mrb[0].mxu0
      %v2143 = vpop.f32.mrb[0].mxu0
      %2144 = vdwg.mxu0
      %v2145 = vadd.f32 %v2095, %v2140
      %2146 = vst.msk [vmem:[#allocation5] sm:$0x7] %vm1483, %v2145
      %v2147 = vld [vmem:[#allocation5] sm:$0x7]
      %v2148 = vadd.f32 %v1481, %v2147
      %v2149 = vld [vmem:[%s11] sm:$0x1]
      %v2151 = vlaneseq
      %v2152 = vshrl.u32 %v2151, 7
      %v2153 = vsub.s32 0, %v2152
      %v2154 = vrot.slane %v2149, %v2153
      %v2156 = vadd.f32 %v2148, %v2154
      %v2157 = vld [vmem:[%s12] sm:$0x1]
      %v2158 = vld [vmem:[%s13] sm:$0x1]
      %v2159 = vsel %vm1483, %v2156, 0.0
      %2160 = vadd.xlane.f32.xlu0 %v2159
      %v2161 = vpop.xlane.xlu0 %2160
      %v2162 = vrcp.pop 32.0
      %v2163 = vmul.f32 %v2161, %v2162
      %v2164 = vsub.f32 %v2156, %v2163
      %v2165 = vmul.f32 %v2164, %v2164
      %v2166 = vsel %vm1483, %v2165, 0.0
      %2167 = vadd.xlane.f32.xlu0 %v2166
      %v2168 = vpop.xlane.xlu0 %2167
      %v2169 = vmul.f32 %v2168, %v2162
      %v2170 = vadd.f32 %v2169, 1e-12
      %v2171 = vrsqrt.pop %v2170
      %v2172 = vmul.f32 %v2164, %v2171
      %v2174 = vlaneseq
      %v2175 = vshrl.u32 %v2174, 7
      %v2176 = vsub.s32 0, %v2175
      %v2177 = vrot.slane %v2157, %v2176
      %v2179 = vmul.f32 %v2172, %v2177
      %v2181 = vlaneseq
      %v2182 = vshrl.u32 %v2181, 7
      %v2183 = vsub.s32 0, %v2182
      %v2184 = vrot.slane %v2158, %v2183
      %v2186 = vadd.f32 %v2179, %v2184
      %v2187 = vpack.c.bf16 %v2186, %v2186
      %v2188 = vld [vmem:[%s14] sm:$0xf]
      %v2189 = vld [vmem:[%s14 + $0x4] sm:$0xf]
      %v2190 = vld [vmem:[%s14 + $0x8] sm:$0xf]
      %v2191 = vld [vmem:[%s14 + $0xc] sm:$0xf]
      %v2192 = vld [vmem:[%s15] sm:$0x1]
      %v2194 = vlaneseq
      %v2195 = vshrl.u32 %v2194, 7
      %v2196 = vsub.s32 0, %v2195
      %v2197 = vrot.slane %v2192, %v2196
      %v2203 = vunpack.c.l.b16 %v2188
      %v2204 = vunpack.c.l.b16 %v2189
      %v2205 = vunpack.c.l.b16 %v2190
      %v2206 = vunpack.c.l.b16 %v2191
      %v2207 = vpack.c.b16 %v2204, %v2203
      %v2208 = vpack.c.b16 %v2206, %v2205
      %vm2211 = vcmask 261120
      %v2213 = vsel %vm2211, %v2187, 0
      %2215 = vmatprep.subr.bf16.mxu0 0
      %2216 = vmatpush1.bf16.msra.mxu0 %v2207
      %2217 = vmatprep.subr.bf16.mxu0 0
      %2218 = vmatpush1.bf16.msra.mxu0 %v2208
      %2219 = vmatprep.subr.bf16.mxu0 0
      %2220 = vmatpush1.bf16.msra.mxu0 0
      %2221 = vmatprep.subr.bf16.mxu0 0
      %2222 = vmatpush1.bf16.msra.mxu0 0
      %2223 = vmatprep.subr.bf16.mxu0 0
      %2224 = vmatpush1.bf16.msra.mxu0 0
      %2225 = vmatprep.subr.bf16.mxu0 0
      %2226 = vmatpush1.bf16.msra.mxu0 0
      %2227 = vmatprep.subr.bf16.mxu0 0
      %2228 = vmatpush1.bf16.msra.mxu0 0
      %2229 = vmatprep.subr.bf16.mxu0 0
      %2230 = vmatpush1.bf16.msra.mxu0 0
      %2231 = vmatprep.subr.bf16.mxu0 0
      %2232 = vmatpush1.bf16.msra.mxu0 0
      %2233 = vmatprep.subr.bf16.mxu0 0
      %2234 = vmatpush1.bf16.msra.mxu0 0
      %2235 = vmatprep.subr.bf16.mxu0 0
      %2236 = vmatpush1.bf16.msra.mxu0 0
      %2237 = vmatprep.subr.bf16.mxu0 0
      %2238 = vmatpush1.bf16.msra.mxu0 0
      %2239 = vmatprep.subr.bf16.mxu0 0
      %2240 = vmatpush1.bf16.msra.mxu0 0
      %2241 = vmatprep.subr.bf16.mxu0 0
      %2242 = vmatpush1.bf16.msra.mxu0 0
      %2243 = vmatprep.subr.bf16.mxu0 0
      %2244 = vmatpush1.bf16.msra.mxu0 0
      %2245 = vmatprep.subr.bf16.mxu0 0
      %2246 = vmatpush1.bf16.msra.mxu0 0
      %2247 = vmatprep.mubr.bf16.mxu0 0
      %2248 = vmatmul.mubr.bf16.gmra.mrb[0].mxu0 %v2213
      %v2249 = vpop.f32.mrb[0].mxu0
      %v2250 = vadd.f32 %v2197, %v2249
      %v2251 = vpop.f32.mrb[0].mxu0
      %v2252 = vpop.f32.mrb[0].mxu0
      %v2253 = vpop.f32.mrb[0].mxu0
      %2254 = vdwg.mxu0
      %v2255 = vmax.f32 %v2250, 0.0
      %v2256 = vpack.c.bf16 %v2255, %v2255
      %v2257 = vld [vmem:[%s16] sm:$0xf]
      %v2258 = vld [vmem:[%s16 + $0x4] sm:$0xf]
      %v2259 = vld [vmem:[%s16 + $0x8] sm:$0xf]
      %v2260 = vld [vmem:[%s16 + $0xc] sm:$0xf]
      %v2261 = vld [vmem:[%s16 + $0x10] sm:$0xf]
      %v2262 = vld [vmem:[%s16 + $0x14] sm:$0xf]
      %v2263 = vld [vmem:[%s16 + $0x18] sm:$0xf]
      %v2264 = vld [vmem:[%s16 + $0x1c] sm:$0xf]
      %v2265 = vld [vmem:[%s17] sm:$0x1]
      %v2267 = vlaneseq
      %v2268 = vshrl.u32 %v2267, 7
      %v2269 = vsub.s32 0, %v2268
      %v2270 = vrot.slane %v2265, %v2269
      %v2280 = vunpack.c.l.b16 %v2257
      %v2281 = vunpack.c.l.b16 %v2258
      %v2282 = vunpack.c.l.b16 %v2259
      %v2283 = vunpack.c.l.b16 %v2260
      %v2284 = vunpack.c.l.b16 %v2261
      %v2285 = vunpack.c.l.b16 %v2262
      %v2286 = vunpack.c.l.b16 %v2263
      %v2287 = vunpack.c.l.b16 %v2264
      %v2288 = vpack.c.b16 %v2281, %v2280
      %v2289 = vpack.c.b16 %v2283, %v2282
      %v2290 = vpack.c.b16 %v2285, %v2284
      %v2291 = vpack.c.b16 %v2287, %v2286
      %vm2296 = vcmask 523264
      %v2298 = vsel %vm2296, %v2256, 0
      %2300 = vmatprep.subr.bf16.mxu0 0
      %2301 = vmatpush1.bf16.msra.mxu0 %v2288
      %2302 = vmatprep.subr.bf16.mxu0 0
      %2303 = vmatpush1.bf16.msra.mxu0 %v2289
      %2304 = vmatprep.subr.bf16.mxu0 0
      %2305 = vmatpush1.bf16.msra.mxu0 %v2290
      %2306 = vmatprep.subr.bf16.mxu0 0
      %2307 = vmatpush1.bf16.msra.mxu0 %v2291
      %2308 = vmatprep.subr.bf16.mxu0 0
      %2309 = vmatpush1.bf16.msra.mxu0 0
      %2310 = vmatprep.subr.bf16.mxu0 0
      %2311 = vmatpush1.bf16.msra.mxu0 0
      %2312 = vmatprep.subr.bf16.mxu0 0
      %2313 = vmatpush1.bf16.msra.mxu0 0
      %2314 = vmatprep.subr.bf16.mxu0 0
      %2315 = vmatpush1.bf16.msra.mxu0 0
      %2316 = vmatprep.subr.bf16.mxu0 0
      %2317 = vmatpush1.bf16.msra.mxu0 0
      %2318 = vmatprep.subr.bf16.mxu0 0
      %2319 = vmatpush1.bf16.msra.mxu0 0
      %2320 = vmatprep.subr.bf16.mxu0 0
      %2321 = vmatpush1.bf16.msra.mxu0 0
      %2322 = vmatprep.subr.bf16.mxu0 0
      %2323 = vmatpush1.bf16.msra.mxu0 0
      %2324 = vmatprep.subr.bf16.mxu0 0
      %2325 = vmatpush1.bf16.msra.mxu0 0
      %2326 = vmatprep.subr.bf16.mxu0 0
      %2327 = vmatpush1.bf16.msra.mxu0 0
      %2328 = vmatprep.subr.bf16.mxu0 0
      %2329 = vmatpush1.bf16.msra.mxu0 0
      %2330 = vmatprep.subr.bf16.mxu0 0
      %2331 = vmatpush1.bf16.msra.mxu0 0
      %2332 = vmatprep.mubr.bf16.mxu0 0
      %2333 = vmatmul.mubr.bf16.gmra.mrb[0].mxu0 %v2298
      %v2334 = vpop.f32.mrb[0].mxu0
      %v2335 = vadd.f32 %v2270, %v2334
      %v2336 = vpop.f32.mrb[0].mxu0
      %v2337 = vpop.f32.mrb[0].mxu0
      %v2338 = vpop.f32.mrb[0].mxu0
      %2339 = vdwg.mxu0
      %v2340 = vadd.f32 %v2156, %v2335
      %2341 = vst.msk [vmem:[%s604] sm:$0x7] %vm1483, %v2340
      %p2342 = scmp.lt.s32.totalorder %s33, 1
      %s2343 = scalar_select %p2342, %s33, 1
      %p2344 = scmp.lt.s32.totalorder %s34, 0
      %s2345 = scalar_select %p2344, %s34, 0
      %s2346 = sadd.s32 %s2345, %s2343
      %s2347 = smul.addr %s2346, 4
      %s2348 = scalar_lea.vmem %s18, %s2347
      // Predicated region
      $region97: #{e2e_forward.8} parent=91 // pred_check
        %p2349 = pneg %p449
      $region98: #{e2e_forward.8} parent=91 // pred_check_branch
        %2351 = sbr.rel (%p2349) target = $region100
      $region99: #{e2e_forward.8} parent=91 // pred_region
        _
      $region100: #{e2e_forward.8} parent=91 // pred_fallthru
        _
    $region92: #{e2e_forward.8} parent=5 // pred_fallthru
      _
    %p2352 = scmp.le.s32.totalorder 2, %s24
    // Predicated region
    $region101: #{e2e_forward.8} parent=5 // pred_check
      %p2353 = pneg %p2352
    $region102: #{e2e_forward.8} parent=5 // pred_check_branch
      %2355 = sbr.rel (%p2353) target = $region104
    $region103: #{e2e_forward.8} parent=5 // pred_region
      %s2356 = ssub.s32 %s24, 2
      // Predicated region
      $region105: #{e2e_forward.8} parent=103 // pred_check
        %p2357 = pneg %p455
      $region106: #{e2e_forward.8} parent=103 // pred_check_branch
        %2359 = sbr.rel (%p2357) target = $region108
      $region107: #{e2e_forward.8} parent=103 // pred_region
        %p2360 = scmp.lt.s32.totalorder %s35, 1
        %s2361 = scalar_select %p2360, %s35, 1
        %p2362 = scmp.lt.s32.totalorder %s36, 0
        %s2363 = scalar_select %p2362, %s36, 0
        %s2364 = sadd.s32 %s2363, %s2361
        %s2365 = smul.addr %s2364, 4
        %s2366 = scalar_lea.vmem %s18, %s2365
      $region108: #{e2e_forward.8} parent=103 // pred_fallthru
        _
    $region104: #{e2e_forward.8} parent=5 // pred_fallthru
      _
  $region6: #{e2e_forward.8} parent=0 // loop_footer
    %s28 = sadd.s32 1, %s24
  $region7: #{e2e_forward.8} parent=0 // loop_footer_branch
    %23 = sbr.rel target = $region3
  $region8: #{e2e_forward.8} parent=0 // loop_exit
    _

</llo_original>
